<compile_context>
chip_gen: v6e
topology: v6e:2x2x1
jax: 0.10.0
libtpu: 0.0.40
codegen_flags: <defaults>
</compile_context>

<pallas_src>
import functools

import jax
import jax.numpy as jnp
from jax import lax
from jax.experimental import pallas as pl
from jax.experimental.pallas import tpu as pltpu


# ----------------------------------------------------------------------------
# Banded weight: fold the kw taps (and the w zero-padding) into the contraction.
#   Wb[kd*3+kh, w_in*Ci + c, w_out*Co + o] = w[o, c, kd, kh, w_in - w_out + 1]
# (zero outside the 3-tap band; the band's zero structure is exact in bf16).
# ----------------------------------------------------------------------------
def _band_weight(w_oidhw, W):
    wt = jnp.transpose(w_oidhw, (2, 3, 4, 1, 0)).astype(jnp.float32)  # (3,3,3,Ci,Co)
    Ci, Co = wt.shape[3], wt.shape[4]
    k = jnp.arange(3)[:, None, None]
    wi = jnp.arange(W)[None, :, None]
    wo = jnp.arange(W)[None, None, :]
    S = (wi == wo + k - 1).astype(jnp.float32)                        # (3, W, W)
    Wb = jnp.einsum('kiw,dhkco->dhicwo', S, wt)                       # (3,3,W,Ci,W,Co)
    return Wb.reshape(9, W * Ci, W * Co).astype(jnp.bfloat16)         # bf16 for MXU


# ----------------------------------------------------------------------------
# Fused kernel: [optional BN+ReLU of previous stage] -> Conv3d(k=3,s=1,p=1)
#               -> per-tile partial BN statistics (sum, sum of squares).
# ----------------------------------------------------------------------------
def _conv_bn_stats_kernel(*refs, tD, H, W, Cin, Co, apply_bn):
    if apply_bn:
        s_ref, t_ref, xc_ref, xlo_ref, xhi_ref, w_ref, o_ref, st_ref, slab_ref = refs
    else:
        xc_ref, xlo_ref, xhi_ref, w_ref, o_ref, st_ref, slab_ref = refs

    d = pl.program_id(1)
    nD = pl.num_programs(1)
    WCin = W * Cin

    def act(v):
        # BN(prev stage) + ReLU applied on the fly (f32 math), result bf16.
        if apply_bn:
            v = jnp.maximum(v * s_ref[...] + t_ref[...], 0.0)
        return v.astype(jnp.bfloat16)

    # Zero only the two H-pad columns (cheap: 2*(tD+2) rows) -- no whole-slab
    # zero-fill.  Safe under per-core scratch reuse with a "parallel" grid.
    slab_ref[:, 0:1, :] = jnp.zeros((tD + 2, 1, WCin), jnp.bfloat16)
    slab_ref[:, H + 1:H + 2, :] = jnp.zeros((tD + 2, 1, WCin), jnp.bfloat16)

    # Interior rows of this D tile.
    slab_ref[1:tD + 1, 1:H + 1, :] = act(xc_ref[0]).reshape(tD, H, WCin)

    # D-halo rows: real data inside the volume, zeros at the volume boundary
    # (the zero branch also clears stale data from the previous grid step).
    @pl.when(d > 0)
    def _():
        slab_ref[0:1, 1:H + 1, :] = act(xlo_ref[0]).reshape(1, H, WCin)

    @pl.when(d == 0)
    def _():
        slab_ref[0:1, 1:H + 1, :] = jnp.zeros((1, H, WCin), jnp.bfloat16)

    @pl.when(d < nD - 1)
    def _():
        slab_ref[tD + 1:tD + 2, 1:H + 1, :] = act(xhi_ref[0]).reshape(1, H, WCin)

    @pl.when(d == nD - 1)
    def _():
        slab_ref[tD + 1:tD + 2, 1:H + 1, :] = jnp.zeros((1, H, WCin), jnp.bfloat16)

    # 9 shifted MXU matmuls (kw folded into K by the banded weight).
    # Value-level accumulation (no o_ref RMW); one slab load per kd, the three
    # kh shifts are slices of the loaded value.
    acc = None
    for kd in range(3):
        v = slab_ref[kd:kd + tD, :, :]                       # (tD, H+2, WCin) bf16
        for kh in range(3):
            xs = v[:, kh:kh + H, :].reshape(tD * H, WCin)
            contrib = jnp.dot(xs, w_ref[kd * 3 + kh],
                              preferred_element_type=jnp.float32)
            acc = contrib if acc is None else acc + contrib

    # Single output store (bf16) + partial BN stats from the f32 accumulator.
    o_ref[0] = acc.astype(o_ref.dtype)
    st_ref[0, 0, 0:1, :] = jnp.sum(acc, axis=0, keepdims=True)
    st_ref[0, 0, 1:2, :] = jnp.sum(acc * acc, axis=0, keepdims=True)


def conv3d_bn_stats(x_flat, w_band, scale_t, shift_t, *, B, D, H, W, Cin, Co, tD):
    """x_flat: [B, D*H, W*Cin] bf16; w_band: [9, W*Cin, W*Co] bf16.
    Returns y: [B, D*H, W*Co] bf16 and partial stats: [B, nD, 2, W*Co] f32."""
    nD = D // tD
    WCin = W * Cin
    WCo = W * Co
    apply_bn = scale_t is not None

    kern = functools.partial(_conv_bn_stats_kernel,
                             tD=tD, H=H, W=W, Cin=Cin, Co=Co, apply_bn=apply_bn)

    in_specs = []
    args = []
    if apply_bn:
        in_specs += [pl.BlockSpec((1, WCin), lambda b, d: (0, 0)),
                     pl.BlockSpec((1, WCin), lambda b, d: (0, 0))]
        args += [scale_t, shift_t]
    in_specs += [
        # current D tile
        pl.BlockSpec((1, tD * H, WCin), lambda b, d: (b, d, 0)),
        # halo D-rows (block size = H rows along the D*H axis -> block idx = D idx)
        pl.BlockSpec((1, H, WCin), lambda b, d: (b, jnp.maximum(d * tD - 1, 0), 0)),
        pl.BlockSpec((1, H, WCin), lambda b, d: (b, jnp.minimum(d * tD + tD, D - 1), 0)),
        # grid-invariant banded weight (bf16).  For large W: single-buffer this
        # (pipeline_mode=pl.Buffered(1)) and tile N band-aware.
        pl.BlockSpec((9, WCin, WCo), lambda b, d: (0, 0, 0)),
    ]
    args += [x_flat, x_flat, x_flat, w_band]

    y, stats = pl.pallas_call(
        kern,
        out_shape=(jax.ShapeDtypeStruct((B, D * H, WCo), jnp.bfloat16),
                   jax.ShapeDtypeStruct((B, nD, 2, WCo), jnp.float32)),
        grid=(B, nD),
        in_specs=in_specs,
        out_specs=(pl.BlockSpec((1, tD * H, WCo), lambda b, d: (b, d, 0)),
                   pl.BlockSpec((1, 1, 2, WCo), lambda b, d: (b, d, 0, 0))),
        scratch_shapes=[pltpu.VMEM((tD + 2, H + 2, WCin), jnp.bfloat16)],
        compiler_params=pltpu.CompilerParams(
            dimension_semantics=("parallel", "parallel"),
            vmem_limit_bytes=48 * 1024 * 1024),   # explicit; < v7x 64 MiB physical
    )(*args)
    return y, stats


# ----------------------------------------------------------------------------
# Final fused BN + ReLU (lane-dense elementwise, large row tiles).
# ----------------------------------------------------------------------------
def _bn_relu_kernel(y_ref, s_ref, t_ref, o_ref):
    o_ref[...] = jnp.maximum(y_ref[...] * s_ref[...] + t_ref[...], 0.0)


def bn_relu(y, scale_t, shift_t, *, B, DH, WCo, tR):
    nR = DH // tR
    return pl.pallas_call(
        _bn_relu_kernel,
        out_shape=jax.ShapeDtypeStruct((B, DH, WCo), jnp.float32),
        grid=(B, nR),
        in_specs=[pl.BlockSpec((1, tR, WCo), lambda b, r: (b, r, 0)),
                  pl.BlockSpec((1, WCo), lambda b, r: (0, 0)),
                  pl.BlockSpec((1, WCo), lambda b, r: (0, 0))],
        out_specs=pl.BlockSpec((1, tR, WCo), lambda b, r: (b, r, 0)),
        compiler_params=pltpu.CompilerParams(
            dimension_semantics=("parallel", "parallel"),
            vmem_limit_bytes=48 * 1024 * 1024),
    )(y, scale_t, shift_t)


# ----------------------------------------------------------------------------
# BN scale/shift from fused partial statistics (tiny XLA math on Co elements).
# ----------------------------------------------------------------------------
def _bn_scale_shift(stats, gamma, beta, n, W, Co, eps=1e-5):
    s = jnp.sum(stats, axis=(0, 1)).reshape(2, W, Co).sum(axis=1)   # (2, Co)
    mean = s[0] / n
    var = s[1] / n - mean * mean          # biased variance (BN training-mode norm)
    scale = gamma / jnp.sqrt(var + eps)
    shift = beta - mean * scale
    # tile once to lane width W*Co (channel pattern repeats every Co lanes)
    scale_t = jnp.tile(scale, W).reshape(1, W * Co)
    shift_t = jnp.tile(shift, W).reshape(1, W * Co)
    return scale_t, shift_t


# ----------------------------------------------------------------------------
# Tiling heuristics
# ----------------------------------------------------------------------------
def _pick_tile_d(D, H, B):
    # Target matmul M = tD*H ~= 256 rows (full MXU rows on v6e/v7x); D % tD == 0.
    tD = max(1, min(D, max(1, 256 // H)))
    while D % tD:
        tD -= 1
    # Keep >= 2 parallel grid steps so both v7x TensorCores get work.
    if B * (D // tD) < 2 and tD > 1:
        tD = max(1, tD // 2)
        while D % tD:
            tD -= 1
    return tD


def _pick_rows(DH, max_rows=4096):
    # Large elementwise tiles (>= 512 rows when available) for HBM roofline.
    tR = min(DH, max_rows)
    while DH % tR:
        tR -= 8
    return tR


# ----------------------------------------------------------------------------
# Doubleconv forward (NCDHW boundary layout, like PyTorch)
# ----------------------------------------------------------------------------
@jax.jit
def doubleconv_forward(x_ncdhw, w1_oidhw, g1, b1, w2_oidhw, g2, b2):
    B, Ci, D, H, W = x_ncdhw.shape
    Co = w1_oidhw.shape[0]
    assert H % 8 == 0, "layout assumes H is a multiple of 8"
    tD = _pick_tile_d(D, H, B)
    eps = 1e-5
    n = float(B * D * H * W)

    # NCDHW -> lane-dense [B, D*H, W*Ci] (bf16 for MXU operands / HBM traffic).
    # NOTE: in a channels-last end-to-end pipeline this transpose and the final
    # one would disappear; they only bridge the PyTorch NCDHW boundary here.
    x = jnp.transpose(x_ncdhw, (0, 2, 3, 4, 1)).astype(jnp.bfloat16)
    x = x.reshape(B, D * H, W * Ci)
    wb1 = _band_weight(w1_oidhw, W)   # (9, W*Ci, W*Co) bf16
    wb2 = _band_weight(w2_oidhw, W)   # (9, W*Co, W*Co) bf16

    # Stage 1: conv1 + fused partial BN stats (BN1+ReLU deferred into conv2).
    y1, st1 = conv3d_bn_stats(x, wb1, None, None,
                              B=B, D=D, H=H, W=W, Cin=Ci, Co=Co, tD=tD)
    s1, t1 = _bn_scale_shift(st1, g1, b1, n, W, Co, eps)

    # Stage 2: fused BN1+ReLU -> conv2 -> fused partial BN stats (y1 read once).
    y2, st2 = conv3d_bn_stats(y1, wb2, s1, t1,
                              B=B, D=D, H=H, W=W, Cin=Co, Co=Co, tD=tD)
    s2, t2 = _bn_scale_shift(st2, g2, b2, n, W, Co, eps)

    # Final BN2 + ReLU (lane-dense elementwise kernel, whole-D*H row tiles).
    out = bn_relu(y2, s2, t2, B=B, DH=D * H, WCo=W * Co, tR=_pick_rows(D * H))

    # TODO(synk): BatchNorm3d running_mean / running_var buffer updates (training
    # side effect) are not emitted; forward output matches PyTorch training mode.
    return jnp.transpose(out.reshape(B, D, H, W, Co), (0, 4, 1, 2, 3))  # NCDHW


# ----------------------------------------------------------------------------
# Pure-JAX f32 reference (mirrors the PyTorch forward) for correctness check
# ----------------------------------------------------------------------------
def _ref_conv_bn_relu(x, w_oidhw, gamma, beta, eps=1e-5):
    y = lax.conv_general_dilated(
        x, w_oidhw, window_strides=(1, 1, 1),
        padding=((1, 1), (1, 1), (1, 1)),
        dimension_numbers=("NCDHW", "OIDHW", "NCDHW"))
    mean = y.mean(axis=(0, 2, 3, 4), keepdims=True)
    var = y.var(axis=(0, 2, 3, 4), keepdims=True)  # biased
    yhat = (y - mean) / jnp.sqrt(var + eps)
    out = yhat * gamma.reshape(1, -1, 1, 1, 1) + beta.reshape(1, -1, 1, 1, 1)
    return jnp.maximum(out, 0.0)


def _ref_doubleconv(x, w1, g1, b1, w2, g2, b2):
    h = _ref_conv_bn_relu(x, w1, g1, b1)
    return _ref_conv_bn_relu(h, w2, g2, b2)


if __name__ == "__main__":
    # Small shapes consistent with the module: [B, Ci, D, H, W]
    B, Ci, Co, D, H, W = 2, 4, 8, 16, 16, 16

    key = jax.random.PRNGKey(0)
    kx, kw1, kw2 = jax.random.split(key, 3)

    x = jax.random.normal(kx, (B, Ci, D, H, W), dtype=jnp.float32)
    # PyTorch weight layout: [Co, Ci, 3, 3, 3]
    w1 = 0.1 * jax.random.normal(kw1, (Co, Ci, 3, 3, 3), dtype=jnp.float32)
    w2 = 0.1 * jax.random.normal(kw2, (Co, Co, 3, 3, 3), dtype=jnp.float32)
    # Non-trivial affine params to exercise the BN scale/shift path.
    g1 = jnp.linspace(0.8, 1.2, Co, dtype=jnp.float32)
    b1 = jnp.linspace(-0.1, 0.1, Co, dtype=jnp.float32)
    g2 = jnp.linspace(1.1, 0.9, Co, dtype=jnp.float32)
    b2 = jnp.linspace(0.05, -0.05, Co, dtype=jnp.float32)

    out = doubleconv_forward(x, w1, g1, b1, w2, g2, b2)
    out = jax.block_until_ready(out)

    ref = _ref_doubleconv(x, w1, g1, b1, w2, g2, b2)
    assert out.shape == (B, Co, D, H, W), out.shape
    # bf16 MXU operands + bf16 intermediate activations vs. pure-f32 reference:
    # typical |err| ~5e-3, tails ~2-3e-2 over two conv+BN stages, so the
    # tolerance reflects bf16 compute rather than f32.
    assert jnp.allclose(out, ref, rtol=2e-2, atol=5e-2), \
        float(jnp.max(jnp.abs(out - ref)))

    print("KERNEL_OK")
</pallas_src>

<mosaic_0001>
module attributes {stable_mosaic.version = 11 : i64} {
  func.func @_conv_bn_stats_kernel(%arg0: i32, %arg1: i32, %arg2: memref<1x256x64xbf16, #tpu.memory_space<vmem>>, %arg3: memref<1x16x64xbf16, #tpu.memory_space<vmem>>, %arg4: memref<1x16x64xbf16, #tpu.memory_space<vmem>>, %arg5: memref<9x64x128xbf16, #tpu.memory_space<vmem>>, %arg6: memref<1x256x128xbf16, #tpu.memory_space<vmem>>, %arg7: memref<1x1x2x128xf32, #tpu.memory_space<vmem>>, %arg8: memref<18x18x64xbf16, #tpu.memory_space<vmem>>) attributes {dimension_semantics = [#tpu.dimension_semantics<parallel>, #tpu.dimension_semantics<parallel>], iteration_bounds = array<i64: 2, 1>, scalar_prefetch = 0 : i64, scratch_operands = 1 : i64, tpu.core_type = #tpu.core_type<tc>, window_params = [{transform_indices = @transform_0, window_bounds = array<i64: 1, 256, 64>}, {transform_indices = @transform_1, window_bounds = array<i64: 1, 16, 64>}, {transform_indices = @transform_2, window_bounds = array<i64: 1, 16, 64>}, {pipeline_mode = #tpu.pipeline_mode<synchronous>, transform_indices = @transform_3, window_bounds = array<i64: 9, 64, 128>}, {transform_indices = @transform_4, window_bounds = array<i64: 1, 256, 128>}, {transform_indices = @transform_5, window_bounds = array<i64: 1, 1, 2, 128>}]} {
    %cst = arith.constant 0.000000e+00 : bf16
    %0 = vector.broadcast %cst : bf16 to vector<18x1x64xbf16>
    %c0 = arith.constant 0 : index
    %c0_0 = arith.constant 0 : index
    %c0_1 = arith.constant 0 : index
    %1 = vector.load %arg8[%c0, %c0_0, %c0_1] : memref<18x18x64xbf16, #tpu.memory_space<vmem>>, vector<18x1x64xbf16>
    tpu.vector_store %arg8[%c0, %c0_0, %c0_1], %0 {strides = array<i32>} : memref<18x18x64xbf16, #tpu.memory_space<vmem>>, vector<18x1x64xbf16>,
    %cst_2 = arith.constant 0.000000e+00 : bf16
    %2 = vector.broadcast %cst_2 : bf16 to vector<18x1x64xbf16>
    %c0_3 = arith.constant 0 : index
    %c17 = arith.constant 17 : index
    %c0_4 = arith.constant 0 : index
    %3 = vector.load %arg8[%c0_3, %c17, %c0_4] : memref<18x18x64xbf16, #tpu.memory_space<vmem>>, vector<18x1x64xbf16>
    tpu.vector_store %arg8[%c0_3, %c17, %c0_4], %2 {strides = array<i32>} : memref<18x18x64xbf16, #tpu.memory_space<vmem>>, vector<18x1x64xbf16>,
    %c0_5 = arith.constant 0 : index
    %c0_6 = arith.constant 0 : index
    %c0_7 = arith.constant 0 : index
    %4 = vector.load %arg2[%c0_5, %c0_6, %c0_7] : memref<1x256x64xbf16, #tpu.memory_space<vmem>>, vector<1x256x64xbf16>
    %5 = vector.shape_cast %4 : vector<1x256x64xbf16> to vector<256x64xbf16>
    %6 = vector.shape_cast %5 : vector<256x64xbf16> to vector<16x16x64xbf16>
    %c1 = arith.constant 1 : index
    %c1_8 = arith.constant 1 : index
    %c0_9 = arith.constant 0 : index
    %7 = vector.load %arg8[%c1, %c1_8, %c0_9] : memref<18x18x64xbf16, #tpu.memory_space<vmem>>, vector<16x16x64xbf16>
    tpu.vector_store %arg8[%c1, %c1_8, %c0_9], %6 {strides = array<i32>} : memref<18x18x64xbf16, #tpu.memory_space<vmem>>, vector<16x16x64xbf16>,
    %c0_i32 = arith.constant 0 : i32
    %8 = arith.cmpi sgt, %arg1, %c0_i32 : i32
    %9 = arith.extui %8 : i1 to i32
    %c0_i32_10 = arith.constant 0 : i32
    %10 = arith.cmpi ne, %9, %c0_i32_10 : i32
    scf.if %10 {
      %c0_68 = arith.constant 0 : index
      %c0_69 = arith.constant 0 : index
      %c0_70 = arith.constant 0 : index
      %91 = vector.load %arg3[%c0_68, %c0_69, %c0_70] : memref<1x16x64xbf16, #tpu.memory_space<vmem>>, vector<1x16x64xbf16>
      %92 = vector.shape_cast %91 : vector<1x16x64xbf16> to vector<16x64xbf16>
      %93 = vector.shape_cast %92 : vector<16x64xbf16> to vector<1x16x64xbf16>
      %c0_71 = arith.constant 0 : index
      %c1_72 = arith.constant 1 : index
      %c0_73 = arith.constant 0 : index
      %94 = vector.load %arg8[%c0_71, %c1_72, %c0_73] : memref<18x18x64xbf16, #tpu.memory_space<vmem>>, vector<1x16x64xbf16>
      tpu.vector_store %arg8[%c0_71, %c1_72, %c0_73], %93 {strides = array<i32>} : memref<18x18x64xbf16, #tpu.memory_space<vmem>>, vector<1x16x64xbf16>,
    } else {
    }
    %c0_i32_11 = arith.constant 0 : i32
    %11 = arith.cmpi eq, %arg1, %c0_i32_11 : i32
    %12 = arith.extui %11 : i1 to i32
    %c0_i32_12 = arith.constant 0 : i32
    %13 = arith.cmpi ne, %12, %c0_i32_12 : i32
    scf.if %13 {
      %cst_68 = arith.constant 0.000000e+00 : bf16
      %91 = vector.broadcast %cst_68 : bf16 to vector<1x16x64xbf16>
      %c0_69 = arith.constant 0 : index
      %c1_70 = arith.constant 1 : index
      %c0_71 = arith.constant 0 : index
      %92 = vector.load %arg8[%c0_69, %c1_70, %c0_71] : memref<18x18x64xbf16, #tpu.memory_space<vmem>>, vector<1x16x64xbf16>
      tpu.vector_store %arg8[%c0_69, %c1_70, %c0_71], %91 {strides = array<i32>} : memref<18x18x64xbf16, #tpu.memory_space<vmem>>, vector<1x16x64xbf16>,
    } else {
    }
    %c0_i32_13 = arith.constant 0 : i32
    %14 = arith.cmpi slt, %arg1, %c0_i32_13 : i32
    %15 = arith.extui %14 : i1 to i32
    %c0_i32_14 = arith.constant 0 : i32
    %16 = arith.cmpi ne, %15, %c0_i32_14 : i32
    scf.if %16 {
      %c0_68 = arith.constant 0 : index
      %c0_69 = arith.constant 0 : index
      %c0_70 = arith.constant 0 : index
      %91 = vector.load %arg4[%c0_68, %c0_69, %c0_70] : memref<1x16x64xbf16, #tpu.memory_space<vmem>>, vector<1x16x64xbf16>
      %92 = vector.shape_cast %91 : vector<1x16x64xbf16> to vector<16x64xbf16>
      %93 = vector.shape_cast %92 : vector<16x64xbf16> to vector<1x16x64xbf16>
      %c17_71 = arith.constant 17 : index
      %c1_72 = arith.constant 1 : index
      %c0_73 = arith.constant 0 : index
      %94 = vector.load %arg8[%c17_71, %c1_72, %c0_73] : memref<18x18x64xbf16, #tpu.memory_space<vmem>>, vector<1x16x64xbf16>
      tpu.vector_store %arg8[%c17_71, %c1_72, %c0_73], %93 {strides = array<i32>} : memref<18x18x64xbf16, #tpu.memory_space<vmem>>, vector<1x16x64xbf16>,
    } else {
    }
    %c0_i32_15 = arith.constant 0 : i32
    %17 = arith.cmpi eq, %arg1, %c0_i32_15 : i32
    %18 = arith.extui %17 : i1 to i32
    %c0_i32_16 = arith.constant 0 : i32
    %19 = arith.cmpi ne, %18, %c0_i32_16 : i32
    scf.if %19 {
      %cst_68 = arith.constant 0.000000e+00 : bf16
      %91 = vector.broadcast %cst_68 : bf16 to vector<1x16x64xbf16>
      %c17_69 = arith.constant 17 : index
      %c1_70 = arith.constant 1 : index
      %c0_71 = arith.constant 0 : index
      %92 = vector.load %arg8[%c17_69, %c1_70, %c0_71] : memref<18x18x64xbf16, #tpu.memory_space<vmem>>, vector<1x16x64xbf16>
      tpu.vector_store %arg8[%c17_69, %c1_70, %c0_71], %91 {strides = array<i32>} : memref<18x18x64xbf16, #tpu.memory_space<vmem>>, vector<1x16x64xbf16>,
    } else {
    }
    %c0_17 = arith.constant 0 : index
    %c0_18 = arith.constant 0 : index
    %c0_19 = arith.constant 0 : index
    %20 = vector.load %arg8[%c0_17, %c0_18, %c0_19] : memref<18x18x64xbf16, #tpu.memory_space<vmem>>, vector<16x18x64xbf16>
    %21 = vector.extract_strided_slice %20 {offsets = [0, 0, 0], sizes = [16, 16, 64], strides = [1, 1, 1]} : vector<16x18x64xbf16> to vector<16x16x64xbf16>
    %22 = vector.shape_cast %21 : vector<16x16x64xbf16> to vector<256x64xbf16>
    %c0_20 = arith.constant 0 : index
    %c0_21 = arith.constant 0 : index
    %c0_22 = arith.constant 0 : index
    %23 = vector.load %arg5[%c0_20, %c0_21, %c0_22] : memref<9x64x128xbf16, #tpu.memory_space<vmem>>, vector<1x64x128xbf16>
    %24 = vector.shape_cast %23 : vector<1x64x128xbf16> to vector<64x128xbf16>
    %cst_23 = arith.constant dense<0.000000e+00> : vector<256x128xf32>
    %25 = tpu.matmul %22, %24, %cst_23 {dimension_numbers = #tpu.dot_dimension_numbers<[1], [0], [0], [1], [0, 0, 1, 1], [], []>} : vector<256x64xbf16>, vector<64x128xbf16>, vector<256x128xf32> -> vector<256x128xf32>
    %26 = vector.extract_strided_slice %20 {offsets = [0, 1, 0], sizes = [16, 16, 64], strides = [1, 1, 1]} : vector<16x18x64xbf16> to vector<16x16x64xbf16>
    %27 = vector.shape_cast %26 : vector<16x16x64xbf16> to vector<256x64xbf16>
    %c1_24 = arith.constant 1 : index
    %c0_25 = arith.constant 0 : index
    %c0_26 = arith.constant 0 : index
    %28 = vector.load %arg5[%c1_24, %c0_25, %c0_26] : memref<9x64x128xbf16, #tpu.memory_space<vmem>>, vector<1x64x128xbf16>
    %29 = vector.shape_cast %28 : vector<1x64x128xbf16> to vector<64x128xbf16>
    %cst_27 = arith.constant dense<0.000000e+00> : vector<256x128xf32>
    %30 = tpu.matmul %27, %29, %cst_27 {dimension_numbers = #tpu.dot_dimension_numbers<[1], [0], [0], [1], [0, 0, 1, 1], [], []>} : vector<256x64xbf16>, vector<64x128xbf16>, vector<256x128xf32> -> vector<256x128xf32>
    %31 = arith.addf %25, %30 : vector<256x128xf32>
    %32 = vector.extract_strided_slice %20 {offsets = [0, 2, 0], sizes = [16, 16, 64], strides = [1, 1, 1]} : vector<16x18x64xbf16> to vector<16x16x64xbf16>
    %33 = vector.shape_cast %32 : vector<16x16x64xbf16> to vector<256x64xbf16>
    %c2 = arith.constant 2 : index
    %c0_28 = arith.constant 0 : index
    %c0_29 = arith.constant 0 : index
    %34 = vector.load %arg5[%c2, %c0_28, %c0_29] : memref<9x64x128xbf16, #tpu.memory_space<vmem>>, vector<1x64x128xbf16>
    %35 = vector.shape_cast %34 : vector<1x64x128xbf16> to vector<64x128xbf16>
    %cst_30 = arith.constant dense<0.000000e+00> : vector<256x128xf32>
    %36 = tpu.matmul %33, %35, %cst_30 {dimension_numbers = #tpu.dot_dimension_numbers<[1], [0], [0], [1], [0, 0, 1, 1], [], []>} : vector<256x64xbf16>, vector<64x128xbf16>, vector<256x128xf32> -> vector<256x128xf32>
    %37 = arith.addf %31, %36 : vector<256x128xf32>
    %c1_31 = arith.constant 1 : index
    %c0_32 = arith.constant 0 : index
    %c0_33 = arith.constant 0 : index
    %38 = vector.load %arg8[%c1_31, %c0_32, %c0_33] : memref<18x18x64xbf16, #tpu.memory_space<vmem>>, vector<16x18x64xbf16>
    %39 = vector.extract_strided_slice %38 {offsets = [0, 0, 0], sizes = [16, 16, 64], strides = [1, 1, 1]} : vector<16x18x64xbf16> to vector<16x16x64xbf16>
    %40 = vector.shape_cast %39 : vector<16x16x64xbf16> to vector<256x64xbf16>
    %c3 = arith.constant 3 : index
    %c0_34 = arith.constant 0 : index
    %c0_35 = arith.constant 0 : index
    %41 = vector.load %arg5[%c3, %c0_34, %c0_35] : memref<9x64x128xbf16, #tpu.memory_space<vmem>>, vector<1x64x128xbf16>
    %42 = vector.shape_cast %41 : vector<1x64x128xbf16> to vector<64x128xbf16>
    %cst_36 = arith.constant dense<0.000000e+00> : vector<256x128xf32>
    %43 = tpu.matmul %40, %42, %cst_36 {dimension_numbers = #tpu.dot_dimension_numbers<[1], [0], [0], [1], [0, 0, 1, 1], [], []>} : vector<256x64xbf16>, vector<64x128xbf16>, vector<256x128xf32> -> vector<256x128xf32>
    %44 = arith.addf %37, %43 : vector<256x128xf32>
    %45 = vector.extract_strided_slice %38 {offsets = [0, 1, 0], sizes = [16, 16, 64], strides = [1, 1, 1]} : vector<16x18x64xbf16> to vector<16x16x64xbf16>
    %46 = vector.shape_cast %45 : vector<16x16x64xbf16> to vector<256x64xbf16>
    %c4 = arith.constant 4 : index
    %c0_37 = arith.constant 0 : index
    %c0_38 = arith.constant 0 : index
    %47 = vector.load %arg5[%c4, %c0_37, %c0_38] : memref<9x64x128xbf16, #tpu.memory_space<vmem>>, vector<1x64x128xbf16>
    %48 = vector.shape_cast %47 : vector<1x64x128xbf16> to vector<64x128xbf16>
    %cst_39 = arith.constant dense<0.000000e+00> : vector<256x128xf32>
    %49 = tpu.matmul %46, %48, %cst_39 {dimension_numbers = #tpu.dot_dimension_numbers<[1], [0], [0], [1], [0, 0, 1, 1], [], []>} : vector<256x64xbf16>, vector<64x128xbf16>, vector<256x128xf32> -> vector<256x128xf32>
    %50 = arith.addf %44, %49 : vector<256x128xf32>
    %51 = vector.extract_strided_slice %38 {offsets = [0, 2, 0], sizes = [16, 16, 64], strides = [1, 1, 1]} : vector<16x18x64xbf16> to vector<16x16x64xbf16>
    %52 = vector.shape_cast %51 : vector<16x16x64xbf16> to vector<256x64xbf16>
    %c5 = arith.constant 5 : index
    %c0_40 = arith.constant 0 : index
    %c0_41 = arith.constant 0 : index
    %53 = vector.load %arg5[%c5, %c0_40, %c0_41] : memref<9x64x128xbf16, #tpu.memory_space<vmem>>, vector<1x64x128xbf16>
    %54 = vector.shape_cast %53 : vector<1x64x128xbf16> to vector<64x128xbf16>
    %cst_42 = arith.constant dense<0.000000e+00> : vector<256x128xf32>
    %55 = tpu.matmul %52, %54, %cst_42 {dimension_numbers = #tpu.dot_dimension_numbers<[1], [0], [0], [1], [0, 0, 1, 1], [], []>} : vector<256x64xbf16>, vector<64x128xbf16>, vector<256x128xf32> -> vector<256x128xf32>
    %56 = arith.addf %50, %55 : vector<256x128xf32>
    %c2_43 = arith.constant 2 : index
    %c0_44 = arith.constant 0 : index
    %c0_45 = arith.constant 0 : index
    %57 = vector.load %arg8[%c2_43, %c0_44, %c0_45] : memref<18x18x64xbf16, #tpu.memory_space<vmem>>, vector<16x18x64xbf16>
    %58 = vector.extract_strided_slice %57 {offsets = [0, 0, 0], sizes = [16, 16, 64], strides = [1, 1, 1]} : vector<16x18x64xbf16> to vector<16x16x64xbf16>
    %59 = vector.shape_cast %58 : vector<16x16x64xbf16> to vector<256x64xbf16>
    %c6 = arith.constant 6 : index
    %c0_46 = arith.constant 0 : index
    %c0_47 = arith.constant 0 : index
    %60 = vector.load %arg5[%c6, %c0_46, %c0_47] : memref<9x64x128xbf16, #tpu.memory_space<vmem>>, vector<1x64x128xbf16>
    %61 = vector.shape_cast %60 : vector<1x64x128xbf16> to vector<64x128xbf16>
    %cst_48 = arith.constant dense<0.000000e+00> : vector<256x128xf32>
    %62 = tpu.matmul %59, %61, %cst_48 {dimension_numbers = #tpu.dot_dimension_numbers<[1], [0], [0], [1], [0, 0, 1, 1], [], []>} : vector<256x64xbf16>, vector<64x128xbf16>, vector<256x128xf32> -> vector<256x128xf32>
    %63 = arith.addf %56, %62 : vector<256x128xf32>
    %64 = vector.extract_strided_slice %57 {offsets = [0, 1, 0], sizes = [16, 16, 64], strides = [1, 1, 1]} : vector<16x18x64xbf16> to vector<16x16x64xbf16>
    %65 = vector.shape_cast %64 : vector<16x16x64xbf16> to vector<256x64xbf16>
    %c7 = arith.constant 7 : index
    %c0_49 = arith.constant 0 : index
    %c0_50 = arith.constant 0 : index
    %66 = vector.load %arg5[%c7, %c0_49, %c0_50] : memref<9x64x128xbf16, #tpu.memory_space<vmem>>, vector<1x64x128xbf16>
    %67 = vector.shape_cast %66 : vector<1x64x128xbf16> to vector<64x128xbf16>
    %cst_51 = arith.constant dense<0.000000e+00> : vector<256x128xf32>
    %68 = tpu.matmul %65, %67, %cst_51 {dimension_numbers = #tpu.dot_dimension_numbers<[1], [0], [0], [1], [0, 0, 1, 1], [], []>} : vector<256x64xbf16>, vector<64x128xbf16>, vector<256x128xf32> -> vector<256x128xf32>
    %69 = arith.addf %63, %68 : vector<256x128xf32>
    %70 = vector.extract_strided_slice %57 {offsets = [0, 2, 0], sizes = [16, 16, 64], strides = [1, 1, 1]} : vector<16x18x64xbf16> to vector<16x16x64xbf16>
    %71 = vector.shape_cast %70 : vector<16x16x64xbf16> to vector<256x64xbf16>
    %c8 = arith.constant 8 : index
    %c0_52 = arith.constant 0 : index
    %c0_53 = arith.constant 0 : index
    %72 = vector.load %arg5[%c8, %c0_52, %c0_53] : memref<9x64x128xbf16, #tpu.memory_space<vmem>>, vector<1x64x128xbf16>
    %73 = vector.shape_cast %72 : vector<1x64x128xbf16> to vector<64x128xbf16>
    %cst_54 = arith.constant dense<0.000000e+00> : vector<256x128xf32>
    %74 = tpu.matmul %71, %73, %cst_54 {dimension_numbers = #tpu.dot_dimension_numbers<[1], [0], [0], [1], [0, 0, 1, 1], [], []>} : vector<256x64xbf16>, vector<64x128xbf16>, vector<256x128xf32> -> vector<256x128xf32>
    %75 = arith.addf %69, %74 : vector<256x128xf32>
    %76 = arith.truncf %75 : vector<256x128xf32> to vector<256x128xbf16>
    %c0_55 = arith.constant 0 : index
    %c0_56 = arith.constant 0 : index
    %c0_57 = arith.constant 0 : index
    %77 = vector.load %arg6[%c0_55, %c0_56, %c0_57] : memref<1x256x128xbf16, #tpu.memory_space<vmem>>, vector<1x256x128xbf16>
    %78 = vector.shape_cast %77 : vector<1x256x128xbf16> to vector<256x128xbf16>
    %79 = vector.shape_cast %76 : vector<256x128xbf16> to vector<1x256x128xbf16>
    tpu.vector_store %arg6[%c0_55, %c0_56, %c0_57], %79 {strides = array<i32>} : memref<1x256x128xbf16, #tpu.memory_space<vmem>>, vector<1x256x128xbf16>,
    %cst_58 = arith.constant dense<0.000000e+00> : vector<128xf32>
    %80 = vector.multi_reduction <add>, %75, %cst_58 [0] : vector<256x128xf32> to vector<128xf32>
    %81 = vector.shape_cast %80 : vector<128xf32> to vector<1x128xf32>
    %c0_59 = arith.constant 0 : index
    %c0_60 = arith.constant 0 : index
    %c0_61 = arith.constant 0 : index
    %c0_62 = arith.constant 0 : index
    %82 = vector.load %arg7[%c0_59, %c0_60, %c0_61, %c0_62] : memref<1x1x2x128xf32, #tpu.memory_space<vmem>>, vector<1x1x1x128xf32>
    %83 = vector.shape_cast %82 : vector<1x1x1x128xf32> to vector<1x128xf32>
    %84 = vector.shape_cast %81 : vector<1x128xf32> to vector<1x1x1x128xf32>
    tpu.vector_store %arg7[%c0_59, %c0_60, %c0_61, %c0_62], %84 {strides = array<i32>} : memref<1x1x2x128xf32, #tpu.memory_space<vmem>>, vector<1x1x1x128xf32>,
    %85 = arith.mulf %75, %75 : vector<256x128xf32>
    %cst_63 = arith.constant dense<0.000000e+00> : vector<128xf32>
    %86 = vector.multi_reduction <add>, %85, %cst_63 [0] : vector<256x128xf32> to vector<128xf32>
    %87 = vector.shape_cast %86 : vector<128xf32> to vector<1x128xf32>
    %c0_64 = arith.constant 0 : index
    %c0_65 = arith.constant 0 : index
    %c1_66 = arith.constant 1 : index
    %c0_67 = arith.constant 0 : index
    %88 = vector.load %arg7[%c0_64, %c0_65, %c1_66, %c0_67] : memref<1x1x2x128xf32, #tpu.memory_space<vmem>>, vector<1x1x1x128xf32>
    %89 = vector.shape_cast %88 : vector<1x1x1x128xf32> to vector<1x128xf32>
    %90 = vector.shape_cast %87 : vector<1x128xf32> to vector<1x1x1x128xf32>
    tpu.vector_store %arg7[%c0_64, %c0_65, %c1_66, %c0_67], %90 {strides = array<i32>} : memref<1x1x2x128xf32, #tpu.memory_space<vmem>>, vector<1x1x1x128xf32>,
    return
  }
  func.func @transform_0(%arg0: i32, %arg1: i32) -> (i32, i32, i32) {
    %c0_i32 = arith.constant 0 : i32
    %c0_i32_0 = arith.constant 0 : i32
    return %arg0, %arg1, %c0_i32 : i32, i32, i32
  }
  func.func @transform_1(%arg0: i32, %arg1: i32) -> (i32, i32, i32) {
    %c16_i32 = arith.constant 16 : i32
    %0 = arith.muli %arg1, %c16_i32 : i32
    %c1_i32 = arith.constant 1 : i32
    %1 = arith.subi %0, %c1_i32 : i32
    %c0_i32 = arith.constant 0 : i32
    %2 = arith.maxsi %1, %c0_i32 : i32
    %c0_i32_0 = arith.constant 0 : i32
    %c0_i32_1 = arith.constant 0 : i32
    return %arg0, %2, %c0_i32_0 : i32, i32, i32
  }
  func.func @transform_2(%arg0: i32, %arg1: i32) -> (i32, i32, i32) {
    %c16_i32 = arith.constant 16 : i32
    %0 = arith.muli %arg1, %c16_i32 : i32
    %c16_i32_0 = arith.constant 16 : i32
    %1 = arith.addi %0, %c16_i32_0 : i32
    %c15_i32 = arith.constant 15 : i32
    %2 = arith.minsi %1, %c15_i32 : i32
    %c0_i32 = arith.constant 0 : i32
    %c0_i32_1 = arith.constant 0 : i32
    return %arg0, %2, %c0_i32 : i32, i32, i32
  }
  func.func @transform_3(%arg0: i32, %arg1: i32) -> (i32, i32, i32) {
    %c0_i32 = arith.constant 0 : i32
    %c0_i32_0 = arith.constant 0 : i32
    %c0_i32_1 = arith.constant 0 : i32
    %c0_i32_2 = arith.constant 0 : i32
    return %c0_i32, %c0_i32_0, %c0_i32_1 : i32, i32, i32
  }
  func.func @transform_4(%arg0: i32, %arg1: i32) -> (i32, i32, i32) {
    %c0_i32 = arith.constant 0 : i32
    %c0_i32_0 = arith.constant 0 : i32
    return %arg0, %arg1, %c0_i32 : i32, i32, i32
  }
  func.func @transform_5(%arg0: i32, %arg1: i32) -> (i32, i32, i32, i32) {
    %c0_i32 = arith.constant 0 : i32
    %c0_i32_0 = arith.constant 0 : i32
    %c0_i32_1 = arith.constant 0 : i32
    return %arg0, %arg1, %c0_i32, %c0_i32_0 : i32, i32, i32, i32
  }
}

module attributes {stable_mosaic.version = 11 : i64} {
  func.func @_conv_bn_stats_kernel(%arg0: i32, %arg1: i32, %arg2: memref<1x128xf32, #tpu.memory_space<vmem>>, %arg3: memref<1x128xf32, #tpu.memory_space<vmem>>, %arg4: memref<1x256x128xbf16, #tpu.memory_space<vmem>>, %arg5: memref<1x16x128xbf16, #tpu.memory_space<vmem>>, %arg6: memref<1x16x128xbf16, #tpu.memory_space<vmem>>, %arg7: memref<9x128x128xbf16, #tpu.memory_space<vmem>>, %arg8: memref<1x256x128xbf16, #tpu.memory_space<vmem>>, %arg9: memref<1x1x2x128xf32, #tpu.memory_space<vmem>>, %arg10: memref<18x18x128xbf16, #tpu.memory_space<vmem>>) attributes {dimension_semantics = [#tpu.dimension_semantics<parallel>, #tpu.dimension_semantics<parallel>], iteration_bounds = array<i64: 2, 1>, scalar_prefetch = 0 : i64, scratch_operands = 1 : i64, tpu.core_type = #tpu.core_type<tc>, window_params = [{pipeline_mode = #tpu.pipeline_mode<synchronous>, transform_indices = @transform_0, window_bounds = array<i64: 1, 128>}, {pipeline_mode = #tpu.pipeline_mode<synchronous>, transform_indices = @transform_1, window_bounds = array<i64: 1, 128>}, {transform_indices = @transform_2, window_bounds = array<i64: 1, 256, 128>}, {transform_indices = @transform_3, window_bounds = array<i64: 1, 16, 128>}, {transform_indices = @transform_4, window_bounds = array<i64: 1, 16, 128>}, {pipeline_mode = #tpu.pipeline_mode<synchronous>, transform_indices = @transform_5, window_bounds = array<i64: 9, 128, 128>}, {transform_indices = @transform_6, window_bounds = array<i64: 1, 256, 128>}, {transform_indices = @transform_7, window_bounds = array<i64: 1, 1, 2, 128>}]} {
    %cst = arith.constant 0.000000e+00 : bf16
    %0 = vector.broadcast %cst : bf16 to vector<18x1x128xbf16>
    %c0 = arith.constant 0 : index
    %c0_0 = arith.constant 0 : index
    %c0_1 = arith.constant 0 : index
    %1 = vector.load %arg10[%c0, %c0_0, %c0_1] : memref<18x18x128xbf16, #tpu.memory_space<vmem>>, vector<18x1x128xbf16>
    tpu.vector_store %arg10[%c0, %c0_0, %c0_1], %0 {strides = array<i32>} : memref<18x18x128xbf16, #tpu.memory_space<vmem>>, vector<18x1x128xbf16>,
    %cst_2 = arith.constant 0.000000e+00 : bf16
    %2 = vector.broadcast %cst_2 : bf16 to vector<18x1x128xbf16>
    %c0_3 = arith.constant 0 : index
    %c17 = arith.constant 17 : index
    %c0_4 = arith.constant 0 : index
    %3 = vector.load %arg10[%c0_3, %c17, %c0_4] : memref<18x18x128xbf16, #tpu.memory_space<vmem>>, vector<18x1x128xbf16>
    tpu.vector_store %arg10[%c0_3, %c17, %c0_4], %2 {strides = array<i32>} : memref<18x18x128xbf16, #tpu.memory_space<vmem>>, vector<18x1x128xbf16>,
    %c0_5 = arith.constant 0 : index
    %c0_6 = arith.constant 0 : index
    %c0_7 = arith.constant 0 : index
    %4 = vector.load %arg4[%c0_5, %c0_6, %c0_7] : memref<1x256x128xbf16, #tpu.memory_space<vmem>>, vector<1x256x128xbf16>
    %5 = vector.shape_cast %4 : vector<1x256x128xbf16> to vector<256x128xbf16>
    %c0_8 = arith.constant 0 : index
    %c0_9 = arith.constant 0 : index
    %6 = vector.load %arg2[%c0_8, %c0_9] : memref<1x128xf32, #tpu.memory_space<vmem>>, vector<1x128xf32>
    %7 = arith.extf %5 : vector<256x128xbf16> to vector<256x128xf32>
    %8 = vector.broadcast %6 : vector<1x128xf32> to vector<256x128xf32>
    %9 = arith.mulf %7, %8 : vector<256x128xf32>
    %c0_10 = arith.constant 0 : index
    %c0_11 = arith.constant 0 : index
    %10 = vector.load %arg3[%c0_10, %c0_11] : memref<1x128xf32, #tpu.memory_space<vmem>>, vector<1x128xf32>
    %11 = vector.broadcast %10 : vector<1x128xf32> to vector<256x128xf32>
    %12 = arith.addf %9, %11 : vector<256x128xf32>
    %cst_12 = arith.constant 0.000000e+00 : f32
    %13 = vector.broadcast %cst_12 : f32 to vector<256x128xf32>
    %14 = arith.maximumf %12, %13 : vector<256x128xf32>
    %15 = arith.truncf %14 : vector<256x128xf32> to vector<256x128xbf16>
    %16 = vector.shape_cast %15 : vector<256x128xbf16> to vector<16x16x128xbf16>
    %c1 = arith.constant 1 : index
    %c1_13 = arith.constant 1 : index
    %c0_14 = arith.constant 0 : index
    %17 = vector.load %arg10[%c1, %c1_13, %c0_14] : memref<18x18x128xbf16, #tpu.memory_space<vmem>>, vector<16x16x128xbf16>
    tpu.vector_store %arg10[%c1, %c1_13, %c0_14], %16 {strides = array<i32>} : memref<18x18x128xbf16, #tpu.memory_space<vmem>>, vector<16x16x128xbf16>,
    %c0_i32 = arith.constant 0 : i32
    %18 = arith.cmpi sgt, %arg1, %c0_i32 : i32
    %19 = arith.extui %18 : i1 to i32
    %c0_i32_15 = arith.constant 0 : i32
    %20 = arith.cmpi ne, %19, %c0_i32_15 : i32
    scf.if %20 {
      %c0_73 = arith.constant 0 : index
      %c0_74 = arith.constant 0 : index
      %c0_75 = arith.constant 0 : index
      %101 = vector.load %arg5[%c0_73, %c0_74, %c0_75] : memref<1x16x128xbf16, #tpu.memory_space<vmem>>, vector<1x16x128xbf16>
      %102 = vector.shape_cast %101 : vector<1x16x128xbf16> to vector<16x128xbf16>
      %c0_76 = arith.constant 0 : index
      %c0_77 = arith.constant 0 : index
      %103 = vector.load %arg2[%c0_76, %c0_77] : memref<1x128xf32, #tpu.memory_space<vmem>>, vector<1x128xf32>
      %104 = arith.extf %102 : vector<16x128xbf16> to vector<16x128xf32>
      %105 = vector.broadcast %103 : vector<1x128xf32> to vector<16x128xf32>
      %106 = arith.mulf %104, %105 : vector<16x128xf32>
      %c0_78 = arith.constant 0 : index
      %c0_79 = arith.constant 0 : index
      %107 = vector.load %arg3[%c0_78, %c0_79] : memref<1x128xf32, #tpu.memory_space<vmem>>, vector<1x128xf32>
      %108 = vector.broadcast %107 : vector<1x128xf32> to vector<16x128xf32>
      %109 = arith.addf %106, %108 : vector<16x128xf32>
      %cst_80 = arith.constant 0.000000e+00 : f32
      %110 = vector.broadcast %cst_80 : f32 to vector<16x128xf32>
      %111 = arith.maximumf %109, %110 : vector<16x128xf32>
      %112 = arith.truncf %111 : vector<16x128xf32> to vector<16x128xbf16>
      %113 = vector.shape_cast %112 : vector<16x128xbf16> to vector<1x16x128xbf16>
      %c0_81 = arith.constant 0 : index
      %c1_82 = arith.constant 1 : index
      %c0_83 = arith.constant 0 : index
      %114 = vector.load %arg10[%c0_81, %c1_82, %c0_83] : memref<18x18x128xbf16, #tpu.memory_space<vmem>>, vector<1x16x128xbf16>
      tpu.vector_store %arg10[%c0_81, %c1_82, %c0_83], %113 {strides = array<i32>} : memref<18x18x128xbf16, #tpu.memory_space<vmem>>, vector<1x16x128xbf16>,
    } else {
    }
    %c0_i32_16 = arith.constant 0 : i32
    %21 = arith.cmpi eq, %arg1, %c0_i32_16 : i32
    %22 = arith.extui %21 : i1 to i32
    %c0_i32_17 = arith.constant 0 : i32
    %23 = arith.cmpi ne, %22, %c0_i32_17 : i32
    scf.if %23 {
      %cst_73 = arith.constant 0.000000e+00 : bf16
      %101 = vector.broadcast %cst_73 : bf16 to vector<1x16x128xbf16>
      %c0_74 = arith.constant 0 : index
      %c1_75 = arith.constant 1 : index
      %c0_76 = arith.constant 0 : index
      %102 = vector.load %arg10[%c0_74, %c1_75, %c0_76] : memref<18x18x128xbf16, #tpu.memory_space<vmem>>, vector<1x16x128xbf16>
      tpu.vector_store %arg10[%c0_74, %c1_75, %c0_76], %101 {strides = array<i32>} : memref<18x18x128xbf16, #tpu.memory_space<vmem>>, vector<1x16x128xbf16>,
    } else {
    }
    %c0_i32_18 = arith.constant 0 : i32
    %24 = arith.cmpi slt, %arg1, %c0_i32_18 : i32
    %25 = arith.extui %24 : i1 to i32
    %c0_i32_19 = arith.constant 0 : i32
    %26 = arith.cmpi ne, %25, %c0_i32_19 : i32
    scf.if %26 {
      %c0_73 = arith.constant 0 : index
      %c0_74 = arith.constant 0 : index
      %c0_75 = arith.constant 0 : index
      %101 = vector.load %arg6[%c0_73, %c0_74, %c0_75] : memref<1x16x128xbf16, #tpu.memory_space<vmem>>, vector<1x16x128xbf16>
      %102 = vector.shape_cast %101 : vector<1x16x128xbf16> to vector<16x128xbf16>
      %c0_76 = arith.constant 0 : index
      %c0_77 = arith.constant 0 : index
      %103 = vector.load %arg2[%c0_76, %c0_77] : memref<1x128xf32, #tpu.memory_space<vmem>>, vector<1x128xf32>
      %104 = arith.extf %102 : vector<16x128xbf16> to vector<16x128xf32>
      %105 = vector.broadcast %103 : vector<1x128xf32> to vector<16x128xf32>
      %106 = arith.mulf %104, %105 : vector<16x128xf32>
      %c0_78 = arith.constant 0 : index
      %c0_79 = arith.constant 0 : index
      %107 = vector.load %arg3[%c0_78, %c0_79] : memref<1x128xf32, #tpu.memory_space<vmem>>, vector<1x128xf32>
      %108 = vector.broadcast %107 : vector<1x128xf32> to vector<16x128xf32>
      %109 = arith.addf %106, %108 : vector<16x128xf32>
      %cst_80 = arith.constant 0.000000e+00 : f32
      %110 = vector.broadcast %cst_80 : f32 to vector<16x128xf32>
      %111 = arith.maximumf %109, %110 : vector<16x128xf32>
      %112 = arith.truncf %111 : vector<16x128xf32> to vector<16x128xbf16>
      %113 = vector.shape_cast %112 : vector<16x128xbf16> to vector<1x16x128xbf16>
      %c17_81 = arith.constant 17 : index
      %c1_82 = arith.constant 1 : index
      %c0_83 = arith.constant 0 : index
      %114 = vector.load %arg10[%c17_81, %c1_82, %c0_83] : memref<18x18x128xbf16, #tpu.memory_space<vmem>>, vector<1x16x128xbf16>
      tpu.vector_store %arg10[%c17_81, %c1_82, %c0_83], %113 {strides = array<i32>} : memref<18x18x128xbf16, #tpu.memory_space<vmem>>, vector<1x16x128xbf16>,
    } else {
    }
    %c0_i32_20 = arith.constant 0 : i32
    %27 = arith.cmpi eq, %arg1, %c0_i32_20 : i32
    %28 = arith.extui %27 : i1 to i32
    %c0_i32_21 = arith.constant 0 : i32
    %29 = arith.cmpi ne, %28, %c0_i32_21 : i32
    scf.if %29 {
      %cst_73 = arith.constant 0.000000e+00 : bf16
      %101 = vector.broadcast %cst_73 : bf16 to vector<1x16x128xbf16>
      %c17_74 = arith.constant 17 : index
      %c1_75 = arith.constant 1 : index
      %c0_76 = arith.constant 0 : index
      %102 = vector.load %arg10[%c17_74, %c1_75, %c0_76] : memref<18x18x128xbf16, #tpu.memory_space<vmem>>, vector<1x16x128xbf16>
      tpu.vector_store %arg10[%c17_74, %c1_75, %c0_76], %101 {strides = array<i32>} : memref<18x18x128xbf16, #tpu.memory_space<vmem>>, vector<1x16x128xbf16>,
    } else {
    }
    %c0_22 = arith.constant 0 : index
    %c0_23 = arith.constant 0 : index
    %c0_24 = arith.constant 0 : index
    %30 = vector.load %arg10[%c0_22, %c0_23, %c0_24] : memref<18x18x128xbf16, #tpu.memory_space<vmem>>, vector<16x18x128xbf16>
    %31 = vector.extract_strided_slice %30 {offsets = [0, 0, 0], sizes = [16, 16, 128], strides = [1, 1, 1]} : vector<16x18x128xbf16> to vector<16x16x128xbf16>
    %32 = vector.shape_cast %31 : vector<16x16x128xbf16> to vector<256x128xbf16>
    %c0_25 = arith.constant 0 : index
    %c0_26 = arith.constant 0 : index
    %c0_27 = arith.constant 0 : index
    %33 = vector.load %arg7[%c0_25, %c0_26, %c0_27] : memref<9x128x128xbf16, #tpu.memory_space<vmem>>, vector<1x128x128xbf16>
    %34 = vector.shape_cast %33 : vector<1x128x128xbf16> to vector<128x128xbf16>
    %cst_28 = arith.constant dense<0.000000e+00> : vector<256x128xf32>
    %35 = tpu.matmul %32, %34, %cst_28 {dimension_numbers = #tpu.dot_dimension_numbers<[1], [0], [0], [1], [0, 0, 1, 1], [], []>} : vector<256x128xbf16>, vector<128x128xbf16>, vector<256x128xf32> -> vector<256x128xf32>
    %36 = vector.extract_strided_slice %30 {offsets = [0, 1, 0], sizes = [16, 16, 128], strides = [1, 1, 1]} : vector<16x18x128xbf16> to vector<16x16x128xbf16>
    %37 = vector.shape_cast %36 : vector<16x16x128xbf16> to vector<256x128xbf16>
    %c1_29 = arith.constant 1 : index
    %c0_30 = arith.constant 0 : index
    %c0_31 = arith.constant 0 : index
    %38 = vector.load %arg7[%c1_29, %c0_30, %c0_31] : memref<9x128x128xbf16, #tpu.memory_space<vmem>>, vector<1x128x128xbf16>
    %39 = vector.shape_cast %38 : vector<1x128x128xbf16> to vector<128x128xbf16>
    %cst_32 = arith.constant dense<0.000000e+00> : vector<256x128xf32>
    %40 = tpu.matmul %37, %39, %cst_32 {dimension_numbers = #tpu.dot_dimension_numbers<[1], [0], [0], [1], [0, 0, 1, 1], [], []>} : vector<256x128xbf16>, vector<128x128xbf16>, vector<256x128xf32> -> vector<256x128xf32>
    %41 = arith.addf %35, %40 : vector<256x128xf32>
    %42 = vector.extract_strided_slice %30 {offsets = [0, 2, 0], sizes = [16, 16, 128], strides = [1, 1, 1]} : vector<16x18x128xbf16> to vector<16x16x128xbf16>
    %43 = vector.shape_cast %42 : vector<16x16x128xbf16> to vector<256x128xbf16>
    %c2 = arith.constant 2 : index
    %c0_33 = arith.constant 0 : index
    %c0_34 = arith.constant 0 : index
    %44 = vector.load %arg7[%c2, %c0_33, %c0_34] : memref<9x128x128xbf16, #tpu.memory_space<vmem>>, vector<1x128x128xbf16>
    %45 = vector.shape_cast %44 : vector<1x128x128xbf16> to vector<128x128xbf16>
    %cst_35 = arith.constant dense<0.000000e+00> : vector<256x128xf32>
    %46 = tpu.matmul %43, %45, %cst_35 {dimension_numbers = #tpu.dot_dimension_numbers<[1], [0], [0], [1], [0, 0, 1, 1], [], []>} : vector<256x128xbf16>, vector<128x128xbf16>, vector<256x128xf32> -> vector<256x128xf32>
    %47 = arith.addf %41, %46 : vector<256x128xf32>
    %c1_36 = arith.constant 1 : index
    %c0_37 = arith.constant 0 : index
    %c0_38 = arith.constant 0 : index
    %48 = vector.load %arg10[%c1_36, %c0_37, %c0_38] : memref<18x18x128xbf16, #tpu.memory_space<vmem>>, vector<16x18x128xbf16>
    %49 = vector.extract_strided_slice %48 {offsets = [0, 0, 0], sizes = [16, 16, 128], strides = [1, 1, 1]} : vector<16x18x128xbf16> to vector<16x16x128xbf16>
    %50 = vector.shape_cast %49 : vector<16x16x128xbf16> to vector<256x128xbf16>
    %c3 = arith.constant 3 : index
    %c0_39 = arith.constant 0 : index
    %c0_40 = arith.constant 0 : index
    %51 = vector.load %arg7[%c3, %c0_39, %c0_40] : memref<9x128x128xbf16, #tpu.memory_space<vmem>>, vector<1x128x128xbf16>
    %52 = vector.shape_cast %51 : vector<1x128x128xbf16> to vector<128x128xbf16>
    %cst_41 = arith.constant dense<0.000000e+00> : vector<256x128xf32>
    %53 = tpu.matmul %50, %52, %cst_41 {dimension_numbers = #tpu.dot_dimension_numbers<[1], [0], [0], [1], [0, 0, 1, 1], [], []>} : vector<256x128xbf16>, vector<128x128xbf16>, vector<256x128xf32> -> vector<256x128xf32>
    %54 = arith.addf %47, %53 : vector<256x128xf32>
    %55 = vector.extract_strided_slice %48 {offsets = [0, 1, 0], sizes = [16, 16, 128], strides = [1, 1, 1]} : vector<16x18x128xbf16> to vector<16x16x128xbf16>
    %56 = vector.shape_cast %55 : vector<16x16x128xbf16> to vector<256x128xbf16>
    %c4 = arith.constant 4 : index
    %c0_42 = arith.constant 0 : index
    %c0_43 = arith.constant 0 : index
    %57 = vector.load %arg7[%c4, %c0_42, %c0_43] : memref<9x128x128xbf16, #tpu.memory_space<vmem>>, vector<1x128x128xbf16>
    %58 = vector.shape_cast %57 : vector<1x128x128xbf16> to vector<128x128xbf16>
    %cst_44 = arith.constant dense<0.000000e+00> : vector<256x128xf32>
    %59 = tpu.matmul %56, %58, %cst_44 {dimension_numbers = #tpu.dot_dimension_numbers<[1], [0], [0], [1], [0, 0, 1, 1], [], []>} : vector<256x128xbf16>, vector<128x128xbf16>, vector<256x128xf32> -> vector<256x128xf32>
    %60 = arith.addf %54, %59 : vector<256x128xf32>
    %61 = vector.extract_strided_slice %48 {offsets = [0, 2, 0], sizes = [16, 16, 128], strides = [1, 1, 1]} : vector<16x18x128xbf16> to vector<16x16x128xbf16>
    %62 = vector.shape_cast %61 : vector<16x16x128xbf16> to vector<256x128xbf16>
    %c5 = arith.constant 5 : index
    %c0_45 = arith.constant 0 : index
    %c0_46 = arith.constant 0 : index
    %63 = vector.load %arg7[%c5, %c0_45, %c0_46] : memref<9x128x128xbf16, #tpu.memory_space<vmem>>, vector<1x128x128xbf16>
    %64 = vector.shape_cast %63 : vector<1x128x128xbf16> to vector<128x128xbf16>
    %cst_47 = arith.constant dense<0.000000e+00> : vector<256x128xf32>
    %65 = tpu.matmul %62, %64, %cst_47 {dimension_numbers = #tpu.dot_dimension_numbers<[1], [0], [0], [1], [0, 0, 1, 1], [], []>} : vector<256x128xbf16>, vector<128x128xbf16>, vector<256x128xf32> -> vector<256x128xf32>
    %66 = arith.addf %60, %65 : vector<256x128xf32>
    %c2_48 = arith.constant 2 : index
    %c0_49 = arith.constant 0 : index
    %c0_50 = arith.constant 0 : index
    %67 = vector.load %arg10[%c2_48, %c0_49, %c0_50] : memref<18x18x128xbf16, #tpu.memory_space<vmem>>, vector<16x18x128xbf16>
    %68 = vector.extract_strided_slice %67 {offsets = [0, 0, 0], sizes = [16, 16, 128], strides = [1, 1, 1]} : vector<16x18x128xbf16> to vector<16x16x128xbf16>
    %69 = vector.shape_cast %68 : vector<16x16x128xbf16> to vector<256x128xbf16>
    %c6 = arith.constant 6 : index
    %c0_51 = arith.constant 0 : index
    %c0_52 = arith.constant 0 : index
    %70 = vector.load %arg7[%c6, %c0_51, %c0_52] : memref<9x128x128xbf16, #tpu.memory_space<vmem>>, vector<1x128x128xbf16>
    %71 = vector.shape_cast %70 : vector<1x128x128xbf16> to vector<128x128xbf16>
    %cst_53 = arith.constant dense<0.000000e+00> : vector<256x128xf32>
    %72 = tpu.matmul %69, %71, %cst_53 {dimension_numbers = #tpu.dot_dimension_numbers<[1], [0], [0], [1], [0, 0, 1, 1], [], []>} : vector<256x128xbf16>, vector<128x128xbf16>, vector<256x128xf32> -> vector<256x128xf32>
    %73 = arith.addf %66, %72 : vector<256x128xf32>
    %74 = vector.extract_strided_slice %67 {offsets = [0, 1, 0], sizes = [16, 16, 128], strides = [1, 1, 1]} : vector<16x18x128xbf16> to vector<16x16x128xbf16>
    %75 = vector.shape_cast %74 : vector<16x16x128xbf16> to vector<256x128xbf16>
    %c7 = arith.constant 7 : index
    %c0_54 = arith.constant 0 : index
    %c0_55 = arith.constant 0 : index
    %76 = vector.load %arg7[%c7, %c0_54, %c0_55] : memref<9x128x128xbf16, #tpu.memory_space<vmem>>, vector<1x128x128xbf16>
    %77 = vector.shape_cast %76 : vector<1x128x128xbf16> to vector<128x128xbf16>
    %cst_56 = arith.constant dense<0.000000e+00> : vector<256x128xf32>
    %78 = tpu.matmul %75, %77, %cst_56 {dimension_numbers = #tpu.dot_dimension_numbers<[1], [0], [0], [1], [0, 0, 1, 1], [], []>} : vector<256x128xbf16>, vector<128x128xbf16>, vector<256x128xf32> -> vector<256x128xf32>
    %79 = arith.addf %73, %78 : vector<256x128xf32>
    %80 = vector.extract_strided_slice %67 {offsets = [0, 2, 0], sizes = [16, 16, 128], strides = [1, 1, 1]} : vector<16x18x128xbf16> to vector<16x16x128xbf16>
    %81 = vector.shape_cast %80 : vector<16x16x128xbf16> to vector<256x128xbf16>
    %c8 = arith.constant 8 : index
    %c0_57 = arith.constant 0 : index
    %c0_58 = arith.constant 0 : index
    %82 = vector.load %arg7[%c8, %c0_57, %c0_58] : memref<9x128x128xbf16, #tpu.memory_space<vmem>>, vector<1x128x128xbf16>
    %83 = vector.shape_cast %82 : vector<1x128x128xbf16> to vector<128x128xbf16>
    %cst_59 = arith.constant dense<0.000000e+00> : vector<256x128xf32>
    %84 = tpu.matmul %81, %83, %cst_59 {dimension_numbers = #tpu.dot_dimension_numbers<[1], [0], [0], [1], [0, 0, 1, 1], [], []>} : vector<256x128xbf16>, vector<128x128xbf16>, vector<256x128xf32> -> vector<256x128xf32>
    %85 = arith.addf %79, %84 : vector<256x128xf32>
    %86 = arith.truncf %85 : vector<256x128xf32> to vector<256x128xbf16>
    %c0_60 = arith.constant 0 : index
    %c0_61 = arith.constant 0 : index
    %c0_62 = arith.constant 0 : index
    %87 = vector.load %arg8[%c0_60, %c0_61, %c0_62] : memref<1x256x128xbf16, #tpu.memory_space<vmem>>, vector<1x256x128xbf16>
    %88 = vector.shape_cast %87 : vector<1x256x128xbf16> to vector<256x128xbf16>
    %89 = vector.shape_cast %86 : vector<256x128xbf16> to vector<1x256x128xbf16>
    tpu.vector_store %arg8[%c0_60, %c0_61, %c0_62], %89 {strides = array<i32>} : memref<1x256x128xbf16, #tpu.memory_space<vmem>>, vector<1x256x128xbf16>,
    %cst_63 = arith.constant dense<0.000000e+00> : vector<128xf32>
    %90 = vector.multi_reduction <add>, %85, %cst_63 [0] : vector<256x128xf32> to vector<128xf32>
    %91 = vector.shape_cast %90 : vector<128xf32> to vector<1x128xf32>
    %c0_64 = arith.constant 0 : index
    %c0_65 = arith.constant 0 : index
    %c0_66 = arith.constant 0 : index
    %c0_67 = arith.constant 0 : index
    %92 = vector.load %arg9[%c0_64, %c0_65, %c0_66, %c0_67] : memref<1x1x2x128xf32, #tpu.memory_space<vmem>>, vector<1x1x1x128xf32>
    %93 = vector.shape_cast %92 : vector<1x1x1x128xf32> to vector<1x128xf32>
    %94 = vector.shape_cast %91 : vector<1x128xf32> to vector<1x1x1x128xf32>
    tpu.vector_store %arg9[%c0_64, %c0_65, %c0_66, %c0_67], %94 {strides = array<i32>} : memref<1x1x2x128xf32, #tpu.memory_space<vmem>>, vector<1x1x1x128xf32>,
    %95 = arith.mulf %85, %85 : vector<256x128xf32>
    %cst_68 = arith.constant dense<0.000000e+00> : vector<128xf32>
    %96 = vector.multi_reduction <add>, %95, %cst_68 [0] : vector<256x128xf32> to vector<128xf32>
    %97 = vector.shape_cast %96 : vector<128xf32> to vector<1x128xf32>
    %c0_69 = arith.constant 0 : index
    %c0_70 = arith.constant 0 : index
    %c1_71 = arith.constant 1 : index
    %c0_72 = arith.constant 0 : index
    %98 = vector.load %arg9[%c0_69, %c0_70, %c1_71, %c0_72] : memref<1x1x2x128xf32, #tpu.memory_space<vmem>>, vector<1x1x1x128xf32>
    %99 = vector.shape_cast %98 : vector<1x1x1x128xf32> to vector<1x128xf32>
    %100 = vector.shape_cast %97 : vector<1x128xf32> to vector<1x1x1x128xf32>
    tpu.vector_store %arg9[%c0_69, %c0_70, %c1_71, %c0_72], %100 {strides = array<i32>} : memref<1x1x2x128xf32, #tpu.memory_space<vmem>>, vector<1x1x1x128xf32>,
    return
  }
  func.func @transform_0(%arg0: i32, %arg1: i32) -> (i32, i32) {
    %c0_i32 = arith.constant 0 : i32
    %c0_i32_0 = arith.constant 0 : i32
    %c0_i32_1 = arith.constant 0 : i32
    return %c0_i32, %c0_i32_0 : i32, i32
  }
  func.func @transform_1(%arg0: i32, %arg1: i32) -> (i32, i32) {
    %c0_i32 = arith.constant 0 : i32
    %c0_i32_0 = arith.constant 0 : i32
    %c0_i32_1 = arith.constant 0 : i32
    return %c0_i32, %c0_i32_0 : i32, i32
  }
  func.func @transform_2(%arg0: i32, %arg1: i32) -> (i32, i32, i32) {
    %c0_i32 = arith.constant 0 : i32
    %c0_i32_0 = arith.constant 0 : i32
    return %arg0, %arg1, %c0_i32 : i32, i32, i32
  }
  func.func @transform_3(%arg0: i32, %arg1: i32) -> (i32, i32, i32) {
    %c16_i32 = arith.constant 16 : i32
    %0 = arith.muli %arg1, %c16_i32 : i32
    %c1_i32 = arith.constant 1 : i32
    %1 = arith.subi %0, %c1_i32 : i32
    %c0_i32 = arith.constant 0 : i32
    %2 = arith.maxsi %1, %c0_i32 : i32
    %c0_i32_0 = arith.constant 0 : i32
    %c0_i32_1 = arith.constant 0 : i32
    return %arg0, %2, %c0_i32_0 : i32, i32, i32
  }
  func.func @transform_4(%arg0: i32, %arg1: i32) -> (i32, i32, i32) {
    %c16_i32 = arith.constant 16 : i32
    %0 = arith.muli %arg1, %c16_i32 : i32
    %c16_i32_0 = arith.constant 16 : i32
    %1 = arith.addi %0, %c16_i32_0 : i32
    %c15_i32 = arith.constant 15 : i32
    %2 = arith.minsi %1, %c15_i32 : i32
    %c0_i32 = arith.constant 0 : i32
    %c0_i32_1 = arith.constant 0 : i32
    return %arg0, %2, %c0_i32 : i32, i32, i32
  }
  func.func @transform_5(%arg0: i32, %arg1: i32) -> (i32, i32, i32) {
    %c0_i32 = arith.constant 0 : i32
    %c0_i32_0 = arith.constant 0 : i32
    %c0_i32_1 = arith.constant 0 : i32
    %c0_i32_2 = arith.constant 0 : i32
    return %c0_i32, %c0_i32_0, %c0_i32_1 : i32, i32, i32
  }
  func.func @transform_6(%arg0: i32, %arg1: i32) -> (i32, i32, i32) {
    %c0_i32 = arith.constant 0 : i32
    %c0_i32_0 = arith.constant 0 : i32
    return %arg0, %arg1, %c0_i32 : i32, i32, i32
  }
  func.func @transform_7(%arg0: i32, %arg1: i32) -> (i32, i32, i32, i32) {
    %c0_i32 = arith.constant 0 : i32
    %c0_i32_0 = arith.constant 0 : i32
    %c0_i32_1 = arith.constant 0 : i32
    return %arg0, %arg1, %c0_i32, %c0_i32_0 : i32, i32, i32, i32
  }
}

module attributes {stable_mosaic.version = 11 : i64} {
  func.func @_bn_relu_kernel(%arg0: i32, %arg1: i32, %arg2: memref<1x256x128xbf16, #tpu.memory_space<vmem>>, %arg3: memref<1x128xf32, #tpu.memory_space<vmem>>, %arg4: memref<1x128xf32, #tpu.memory_space<vmem>>, %arg5: memref<1x256x128xf32, #tpu.memory_space<vmem>>) attributes {dimension_semantics = [#tpu.dimension_semantics<parallel>, #tpu.dimension_semantics<parallel>], iteration_bounds = array<i64: 2, 1>, scalar_prefetch = 0 : i64, scratch_operands = 0 : i64, tpu.core_type = #tpu.core_type<tc>, window_params = [{transform_indices = @transform_0, window_bounds = array<i64: 1, 256, 128>}, {pipeline_mode = #tpu.pipeline_mode<synchronous>, transform_indices = @transform_1, window_bounds = array<i64: 1, 128>}, {pipeline_mode = #tpu.pipeline_mode<synchronous>, transform_indices = @transform_2, window_bounds = array<i64: 1, 128>}, {transform_indices = @transform_3, window_bounds = array<i64: 1, 256, 128>}]} {
    %c0 = arith.constant 0 : index
    %c0_0 = arith.constant 0 : index
    %c0_1 = arith.constant 0 : index
    %0 = vector.load %arg2[%c0, %c0_0, %c0_1] : memref<1x256x128xbf16, #tpu.memory_space<vmem>>, vector<1x256x128xbf16>
    %c0_2 = arith.constant 0 : index
    %c0_3 = arith.constant 0 : index
    %1 = vector.load %arg3[%c0_2, %c0_3] : memref<1x128xf32, #tpu.memory_space<vmem>>, vector<1x128xf32>
    %2 = arith.extf %0 : vector<1x256x128xbf16> to vector<1x256x128xf32>
    %3 = vector.shape_cast %1 : vector<1x128xf32> to vector<1x1x128xf32>
    %4 = vector.broadcast %3 : vector<1x1x128xf32> to vector<1x256x128xf32>
    %5 = arith.mulf %2, %4 : vector<1x256x128xf32>
    %c0_4 = arith.constant 0 : index
    %c0_5 = arith.constant 0 : index
    %6 = vector.load %arg4[%c0_4, %c0_5] : memref<1x128xf32, #tpu.memory_space<vmem>>, vector<1x128xf32>
    %7 = vector.shape_cast %6 : vector<1x128xf32> to vector<1x1x128xf32>
    %8 = vector.broadcast %7 : vector<1x1x128xf32> to vector<1x256x128xf32>
    %9 = arith.addf %5, %8 : vector<1x256x128xf32>
    %cst = arith.constant 0.000000e+00 : f32
    %10 = vector.broadcast %cst : f32 to vector<1x256x128xf32>
    %11 = arith.maximumf %9, %10 : vector<1x256x128xf32>
    %c0_6 = arith.constant 0 : index
    %c0_7 = arith.constant 0 : index
    %c0_8 = arith.constant 0 : index
    %12 = vector.load %arg5[%c0_6, %c0_7, %c0_8] : memref<1x256x128xf32, #tpu.memory_space<vmem>>, vector<1x256x128xf32>
    tpu.vector_store %arg5[%c0_6, %c0_7, %c0_8], %11 {strides = array<i32>} : memref<1x256x128xf32, #tpu.memory_space<vmem>>, vector<1x256x128xf32>,
    return
  }
  func.func @transform_0(%arg0: i32, %arg1: i32) -> (i32, i32, i32) {
    %c0_i32 = arith.constant 0 : i32
    %c0_i32_0 = arith.constant 0 : i32
    return %arg0, %arg1, %c0_i32 : i32, i32, i32
  }
  func.func @transform_1(%arg0: i32, %arg1: i32) -> (i32, i32) {
    %c0_i32 = arith.constant 0 : i32
    %c0_i32_0 = arith.constant 0 : i32
    %c0_i32_1 = arith.constant 0 : i32
    return %c0_i32, %c0_i32_0 : i32, i32
  }
  func.func @transform_2(%arg0: i32, %arg1: i32) -> (i32, i32) {
    %c0_i32 = arith.constant 0 : i32
    %c0_i32_0 = arith.constant 0 : i32
    %c0_i32_1 = arith.constant 0 : i32
    return %c0_i32, %c0_i32_0 : i32, i32
  }
  func.func @transform_3(%arg0: i32, %arg1: i32) -> (i32, i32, i32) {
    %c0_i32 = arith.constant 0 : i32
    %c0_i32_0 = arith.constant 0 : i32
    return %arg0, %arg1, %c0_i32 : i32, i32, i32
  }
}

</mosaic_0001>

<llo_original>
// kernel: tile.28
$region0: #{tile.28}
  #allocation0 [shape = 's32[1]{0}', space=sflag, size = 0x4, scoped, tag = 'scoped memory for tile.28']
  %s0 = inlined_call_operand.vmem [shape: f32[8], index: 0, kind: input, shape index: {}]
  %s1 = inlined_call_operand.vmem [shape: f32[16,8], index: 1, kind: output, shape index: {}]
  // Predicated region
  $region2: #{tile.28} parent=0 // pred_check
    _
  $region3: #{tile.28} parent=0 // pred_check_branch
    %3 = sbr.rel (0) target = $region5
  $region4: #{tile.28} parent=0 // pred_region
    _
  $region5: #{tile.28} parent=0 // pred_fallthru
    _
  %v4 = vld [vmem:[%s0] ss:$0 sm:$0xff]
  %5 = vst [vmem:[%s1] sm:$0xff] %v4
  %s6 = scalar_lea.vmem %s1, 8
  %7 = vst [vmem:[%s6] sm:$0xff] %v4

// kernel: tile.29
$region0: #{tile.29}
  %s0 = inlined_call_operand.vmem [shape: f32[16,8], index: 0, kind: input, shape index: {}]
  %s1 = inlined_call_operand.vmem [shape: f32[1,128], index: 1, kind: output, shape index: {}]
  $region1: #{tile.29} parent=0
    #allocation0 [shape = 'u8[4096]{0}', space=vmem, size = 0x1000, scoped, tag = 'scoped mem for output reshape']
    %v2 = vld [vmem:[%s0] sm:$0x1]
    %vm3 = vcmask 64512
    %4 = vst.msk [vmem:[#allocation0] sm:$0x1] %vm3, %v2
    %s5 = scalar_lea.vmem %s0, 15
    %v6 = vld [vmem:[%s5] sm:$0x1]
    %7 = vrot.lane.b32.xlu0 %v6, 120
    %v8 = vpop.permute.xlu0 %7
    %vm9 = vcmask 1048512
    %10 = vst.msk [vmem:[#allocation0] sm:$0x1] %vm9, %v8
    %s11 = scalar_lea.vmem %s0, 14
    %v12 = vld [vmem:[%s11] sm:$0x1]
    %13 = vrot.lane.b32.xlu0 %v12, 112
    %v14 = vpop.permute.xlu0 %13
    %vm15 = vcmask 982912
    %16 = vst.msk [vmem:[#allocation0] sm:$0x1] %vm15, %v14
    %s17 = scalar_lea.vmem %s0, 13
    %v18 = vld [vmem:[%s17] sm:$0x1]
    %19 = vrot.lane.b32.xlu0 %v18, 104
    %v20 = vpop.permute.xlu0 %19
    %vm21 = vcmask 917312
    %22 = vst.msk [vmem:[#allocation0] sm:$0x1] %vm21, %v20
    %s23 = scalar_lea.vmem %s0, 12
    %v24 = vld [vmem:[%s23] sm:$0x1]
    %25 = vrot.lane.b32.xlu0 %v24, 96
    %v26 = vpop.permute.xlu0 %25
    %vm27 = vcmask 851712
    %28 = vst.msk [vmem:[#allocation0] sm:$0x1] %vm27, %v26
    %s29 = scalar_lea.vmem %s0, 11
    %v30 = vld [vmem:[%s29] sm:$0x1]
    %31 = vrot.lane.b32.xlu0 %v30, 88
    %v32 = vpop.permute.xlu0 %31
    %vm33 = vcmask 786112
    %34 = vst.msk [vmem:[#allocation0] sm:$0x1] %vm33, %v32
    %s35 = scalar_lea.vmem %s0, 10
    %v36 = vld [vmem:[%s35] sm:$0x1]
    %37 = vrot.lane.b32.xlu0 %v36, 80
    %v38 = vpop.permute.xlu0 %37
    %vm39 = vcmask 720512
    %40 = vst.msk [vmem:[#allocation0] sm:$0x1] %vm39, %v38
    %s41 = scalar_lea.vmem %s0, 9
    %v42 = vld [vmem:[%s41] sm:$0x1]
    %43 = vrot.lane.b32.xlu0 %v42, 72
    %v44 = vpop.permute.xlu0 %43
    %vm45 = vcmask 654912
    %46 = vst.msk [vmem:[#allocation0] sm:$0x1] %vm45, %v44
    %s47 = scalar_lea.vmem %s0, 8
    %v48 = vld [vmem:[%s47] sm:$0x1]
    %49 = vrot.lane.b32.xlu0 %v48, 64
    %v50 = vpop.permute.xlu0 %49
    %vm51 = vcmask 589312
    %52 = vst.msk [vmem:[#allocation0] sm:$0x1] %vm51, %v50
    %s53 = scalar_lea.vmem %s0, 7
    %v54 = vld [vmem:[%s53] sm:$0x1]
    %55 = vrot.lane.b32.xlu0 %v54, 56
    %v56 = vpop.permute.xlu0 %55
    %vm57 = vcmask 523712
    %58 = vst.msk [vmem:[#allocation0] sm:$0x1] %vm57, %v56
    %s59 = scalar_lea.vmem %s0, 6
    %v60 = vld [vmem:[%s59] sm:$0x1]
    %61 = vrot.lane.b32.xlu0 %v60, 48
    %v62 = vpop.permute.xlu0 %61
    %vm63 = vcmask 458112
    %64 = vst.msk [vmem:[#allocation0] sm:$0x1] %vm63, %v62
    %s65 = scalar_lea.vmem %s0, 5
    %v66 = vld [vmem:[%s65] sm:$0x1]
    %67 = vrot.lane.b32.xlu0 %v66, 40
    %v68 = vpop.permute.xlu0 %67
    %vm69 = vcmask 392512
    %70 = vst.msk [vmem:[#allocation0] sm:$0x1] %vm69, %v68
    %s71 = scalar_lea.vmem %s0, 4
    %v72 = vld [vmem:[%s71] sm:$0x1]
    %73 = vrot.lane.b32.xlu0 %v72, 32
    %v74 = vpop.permute.xlu0 %73
    %vm75 = vcmask 326912
    %76 = vst.msk [vmem:[#allocation0] sm:$0x1] %vm75, %v74
    %s77 = scalar_lea.vmem %s0, 3
    %v78 = vld [vmem:[%s77] sm:$0x1]
    %79 = vrot.lane.b32.xlu0 %v78, 24
    %v80 = vpop.permute.xlu0 %79
    %vm81 = vcmask 261312
    %82 = vst.msk [vmem:[#allocation0] sm:$0x1] %vm81, %v80
    %s83 = scalar_lea.vmem %s0, 2
    %v84 = vld [vmem:[%s83] sm:$0x1]
    %85 = vrot.lane.b32.xlu0 %v84, 16
    %v86 = vpop.permute.xlu0 %85
    %vm87 = vcmask 195712
    %88 = vst.msk [vmem:[#allocation0] sm:$0x1] %vm87, %v86
    %s89 = scalar_lea.vmem %s0, 1
    %v90 = vld [vmem:[%s89] sm:$0x1]
    %91 = vrot.lane.b32.xlu0 %v90, 8
    %v92 = vpop.permute.xlu0 %91
    %vm93 = vcmask 130112
    %94 = vst.msk [vmem:[#allocation0] sm:$0x1] %vm93, %v92
    %s96 = sshll.u32 1, 1
    %s97 = ssub.s32 %s96, 1
    %v99 = vld [vmem:[#allocation0] sm:%s97]
    %s100 = sshll.u32 1, 1
    %s101 = ssub.s32 %s100, 1
    %102 = vst [vmem:[%s1] sm:%s101] %v99

// kernel: doubleconv_forward.3
$region0: #{doubleconv_forward.3}
  #allocation0 [shape = 'u32[]', space=smem, size = 0x4, offset = 0x4, fixed_abs, tag = 'smem constant byte address 0x4 - core index']
  #allocation1 [shape = 'u32[144,128]{1,0:T(1,128)}', space=vmem, size = 0x12000, scoped, tag = 'internal scratch']
  #allocation2 [shape = 'bf16[18,18,64]{2,1,0:T(8,128)(2,1)}', space=vmem, size = 0x1b000, scoped, tag = 'scratch operand']
  %s0 = inlined_call_operand.vmem [shape: bf16[2,256,64], index: 0, kind: input, shape index: {}, may-alias: {0,1,2}]
  %s1 = inlined_call_operand.vmem [shape: bf16[2,256,64], index: 1, kind: input, shape index: {}, may-alias: {0,1,2}]
  %s2 = inlined_call_operand.vmem [shape: bf16[2,256,64], index: 2, kind: input, shape index: {}, may-alias: {0,1,2}]
  %s3 = inlined_call_operand.vmem [shape: bf16[9,64,128], index: 3, kind: input, shape index: {}]
  %s4 = inlined_call_operand.vmem [shape: bf16[2,256,128], index: 4, kind: output, shape index: {0}]
  %s5 = inlined_call_operand.vmem [shape: f32[2,1,2,128], index: 5, kind: output, shape index: {1}]
  %6 = xla_tuple %s4, %s5
  %s7 = sld [smem:[#allocation0]]
  $region73: #{doubleconv_forward.3} parent=0
    _
  %s9 = ssub.s32 1, %s7
  %s10 = scalar_select 0, %s9, %s7
  loop: start=0, step=1, limit=4
  $region2: #{doubleconv_forward.3} parent=0 // loop_pre_header
    _
  $region3: #{doubleconv_forward.3} parent=0 // loop_header
    %s12 = sphi 0, %s16
    %p13 = scmp.ge.s32.totalorder %s12, 4
    %s19 = sphi 0, %s31
    %s20 = sphi 0, %s27
    %s21 = sphi 0, %s19
    %s22 = sphi 0, %s20
    %s23 = sphi 0, %s21
    %s24 = sphi 0, %s22
    %s36 = sphi 0, %s38
    %s39 = sphi 0, %s36
    %s40 = sphi 0, %s39
    %s56 = sphi 0, %s40
    %s72 = sphi 0, %s74
    %s75 = sphi 0, %s72
    %s76 = sphi 0, %s75
    %s92 = sphi 0, %s76
    %s108 = sphi 0, %s110
    %s111 = sphi 0, %s108
    %s112 = sphi 0, %s111
    %s128 = sphi 0, %s112
    %s132 = sphi 0, %s132
    %s134 = sphi 0, %s132
    %s135 = sphi 0, %s134
    %s149 = sphi 0, %s135
    %s157 = sphi 0, %s159
    %s160 = sphi 0, %s157
    %s161 = sphi 0, %s160
    %s177 = sphi 0, %s161
    %s185 = sphi 0, %s187
    %s188 = sphi 0, %s185
    %s189 = sphi 0, %s188
    %s205 = sphi 0, %s189
  $region4: #{doubleconv_forward.3} parent=0 // loop_header_branch
    %15 = sbr.rel (%p13) target = $region8
  $region5: #{doubleconv_forward.3} parent=0 // loop_body
    %s17 = ssub.s32 %s12, 1
    %s18 = ssub.s32 %s12, 2
    %s25 = sadd.s32 1, %s20
    %p26 = scmp.ge.s32.totalorder %s25, 1
    %s27 = scalar_select %p26, 0, %s25
    %s28 = sadd.s32 1, %s19
    %s29 = scalar_select %p26, %s28, %s19
    %p30 = scmp.ge.s32.totalorder %s29, 2
    %s31 = scalar_select %p30, 0, %s29
    %s32 = ssub.s32 %s19, %s31
    %s33 = ssub.s32 %s20, %s27
    %s34 = sor.u32 %s32, %s33
    %p35 = scmp.eq.s32.totalorder %s34, 0
    %s37 = sadd.s32 %s36, 1
    %s38 = scalar_select %p35, %s36, %s37
    %p41 = pneg %p35
    %p42 = scmp.eq.s32.totalorder %s12, 1
    %p43 = por %p41, %p42
    %p44 = scmp.ne.s32.totalorder %s36, %s39
    %p45 = scmp.eq.s32.totalorder %s12, 0
    %p46 = por %p44, %p45
    %p47 = scmp.ne.s32.totalorder %s36, %s39
    %p48 = scmp.eq.s32.totalorder %s17, 1
    %p49 = por %p47, %p48
    %p50 = scmp.ne.s32.totalorder %s39, %s40
    %p51 = scmp.eq.s32.totalorder %s17, 0
    %p52 = por %p50, %p51
    %p53 = scmp.ne.s32.totalorder %s39, %s40
    %p54 = scmp.eq.s32.totalorder %s18, 1
    %p55 = por %p53, %p54
    %p57 = scmp.ne.s32.totalorder %s40, %s56
    %p58 = scmp.eq.s32.totalorder %s18, 0
    %p59 = por %p57, %p58
    %s60 = smul.u32 %s20, 16
    %s61 = ssub.s32 %s60, 1
    %p62 = scmp.gt.s32.totalorder %s61, 0
    %s63 = scalar_select %p62, %s61, 0
    %s64 = smul.u32 %s27, 16
    %s65 = ssub.s32 %s64, 1
    %p66 = scmp.gt.s32.totalorder %s65, 0
    %s67 = scalar_select %p66, %s65, 0
    %s68 = ssub.s32 %s19, %s31
    %s69 = ssub.s32 %s63, %s67
    %s70 = sor.u32 %s68, %s69
    %p71 = scmp.eq.s32.totalorder %s70, 0
    %s73 = sadd.s32 %s72, 1
    %s74 = scalar_select %p71, %s72, %s73
    %p77 = pneg %p71
    %p78 = scmp.eq.s32.totalorder %s12, 1
    %p79 = por %p77, %p78
    %p80 = scmp.ne.s32.totalorder %s72, %s75
    %p81 = scmp.eq.s32.totalorder %s12, 0
    %p82 = por %p80, %p81
    %p83 = scmp.ne.s32.totalorder %s72, %s75
    %p84 = scmp.eq.s32.totalorder %s17, 1
    %p85 = por %p83, %p84
    %p86 = scmp.ne.s32.totalorder %s75, %s76
    %p87 = scmp.eq.s32.totalorder %s17, 0
    %p88 = por %p86, %p87
    %p89 = scmp.ne.s32.totalorder %s75, %s76
    %p90 = scmp.eq.s32.totalorder %s18, 1
    %p91 = por %p89, %p90
    %p93 = scmp.ne.s32.totalorder %s76, %s92
    %p94 = scmp.eq.s32.totalorder %s18, 0
    %p95 = por %p93, %p94
    %s96 = smul.u32 %s20, 16
    %s97 = sadd.s32 %s96, 16
    %p98 = scmp.lt.s32.totalorder %s97, 15
    %s99 = scalar_select %p98, %s97, 15
    %s100 = smul.u32 %s27, 16
    %s101 = sadd.s32 %s100, 16
    %p102 = scmp.lt.s32.totalorder %s101, 15
    %s103 = scalar_select %p102, %s101, 15
    %s104 = ssub.s32 %s19, %s31
    %s105 = ssub.s32 %s99, %s103
    %s106 = sor.u32 %s104, %s105
    %p107 = scmp.eq.s32.totalorder %s106, 0
    %s109 = sadd.s32 %s108, 1
    %s110 = scalar_select %p107, %s108, %s109
    %p113 = pneg %p107
    %p114 = scmp.eq.s32.totalorder %s12, 1
    %p115 = por %p113, %p114
    %p116 = scmp.ne.s32.totalorder %s108, %s111
    %p117 = scmp.eq.s32.totalorder %s12, 0
    %p118 = por %p116, %p117
    %p119 = scmp.ne.s32.totalorder %s108, %s111
    %p120 = scmp.eq.s32.totalorder %s17, 1
    %p121 = por %p119, %p120
    %p122 = scmp.ne.s32.totalorder %s111, %s112
    %p123 = scmp.eq.s32.totalorder %s17, 0
    %p124 = por %p122, %p123
    %p125 = scmp.ne.s32.totalorder %s111, %s112
    %p126 = scmp.eq.s32.totalorder %s18, 1
    %p127 = por %p125, %p126
    %p129 = scmp.ne.s32.totalorder %s112, %s128
    %p130 = scmp.eq.s32.totalorder %s18, 0
    %p131 = por %p129, %p130
    %s133 = sadd.s32 %s132, 1
    %p136 = scmp.eq.s32.totalorder %s12, 1
    %p137 = scmp.ne.s32.totalorder %s132, %s134
    %p138 = scmp.eq.s32.totalorder %s12, 0
    %p139 = por %p137, %p138
    %p140 = scmp.ne.s32.totalorder %s132, %s134
    %p141 = scmp.eq.s32.totalorder %s17, 1
    %p142 = por %p140, %p141
    %p143 = scmp.ne.s32.totalorder %s134, %s135
    %p144 = scmp.eq.s32.totalorder %s17, 0
    %p145 = por %p143, %p144
    %p146 = scmp.ne.s32.totalorder %s134, %s135
    %p147 = scmp.eq.s32.totalorder %s18, 1
    %p148 = por %p146, %p147
    %p150 = scmp.ne.s32.totalorder %s135, %s149
    %p151 = scmp.eq.s32.totalorder %s18, 0
    %p152 = por %p150, %p151
    %s153 = ssub.s32 %s19, %s31
    %s154 = ssub.s32 %s20, %s27
    %s155 = sor.u32 %s153, %s154
    %p156 = scmp.eq.s32.totalorder %s155, 0
    %s158 = sadd.s32 %s157, 1
    %s159 = scalar_select %p156, %s157, %s158
    %p162 = pneg %p156
    %p163 = scmp.eq.s32.totalorder %s12, 1
    %p164 = por %p162, %p163
    %p165 = scmp.ne.s32.totalorder %s157, %s160
    %p166 = scmp.eq.s32.totalorder %s12, 0
    %p167 = por %p165, %p166
    %p168 = scmp.ne.s32.totalorder %s157, %s160
    %p169 = scmp.eq.s32.totalorder %s17, 1
    %p170 = por %p168, %p169
    %p171 = scmp.ne.s32.totalorder %s160, %s161
    %p172 = scmp.eq.s32.totalorder %s17, 0
    %p173 = por %p171, %p172
    %p174 = scmp.ne.s32.totalorder %s160, %s161
    %p175 = scmp.eq.s32.totalorder %s18, 1
    %p176 = por %p174, %p175
    %p178 = scmp.ne.s32.totalorder %s161, %s177
    %p179 = scmp.eq.s32.totalorder %s18, 0
    %p180 = por %p178, %p179
    %s181 = ssub.s32 %s19, %s31
    %s182 = ssub.s32 %s20, %s27
    %s183 = sor.u32 %s181, %s182
    %p184 = scmp.eq.s32.totalorder %s183, 0
    %s186 = sadd.s32 %s185, 1
    %s187 = scalar_select %p184, %s185, %s186
    %p190 = pneg %p184
    %p191 = scmp.eq.s32.totalorder %s12, 1
    %p192 = por %p190, %p191
    %p193 = scmp.ne.s32.totalorder %s185, %s188
    %p194 = scmp.eq.s32.totalorder %s12, 0
    %p195 = por %p193, %p194
    %p196 = scmp.ne.s32.totalorder %s185, %s188
    %p197 = scmp.eq.s32.totalorder %s17, 1
    %p198 = por %p196, %p197
    %p199 = scmp.ne.s32.totalorder %s188, %s189
    %p200 = scmp.eq.s32.totalorder %s17, 0
    %p201 = por %p199, %p200
    %p202 = scmp.ne.s32.totalorder %s188, %s189
    %p203 = scmp.eq.s32.totalorder %s18, 1
    %p204 = por %p202, %p203
    %p206 = scmp.ne.s32.totalorder %s189, %s205
    %p207 = scmp.eq.s32.totalorder %s18, 0
    %p208 = por %p206, %p207
    %p209 = scmp.le.s32.totalorder 1, %s12
    %p210 = scmp.lt.s32.totalorder %s12, 3
    %p211 = pnand %p209, %p210
    %p212 = pneg %p211
    // Predicated region
    $region9: #{doubleconv_forward.3} parent=5 // pred_check
      _
    $region10: #{doubleconv_forward.3} parent=5 // pred_check_branch
      %214 = sbr.rel (%p211) target = $region12
    $region11: #{doubleconv_forward.3} parent=5 // pred_region
      %s215 = ssub.s32 %s12, 1
      // Predicated region
      $region13: #{doubleconv_forward.3} parent=11 // pred_check
        %p216 = pneg %p145
      $region14: #{doubleconv_forward.3} parent=11 // pred_check_branch
        %218 = sbr.rel (%p216) target = $region16
      $region15: #{doubleconv_forward.3} parent=11 // pred_region
        _
      $region16: #{doubleconv_forward.3} parent=11 // pred_fallthru
        _
    $region12: #{doubleconv_forward.3} parent=5 // pred_fallthru
      _
    %p219 = scmp.lt.s32.totalorder %s12, 2
    // Predicated region
    $region17: #{doubleconv_forward.3} parent=5 // pred_check
      %p220 = pneg %p219
    $region18: #{doubleconv_forward.3} parent=5 // pred_check_branch
      %222 = sbr.rel (%p220) target = $region20
    $region19: #{doubleconv_forward.3} parent=5 // pred_region
      // Predicated region
      $region21: #{doubleconv_forward.3} parent=19 // pred_check
        %p223 = pneg %p46
      $region22: #{doubleconv_forward.3} parent=19 // pred_check_branch
        %225 = sbr.rel (%p223) target = $region24
      $region23: #{doubleconv_forward.3} parent=19 // pred_region
        %s226 = smul.u32 32, %s20
        %p227 = scmp.lt.s32.totalorder %s19, 1
        %s228 = scalar_select %p227, %s19, 1
        %p229 = scmp.lt.s32.totalorder %s226, 31
        %s230 = scalar_select %p229, %s226, 31
        %s231 = smul.addr %s228, 32
        %s232 = sadd.s32 %s230, %s231
        %s233 = smul.addr %s232, 4
        %s234 = scalar_lea.vmem %s0, %s233
        %s235 = smul.u32 32, %s20
      $region24: #{doubleconv_forward.3} parent=19 // pred_fallthru
        _
      // Predicated region
      $region25: #{doubleconv_forward.3} parent=19 // pred_check
        %p236 = pneg %p82
      $region26: #{doubleconv_forward.3} parent=19 // pred_check_branch
        %238 = sbr.rel (%p236) target = $region28
      $region27: #{doubleconv_forward.3} parent=19 // pred_region
        %s239 = smul.u32 %s20, 16
        %s240 = ssub.s32 %s239, 1
        %p241 = scmp.gt.s32.totalorder %s240, 0
        %s242 = scalar_select %p241, %s240, 0
        %s243 = smul.u32 2, %s242
        %p244 = scmp.lt.s32.totalorder %s19, 1
        %s245 = scalar_select %p244, %s19, 1
        %p246 = scmp.lt.s32.totalorder %s243, 31
        %s247 = scalar_select %p246, %s243, 31
        %s248 = smul.addr %s245, 32
        %s249 = sadd.s32 %s247, %s248
        %s250 = smul.addr %s249, 4
        %s251 = scalar_lea.vmem %s1, %s250
        %s252 = smul.u32 %s20, 16
        %s253 = ssub.s32 %s252, 1
        %p254 = scmp.gt.s32.totalorder %s253, 0
        %s255 = scalar_select %p254, %s253, 0
        %s256 = smul.u32 2, %s255
      $region28: #{doubleconv_forward.3} parent=19 // pred_fallthru
        _
      // Predicated region
      $region29: #{doubleconv_forward.3} parent=19 // pred_check
        %p257 = pneg %p118
      $region30: #{doubleconv_forward.3} parent=19 // pred_check_branch
        %259 = sbr.rel (%p257) target = $region32
      $region31: #{doubleconv_forward.3} parent=19 // pred_region
        %s260 = smul.u32 %s20, 16
        %s261 = sadd.s32 %s260, 16
        %p262 = scmp.lt.s32.totalorder %s261, 15
        %s263 = scalar_select %p262, %s261, 15
        %s264 = smul.u32 2, %s263
        %p265 = scmp.lt.s32.totalorder %s19, 1
        %s266 = scalar_select %p265, %s19, 1
        %p267 = scmp.lt.s32.totalorder %s264, 31
        %s268 = scalar_select %p267, %s264, 31
        %s269 = smul.addr %s266, 32
        %s270 = sadd.s32 %s268, %s269
        %s271 = smul.addr %s270, 4
        %s272 = scalar_lea.vmem %s2, %s271
        %s273 = smul.u32 %s20, 16
        %s274 = sadd.s32 %s273, 16
        %p275 = scmp.lt.s32.totalorder %s274, 15
        %s276 = scalar_select %p275, %s274, 15
        %s277 = smul.u32 2, %s276
      $region32: #{doubleconv_forward.3} parent=19 // pred_fallthru
        _
    $region20: #{doubleconv_forward.3} parent=5 // pred_fallthru
      _
    %p278 = scmp.le.s32.totalorder 1, %s12
    %p279 = scmp.lt.s32.totalorder %s12, 3
    %p280 = pnand %p278, %p279
    %p281 = pneg %p280
    // Predicated region
    $region33: #{doubleconv_forward.3} parent=5 // pred_check
      _
    $region34: #{doubleconv_forward.3} parent=5 // pred_check_branch
      %283 = sbr.rel (%p280) target = $region36
    $region35: #{doubleconv_forward.3} parent=5 // pred_region
      %s284 = ssub.s32 %s12, 1
      %s285 = smul.u32 32, %s22
      %p286 = scmp.lt.s32.totalorder %s21, 1
      %s287 = scalar_select %p286, %s21, 1
      %p288 = scmp.lt.s32.totalorder %s285, 31
      %s289 = scalar_select %p288, %s285, 31
      %s290 = smul.addr %s287, 32
      %s291 = sadd.s32 %s289, %s290
      %s292 = smul.addr %s291, 4
      %s293 = scalar_lea.vmem %s0, %s292
      %p294 = pneg %p52
      %p295 = pneg %p49
      %s296 = smul.u32 %s22, 16
      %s297 = ssub.s32 %s296, 1
      %p298 = scmp.gt.s32.totalorder %s297, 0
      %s299 = scalar_select %p298, %s297, 0
      %s300 = smul.u32 2, %s299
      %p301 = scmp.lt.s32.totalorder %s21, 1
      %s302 = scalar_select %p301, %s21, 1
      %p303 = scmp.lt.s32.totalorder %s300, 31
      %s304 = scalar_select %p303, %s300, 31
      %s305 = smul.addr %s302, 32
      %s306 = sadd.s32 %s304, %s305
      %s307 = smul.addr %s306, 4
      %s308 = scalar_lea.vmem %s1, %s307
      %p309 = pneg %p88
      %p310 = pneg %p85
      %s311 = smul.u32 %s22, 16
      %s312 = sadd.s32 %s311, 16
      %p313 = scmp.lt.s32.totalorder %s312, 15
      %s314 = scalar_select %p313, %s312, 15
      %s315 = smul.u32 2, %s314
      %p316 = scmp.lt.s32.totalorder %s21, 1
      %s317 = scalar_select %p316, %s21, 1
      %p318 = scmp.lt.s32.totalorder %s315, 31
      %s319 = scalar_select %p318, %s315, 31
      %s320 = smul.addr %s317, 32
      %s321 = sadd.s32 %s319, %s320
      %s322 = smul.addr %s321, 4
      %s323 = scalar_lea.vmem %s2, %s322
      %p324 = pneg %p124
      %p325 = pneg %p121
      %p326 = pneg %p145
      %p327 = pneg %p142
      %p328 = pneg %p173
      %p329 = pneg %p170
      %s330 = smul.u32 32, %s22
      %p331 = scmp.lt.s32.totalorder %s21, 1
      %s332 = scalar_select %p331, %s21, 1
      %p333 = scmp.lt.s32.totalorder %s330, 31
      %s334 = scalar_select %p333, %s330, 31
      %s335 = smul.addr %s332, 32
      %s336 = sadd.s32 %s334, %s335
      %s337 = smul.addr %s336, 4
      %s338 = scalar_lea.vmem %s4, %s337
      %p339 = pneg %p201
      %p340 = pneg %p198
      %p341 = scmp.lt.s32.totalorder %s21, 1
      %s342 = scalar_select %p341, %s21, 1
      %p343 = scmp.lt.s32.totalorder %s22, 0
      %s344 = scalar_select %p343, %s22, 0
      %s345 = sadd.s32 %s344, %s342
      %s346 = smul.addr %s345, 2
      %s347 = scalar_lea.vmem %s5, %s346
      %s348 = smul.u32 32, %s22
      %p349 = scmp.lt.s32.totalorder %s21, 1
      %s350 = scalar_select %p349, %s21, 1
      %p351 = scmp.lt.s32.totalorder %s348, 31
      %s352 = scalar_select %p351, %s348, 31
      %s353 = smul.addr %s350, 32
      %s354 = sadd.s32 %s352, %s353
      %s355 = smul.addr %s354, 4
      %s356 = scalar_lea.vmem %s0, %s355
      %s357 = smul.u32 32, %s22
      %s358 = smul.u32 %s22, 16
      %s359 = ssub.s32 %s358, 1
      %p360 = scmp.gt.s32.totalorder %s359, 0
      %s361 = scalar_select %p360, %s359, 0
      %s362 = smul.u32 2, %s361
      %p363 = scmp.lt.s32.totalorder %s21, 1
      %s364 = scalar_select %p363, %s21, 1
      %p365 = scmp.lt.s32.totalorder %s362, 31
      %s366 = scalar_select %p365, %s362, 31
      %s367 = smul.addr %s364, 32
      %s368 = sadd.s32 %s366, %s367
      %s369 = smul.addr %s368, 4
      %s370 = scalar_lea.vmem %s1, %s369
      %s371 = smul.u32 %s22, 16
      %s372 = ssub.s32 %s371, 1
      %p373 = scmp.gt.s32.totalorder %s372, 0
      %s374 = scalar_select %p373, %s372, 0
      %s375 = smul.u32 2, %s374
      %s376 = smul.u32 %s22, 16
      %s377 = sadd.s32 %s376, 16
      %p378 = scmp.lt.s32.totalorder %s377, 15
      %s379 = scalar_select %p378, %s377, 15
      %s380 = smul.u32 2, %s379
      %p381 = scmp.lt.s32.totalorder %s21, 1
      %s382 = scalar_select %p381, %s21, 1
      %p383 = scmp.lt.s32.totalorder %s380, 31
      %s384 = scalar_select %p383, %s380, 31
      %s385 = smul.addr %s382, 32
      %s386 = sadd.s32 %s384, %s385
      %s387 = smul.addr %s386, 4
      %s388 = scalar_lea.vmem %s2, %s387
      %s389 = smul.u32 %s22, 16
      %s390 = sadd.s32 %s389, 16
      %p391 = scmp.lt.s32.totalorder %s390, 15
      %s392 = scalar_select %p391, %s390, 15
      %s393 = smul.u32 2, %s392
      %s394 = smul.u32 32, %s22
      %p395 = scmp.lt.s32.totalorder %s21, 1
      %s396 = scalar_select %p395, %s21, 1
      %p397 = scmp.lt.s32.totalorder %s394, 31
      %s398 = scalar_select %p397, %s394, 31
      %s399 = smul.addr %s396, 32
      %s400 = sadd.s32 %s398, %s399
      %s401 = smul.addr %s400, 4
      %s402 = scalar_lea.vmem %s4, %s401
      %s403 = smul.u32 32, %s22
      %p404 = scmp.lt.s32.totalorder %s21, 1
      %s405 = scalar_select %p404, %s21, 1
      %p406 = scmp.lt.s32.totalorder %s22, 0
      %s407 = scalar_select %p406, %s22, 0
      %s408 = sadd.s32 %s407, %s405
      %s409 = smul.addr %s408, 2
      %s410 = scalar_lea.vmem %s5, %s409
      %vm412 = vcmask 516096
      %vm413 = vsmask.f32 256
      %vm414 = vmand %vm412, %vm413
      %v415 = vld [vmem:[#allocation2] sm:$0x1]
      %v416 = vsel %vm414, 0, %v415
      %417 = vst [vmem:[#allocation2] sm:$0x1] %v416
      %v418 = vld [vmem:[#allocation2 + $0xc] sm:$0x1]
      %v419 = vsel %vm414, 0, %v418
      %420 = vst [vmem:[#allocation2 + $0xc] sm:$0x1] %v419
      %v421 = vld [vmem:[#allocation2 + $0x18] sm:$0x1]
      %v422 = vsel %vm414, 0, %v421
      %423 = vst [vmem:[#allocation2 + $0x18] sm:$0x1] %v422
      %v424 = vld [vmem:[#allocation2 + $0x24] sm:$0x1]
      %v425 = vsel %vm414, 0, %v424
      %426 = vst [vmem:[#allocation2 + $0x24] sm:$0x1] %v425
      %v427 = vld [vmem:[#allocation2 + $0x30] sm:$0x1]
      %v428 = vsel %vm414, 0, %v427
      %429 = vst [vmem:[#allocation2 + $0x30] sm:$0x1] %v428
      %v430 = vld [vmem:[#allocation2 + $0x3c] sm:$0x1]
      %v431 = vsel %vm414, 0, %v430
      %432 = vst [vmem:[#allocation2 + $0x3c] sm:$0x1] %v431
      %v433 = vld [vmem:[#allocation2 + $0x48] sm:$0x1]
      %v434 = vsel %vm414, 0, %v433
      %435 = vst [vmem:[#allocation2 + $0x48] sm:$0x1] %v434
      %v436 = vld [vmem:[#allocation2 + $0x54] sm:$0x1]
      %v437 = vsel %vm414, 0, %v436
      %438 = vst [vmem:[#allocation2 + $0x54] sm:$0x1] %v437
      %v439 = vld [vmem:[#allocation2 + $0x60] sm:$0x1]
      %v440 = vsel %vm414, 0, %v439
      %441 = vst [vmem:[#allocation2 + $0x60] sm:$0x1] %v440
      %v442 = vld [vmem:[#allocation2 + $0x6c] sm:$0x1]
      %v443 = vsel %vm414, 0, %v442
      %444 = vst [vmem:[#allocation2 + $0x6c] sm:$0x1] %v443
      %v445 = vld [vmem:[#allocation2 + $0x78] sm:$0x1]
      %v446 = vsel %vm414, 0, %v445
      %447 = vst [vmem:[#allocation2 + $0x78] sm:$0x1] %v446
      %v448 = vld [vmem:[#allocation2 + $0x84] sm:$0x1]
      %v449 = vsel %vm414, 0, %v448
      %450 = vst [vmem:[#allocation2 + $0x84] sm:$0x1] %v449
      %v451 = vld [vmem:[#allocation2 + $0x90] sm:$0x1]
      %v452 = vsel %vm414, 0, %v451
      %453 = vst [vmem:[#allocation2 + $0x90] sm:$0x1] %v452
      %v454 = vld [vmem:[#allocation2 + $0x9c] sm:$0x1]
      %v455 = vsel %vm414, 0, %v454
      %456 = vst [vmem:[#allocation2 + $0x9c] sm:$0x1] %v455
      %v457 = vld [vmem:[#allocation2 + $0xa8] sm:$0x1]
      %v458 = vsel %vm414, 0, %v457
      %459 = vst [vmem:[#allocation2 + $0xa8] sm:$0x1] %v458
      %v460 = vld [vmem:[#allocation2 + $0xb4] sm:$0x1]
      %v461 = vsel %vm414, 0, %v460
      %462 = vst [vmem:[#allocation2 + $0xb4] sm:$0x1] %v461
      %v463 = vld [vmem:[#allocation2 + $0xc0] sm:$0x1]
      %v464 = vsel %vm414, 0, %v463
      %465 = vst [vmem:[#allocation2 + $0xc0] sm:$0x1] %v464
      %v466 = vld [vmem:[#allocation2 + $0xcc] sm:$0x1]
      %v467 = vsel %vm414, 0, %v466
      %468 = vst [vmem:[#allocation2 + $0xcc] sm:$0x1] %v467
      %vm469 = vsmask.f32 7938
      %vm470 = vmand %vm412, %vm469
      %v471 = vld [vmem:[#allocation2 + $0x8] sm:$0x1]
      %v472 = vsel %vm470, 0, %v471
      %473 = vst [vmem:[#allocation2 + $0x8] sm:$0x1] %v472
      %v474 = vld [vmem:[#allocation2 + $0x14] sm:$0x1]
      %v475 = vsel %vm470, 0, %v474
      %476 = vst [vmem:[#allocation2 + $0x14] sm:$0x1] %v475
      %v477 = vld [vmem:[#allocation2 + $0x20] sm:$0x1]
      %v478 = vsel %vm470, 0, %v477
      %479 = vst [vmem:[#allocation2 + $0x20] sm:$0x1] %v478
      %v480 = vld [vmem:[#allocation2 + $0x2c] sm:$0x1]
      %v481 = vsel %vm470, 0, %v480
      %482 = vst [vmem:[#allocation2 + $0x2c] sm:$0x1] %v481
      %v483 = vld [vmem:[#allocation2 + $0x38] sm:$0x1]
      %v484 = vsel %vm470, 0, %v483
      %485 = vst [vmem:[#allocation2 + $0x38] sm:$0x1] %v484
      %v486 = vld [vmem:[#allocation2 + $0x44] sm:$0x1]
      %v487 = vsel %vm470, 0, %v486
      %488 = vst [vmem:[#allocation2 + $0x44] sm:$0x1] %v487
      %v489 = vld [vmem:[#allocation2 + $0x50] sm:$0x1]
      %v490 = vsel %vm470, 0, %v489
      %491 = vst [vmem:[#allocation2 + $0x50] sm:$0x1] %v490
      %v492 = vld [vmem:[#allocation2 + $0x5c] sm:$0x1]
      %v493 = vsel %vm470, 0, %v492
      %494 = vst [vmem:[#allocation2 + $0x5c] sm:$0x1] %v493
      %v495 = vld [vmem:[#allocation2 + $0x68] sm:$0x1]
      %v496 = vsel %vm470, 0, %v495
      %497 = vst [vmem:[#allocation2 + $0x68] sm:$0x1] %v496
      %v498 = vld [vmem:[#allocation2 + $0x74] sm:$0x1]
      %v499 = vsel %vm470, 0, %v498
      %500 = vst [vmem:[#allocation2 + $0x74] sm:$0x1] %v499
      %v501 = vld [vmem:[#allocation2 + $0x80] sm:$0x1]
      %v502 = vsel %vm470, 0, %v501
      %503 = vst [vmem:[#allocation2 + $0x80] sm:$0x1] %v502
      %v504 = vld [vmem:[#allocation2 + $0x8c] sm:$0x1]
      %v505 = vsel %vm470, 0, %v504
      %506 = vst [vmem:[#allocation2 + $0x8c] sm:$0x1] %v505
      %v507 = vld [vmem:[#allocation2 + $0x98] sm:$0x1]
      %v508 = vsel %vm470, 0, %v507
      %509 = vst [vmem:[#allocation2 + $0x98] sm:$0x1] %v508
      %v510 = vld [vmem:[#allocation2 + $0xa4] sm:$0x1]
      %v511 = vsel %vm470, 0, %v510
      %512 = vst [vmem:[#allocation2 + $0xa4] sm:$0x1] %v511
      %v513 = vld [vmem:[#allocation2 + $0xb0] sm:$0x1]
      %v514 = vsel %vm470, 0, %v513
      %515 = vst [vmem:[#allocation2 + $0xb0] sm:$0x1] %v514
      %v516 = vld [vmem:[#allocation2 + $0xbc] sm:$0x1]
      %v517 = vsel %vm470, 0, %v516
      %518 = vst [vmem:[#allocation2 + $0xbc] sm:$0x1] %v517
      %v519 = vld [vmem:[#allocation2 + $0xc8] sm:$0x1]
      %v520 = vsel %vm470, 0, %v519
      %521 = vst [vmem:[#allocation2 + $0xc8] sm:$0x1] %v520
      %v522 = vld [vmem:[#allocation2 + $0xd4] sm:$0x1]
      %v523 = vsel %vm470, 0, %v522
      %524 = vst [vmem:[#allocation2 + $0xd4] sm:$0x1] %v523
      %v525 = vld [vmem:[%s356] sm:$0xf]
      %v526 = vld [vmem:[%s356 + $0x4] sm:$0xf]
      %v527 = vld [vmem:[%s356 + $0x8] sm:$0xf]
      %v528 = vld [vmem:[%s356 + $0xc] sm:$0xf]
      %v529 = vld [vmem:[%s356 + $0x10] sm:$0xf]
      %v530 = vld [vmem:[%s356 + $0x14] sm:$0xf]
      %v531 = vld [vmem:[%s356 + $0x18] sm:$0xf]
      %v532 = vld [vmem:[%s356 + $0x1c] sm:$0xf]
      %v533 = vld [vmem:[%s356 + $0x20] sm:$0xf]
      %v534 = vld [vmem:[%s356 + $0x24] sm:$0xf]
      %v535 = vld [vmem:[%s356 + $0x28] sm:$0xf]
      %v536 = vld [vmem:[%s356 + $0x2c] sm:$0xf]
      %v537 = vld [vmem:[%s356 + $0x30] sm:$0xf]
      %v538 = vld [vmem:[%s356 + $0x34] sm:$0xf]
      %v539 = vld [vmem:[%s356 + $0x38] sm:$0xf]
      %v540 = vld [vmem:[%s356 + $0x3c] sm:$0xf]
      %v541 = vld [vmem:[%s356 + $0x40] sm:$0xf]
      %v542 = vld [vmem:[%s356 + $0x44] sm:$0xf]
      %v543 = vld [vmem:[%s356 + $0x48] sm:$0xf]
      %v544 = vld [vmem:[%s356 + $0x4c] sm:$0xf]
      %v545 = vld [vmem:[%s356 + $0x50] sm:$0xf]
      %v546 = vld [vmem:[%s356 + $0x54] sm:$0xf]
      %v547 = vld [vmem:[%s356 + $0x58] sm:$0xf]
      %v548 = vld [vmem:[%s356 + $0x5c] sm:$0xf]
      %v549 = vld [vmem:[%s356 + $0x60] sm:$0xf]
      %v550 = vld [vmem:[%s356 + $0x64] sm:$0xf]
      %v551 = vld [vmem:[%s356 + $0x68] sm:$0xf]
      %v552 = vld [vmem:[%s356 + $0x6c] sm:$0xf]
      %v553 = vld [vmem:[%s356 + $0x70] sm:$0xf]
      %v554 = vld [vmem:[%s356 + $0x74] sm:$0xf]
      %v555 = vld [vmem:[%s356 + $0x78] sm:$0xf]
      %v556 = vld [vmem:[%s356 + $0x7c] sm:$0xf]
      %vm557 = vsmask.f32 4368
      %vm558 = vmor %vm413, %vm557
      %v560 = vshrl.u32 %v525, 16
      %v562 = vrot.slane %v560, 7
      %v563 = vshll.u32 %v525, 16
      %v565 = vor.u32 %v562, %v563
      %v566 = vrot.slane %v562, 4
      %v568 = vshrl.u32 %v526, 16
      %v570 = vrot.slane %v568, 7
      %v571 = vshll.u32 %v526, 16
      %v573 = vor.u32 %v570, %v571
      %v574 = vsel %vm558, %v566, %v573
      %v575 = vrot.slane %v570, 4
      %v577 = vshrl.u32 %v527, 16
      %v579 = vrot.slane %v577, 7
      %v580 = vshll.u32 %v527, 16
      %v582 = vor.u32 %v579, %v580
      %v583 = vrot.slane %v579, 4
      %v585 = vshrl.u32 %v528, 16
      %v587 = vrot.slane %v585, 7
      %v588 = vshll.u32 %v528, 16
      %v590 = vor.u32 %v587, %v588
      %v591 = vsel %vm558, %v583, %v590
      %v592 = vrot.slane %v587, 4
      %v594 = vshrl.u32 %v529, 16
      %v596 = vrot.slane %v594, 7
      %v597 = vshll.u32 %v529, 16
      %v599 = vor.u32 %v596, %v597
      %v600 = vrot.slane %v596, 4
      %v602 = vshrl.u32 %v530, 16
      %v604 = vrot.slane %v602, 7
      %v605 = vshll.u32 %v530, 16
      %v607 = vor.u32 %v604, %v605
      %v608 = vsel %vm558, %v600, %v607
      %v609 = vrot.slane %v604, 4
      %v611 = vshrl.u32 %v531, 16
      %v613 = vrot.slane %v611, 7
      %v614 = vshll.u32 %v531, 16
      %v616 = vor.u32 %v613, %v614
      %v617 = vrot.slane %v613, 4
      %v619 = vshrl.u32 %v532, 16
      %v621 = vrot.slane %v619, 7
      %v622 = vshll.u32 %v532, 16
      %v624 = vor.u32 %v621, %v622
      %v625 = vsel %vm558, %v617, %v624
      %v626 = vrot.slane %v621, 4
      %v628 = vshrl.u32 %v533, 16
      %v630 = vrot.slane %v628, 7
      %v631 = vshll.u32 %v533, 16
      %v633 = vor.u32 %v630, %v631
      %v634 = vrot.slane %v630, 4
      %v636 = vshrl.u32 %v534, 16
      %v638 = vrot.slane %v636, 7
      %v639 = vshll.u32 %v534, 16
      %v641 = vor.u32 %v638, %v639
      %v642 = vsel %vm558, %v634, %v641
      %v643 = vrot.slane %v638, 4
      %v645 = vshrl.u32 %v535, 16
      %v647 = vrot.slane %v645, 7
      %v648 = vshll.u32 %v535, 16
      %v650 = vor.u32 %v647, %v648
      %v651 = vrot.slane %v647, 4
      %v653 = vshrl.u32 %v536, 16
      %v655 = vrot.slane %v653, 7
      %v656 = vshll.u32 %v536, 16
      %v658 = vor.u32 %v655, %v656
      %v659 = vsel %vm558, %v651, %v658
      %v660 = vrot.slane %v655, 4
      %v662 = vshrl.u32 %v537, 16
      %v664 = vrot.slane %v662, 7
      %v665 = vshll.u32 %v537, 16
      %v667 = vor.u32 %v664, %v665
      %v668 = vrot.slane %v664, 4
      %v670 = vshrl.u32 %v538, 16
      %v672 = vrot.slane %v670, 7
      %v673 = vshll.u32 %v538, 16
      %v675 = vor.u32 %v672, %v673
      %v676 = vsel %vm558, %v668, %v675
      %v677 = vrot.slane %v672, 4
      %v679 = vshrl.u32 %v539, 16
      %v681 = vrot.slane %v679, 7
      %v682 = vshll.u32 %v539, 16
      %v684 = vor.u32 %v681, %v682
      %v685 = vrot.slane %v681, 4
      %v687 = vshrl.u32 %v540, 16
      %v689 = vrot.slane %v687, 7
      %v690 = vshll.u32 %v540, 16
      %v692 = vor.u32 %v689, %v690
      %v693 = vsel %vm558, %v685, %v692
      %v694 = vrot.slane %v689, 4
      %v696 = vshrl.u32 %v541, 16
      %v698 = vrot.slane %v696, 7
      %v699 = vshll.u32 %v541, 16
      %v701 = vor.u32 %v698, %v699
      %v702 = vrot.slane %v698, 4
      %v704 = vshrl.u32 %v542, 16
      %v706 = vrot.slane %v704, 7
      %v707 = vshll.u32 %v542, 16
      %v709 = vor.u32 %v706, %v707
      %v710 = vsel %vm558, %v702, %v709
      %v711 = vrot.slane %v706, 4
      %v713 = vshrl.u32 %v543, 16
      %v715 = vrot.slane %v713, 7
      %v716 = vshll.u32 %v543, 16
      %v718 = vor.u32 %v715, %v716
      %v719 = vrot.slane %v715, 4
      %v721 = vshrl.u32 %v544, 16
      %v723 = vrot.slane %v721, 7
      %v724 = vshll.u32 %v544, 16
      %v726 = vor.u32 %v723, %v724
      %v727 = vsel %vm558, %v719, %v726
      %v728 = vrot.slane %v723, 4
      %v730 = vshrl.u32 %v545, 16
      %v732 = vrot.slane %v730, 7
      %v733 = vshll.u32 %v545, 16
      %v735 = vor.u32 %v732, %v733
      %v736 = vrot.slane %v732, 4
      %v738 = vshrl.u32 %v546, 16
      %v740 = vrot.slane %v738, 7
      %v741 = vshll.u32 %v546, 16
      %v743 = vor.u32 %v740, %v741
      %v744 = vsel %vm558, %v736, %v743
      %v745 = vrot.slane %v740, 4
      %v747 = vshrl.u32 %v547, 16
      %v749 = vrot.slane %v747, 7
      %v750 = vshll.u32 %v547, 16
      %v752 = vor.u32 %v749, %v750
      %v753 = vrot.slane %v749, 4
      %v755 = vshrl.u32 %v548, 16
      %v757 = vrot.slane %v755, 7
      %v758 = vshll.u32 %v548, 16
      %v760 = vor.u32 %v757, %v758
      %v761 = vsel %vm558, %v753, %v760
      %v762 = vrot.slane %v757, 4
      %v764 = vshrl.u32 %v549, 16
      %v766 = vrot.slane %v764, 7
      %v767 = vshll.u32 %v549, 16
      %v769 = vor.u32 %v766, %v767
      %v770 = vrot.slane %v766, 4
      %v772 = vshrl.u32 %v550, 16
      %v774 = vrot.slane %v772, 7
      %v775 = vshll.u32 %v550, 16
      %v777 = vor.u32 %v774, %v775
      %v778 = vsel %vm558, %v770, %v777
      %v779 = vrot.slane %v774, 4
      %v781 = vshrl.u32 %v551, 16
      %v783 = vrot.slane %v781, 7
      %v784 = vshll.u32 %v551, 16
      %v786 = vor.u32 %v783, %v784
      %v787 = vrot.slane %v783, 4
      %v789 = vshrl.u32 %v552, 16
      %v791 = vrot.slane %v789, 7
      %v792 = vshll.u32 %v552, 16
      %v794 = vor.u32 %v791, %v792
      %v795 = vsel %vm558, %v787, %v794
      %v796 = vrot.slane %v791, 4
      %v798 = vshrl.u32 %v553, 16
      %v800 = vrot.slane %v798, 7
      %v801 = vshll.u32 %v553, 16
      %v803 = vor.u32 %v800, %v801
      %v804 = vrot.slane %v800, 4
      %v806 = vshrl.u32 %v554, 16
      %v808 = vrot.slane %v806, 7
      %v809 = vshll.u32 %v554, 16
      %v811 = vor.u32 %v808, %v809
      %v812 = vsel %vm558, %v804, %v811
      %v813 = vrot.slane %v808, 4
      %v815 = vshrl.u32 %v555, 16
      %v817 = vrot.slane %v815, 7
      %v818 = vshll.u32 %v555, 16
      %v820 = vor.u32 %v817, %v818
      %v821 = vrot.slane %v817, 4
      %v823 = vshrl.u32 %v556, 16
      %v825 = vrot.slane %v823, 7
      %v826 = vshll.u32 %v556, 16
      %v828 = vor.u32 %v825, %v826
      %v829 = vsel %vm558, %v821, %v828
      %v830 = vrot.slane %v825, 4
      %s879 = scalar_lea.vmem [#allocation2], 12
      %vm880 = vcmask 519168
      %vm881 = vmand %vm880, %vm469
      %v882 = vld [vmem:[%s879] sm:$0xf]
      %v883 = vsel %vm881, %v565, %v882
      %884 = vst [vmem:[%s879] sm:$0xf] %v883
      %vm885 = vcmask 519168
      %886 = vst.msk [vmem:[%s879 + $0x4] sm:$0xf] %vm885, %v574
      %v887 = vld [vmem:[%s879 + $0x8] sm:$0x1]
      %v888 = vsel %vm414, %v575, %v887
      %889 = vst [vmem:[%s879 + $0x8] sm:$0x1] %v888
      %v890 = vld [vmem:[%s879 + $0xc] sm:$0xf]
      %v891 = vsel %vm881, %v582, %v890
      %892 = vst [vmem:[%s879 + $0xc] sm:$0xf] %v891
      %893 = vst.msk [vmem:[%s879 + $0x10] sm:$0xf] %vm885, %v591
      %v894 = vld [vmem:[%s879 + $0x14] sm:$0x1]
      %v895 = vsel %vm414, %v592, %v894
      %896 = vst [vmem:[%s879 + $0x14] sm:$0x1] %v895
      %v897 = vld [vmem:[%s879 + $0x18] sm:$0xf]
      %v898 = vsel %vm881, %v599, %v897
      %899 = vst [vmem:[%s879 + $0x18] sm:$0xf] %v898
      %900 = vst.msk [vmem:[%s879 + $0x1c] sm:$0xf] %vm885, %v608
      %v901 = vld [vmem:[%s879 + $0x20] sm:$0x1]
      %v902 = vsel %vm414, %v609, %v901
      %903 = vst [vmem:[%s879 + $0x20] sm:$0x1] %v902
      %v904 = vld [vmem:[%s879 + $0x24] sm:$0xf]
      %v905 = vsel %vm881, %v616, %v904
      %906 = vst [vmem:[%s879 + $0x24] sm:$0xf] %v905
      %907 = vst.msk [vmem:[%s879 + $0x28] sm:$0xf] %vm885, %v625
      %v908 = vld [vmem:[%s879 + $0x2c] sm:$0x1]
      %v909 = vsel %vm414, %v626, %v908
      %910 = vst [vmem:[%s879 + $0x2c] sm:$0x1] %v909
      %v911 = vld [vmem:[%s879 + $0x30] sm:$0xf]
      %v912 = vsel %vm881, %v633, %v911
      %913 = vst [vmem:[%s879 + $0x30] sm:$0xf] %v912
      %914 = vst.msk [vmem:[%s879 + $0x34] sm:$0xf] %vm885, %v642
      %v915 = vld [vmem:[%s879 + $0x38] sm:$0x1]
      %v916 = vsel %vm414, %v643, %v915
      %917 = vst [vmem:[%s879 + $0x38] sm:$0x1] %v916
      %v918 = vld [vmem:[%s879 + $0x3c] sm:$0xf]
      %v919 = vsel %vm881, %v650, %v918
      %920 = vst [vmem:[%s879 + $0x3c] sm:$0xf] %v919
      %921 = vst.msk [vmem:[%s879 + $0x40] sm:$0xf] %vm885, %v659
      %v922 = vld [vmem:[%s879 + $0x44] sm:$0x1]
      %v923 = vsel %vm414, %v660, %v922
      %924 = vst [vmem:[%s879 + $0x44] sm:$0x1] %v923
      %v925 = vld [vmem:[%s879 + $0x48] sm:$0xf]
      %v926 = vsel %vm881, %v667, %v925
      %927 = vst [vmem:[%s879 + $0x48] sm:$0xf] %v926
      %928 = vst.msk [vmem:[%s879 + $0x4c] sm:$0xf] %vm885, %v676
      %v929 = vld [vmem:[%s879 + $0x50] sm:$0x1]
      %v930 = vsel %vm414, %v677, %v929
      %931 = vst [vmem:[%s879 + $0x50] sm:$0x1] %v930
      %v932 = vld [vmem:[%s879 + $0x54] sm:$0xf]
      %v933 = vsel %vm881, %v684, %v932
      %934 = vst [vmem:[%s879 + $0x54] sm:$0xf] %v933
      %935 = vst.msk [vmem:[%s879 + $0x58] sm:$0xf] %vm885, %v693
      %v936 = vld [vmem:[%s879 + $0x5c] sm:$0x1]
      %v937 = vsel %vm414, %v694, %v936
      %938 = vst [vmem:[%s879 + $0x5c] sm:$0x1] %v937
      %v939 = vld [vmem:[%s879 + $0x60] sm:$0xf]
      %v940 = vsel %vm881, %v701, %v939
      %941 = vst [vmem:[%s879 + $0x60] sm:$0xf] %v940
      %942 = vst.msk [vmem:[%s879 + $0x64] sm:$0xf] %vm885, %v710
      %v943 = vld [vmem:[%s879 + $0x68] sm:$0x1]
      %v944 = vsel %vm414, %v711, %v943
      %945 = vst [vmem:[%s879 + $0x68] sm:$0x1] %v944
      %v946 = vld [vmem:[%s879 + $0x6c] sm:$0xf]
      %v947 = vsel %vm881, %v718, %v946
      %948 = vst [vmem:[%s879 + $0x6c] sm:$0xf] %v947
      %949 = vst.msk [vmem:[%s879 + $0x70] sm:$0xf] %vm885, %v727
      %v950 = vld [vmem:[%s879 + $0x74] sm:$0x1]
      %v951 = vsel %vm414, %v728, %v950
      %952 = vst [vmem:[%s879 + $0x74] sm:$0x1] %v951
      %v953 = vld [vmem:[%s879 + $0x78] sm:$0xf]
      %v954 = vsel %vm881, %v735, %v953
      %955 = vst [vmem:[%s879 + $0x78] sm:$0xf] %v954
      %956 = vst.msk [vmem:[%s879 + $0x7c] sm:$0xf] %vm885, %v744
      %v957 = vld [vmem:[%s879 + $0x80] sm:$0x1]
      %v958 = vsel %vm414, %v745, %v957
      %959 = vst [vmem:[%s879 + $0x80] sm:$0x1] %v958
      %v960 = vld [vmem:[%s879 + $0x84] sm:$0xf]
      %v961 = vsel %vm881, %v752, %v960
      %962 = vst [vmem:[%s879 + $0x84] sm:$0xf] %v961
      %963 = vst.msk [vmem:[%s879 + $0x88] sm:$0xf] %vm885, %v761
      %v964 = vld [vmem:[%s879 + $0x8c] sm:$0x1]
      %v965 = vsel %vm414, %v762, %v964
      %966 = vst [vmem:[%s879 + $0x8c] sm:$0x1] %v965
      %v967 = vld [vmem:[%s879 + $0x90] sm:$0xf]
      %v968 = vsel %vm881, %v769, %v967
      %969 = vst [vmem:[%s879 + $0x90] sm:$0xf] %v968
      %970 = vst.msk [vmem:[%s879 + $0x94] sm:$0xf] %vm885, %v778
      %v971 = vld [vmem:[%s879 + $0x98] sm:$0x1]
      %v972 = vsel %vm414, %v779, %v971
      %973 = vst [vmem:[%s879 + $0x98] sm:$0x1] %v972
      %v974 = vld [vmem:[%s879 + $0x9c] sm:$0xf]
      %v975 = vsel %vm881, %v786, %v974
      %976 = vst [vmem:[%s879 + $0x9c] sm:$0xf] %v975
      %977 = vst.msk [vmem:[%s879 + $0xa0] sm:$0xf] %vm885, %v795
      %v978 = vld [vmem:[%s879 + $0xa4] sm:$0x1]
      %v979 = vsel %vm414, %v796, %v978
      %980 = vst [vmem:[%s879 + $0xa4] sm:$0x1] %v979
      %v981 = vld [vmem:[%s879 + $0xa8] sm:$0xf]
      %v982 = vsel %vm881, %v803, %v981
      %983 = vst [vmem:[%s879 + $0xa8] sm:$0xf] %v982
      %984 = vst.msk [vmem:[%s879 + $0xac] sm:$0xf] %vm885, %v812
      %v985 = vld [vmem:[%s879 + $0xb0] sm:$0x1]
      %v986 = vsel %vm414, %v813, %v985
      %987 = vst [vmem:[%s879 + $0xb0] sm:$0x1] %v986
      %v988 = vld [vmem:[%s879 + $0xb4] sm:$0xf]
      %v989 = vsel %vm881, %v820, %v988
      %990 = vst [vmem:[%s879 + $0xb4] sm:$0xf] %v989
      %991 = vst.msk [vmem:[%s879 + $0xb8] sm:$0xf] %vm885, %v829
      %v992 = vld [vmem:[%s879 + $0xbc] sm:$0x1]
      %v993 = vsel %vm414, %v830, %v992
      %994 = vst [vmem:[%s879 + $0xbc] sm:$0x1] %v993
      %p995 = scmp.gt.s32.totalorder %s22, 0
      // Predicated region
      $region37: #{doubleconv_forward.3} parent=35 // pred_check
        %p996 = pneg %p995
      $region38: #{doubleconv_forward.3} parent=35 // pred_check_branch
        %998 = sbr.rel (%p996) target = $region40
      $region39: #{doubleconv_forward.3} parent=35 // pred_region
        %v999 = vld [vmem:[%s370] sm:$0xf]
        %v1000 = vld [vmem:[%s370 + $0x4] sm:$0xf]
        %v1002 = vshrl.u32 %v999, 16
        %v1004 = vrot.slane %v1002, 7
        %v1005 = vshll.u32 %v999, 16
        %v1007 = vor.u32 %v1004, %v1005
        %v1008 = vrot.slane %v1004, 4
        %v1010 = vshrl.u32 %v1000, 16
        %v1012 = vrot.slane %v1010, 7
        %v1013 = vshll.u32 %v1000, 16
        %v1015 = vor.u32 %v1012, %v1013
        %v1016 = vsel %vm558, %v1008, %v1015
        %v1017 = vrot.slane %v1012, 4
        %v1021 = vld [vmem:[#allocation2] sm:$0xf]
        %v1022 = vsel %vm881, %v1007, %v1021
        %1023 = vst [vmem:[#allocation2] sm:$0xf] %v1022
        %1024 = vst.msk [vmem:[#allocation2 + $0x4] sm:$0xf] %vm885, %v1016
        %v1025 = vld [vmem:[#allocation2 + $0x8] sm:$0x1]
        %v1026 = vsel %vm414, %v1017, %v1025
        %1027 = vst [vmem:[#allocation2 + $0x8] sm:$0x1] %v1026
      $region40: #{doubleconv_forward.3} parent=35 // pred_fallthru
        _
      %p1028 = scmp.eq.s32.totalorder %s22, 0
      // Predicated region
      $region41: #{doubleconv_forward.3} parent=35 // pred_check
        %p1029 = pneg %p1028
      $region42: #{doubleconv_forward.3} parent=35 // pred_check_branch
        %1031 = sbr.rel (%p1029) target = $region44
      $region43: #{doubleconv_forward.3} parent=35 // pred_region
        %v1032 = vld [vmem:[#allocation2] sm:$0xf]
        %v1033 = vsel %vm881, 0, %v1032
        %1034 = vst [vmem:[#allocation2] sm:$0xf] %v1033
        %1035 = vst.msk [vmem:[#allocation2 + $0x4] sm:$0xf] %vm885, 0
        %v1036 = vld [vmem:[#allocation2 + $0x8] sm:$0x1]
        %v1037 = vsel %vm414, 0, %v1036
        %1038 = vst [vmem:[#allocation2 + $0x8] sm:$0x1] %v1037
      $region44: #{doubleconv_forward.3} parent=35 // pred_fallthru
        _
      %p1039 = scmp.lt.s32.totalorder %s22, 0
      // Predicated region
      $region45: #{doubleconv_forward.3} parent=35 // pred_check
        %p1040 = pneg %p1039
      $region46: #{doubleconv_forward.3} parent=35 // pred_check_branch
        %1042 = sbr.rel (%p1040) target = $region48
      $region47: #{doubleconv_forward.3} parent=35 // pred_region
        %v1043 = vld [vmem:[%s388] sm:$0xf]
        %v1044 = vld [vmem:[%s388 + $0x4] sm:$0xf]
        %v1046 = vshrl.u32 %v1043, 16
        %v1048 = vrot.slane %v1046, 7
        %v1049 = vshll.u32 %v1043, 16
        %v1051 = vor.u32 %v1048, %v1049
        %v1052 = vrot.slane %v1048, 4
        %v1054 = vshrl.u32 %v1044, 16
        %v1056 = vrot.slane %v1054, 7
        %v1057 = vshll.u32 %v1044, 16
        %v1059 = vor.u32 %v1056, %v1057
        %v1060 = vsel %vm558, %v1052, %v1059
        %v1061 = vrot.slane %v1056, 4
        %s1065 = scalar_lea.vmem [#allocation2], 204
        %v1066 = vld [vmem:[%s1065] sm:$0xf]
        %v1067 = vsel %vm881, %v1051, %v1066
        %1068 = vst [vmem:[%s1065] sm:$0xf] %v1067
        %1069 = vst.msk [vmem:[%s1065 + $0x4] sm:$0xf] %vm885, %v1060
        %v1070 = vld [vmem:[%s1065 + $0x8] sm:$0x1]
        %v1071 = vsel %vm414, %v1061, %v1070
        %1072 = vst [vmem:[%s1065 + $0x8] sm:$0x1] %v1071
      $region48: #{doubleconv_forward.3} parent=35 // pred_fallthru
        _
      // Predicated region
      $region49: #{doubleconv_forward.3} parent=35 // pred_check
        %p1073 = pneg %p1028
      $region50: #{doubleconv_forward.3} parent=35 // pred_check_branch
        %1075 = sbr.rel (%p1073) target = $region52
      $region51: #{doubleconv_forward.3} parent=35 // pred_region
        %s1076 = scalar_lea.vmem [#allocation2], 204
        %v1077 = vld [vmem:[%s1076] sm:$0xf]
        %v1078 = vsel %vm881, 0, %v1077
        %1079 = vst [vmem:[%s1076] sm:$0xf] %v1078
        %1080 = vst.msk [vmem:[%s1076 + $0x4] sm:$0xf] %vm885, 0
        %v1081 = vld [vmem:[%s1076 + $0x8] sm:$0x1]
        %v1082 = vsel %vm414, 0, %v1081
        %1083 = vst [vmem:[%s1076 + $0x8] sm:$0x1] %v1082
      $region52: #{doubleconv_forward.3} parent=35 // pred_fallthru
        _
      %v1084 = vld [vmem:[#allocation2] sm:$0xf]
      %v1085 = vld [vmem:[#allocation2 + $0x4] sm:$0xf]
      %v1086 = vld [vmem:[#allocation2 + $0x8] sm:$0x1]
      %v1087 = vld [vmem:[#allocation2 + $0xc] sm:$0xf]
      %v1088 = vld [vmem:[#allocation2 + $0x10] sm:$0xf]
      %v1089 = vld [vmem:[#allocation2 + $0x14] sm:$0x1]
      %v1090 = vld [vmem:[#allocation2 + $0x18] sm:$0xf]
      %v1091 = vld [vmem:[#allocation2 + $0x1c] sm:$0xf]
      %v1092 = vld [vmem:[#allocation2 + $0x20] sm:$0x1]
      %v1093 = vld [vmem:[#allocation2 + $0x24] sm:$0xf]
      %v1094 = vld [vmem:[#allocation2 + $0x28] sm:$0xf]
      %v1095 = vld [vmem:[#allocation2 + $0x2c] sm:$0x1]
      %v1096 = vld [vmem:[#allocation2 + $0x30] sm:$0xf]
      %v1097 = vld [vmem:[#allocation2 + $0x34] sm:$0xf]
      %v1098 = vld [vmem:[#allocation2 + $0x38] sm:$0x1]
      %v1099 = vld [vmem:[#allocation2 + $0x3c] sm:$0xf]
      %v1100 = vld [vmem:[#allocation2 + $0x40] sm:$0xf]
      %v1101 = vld [vmem:[#allocation2 + $0x44] sm:$0x1]
      %v1102 = vld [vmem:[#allocation2 + $0x48] sm:$0xf]
      %v1103 = vld [vmem:[#allocation2 + $0x4c] sm:$0xf]
      %v1104 = vld [vmem:[#allocation2 + $0x50] sm:$0x1]
      %v1105 = vld [vmem:[#allocation2 + $0x54] sm:$0xf]
      %v1106 = vld [vmem:[#allocation2 + $0x58] sm:$0xf]
      %v1107 = vld [vmem:[#allocation2 + $0x5c] sm:$0x1]
      %v1108 = vld [vmem:[#allocation2 + $0x60] sm:$0xf]
      %v1109 = vld [vmem:[#allocation2 + $0x64] sm:$0xf]
      %v1110 = vld [vmem:[#allocation2 + $0x68] sm:$0x1]
      %v1111 = vld [vmem:[#allocation2 + $0x6c] sm:$0xf]
      %v1112 = vld [vmem:[#allocation2 + $0x70] sm:$0xf]
      %v1113 = vld [vmem:[#allocation2 + $0x74] sm:$0x1]
      %v1114 = vld [vmem:[#allocation2 + $0x78] sm:$0xf]
      %v1115 = vld [vmem:[#allocation2 + $0x7c] sm:$0xf]
      %v1116 = vld [vmem:[#allocation2 + $0x80] sm:$0x1]
      %v1117 = vld [vmem:[#allocation2 + $0x84] sm:$0xf]
      %v1118 = vld [vmem:[#allocation2 + $0x88] sm:$0xf]
      %v1119 = vld [vmem:[#allocation2 + $0x8c] sm:$0x1]
      %v1120 = vld [vmem:[#allocation2 + $0x90] sm:$0xf]
      %v1121 = vld [vmem:[#allocation2 + $0x94] sm:$0xf]
      %v1122 = vld [vmem:[#allocation2 + $0x98] sm:$0x1]
      %v1123 = vld [vmem:[#allocation2 + $0x9c] sm:$0xf]
      %v1124 = vld [vmem:[#allocation2 + $0xa0] sm:$0xf]
      %v1125 = vld [vmem:[#allocation2 + $0xa4] sm:$0x1]
      %v1126 = vld [vmem:[#allocation2 + $0xa8] sm:$0xf]
      %v1127 = vld [vmem:[#allocation2 + $0xac] sm:$0xf]
      %v1128 = vld [vmem:[#allocation2 + $0xb0] sm:$0x1]
      %v1129 = vld [vmem:[#allocation2 + $0xb4] sm:$0xf]
      %v1130 = vld [vmem:[#allocation2 + $0xb8] sm:$0xf]
      %v1131 = vld [vmem:[#allocation2 + $0xbc] sm:$0x1]
      %v1132 = vld [vmem:[%s3] sm:$0xf]
      %v1133 = vld [vmem:[%s3 + $0x4] sm:$0xf]
      %v1134 = vld [vmem:[%s3 + $0x8] sm:$0xf]
      %v1135 = vld [vmem:[%s3 + $0xc] sm:$0xf]
      %v1136 = vld [vmem:[%s3 + $0x10] sm:$0xf]
      %v1137 = vld [vmem:[%s3 + $0x14] sm:$0xf]
      %v1138 = vld [vmem:[%s3 + $0x18] sm:$0xf]
      %v1139 = vld [vmem:[%s3 + $0x1c] sm:$0xf]
      %vm1140 = vsmask.f32 3328
      %vm1141 = vsmask.f32 7440
      %vm1142 = vmor %vm1140, %vm1141
      %v1144 = vshrl.u32 %v1084, 16
      %v1146 = vrot.slane %v1144, 4
      %v1147 = vshll.u32 %v1084, 16
      %v1149 = vrot.slane %v1147, 5
      %v1150 = vor.u32 %v1146, %v1149
      %v1151 = vrot.slane %v1150, 4
      %v1153 = vshll.u32 %v1085, 16
      %v1155 = vrot.slane %v1153, 5
      %v1156 = vsel %vm1142, %v1151, %v1155
      %v1157 = vshrl.u32 %v1085, 16
      %v1159 = vrot.slane %v1157, 4
      %v1160 = vor.u32 %v1159, %v1155
      %v1161 = vrot.slane %v1160, 4
      %v1163 = vshll.u32 %v1086, 16
      %v1165 = vrot.slane %v1163, 5
      %v1166 = vsel %vm1142, %v1161, %v1165
      %v1168 = vshrl.u32 %v1087, 16
      %v1170 = vrot.slane %v1168, 4
      %v1171 = vshll.u32 %v1087, 16
      %v1173 = vrot.slane %v1171, 5
      %v1174 = vor.u32 %v1170, %v1173
      %v1175 = vrot.slane %v1174, 4
      %v1177 = vshll.u32 %v1088, 16
      %v1179 = vrot.slane %v1177, 5
      %v1180 = vsel %vm1142, %v1175, %v1179
      %v1181 = vshrl.u32 %v1088, 16
      %v1183 = vrot.slane %v1181, 4
      %v1184 = vor.u32 %v1183, %v1179
      %v1185 = vrot.slane %v1184, 4
      %v1187 = vshll.u32 %v1089, 16
      %v1189 = vrot.slane %v1187, 5
      %v1190 = vsel %vm1142, %v1185, %v1189
      %v1192 = vshrl.u32 %v1090, 16
      %v1194 = vrot.slane %v1192, 4
      %v1195 = vshll.u32 %v1090, 16
      %v1197 = vrot.slane %v1195, 5
      %v1198 = vor.u32 %v1194, %v1197
      %v1199 = vrot.slane %v1198, 4
      %v1201 = vshll.u32 %v1091, 16
      %v1203 = vrot.slane %v1201, 5
      %v1204 = vsel %vm1142, %v1199, %v1203
      %v1205 = vshrl.u32 %v1091, 16
      %v1207 = vrot.slane %v1205, 4
      %v1208 = vor.u32 %v1207, %v1203
      %v1209 = vrot.slane %v1208, 4
      %v1211 = vshll.u32 %v1092, 16
      %v1213 = vrot.slane %v1211, 5
      %v1214 = vsel %vm1142, %v1209, %v1213
      %v1216 = vshrl.u32 %v1093, 16
      %v1218 = vrot.slane %v1216, 4
      %v1219 = vshll.u32 %v1093, 16
      %v1221 = vrot.slane %v1219, 5
      %v1222 = vor.u32 %v1218, %v1221
      %v1223 = vrot.slane %v1222, 4
      %v1225 = vshll.u32 %v1094, 16
      %v1227 = vrot.slane %v1225, 5
      %v1228 = vsel %vm1142, %v1223, %v1227
      %v1229 = vshrl.u32 %v1094, 16
      %v1231 = vrot.slane %v1229, 4
      %v1232 = vor.u32 %v1231, %v1227
      %v1233 = vrot.slane %v1232, 4
      %v1235 = vshll.u32 %v1095, 16
      %v1237 = vrot.slane %v1235, 5
      %v1238 = vsel %vm1142, %v1233, %v1237
      %v1240 = vshrl.u32 %v1096, 16
      %v1242 = vrot.slane %v1240, 4
      %v1243 = vshll.u32 %v1096, 16
      %v1245 = vrot.slane %v1243, 5
      %v1246 = vor.u32 %v1242, %v1245
      %v1247 = vrot.slane %v1246, 4
      %v1249 = vshll.u32 %v1097, 16
      %v1251 = vrot.slane %v1249, 5
      %v1252 = vsel %vm1142, %v1247, %v1251
      %v1253 = vshrl.u32 %v1097, 16
      %v1255 = vrot.slane %v1253, 4
      %v1256 = vor.u32 %v1255, %v1251
      %v1257 = vrot.slane %v1256, 4
      %v1259 = vshll.u32 %v1098, 16
      %v1261 = vrot.slane %v1259, 5
      %v1262 = vsel %vm1142, %v1257, %v1261
      %v1264 = vshrl.u32 %v1099, 16
      %v1266 = vrot.slane %v1264, 4
      %v1267 = vshll.u32 %v1099, 16
      %v1269 = vrot.slane %v1267, 5
      %v1270 = vor.u32 %v1266, %v1269
      %v1271 = vrot.slane %v1270, 4
      %v1273 = vshll.u32 %v1100, 16
      %v1275 = vrot.slane %v1273, 5
      %v1276 = vsel %vm1142, %v1271, %v1275
      %v1277 = vshrl.u32 %v1100, 16
      %v1279 = vrot.slane %v1277, 4
      %v1280 = vor.u32 %v1279, %v1275
      %v1281 = vrot.slane %v1280, 4
      %v1283 = vshll.u32 %v1101, 16
      %v1285 = vrot.slane %v1283, 5
      %v1286 = vsel %vm1142, %v1281, %v1285
      %v1288 = vshrl.u32 %v1102, 16
      %v1290 = vrot.slane %v1288, 4
      %v1291 = vshll.u32 %v1102, 16
      %v1293 = vrot.slane %v1291, 5
      %v1294 = vor.u32 %v1290, %v1293
      %v1295 = vrot.slane %v1294, 4
      %v1297 = vshll.u32 %v1103, 16
      %v1299 = vrot.slane %v1297, 5
      %v1300 = vsel %vm1142, %v1295, %v1299
      %v1301 = vshrl.u32 %v1103, 16
      %v1303 = vrot.slane %v1301, 4
      %v1304 = vor.u32 %v1303, %v1299
      %v1305 = vrot.slane %v1304, 4
      %v1307 = vshll.u32 %v1104, 16
      %v1309 = vrot.slane %v1307, 5
      %v1310 = vsel %vm1142, %v1305, %v1309
      %v1312 = vshrl.u32 %v1105, 16
      %v1314 = vrot.slane %v1312, 4
      %v1315 = vshll.u32 %v1105, 16
      %v1317 = vrot.slane %v1315, 5
      %v1318 = vor.u32 %v1314, %v1317
      %v1319 = vrot.slane %v1318, 4
      %v1321 = vshll.u32 %v1106, 16
      %v1323 = vrot.slane %v1321, 5
      %v1324 = vsel %vm1142, %v1319, %v1323
      %v1325 = vshrl.u32 %v1106, 16
      %v1327 = vrot.slane %v1325, 4
      %v1328 = vor.u32 %v1327, %v1323
      %v1329 = vrot.slane %v1328, 4
      %v1331 = vshll.u32 %v1107, 16
      %v1333 = vrot.slane %v1331, 5
      %v1334 = vsel %vm1142, %v1329, %v1333
      %v1336 = vshrl.u32 %v1108, 16
      %v1338 = vrot.slane %v1336, 4
      %v1339 = vshll.u32 %v1108, 16
      %v1341 = vrot.slane %v1339, 5
      %v1342 = vor.u32 %v1338, %v1341
      %v1343 = vrot.slane %v1342, 4
      %v1345 = vshll.u32 %v1109, 16
      %v1347 = vrot.slane %v1345, 5
      %v1348 = vsel %vm1142, %v1343, %v1347
      %v1349 = vshrl.u32 %v1109, 16
      %v1351 = vrot.slane %v1349, 4
      %v1352 = vor.u32 %v1351, %v1347
      %v1353 = vrot.slane %v1352, 4
      %v1355 = vshll.u32 %v1110, 16
      %v1357 = vrot.slane %v1355, 5
      %v1358 = vsel %vm1142, %v1353, %v1357
      %v1360 = vshrl.u32 %v1111, 16
      %v1362 = vrot.slane %v1360, 4
      %v1363 = vshll.u32 %v1111, 16
      %v1365 = vrot.slane %v1363, 5
      %v1366 = vor.u32 %v1362, %v1365
      %v1367 = vrot.slane %v1366, 4
      %v1369 = vshll.u32 %v1112, 16
      %v1371 = vrot.slane %v1369, 5
      %v1372 = vsel %vm1142, %v1367, %v1371
      %v1373 = vshrl.u32 %v1112, 16
      %v1375 = vrot.slane %v1373, 4
      %v1376 = vor.u32 %v1375, %v1371
      %v1377 = vrot.slane %v1376, 4
      %v1379 = vshll.u32 %v1113, 16
      %v1381 = vrot.slane %v1379, 5
      %v1382 = vsel %vm1142, %v1377, %v1381
      %v1384 = vshrl.u32 %v1114, 16
      %v1386 = vrot.slane %v1384, 4
      %v1387 = vshll.u32 %v1114, 16
      %v1389 = vrot.slane %v1387, 5
      %v1390 = vor.u32 %v1386, %v1389
      %v1391 = vrot.slane %v1390, 4
      %v1393 = vshll.u32 %v1115, 16
      %v1395 = vrot.slane %v1393, 5
      %v1396 = vsel %vm1142, %v1391, %v1395
      %v1397 = vshrl.u32 %v1115, 16
      %v1399 = vrot.slane %v1397, 4
      %v1400 = vor.u32 %v1399, %v1395
      %v1401 = vrot.slane %v1400, 4
      %v1403 = vshll.u32 %v1116, 16
      %v1405 = vrot.slane %v1403, 5
      %v1406 = vsel %vm1142, %v1401, %v1405
      %v1408 = vshrl.u32 %v1117, 16
      %v1410 = vrot.slane %v1408, 4
      %v1411 = vshll.u32 %v1117, 16
      %v1413 = vrot.slane %v1411, 5
      %v1414 = vor.u32 %v1410, %v1413
      %v1415 = vrot.slane %v1414, 4
      %v1417 = vshll.u32 %v1118, 16
      %v1419 = vrot.slane %v1417, 5
      %v1420 = vsel %vm1142, %v1415, %v1419
      %v1421 = vshrl.u32 %v1118, 16
      %v1423 = vrot.slane %v1421, 4
      %v1424 = vor.u32 %v1423, %v1419
      %v1425 = vrot.slane %v1424, 4
      %v1427 = vshll.u32 %v1119, 16
      %v1429 = vrot.slane %v1427, 5
      %v1430 = vsel %vm1142, %v1425, %v1429
      %v1432 = vshrl.u32 %v1120, 16
      %v1434 = vrot.slane %v1432, 4
      %v1435 = vshll.u32 %v1120, 16
      %v1437 = vrot.slane %v1435, 5
      %v1438 = vor.u32 %v1434, %v1437
      %v1439 = vrot.slane %v1438, 4
      %v1441 = vshll.u32 %v1121, 16
      %v1443 = vrot.slane %v1441, 5
      %v1444 = vsel %vm1142, %v1439, %v1443
      %v1445 = vshrl.u32 %v1121, 16
      %v1447 = vrot.slane %v1445, 4
      %v1448 = vor.u32 %v1447, %v1443
      %v1449 = vrot.slane %v1448, 4
      %v1451 = vshll.u32 %v1122, 16
      %v1453 = vrot.slane %v1451, 5
      %v1454 = vsel %vm1142, %v1449, %v1453
      %v1456 = vshrl.u32 %v1123, 16
      %v1458 = vrot.slane %v1456, 4
      %v1459 = vshll.u32 %v1123, 16
      %v1461 = vrot.slane %v1459, 5
      %v1462 = vor.u32 %v1458, %v1461
      %v1463 = vrot.slane %v1462, 4
      %v1465 = vshll.u32 %v1124, 16
      %v1467 = vrot.slane %v1465, 5
      %v1468 = vsel %vm1142, %v1463, %v1467
      %v1469 = vshrl.u32 %v1124, 16
      %v1471 = vrot.slane %v1469, 4
      %v1472 = vor.u32 %v1471, %v1467
      %v1473 = vrot.slane %v1472, 4
      %v1475 = vshll.u32 %v1125, 16
      %v1477 = vrot.slane %v1475, 5
      %v1478 = vsel %vm1142, %v1473, %v1477
      %v1480 = vshrl.u32 %v1126, 16
      %v1482 = vrot.slane %v1480, 4
      %v1483 = vshll.u32 %v1126, 16
      %v1485 = vrot.slane %v1483, 5
      %v1486 = vor.u32 %v1482, %v1485
      %v1487 = vrot.slane %v1486, 4
      %v1489 = vshll.u32 %v1127, 16
      %v1491 = vrot.slane %v1489, 5
      %v1492 = vsel %vm1142, %v1487, %v1491
      %v1493 = vshrl.u32 %v1127, 16
      %v1495 = vrot.slane %v1493, 4
      %v1496 = vor.u32 %v1495, %v1491
      %v1497 = vrot.slane %v1496, 4
      %v1499 = vshll.u32 %v1128, 16
      %v1501 = vrot.slane %v1499, 5
      %v1502 = vsel %vm1142, %v1497, %v1501
      %v1504 = vshrl.u32 %v1129, 16
      %v1506 = vrot.slane %v1504, 4
      %v1507 = vshll.u32 %v1129, 16
      %v1509 = vrot.slane %v1507, 5
      %v1510 = vor.u32 %v1506, %v1509
      %v1511 = vrot.slane %v1510, 4
      %v1513 = vshll.u32 %v1130, 16
      %v1515 = vrot.slane %v1513, 5
      %v1516 = vsel %vm1142, %v1511, %v1515
      %v1517 = vshrl.u32 %v1130, 16
      %v1519 = vrot.slane %v1517, 4
      %v1520 = vor.u32 %v1519, %v1515
      %v1521 = vrot.slane %v1520, 4
      %v1523 = vshll.u32 %v1131, 16
      %v1525 = vrot.slane %v1523, 5
      %v1526 = vsel %vm1142, %v1521, %v1525
      %s1527 = scalar_lea.vmem %s3, 32
      %v1528 = vld [vmem:[%s1527] sm:$0xf]
      %v1529 = vld [vmem:[%s1527 + $0x4] sm:$0xf]
      %v1530 = vld [vmem:[%s1527 + $0x8] sm:$0xf]
      %v1531 = vld [vmem:[%s1527 + $0xc] sm:$0xf]
      %v1532 = vld [vmem:[%s1527 + $0x10] sm:$0xf]
      %v1533 = vld [vmem:[%s1527 + $0x14] sm:$0xf]
      %v1534 = vld [vmem:[%s1527 + $0x18] sm:$0xf]
      %v1535 = vld [vmem:[%s1527 + $0x1c] sm:$0xf]
      %v1536 = vunpack.c.l.b16 %v1156
      %v1537 = vunpack.c.l.b16 %v1166
      %v1538 = vunpack.c.l.b16 %v1180
      %v1539 = vunpack.c.l.b16 %v1190
      %v1540 = vunpack.c.l.b16 %v1204
      %v1541 = vunpack.c.l.b16 %v1214
      %v1542 = vunpack.c.l.b16 %v1228
      %v1543 = vunpack.c.l.b16 %v1238
      %v1544 = vunpack.c.l.b16 %v1252
      %v1545 = vunpack.c.l.b16 %v1262
      %v1546 = vunpack.c.l.b16 %v1276
      %v1547 = vunpack.c.l.b16 %v1286
      %v1548 = vunpack.c.l.b16 %v1300
      %v1549 = vunpack.c.l.b16 %v1310
      %v1550 = vunpack.c.l.b16 %v1324
      %v1551 = vunpack.c.l.b16 %v1334
      %v1552 = vunpack.c.l.b16 %v1348
      %v1553 = vunpack.c.l.b16 %v1358
      %v1554 = vunpack.c.l.b16 %v1372
      %v1555 = vunpack.c.l.b16 %v1382
      %v1556 = vunpack.c.l.b16 %v1396
      %v1557 = vunpack.c.l.b16 %v1406
      %v1558 = vunpack.c.l.b16 %v1420
      %v1559 = vunpack.c.l.b16 %v1430
      %v1560 = vunpack.c.l.b16 %v1444
      %v1561 = vunpack.c.l.b16 %v1454
      %v1562 = vunpack.c.l.b16 %v1468
      %v1563 = vunpack.c.l.b16 %v1478
      %v1564 = vunpack.c.l.b16 %v1492
      %v1565 = vunpack.c.l.b16 %v1502
      %v1566 = vunpack.c.l.b16 %v1516
      %v1567 = vunpack.c.l.b16 %v1526
      %v1568 = vpack.c.b16 %v1537, %v1536
      %v1569 = vpack.c.b16 %v1539, %v1538
      %v1570 = vpack.c.b16 %v1541, %v1540
      %v1571 = vpack.c.b16 %v1543, %v1542
      %v1572 = vpack.c.b16 %v1545, %v1544
      %v1573 = vpack.c.b16 %v1547, %v1546
      %v1574 = vpack.c.b16 %v1549, %v1548
      %v1575 = vpack.c.b16 %v1551, %v1550
      %v1576 = vpack.c.b16 %v1553, %v1552
      %v1577 = vpack.c.b16 %v1555, %v1554
      %v1578 = vpack.c.b16 %v1557, %v1556
      %v1579 = vpack.c.b16 %v1559, %v1558
      %v1580 = vpack.c.b16 %v1561, %v1560
      %v1581 = vpack.c.b16 %v1563, %v1562
      %v1582 = vpack.c.b16 %v1565, %v1564
      %v1583 = vpack.c.b16 %v1567, %v1566
      %v1592 = vunpack.c.l.b16 %v1528
      %v1593 = vunpack.c.l.b16 %v1529
      %v1594 = vunpack.c.l.b16 %v1530
      %v1595 = vunpack.c.l.b16 %v1531
      %v1596 = vunpack.c.l.b16 %v1532
      %v1597 = vunpack.c.l.b16 %v1533
      %v1598 = vunpack.c.l.b16 %v1534
      %v1599 = vunpack.c.l.b16 %v1535
      %v1600 = vpack.c.b16 %v1593, %v1592
      %v1601 = vpack.c.b16 %v1595, %v1594
      %v1602 = vpack.c.b16 %v1597, %v1596
      %v1603 = vpack.c.b16 %v1599, %v1598
      %vm1608 = vcmask 523264
      %v1610 = vsel %vm1608, %v1568, 0
      %v1613 = vsel %vm1608, %v1569, 0
      %v1616 = vsel %vm1608, %v1570, 0
      %v1619 = vsel %vm1608, %v1571, 0
      %v1622 = vsel %vm1608, %v1572, 0
      %v1625 = vsel %vm1608, %v1573, 0
      %v1628 = vsel %vm1608, %v1574, 0
      %v1631 = vsel %vm1608, %v1575, 0
      %v1634 = vsel %vm1608, %v1576, 0
      %v1637 = vsel %vm1608, %v1577, 0
      %v1640 = vsel %vm1608, %v1578, 0
      %v1643 = vsel %vm1608, %v1579, 0
      %v1646 = vsel %vm1608, %v1580, 0
      %v1649 = vsel %vm1608, %v1581, 0
      %v1652 = vsel %vm1608, %v1582, 0
      %v1655 = vsel %vm1608, %v1583, 0
      %1657 = vmatprep.subr.bf16.mxu0 0
      %1658 = vmatpush1.bf16.msra.mxu0 0
      %1659 = vmatprep.subr.bf16.mxu0 0
      %1660 = vmatpush1.bf16.msra.mxu0 0
      %1661 = vmatprep.subr.bf16.mxu0 0
      %1662 = vmatpush1.bf16.msra.mxu0 0
      %1663 = vmatprep.subr.bf16.mxu0 0
      %1664 = vmatpush1.bf16.msra.mxu0 0
      %1665 = vmatprep.subr.bf16.mxu0 0
      %1666 = vmatpush1.bf16.msra.mxu0 %v1603
      %1667 = vmatprep.subr.bf16.mxu0 0
      %1668 = vmatpush1.bf16.msra.mxu0 %v1602
      %1669 = vmatprep.subr.bf16.mxu0 0
      %1670 = vmatpush1.bf16.msra.mxu0 %v1601
      %1671 = vmatprep.subr.bf16.mxu0 0
      %1672 = vmatpush1.bf16.msra.mxu0 %v1600
      %1673 = vmatprep.subr.bf16.mxu0 0
      %1674 = vmatpush2.bf16.msra.mxu0 0
      %1675 = vmatprep.subr.bf16.mxu0 0
      %1676 = vmatpush2.bf16.msra.mxu0 0
      %1677 = vmatprep.subr.bf16.mxu0 0
      %1678 = vmatpush2.bf16.msra.mxu0 0
      %1679 = vmatprep.subr.bf16.mxu0 0
      %1680 = vmatpush2.bf16.msra.mxu0 0
      %1681 = vmatprep.subr.bf16.mxu0 0
      %1682 = vmatpush2.bf16.msra.mxu0 0
      %1683 = vmatprep.subr.bf16.mxu0 0
      %1684 = vmatpush2.bf16.msra.mxu0 0
      %1685 = vmatprep.subr.bf16.mxu0 0
      %1686 = vmatpush2.bf16.msra.mxu0 0
      %1687 = vmatprep.subr.bf16.mxu0 0
      %1688 = vmatpush2.bf16.msra.mxu0 0
      %1689 = vmatprep.mubr.bf16.mxu0 0
      %1690 = vmatmul.mubr.bf16.gmra.mxu0 %v1610
      %v1691 = vpop.f32.mrf.mxu0
      %v1692 = vadd.f32 0.0, %v1691
      %v1693 = vpop.f32.mrf.mxu0
      %v1694 = vpop.f32.mrf.mxu0
      %v1695 = vadd.f32 0.0, %v1694
      %v1696 = vpop.f32.mrf.mxu0
      %1697 = vmatprep.mubr.bf16.mxu0 0
      %1698 = vmatmul.mubr.bf16.gmra.mxu0 %v1613
      %v1699 = vpop.f32.mrf.mxu0
      %v1700 = vadd.f32 0.0, %v1699
      %v1701 = vpop.f32.mrf.mxu0
      %v1702 = vpop.f32.mrf.mxu0
      %v1703 = vadd.f32 0.0, %v1702
      %v1704 = vpop.f32.mrf.mxu0
      %1705 = vmatprep.mubr.bf16.mxu0 0
      %1706 = vmatmul.mubr.bf16.gmra.mxu0 %v1616
      %v1707 = vpop.f32.mrf.mxu0
      %v1708 = vadd.f32 0.0, %v1707
      %v1709 = vpop.f32.mrf.mxu0
      %v1710 = vpop.f32.mrf.mxu0
      %v1711 = vadd.f32 0.0, %v1710
      %v1712 = vpop.f32.mrf.mxu0
      %1713 = vmatprep.mubr.bf16.mxu0 0
      %1714 = vmatmul.mubr.bf16.gmra.mxu0 %v1619
      %v1715 = vpop.f32.mrf.mxu0
      %v1716 = vadd.f32 0.0, %v1715
      %v1717 = vpop.f32.mrf.mxu0
      %v1718 = vpop.f32.mrf.mxu0
      %v1719 = vadd.f32 0.0, %v1718
      %v1720 = vpop.f32.mrf.mxu0
      %1721 = vmatprep.mubr.bf16.mxu0 0
      %1722 = vmatmul.mubr.bf16.gmra.mxu0 %v1622
      %v1723 = vpop.f32.mrf.mxu0
      %v1724 = vadd.f32 0.0, %v1723
      %v1725 = vpop.f32.mrf.mxu0
      %v1726 = vpop.f32.mrf.mxu0
      %v1727 = vadd.f32 0.0, %v1726
      %v1728 = vpop.f32.mrf.mxu0
      %1729 = vmatprep.mubr.bf16.mxu0 0
      %1730 = vmatmul.mubr.bf16.gmra.mxu0 %v1625
      %v1731 = vpop.f32.mrf.mxu0
      %v1732 = vadd.f32 0.0, %v1731
      %v1733 = vpop.f32.mrf.mxu0
      %v1734 = vpop.f32.mrf.mxu0
      %v1735 = vadd.f32 0.0, %v1734
      %v1736 = vpop.f32.mrf.mxu0
      %1737 = vmatprep.mubr.bf16.mxu0 0
      %1738 = vmatmul.mubr.bf16.gmra.mxu0 %v1628
      %v1739 = vpop.f32.mrf.mxu0
      %v1740 = vadd.f32 0.0, %v1739
      %v1741 = vpop.f32.mrf.mxu0
      %v1742 = vpop.f32.mrf.mxu0
      %v1743 = vadd.f32 0.0, %v1742
      %v1744 = vpop.f32.mrf.mxu0
      %1745 = vmatprep.mubr.bf16.mxu0 0
      %1746 = vmatmul.mubr.bf16.gmra.mxu0 %v1631
      %v1747 = vpop.f32.mrf.mxu0
      %v1748 = vadd.f32 0.0, %v1747
      %v1749 = vpop.f32.mrf.mxu0
      %v1750 = vpop.f32.mrf.mxu0
      %v1751 = vadd.f32 0.0, %v1750
      %v1752 = vpop.f32.mrf.mxu0
      %1753 = vmatprep.mubr.bf16.mxu0 0
      %1754 = vmatmul.mubr.bf16.gmra.mxu0 %v1634
      %v1755 = vpop.f32.mrf.mxu0
      %v1756 = vadd.f32 0.0, %v1755
      %v1757 = vpop.f32.mrf.mxu0
      %v1758 = vpop.f32.mrf.mxu0
      %v1759 = vadd.f32 0.0, %v1758
      %v1760 = vpop.f32.mrf.mxu0
      %1761 = vmatprep.mubr.bf16.mxu0 0
      %1762 = vmatmul.mubr.bf16.gmra.mxu0 %v1637
      %v1763 = vpop.f32.mrf.mxu0
      %v1764 = vadd.f32 0.0, %v1763
      %v1765 = vpop.f32.mrf.mxu0
      %v1766 = vpop.f32.mrf.mxu0
      %v1767 = vadd.f32 0.0, %v1766
      %v1768 = vpop.f32.mrf.mxu0
      %1769 = vmatprep.mubr.bf16.mxu0 0
      %1770 = vmatmul.mubr.bf16.gmra.mxu0 %v1640
      %v1771 = vpop.f32.mrf.mxu0
      %v1772 = vadd.f32 0.0, %v1771
      %v1773 = vpop.f32.mrf.mxu0
      %v1774 = vpop.f32.mrf.mxu0
      %v1775 = vadd.f32 0.0, %v1774
      %v1776 = vpop.f32.mrf.mxu0
      %1777 = vmatprep.mubr.bf16.mxu0 0
      %1778 = vmatmul.mubr.bf16.gmra.mxu0 %v1643
      %v1779 = vpop.f32.mrf.mxu0
      %v1780 = vadd.f32 0.0, %v1779
      %v1781 = vpop.f32.mrf.mxu0
      %v1782 = vpop.f32.mrf.mxu0
      %v1783 = vadd.f32 0.0, %v1782
      %v1784 = vpop.f32.mrf.mxu0
      %1785 = vmatprep.mubr.bf16.mxu0 0
      %1786 = vmatmul.mubr.bf16.gmra.mxu0 %v1646
      %v1787 = vpop.f32.mrf.mxu0
      %v1788 = vadd.f32 0.0, %v1787
      %v1789 = vpop.f32.mrf.mxu0
      %v1790 = vpop.f32.mrf.mxu0
      %v1791 = vadd.f32 0.0, %v1790
      %v1792 = vpop.f32.mrf.mxu0
      %1793 = vmatprep.mubr.bf16.mxu0 0
      %1794 = vmatmul.mubr.bf16.gmra.mxu0 %v1649
      %v1795 = vpop.f32.mrf.mxu0
      %v1796 = vadd.f32 0.0, %v1795
      %v1797 = vpop.f32.mrf.mxu0
      %v1798 = vpop.f32.mrf.mxu0
      %v1799 = vadd.f32 0.0, %v1798
      %v1800 = vpop.f32.mrf.mxu0
      %1801 = vmatprep.mubr.bf16.mxu0 0
      %1802 = vmatmul.mubr.bf16.gmra.mxu0 %v1652
      %v1803 = vpop.f32.mrf.mxu0
      %v1804 = vadd.f32 0.0, %v1803
      %v1805 = vpop.f32.mrf.mxu0
      %v1806 = vpop.f32.mrf.mxu0
      %v1807 = vadd.f32 0.0, %v1806
      %v1808 = vpop.f32.mrf.mxu0
      %1809 = vmatprep.mubr.bf16.mxu0 0
      %1810 = vmatmul.mubr.bf16.gmra.mxu0 %v1655
      %v1811 = vpop.f32.mrf.mxu0
      %v1812 = vadd.f32 0.0, %v1811
      %v1813 = vpop.f32.mrf.mxu0
      %v1814 = vpop.f32.mrf.mxu0
      %v1815 = vadd.f32 0.0, %v1814
      %v1816 = vpop.f32.mrf.mxu0
      %1817 = vdwg.mxu0
      %v1850 = vunpack.c.l.b16 %v1084
      %v1851 = vunpack.c.l.b16 %v1085
      %v1852 = vunpack.c.l.b16 %v1087
      %v1853 = vunpack.c.l.b16 %v1088
      %v1854 = vunpack.c.l.b16 %v1090
      %v1855 = vunpack.c.l.b16 %v1091
      %v1856 = vunpack.c.l.b16 %v1093
      %v1857 = vunpack.c.l.b16 %v1094
      %v1858 = vunpack.c.l.b16 %v1096
      %v1859 = vunpack.c.l.b16 %v1097
      %v1860 = vunpack.c.l.b16 %v1099
      %v1861 = vunpack.c.l.b16 %v1100
      %v1862 = vunpack.c.l.b16 %v1102
      %v1863 = vunpack.c.l.b16 %v1103
      %v1864 = vunpack.c.l.b16 %v1105
      %v1865 = vunpack.c.l.b16 %v1106
      %v1866 = vunpack.c.l.b16 %v1108
      %v1867 = vunpack.c.l.b16 %v1109
      %v1868 = vunpack.c.l.b16 %v1111
      %v1869 = vunpack.c.l.b16 %v1112
      %v1870 = vunpack.c.l.b16 %v1114
      %v1871 = vunpack.c.l.b16 %v1115
      %v1872 = vunpack.c.l.b16 %v1117
      %v1873 = vunpack.c.l.b16 %v1118
      %v1874 = vunpack.c.l.b16 %v1120
      %v1875 = vunpack.c.l.b16 %v1121
      %v1876 = vunpack.c.l.b16 %v1123
      %v1877 = vunpack.c.l.b16 %v1124
      %v1878 = vunpack.c.l.b16 %v1126
      %v1879 = vunpack.c.l.b16 %v1127
      %v1880 = vunpack.c.l.b16 %v1129
      %v1881 = vunpack.c.l.b16 %v1130
      %v1882 = vpack.c.b16 %v1851, %v1850
      %v1883 = vpack.c.b16 %v1853, %v1852
      %v1884 = vpack.c.b16 %v1855, %v1854
      %v1885 = vpack.c.b16 %v1857, %v1856
      %v1886 = vpack.c.b16 %v1859, %v1858
      %v1887 = vpack.c.b16 %v1861, %v1860
      %v1888 = vpack.c.b16 %v1863, %v1862
      %v1889 = vpack.c.b16 %v1865, %v1864
      %v1890 = vpack.c.b16 %v1867, %v1866
      %v1891 = vpack.c.b16 %v1869, %v1868
      %v1892 = vpack.c.b16 %v1871, %v1870
      %v1893 = vpack.c.b16 %v1873, %v1872
      %v1894 = vpack.c.b16 %v1875, %v1874
      %v1895 = vpack.c.b16 %v1877, %v1876
      %v1896 = vpack.c.b16 %v1879, %v1878
      %v1897 = vpack.c.b16 %v1881, %v1880
      %v1906 = vunpack.c.l.b16 %v1132
      %v1907 = vunpack.c.l.b16 %v1133
      %v1908 = vunpack.c.l.b16 %v1134
      %v1909 = vunpack.c.l.b16 %v1135
      %v1910 = vunpack.c.l.b16 %v1136
      %v1911 = vunpack.c.l.b16 %v1137
      %v1912 = vunpack.c.l.b16 %v1138
      %v1913 = vunpack.c.l.b16 %v1139
      %v1914 = vpack.c.b16 %v1907, %v1906
      %v1915 = vpack.c.b16 %v1909, %v1908
      %v1916 = vpack.c.b16 %v1911, %v1910
      %v1917 = vpack.c.b16 %v1913, %v1912
      %v1923 = vsel %vm1608, %v1882, 0
      %v1926 = vsel %vm1608, %v1883, 0
      %v1929 = vsel %vm1608, %v1884, 0
      %v1932 = vsel %vm1608, %v1885, 0
      %v1935 = vsel %vm1608, %v1886, 0
      %v1938 = vsel %vm1608, %v1887, 0
      %v1941 = vsel %vm1608, %v1888, 0
      %v1944 = vsel %vm1608, %v1889, 0
      %v1947 = vsel %vm1608, %v1890, 0
      %v1950 = vsel %vm1608, %v1891, 0
      %v1953 = vsel %vm1608, %v1892, 0
      %v1956 = vsel %vm1608, %v1893, 0
      %v1959 = vsel %vm1608, %v1894, 0
      %v1962 = vsel %vm1608, %v1895, 0
      %v1965 = vsel %vm1608, %v1896, 0
      %v1968 = vsel %vm1608, %v1897, 0
      %1970 = vmatprep.subr.bf16.mxu0 0
      %1971 = vmatpush1.bf16.msra.mxu0 0
      %1972 = vmatprep.subr.bf16.mxu0 0
      %1973 = vmatpush1.bf16.msra.mxu0 0
      %1974 = vmatprep.subr.bf16.mxu0 0
      %1975 = vmatpush1.bf16.msra.mxu0 0
      %1976 = vmatprep.subr.bf16.mxu0 0
      %1977 = vmatpush1.bf16.msra.mxu0 0
      %1978 = vmatprep.subr.bf16.mxu0 0
      %1979 = vmatpush1.bf16.msra.mxu0 %v1917
      %1980 = vmatprep.subr.bf16.mxu0 0
      %1981 = vmatpush1.bf16.msra.mxu0 %v1916
      %1982 = vmatprep.subr.bf16.mxu0 0
      %1983 = vmatpush1.bf16.msra.mxu0 %v1915
      %1984 = vmatprep.subr.bf16.mxu0 0
      %1985 = vmatpush1.bf16.msra.mxu0 %v1914
      %1986 = vmatprep.subr.bf16.mxu0 0
      %1987 = vmatpush2.bf16.msra.mxu0 0
      %1988 = vmatprep.subr.bf16.mxu0 0
      %1989 = vmatpush2.bf16.msra.mxu0 0
      %1990 = vmatprep.subr.bf16.mxu0 0
      %1991 = vmatpush2.bf16.msra.mxu0 0
      %1992 = vmatprep.subr.bf16.mxu0 0
      %1993 = vmatpush2.bf16.msra.mxu0 0
      %1994 = vmatprep.subr.bf16.mxu0 0
      %1995 = vmatpush2.bf16.msra.mxu0 0
      %1996 = vmatprep.subr.bf16.mxu0 0
      %1997 = vmatpush2.bf16.msra.mxu0 0
      %1998 = vmatprep.subr.bf16.mxu0 0
      %1999 = vmatpush2.bf16.msra.mxu0 0
      %2000 = vmatprep.subr.bf16.mxu0 0
      %2001 = vmatpush2.bf16.msra.mxu0 0
      %2002 = vmatprep.mubr.bf16.mxu0 0
      %2003 = vmatmul.mubr.bf16.gmra.mxu0 %v1923
      %v2004 = vpop.f32.mrf.mxu0
      %v2005 = vadd.f32 %v1692, %v2004
      %v2006 = vpop.f32.mrf.mxu0
      %v2007 = vpop.f32.mrf.mxu0
      %v2008 = vadd.f32 %v1695, %v2007
      %v2009 = vpop.f32.mrf.mxu0
      %2010 = vmatprep.mubr.bf16.mxu0 0
      %2011 = vmatmul.mubr.bf16.gmra.mxu0 %v1926
      %v2012 = vpop.f32.mrf.mxu0
      %v2013 = vadd.f32 %v1700, %v2012
      %v2014 = vpop.f32.mrf.mxu0
      %v2015 = vpop.f32.mrf.mxu0
      %v2016 = vadd.f32 %v1703, %v2015
      %v2017 = vpop.f32.mrf.mxu0
      %2018 = vmatprep.mubr.bf16.mxu0 0
      %2019 = vmatmul.mubr.bf16.gmra.mxu0 %v1929
      %v2020 = vpop.f32.mrf.mxu0
      %v2021 = vadd.f32 %v1708, %v2020
      %v2022 = vpop.f32.mrf.mxu0
      %v2023 = vpop.f32.mrf.mxu0
      %v2024 = vadd.f32 %v1711, %v2023
      %v2025 = vpop.f32.mrf.mxu0
      %2026 = vmatprep.mubr.bf16.mxu0 0
      %2027 = vmatmul.mubr.bf16.gmra.mxu0 %v1932
      %v2028 = vpop.f32.mrf.mxu0
      %v2029 = vadd.f32 %v1716, %v2028
      %v2030 = vpop.f32.mrf.mxu0
      %v2031 = vpop.f32.mrf.mxu0
      %v2032 = vadd.f32 %v1719, %v2031
      %v2033 = vpop.f32.mrf.mxu0
      %2034 = vmatprep.mubr.bf16.mxu0 0
      %2035 = vmatmul.mubr.bf16.gmra.mxu0 %v1935
      %v2036 = vpop.f32.mrf.mxu0
      %v2037 = vadd.f32 %v1724, %v2036
      %v2038 = vpop.f32.mrf.mxu0
      %v2039 = vpop.f32.mrf.mxu0
      %v2040 = vadd.f32 %v1727, %v2039
      %v2041 = vpop.f32.mrf.mxu0
      %2042 = vmatprep.mubr.bf16.mxu0 0
      %2043 = vmatmul.mubr.bf16.gmra.mxu0 %v1938
      %v2044 = vpop.f32.mrf.mxu0
      %v2045 = vadd.f32 %v1732, %v2044
      %v2046 = vpop.f32.mrf.mxu0
      %v2047 = vpop.f32.mrf.mxu0
      %v2048 = vadd.f32 %v1735, %v2047
      %v2049 = vpop.f32.mrf.mxu0
      %2050 = vmatprep.mubr.bf16.mxu0 0
      %2051 = vmatmul.mubr.bf16.gmra.mxu0 %v1941
      %v2052 = vpop.f32.mrf.mxu0
      %v2053 = vadd.f32 %v1740, %v2052
      %v2054 = vpop.f32.mrf.mxu0
      %v2055 = vpop.f32.mrf.mxu0
      %v2056 = vadd.f32 %v1743, %v2055
      %v2057 = vpop.f32.mrf.mxu0
      %2058 = vmatprep.mubr.bf16.mxu0 0
      %2059 = vmatmul.mubr.bf16.gmra.mxu0 %v1944
      %v2060 = vpop.f32.mrf.mxu0
      %v2061 = vadd.f32 %v1748, %v2060
      %v2062 = vpop.f32.mrf.mxu0
      %v2063 = vpop.f32.mrf.mxu0
      %v2064 = vadd.f32 %v1751, %v2063
      %v2065 = vpop.f32.mrf.mxu0
      %2066 = vmatprep.mubr.bf16.mxu0 0
      %2067 = vmatmul.mubr.bf16.gmra.mxu0 %v1947
      %v2068 = vpop.f32.mrf.mxu0
      %v2069 = vadd.f32 %v1756, %v2068
      %v2070 = vpop.f32.mrf.mxu0
      %v2071 = vpop.f32.mrf.mxu0
      %v2072 = vadd.f32 %v1759, %v2071
      %v2073 = vpop.f32.mrf.mxu0
      %2074 = vmatprep.mubr.bf16.mxu0 0
      %2075 = vmatmul.mubr.bf16.gmra.mxu0 %v1950
      %v2076 = vpop.f32.mrf.mxu0
      %v2077 = vadd.f32 %v1764, %v2076
      %v2078 = vpop.f32.mrf.mxu0
      %v2079 = vpop.f32.mrf.mxu0
      %v2080 = vadd.f32 %v1767, %v2079
      %v2081 = vpop.f32.mrf.mxu0
      %2082 = vmatprep.mubr.bf16.mxu0 0
      %2083 = vmatmul.mubr.bf16.gmra.mxu0 %v1953
      %v2084 = vpop.f32.mrf.mxu0
      %v2085 = vadd.f32 %v1772, %v2084
      %v2086 = vpop.f32.mrf.mxu0
      %v2087 = vpop.f32.mrf.mxu0
      %v2088 = vadd.f32 %v1775, %v2087
      %v2089 = vpop.f32.mrf.mxu0
      %2090 = vmatprep.mubr.bf16.mxu0 0
      %2091 = vmatmul.mubr.bf16.gmra.mxu0 %v1956
      %v2092 = vpop.f32.mrf.mxu0
      %v2093 = vadd.f32 %v1780, %v2092
      %v2094 = vpop.f32.mrf.mxu0
      %v2095 = vpop.f32.mrf.mxu0
      %v2096 = vadd.f32 %v1783, %v2095
      %v2097 = vpop.f32.mrf.mxu0
      %2098 = vmatprep.mubr.bf16.mxu0 0
      %2099 = vmatmul.mubr.bf16.gmra.mxu0 %v1959
      %v2100 = vpop.f32.mrf.mxu0
      %v2101 = vadd.f32 %v1788, %v2100
      %v2102 = vpop.f32.mrf.mxu0
      %v2103 = vpop.f32.mrf.mxu0
      %v2104 = vadd.f32 %v1791, %v2103
      %v2105 = vpop.f32.mrf.mxu0
      %2106 = vmatprep.mubr.bf16.mxu0 0
      %2107 = vmatmul.mubr.bf16.gmra.mxu0 %v1962
      %v2108 = vpop.f32.mrf.mxu0
      %v2109 = vadd.f32 %v1796, %v2108
      %v2110 = vpop.f32.mrf.mxu0
      %v2111 = vpop.f32.mrf.mxu0
      %v2112 = vadd.f32 %v1799, %v2111
      %v2113 = vpop.f32.mrf.mxu0
      %2114 = vmatprep.mubr.bf16.mxu0 0
      %2115 = vmatmul.mubr.bf16.gmra.mxu0 %v1965
      %v2116 = vpop.f32.mrf.mxu0
      %v2117 = vadd.f32 %v1804, %v2116
      %v2118 = vpop.f32.mrf.mxu0
      %v2119 = vpop.f32.mrf.mxu0
      %v2120 = vadd.f32 %v1807, %v2119
      %v2121 = vpop.f32.mrf.mxu0
      %2122 = vmatprep.mubr.bf16.mxu0 0
      %2123 = vmatmul.mubr.bf16.gmra.mxu0 %v1968
      %v2124 = vpop.f32.mrf.mxu0
      %v2125 = vadd.f32 %v1812, %v2124
      %v2126 = vpop.f32.mrf.mxu0
      %v2127 = vpop.f32.mrf.mxu0
      %v2128 = vadd.f32 %v1815, %v2127
      %v2129 = vpop.f32.mrf.mxu0
      %2130 = vdwg.mxu0
      %vm2147 = vcmask 1042432
      %vm2148 = vcmask 1046532
      %vm2149 = vmor %vm2147, %vm2148
      %v2150 = vrot.slane %v1084, 5
      %v2151 = vrot.slane %v2150, 4
      %v2152 = vrot.slane %v1085, 5
      %v2153 = vsel %vm2149, %v2151, %v2152
      %v2154 = vrot.slane %v2152, 4
      %v2155 = vrot.slane %v1086, 5
      %v2156 = vsel %vm2149, %v2154, %v2155
      %v2157 = vrot.slane %v1087, 5
      %v2158 = vrot.slane %v2157, 4
      %v2159 = vrot.slane %v1088, 5
      %v2160 = vsel %vm2149, %v2158, %v2159
      %v2161 = vrot.slane %v2159, 4
      %v2162 = vrot.slane %v1089, 5
      %v2163 = vsel %vm2149, %v2161, %v2162
      %v2164 = vrot.slane %v1090, 5
      %v2165 = vrot.slane %v2164, 4
      %v2166 = vrot.slane %v1091, 5
      %v2167 = vsel %vm2149, %v2165, %v2166
      %v2168 = vrot.slane %v2166, 4
      %v2169 = vrot.slane %v1092, 5
      %v2170 = vsel %vm2149, %v2168, %v2169
      %v2171 = vrot.slane %v1093, 5
      %v2172 = vrot.slane %v2171, 4
      %v2173 = vrot.slane %v1094, 5
      %v2174 = vsel %vm2149, %v2172, %v2173
      %v2175 = vrot.slane %v2173, 4
      %v2176 = vrot.slane %v1095, 5
      %v2177 = vsel %vm2149, %v2175, %v2176
      %v2178 = vrot.slane %v1096, 5
      %v2179 = vrot.slane %v2178, 4
      %v2180 = vrot.slane %v1097, 5
      %v2181 = vsel %vm2149, %v2179, %v2180
      %v2182 = vrot.slane %v2180, 4
      %v2183 = vrot.slane %v1098, 5
      %v2184 = vsel %vm2149, %v2182, %v2183
      %v2185 = vrot.slane %v1099, 5
      %v2186 = vrot.slane %v2185, 4
      %v2187 = vrot.slane %v1100, 5
      %v2188 = vsel %vm2149, %v2186, %v2187
      %v2189 = vrot.slane %v2187, 4
      %v2190 = vrot.slane %v1101, 5
      %v2191 = vsel %vm2149, %v2189, %v2190
      %v2192 = vrot.slane %v1102, 5
      %v2193 = vrot.slane %v2192, 4
      %v2194 = vrot.slane %v1103, 5
      %v2195 = vsel %vm2149, %v2193, %v2194
      %v2196 = vrot.slane %v2194, 4
      %v2197 = vrot.slane %v1104, 5
      %v2198 = vsel %vm2149, %v2196, %v2197
      %v2199 = vrot.slane %v1105, 5
      %v2200 = vrot.slane %v2199, 4
      %v2201 = vrot.slane %v1106, 5
      %v2202 = vsel %vm2149, %v2200, %v2201
      %v2203 = vrot.slane %v2201, 4
      %v2204 = vrot.slane %v1107, 5
      %v2205 = vsel %vm2149, %v2203, %v2204
      %v2206 = vrot.slane %v1108, 5
      %v2207 = vrot.slane %v2206, 4
      %v2208 = vrot.slane %v1109, 5
      %v2209 = vsel %vm2149, %v2207, %v2208
      %v2210 = vrot.slane %v2208, 4
      %v2211 = vrot.slane %v1110, 5
      %v2212 = vsel %vm2149, %v2210, %v2211
      %v2213 = vrot.slane %v1111, 5
      %v2214 = vrot.slane %v2213, 4
      %v2215 = vrot.slane %v1112, 5
      %v2216 = vsel %vm2149, %v2214, %v2215
      %v2217 = vrot.slane %v2215, 4
      %v2218 = vrot.slane %v1113, 5
      %v2219 = vsel %vm2149, %v2217, %v2218
      %v2220 = vrot.slane %v1114, 5
      %v2221 = vrot.slane %v2220, 4
      %v2222 = vrot.slane %v1115, 5
      %v2223 = vsel %vm2149, %v2221, %v2222
      %v2224 = vrot.slane %v2222, 4
      %v2225 = vrot.slane %v1116, 5
      %v2226 = vsel %vm2149, %v2224, %v2225
      %v2227 = vrot.slane %v1117, 5
      %v2228 = vrot.slane %v2227, 4
      %v2229 = vrot.slane %v1118, 5
      %v2230 = vsel %vm2149, %v2228, %v2229
      %v2231 = vrot.slane %v2229, 4
      %v2232 = vrot.slane %v1119, 5
      %v2233 = vsel %vm2149, %v2231, %v2232
      %v2234 = vrot.slane %v1120, 5
      %v2235 = vrot.slane %v2234, 4
      %v2236 = vrot.slane %v1121, 5
      %v2237 = vsel %vm2149, %v2235, %v2236
      %v2238 = vrot.slane %v2236, 4
      %v2239 = vrot.slane %v1122, 5
      %v2240 = vsel %vm2149, %v2238, %v2239
      %v2241 = vrot.slane %v1123, 5
      %v2242 = vrot.slane %v2241, 4
      %v2243 = vrot.slane %v1124, 5
      %v2244 = vsel %vm2149, %v2242, %v2243
      %v2245 = vrot.slane %v2243, 4
      %v2246 = vrot.slane %v1125, 5
      %v2247 = vsel %vm2149, %v2245, %v2246
      %v2248 = vrot.slane %v1126, 5
      %v2249 = vrot.slane %v2248, 4
      %v2250 = vrot.slane %v1127, 5
      %v2251 = vsel %vm2149, %v2249, %v2250
      %v2252 = vrot.slane %v2250, 4
      %v2253 = vrot.slane %v1128, 5
      %v2254 = vsel %vm2149, %v2252, %v2253
      %v2255 = vrot.slane %v1129, 5
      %v2256 = vrot.slane %v2255, 4
      %v2257 = vrot.slane %v1130, 5
      %v2258 = vsel %vm2149, %v2256, %v2257
      %v2259 = vrot.slane %v2257, 4
      %v2260 = vrot.slane %v1131, 5
      %v2261 = vsel %vm2149, %v2259, %v2260
      %s2262 = scalar_lea.vmem %s3, 64
      %v2263 = vld [vmem:[%s2262] sm:$0xf]
      %v2264 = vld [vmem:[%s2262 + $0x4] sm:$0xf]
      %v2265 = vld [vmem:[%s2262 + $0x8] sm:$0xf]
      %v2266 = vld [vmem:[%s2262 + $0xc] sm:$0xf]
      %v2267 = vld [vmem:[%s2262 + $0x10] sm:$0xf]
      %v2268 = vld [vmem:[%s2262 + $0x14] sm:$0xf]
      %v2269 = vld [vmem:[%s2262 + $0x18] sm:$0xf]
      %v2270 = vld [vmem:[%s2262 + $0x1c] sm:$0xf]
      %v2271 = vunpack.c.l.b16 %v2153
      %v2272 = vunpack.c.l.b16 %v2156
      %v2273 = vunpack.c.l.b16 %v2160
      %v2274 = vunpack.c.l.b16 %v2163
      %v2275 = vunpack.c.l.b16 %v2167
      %v2276 = vunpack.c.l.b16 %v2170
      %v2277 = vunpack.c.l.b16 %v2174
      %v2278 = vunpack.c.l.b16 %v2177
      %v2279 = vunpack.c.l.b16 %v2181
      %v2280 = vunpack.c.l.b16 %v2184
      %v2281 = vunpack.c.l.b16 %v2188
      %v2282 = vunpack.c.l.b16 %v2191
      %v2283 = vunpack.c.l.b16 %v2195
      %v2284 = vunpack.c.l.b16 %v2198
      %v2285 = vunpack.c.l.b16 %v2202
      %v2286 = vunpack.c.l.b16 %v2205
      %v2287 = vunpack.c.l.b16 %v2209
      %v2288 = vunpack.c.l.b16 %v2212
      %v2289 = vunpack.c.l.b16 %v2216
      %v2290 = vunpack.c.l.b16 %v2219
      %v2291 = vunpack.c.l.b16 %v2223
      %v2292 = vunpack.c.l.b16 %v2226
      %v2293 = vunpack.c.l.b16 %v2230
      %v2294 = vunpack.c.l.b16 %v2233
      %v2295 = vunpack.c.l.b16 %v2237
      %v2296 = vunpack.c.l.b16 %v2240
      %v2297 = vunpack.c.l.b16 %v2244
      %v2298 = vunpack.c.l.b16 %v2247
      %v2299 = vunpack.c.l.b16 %v2251
      %v2300 = vunpack.c.l.b16 %v2254
      %v2301 = vunpack.c.l.b16 %v2258
      %v2302 = vunpack.c.l.b16 %v2261
      %v2303 = vpack.c.b16 %v2272, %v2271
      %v2304 = vpack.c.b16 %v2274, %v2273
      %v2305 = vpack.c.b16 %v2276, %v2275
      %v2306 = vpack.c.b16 %v2278, %v2277
      %v2307 = vpack.c.b16 %v2280, %v2279
      %v2308 = vpack.c.b16 %v2282, %v2281
      %v2309 = vpack.c.b16 %v2284, %v2283
      %v2310 = vpack.c.b16 %v2286, %v2285
      %v2311 = vpack.c.b16 %v2288, %v2287
      %v2312 = vpack.c.b16 %v2290, %v2289
      %v2313 = vpack.c.b16 %v2292, %v2291
      %v2314 = vpack.c.b16 %v2294, %v2293
      %v2315 = vpack.c.b16 %v2296, %v2295
      %v2316 = vpack.c.b16 %v2298, %v2297
      %v2317 = vpack.c.b16 %v2300, %v2299
      %v2318 = vpack.c.b16 %v2302, %v2301
      %v2327 = vunpack.c.l.b16 %v2263
      %v2328 = vunpack.c.l.b16 %v2264
      %v2329 = vunpack.c.l.b16 %v2265
      %v2330 = vunpack.c.l.b16 %v2266
      %v2331 = vunpack.c.l.b16 %v2267
      %v2332 = vunpack.c.l.b16 %v2268
      %v2333 = vunpack.c.l.b16 %v2269
      %v2334 = vunpack.c.l.b16 %v2270
      %v2335 = vpack.c.b16 %v2328, %v2327
      %v2336 = vpack.c.b16 %v2330, %v2329
      %v2337 = vpack.c.b16 %v2332, %v2331
      %v2338 = vpack.c.b16 %v2334, %v2333
      %v2344 = vsel %vm1608, %v2303, 0
      %v2347 = vsel %vm1608, %v2304, 0
      %v2350 = vsel %vm1608, %v2305, 0
      %v2353 = vsel %vm1608, %v2306, 0
      %v2356 = vsel %vm1608, %v2307, 0
      %v2359 = vsel %vm1608, %v2308, 0
      %v2362 = vsel %vm1608, %v2309, 0
      %v2365 = vsel %vm1608, %v2310, 0
      %v2368 = vsel %vm1608, %v2311, 0
      %v2371 = vsel %vm1608, %v2312, 0
      %v2374 = vsel %vm1608, %v2313, 0
      %v2377 = vsel %vm1608, %v2314, 0
      %v2380 = vsel %vm1608, %v2315, 0
      %v2383 = vsel %vm1608, %v2316, 0
      %v2386 = vsel %vm1608, %v2317, 0
      %v2389 = vsel %vm1608, %v2318, 0
      %2391 = vmatprep.subr.bf16.mxu0 0
      %2392 = vmatpush1.bf16.msra.mxu0 0
      %2393 = vmatprep.subr.bf16.mxu0 0
      %2394 = vmatpush1.bf16.msra.mxu0 0
      %2395 = vmatprep.subr.bf16.mxu0 0
      %2396 = vmatpush1.bf16.msra.mxu0 0
      %2397 = vmatprep.subr.bf16.mxu0 0
      %2398 = vmatpush1.bf16.msra.mxu0 0
      %2399 = vmatprep.subr.bf16.mxu0 0
      %2400 = vmatpush1.bf16.msra.mxu0 %v2338
      %2401 = vmatprep.subr.bf16.mxu0 0
      %2402 = vmatpush1.bf16.msra.mxu0 %v2337
      %2403 = vmatprep.subr.bf16.mxu0 0
      %2404 = vmatpush1.bf16.msra.mxu0 %v2336
      %2405 = vmatprep.subr.bf16.mxu0 0
      %2406 = vmatpush1.bf16.msra.mxu0 %v2335
      %2407 = vmatprep.subr.bf16.mxu0 0
      %2408 = vmatpush2.bf16.msra.mxu0 0
      %2409 = vmatprep.subr.bf16.mxu0 0
      %2410 = vmatpush2.bf16.msra.mxu0 0
      %2411 = vmatprep.subr.bf16.mxu0 0
      %2412 = vmatpush2.bf16.msra.mxu0 0
      %2413 = vmatprep.subr.bf16.mxu0 0
      %2414 = vmatpush2.bf16.msra.mxu0 0
      %2415 = vmatprep.subr.bf16.mxu0 0
      %2416 = vmatpush2.bf16.msra.mxu0 0
      %2417 = vmatprep.subr.bf16.mxu0 0
      %2418 = vmatpush2.bf16.msra.mxu0 0
      %2419 = vmatprep.subr.bf16.mxu0 0
      %2420 = vmatpush2.bf16.msra.mxu0 0
      %2421 = vmatprep.subr.bf16.mxu0 0
      %2422 = vmatpush2.bf16.msra.mxu0 0
      %2423 = vmatprep.mubr.bf16.mxu0 0
      %2424 = vmatmul.mubr.bf16.gmra.mxu0 %v2344
      %v2425 = vpop.f32.mrf.mxu0
      %v2426 = vadd.f32 0.0, %v2425
      %v2427 = vpop.f32.mrf.mxu0
      %v2428 = vpop.f32.mrf.mxu0
      %v2429 = vadd.f32 0.0, %v2428
      %v2430 = vpop.f32.mrf.mxu0
      %2431 = vmatprep.mubr.bf16.mxu0 0
      %2432 = vmatmul.mubr.bf16.gmra.mxu0 %v2347
      %v2433 = vpop.f32.mrf.mxu0
      %v2434 = vadd.f32 0.0, %v2433
      %v2435 = vpop.f32.mrf.mxu0
      %v2436 = vpop.f32.mrf.mxu0
      %v2437 = vadd.f32 0.0, %v2436
      %v2438 = vpop.f32.mrf.mxu0
      %2439 = vmatprep.mubr.bf16.mxu0 0
      %2440 = vmatmul.mubr.bf16.gmra.mxu0 %v2350
      %v2441 = vpop.f32.mrf.mxu0
      %v2442 = vadd.f32 0.0, %v2441
      %v2443 = vpop.f32.mrf.mxu0
      %v2444 = vpop.f32.mrf.mxu0
      %v2445 = vadd.f32 0.0, %v2444
      %v2446 = vpop.f32.mrf.mxu0
      %2447 = vmatprep.mubr.bf16.mxu0 0
      %2448 = vmatmul.mubr.bf16.gmra.mxu0 %v2353
      %v2449 = vpop.f32.mrf.mxu0
      %v2450 = vadd.f32 0.0, %v2449
      %v2451 = vpop.f32.mrf.mxu0
      %v2452 = vpop.f32.mrf.mxu0
      %v2453 = vadd.f32 0.0, %v2452
      %v2454 = vpop.f32.mrf.mxu0
      %2455 = vmatprep.mubr.bf16.mxu0 0
      %2456 = vmatmul.mubr.bf16.gmra.mxu0 %v2356
      %v2457 = vpop.f32.mrf.mxu0
      %v2458 = vadd.f32 0.0, %v2457
      %v2459 = vpop.f32.mrf.mxu0
      %v2460 = vpop.f32.mrf.mxu0
      %v2461 = vadd.f32 0.0, %v2460
      %v2462 = vpop.f32.mrf.mxu0
      %2463 = vmatprep.mubr.bf16.mxu0 0
      %2464 = vmatmul.mubr.bf16.gmra.mxu0 %v2359
      %v2465 = vpop.f32.mrf.mxu0
      %v2466 = vadd.f32 0.0, %v2465
      %v2467 = vpop.f32.mrf.mxu0
      %v2468 = vpop.f32.mrf.mxu0
      %v2469 = vadd.f32 0.0, %v2468
      %v2470 = vpop.f32.mrf.mxu0
      %2471 = vmatprep.mubr.bf16.mxu0 0
      %2472 = vmatmul.mubr.bf16.gmra.mxu0 %v2362
      %v2473 = vpop.f32.mrf.mxu0
      %v2474 = vadd.f32 0.0, %v2473
      %v2475 = vpop.f32.mrf.mxu0
      %v2476 = vpop.f32.mrf.mxu0
      %v2477 = vadd.f32 0.0, %v2476
      %v2478 = vpop.f32.mrf.mxu0
      %2479 = vmatprep.mubr.bf16.mxu0 0
      %2480 = vmatmul.mubr.bf16.gmra.mxu0 %v2365
      %v2481 = vpop.f32.mrf.mxu0
      %v2482 = vadd.f32 0.0, %v2481
      %v2483 = vpop.f32.mrf.mxu0
      %v2484 = vpop.f32.mrf.mxu0
      %v2485 = vadd.f32 0.0, %v2484
      %v2486 = vpop.f32.mrf.mxu0
      %2487 = vmatprep.mubr.bf16.mxu0 0
      %2488 = vmatmul.mubr.bf16.gmra.mxu0 %v2368
      %v2489 = vpop.f32.mrf.mxu0
      %v2490 = vadd.f32 0.0, %v2489
      %v2491 = vpop.f32.mrf.mxu0
      %v2492 = vpop.f32.mrf.mxu0
      %v2493 = vadd.f32 0.0, %v2492
      %v2494 = vpop.f32.mrf.mxu0
      %2495 = vmatprep.mubr.bf16.mxu0 0
      %2496 = vmatmul.mubr.bf16.gmra.mxu0 %v2371
      %v2497 = vpop.f32.mrf.mxu0
      %v2498 = vadd.f32 0.0, %v2497
      %v2499 = vpop.f32.mrf.mxu0
      %v2500 = vpop.f32.mrf.mxu0
      %v2501 = vadd.f32 0.0, %v2500
      %v2502 = vpop.f32.mrf.mxu0
      %2503 = vmatprep.mubr.bf16.mxu0 0
      %2504 = vmatmul.mubr.bf16.gmra.mxu0 %v2374
      %v2505 = vpop.f32.mrf.mxu0
      %v2506 = vadd.f32 0.0, %v2505
      %v2507 = vpop.f32.mrf.mxu0
      %v2508 = vpop.f32.mrf.mxu0
      %v2509 = vadd.f32 0.0, %v2508
      %v2510 = vpop.f32.mrf.mxu0
      %2511 = vmatprep.mubr.bf16.mxu0 0
      %2512 = vmatmul.mubr.bf16.gmra.mxu0 %v2377
      %v2513 = vpop.f32.mrf.mxu0
      %v2514 = vadd.f32 0.0, %v2513
      %v2515 = vpop.f32.mrf.mxu0
      %v2516 = vpop.f32.mrf.mxu0
      %v2517 = vadd.f32 0.0, %v2516
      %v2518 = vpop.f32.mrf.mxu0
      %2519 = vmatprep.mubr.bf16.mxu0 0
      %2520 = vmatmul.mubr.bf16.gmra.mxu0 %v2380
      %v2521 = vpop.f32.mrf.mxu0
      %v2522 = vadd.f32 0.0, %v2521
      %v2523 = vpop.f32.mrf.mxu0
      %v2524 = vpop.f32.mrf.mxu0
      %v2525 = vadd.f32 0.0, %v2524
      %v2526 = vpop.f32.mrf.mxu0
      %2527 = vmatprep.mubr.bf16.mxu0 0
      %2528 = vmatmul.mubr.bf16.gmra.mxu0 %v2383
      %v2529 = vpop.f32.mrf.mxu0
      %v2530 = vadd.f32 0.0, %v2529
      %v2531 = vpop.f32.mrf.mxu0
      %v2532 = vpop.f32.mrf.mxu0
      %v2533 = vadd.f32 0.0, %v2532
      %v2534 = vpop.f32.mrf.mxu0
      %2535 = vmatprep.mubr.bf16.mxu0 0
      %2536 = vmatmul.mubr.bf16.gmra.mxu0 %v2386
      %v2537 = vpop.f32.mrf.mxu0
      %v2538 = vadd.f32 0.0, %v2537
      %v2539 = vpop.f32.mrf.mxu0
      %v2540 = vpop.f32.mrf.mxu0
      %v2541 = vadd.f32 0.0, %v2540
      %v2542 = vpop.f32.mrf.mxu0
      %2543 = vmatprep.mubr.bf16.mxu0 0
      %2544 = vmatmul.mubr.bf16.gmra.mxu0 %v2389
      %v2545 = vpop.f32.mrf.mxu0
      %v2546 = vadd.f32 0.0, %v2545
      %v2547 = vpop.f32.mrf.mxu0
      %v2548 = vpop.f32.mrf.mxu0
      %v2549 = vadd.f32 0.0, %v2548
      %v2550 = vpop.f32.mrf.mxu0
      %2551 = vdwg.mxu0
      %v2552 = vadd.f32 %v2005, %v2426
      %v2553 = vadd.f32 %v2008, %v2429
      %v2554 = vadd.f32 %v2013, %v2434
      %v2555 = vadd.f32 %v2016, %v2437
      %v2556 = vadd.f32 %v2021, %v2442
      %v2557 = vadd.f32 %v2024, %v2445
      %v2558 = vadd.f32 %v2029, %v2450
      %v2559 = vadd.f32 %v2032, %v2453
      %v2560 = vadd.f32 %v2037, %v2458
      %v2561 = vadd.f32 %v2040, %v2461
      %v2562 = vadd.f32 %v2045, %v2466
      %v2563 = vadd.f32 %v2048, %v2469
      %v2564 = vadd.f32 %v2053, %v2474
      %v2565 = vadd.f32 %v2056, %v2477
      %v2566 = vadd.f32 %v2061, %v2482
      %v2567 = vadd.f32 %v2064, %v2485
      %v2568 = vadd.f32 %v2069, %v2490
      %v2569 = vadd.f32 %v2072, %v2493
      %v2570 = vadd.f32 %v2077, %v2498
      %v2571 = vadd.f32 %v2080, %v2501
      %v2572 = vadd.f32 %v2085, %v2506
      %v2573 = vadd.f32 %v2088, %v2509
      %v2574 = vadd.f32 %v2093, %v2514
      %v2575 = vadd.f32 %v2096, %v2517
      %v2576 = vadd.f32 %v2101, %v2522
      %v2577 = vadd.f32 %v2104, %v2525
      %v2578 = vadd.f32 %v2109, %v2530
      %v2579 = vadd.f32 %v2112, %v2533
      %v2580 = vadd.f32 %v2117, %v2538
      %v2581 = vadd.f32 %v2120, %v2541
      %v2582 = vadd.f32 %v2125, %v2546
      %v2583 = vadd.f32 %v2128, %v2549
      %v2584 = vld [vmem:[%s879] sm:$0xf]
      %v2585 = vld [vmem:[%s879 + $0x4] sm:$0xf]
      %v2586 = vld [vmem:[%s879 + $0x8] sm:$0x1]
      %v2587 = vld [vmem:[%s879 + $0xc] sm:$0xf]
      %v2588 = vld [vmem:[%s879 + $0x10] sm:$0xf]
      %v2589 = vld [vmem:[%s879 + $0x14] sm:$0x1]
      %v2590 = vld [vmem:[%s879 + $0x18] sm:$0xf]
      %v2591 = vld [vmem:[%s879 + $0x1c] sm:$0xf]
      %v2592 = vld [vmem:[%s879 + $0x20] sm:$0x1]
      %v2593 = vld [vmem:[%s879 + $0x24] sm:$0xf]
      %v2594 = vld [vmem:[%s879 + $0x28] sm:$0xf]
      %v2595 = vld [vmem:[%s879 + $0x2c] sm:$0x1]
      %v2596 = vld [vmem:[%s879 + $0x30] sm:$0xf]
      %v2597 = vld [vmem:[%s879 + $0x34] sm:$0xf]
      %v2598 = vld [vmem:[%s879 + $0x38] sm:$0x1]
      %v2599 = vld [vmem:[%s879 + $0x3c] sm:$0xf]
      %v2600 = vld [vmem:[%s879 + $0x40] sm:$0xf]
      %v2601 = vld [vmem:[%s879 + $0x44] sm:$0x1]
      %v2602 = vld [vmem:[%s879 + $0x48] sm:$0xf]
      %v2603 = vld [vmem:[%s879 + $0x4c] sm:$0xf]
      %v2604 = vld [vmem:[%s879 + $0x50] sm:$0x1]
      %v2605 = vld [vmem:[%s879 + $0x54] sm:$0xf]
      %v2606 = vld [vmem:[%s879 + $0x58] sm:$0xf]
      %v2607 = vld [vmem:[%s879 + $0x5c] sm:$0x1]
      %v2608 = vld [vmem:[%s879 + $0x60] sm:$0xf]
      %v2609 = vld [vmem:[%s879 + $0x64] sm:$0xf]
      %v2610 = vld [vmem:[%s879 + $0x68] sm:$0x1]
      %v2611 = vld [vmem:[%s879 + $0x6c] sm:$0xf]
      %v2612 = vld [vmem:[%s879 + $0x70] sm:$0xf]
      %v2613 = vld [vmem:[%s879 + $0x74] sm:$0x1]
      %v2614 = vld [vmem:[%s879 + $0x78] sm:$0xf]
      %v2615 = vld [vmem:[%s879 + $0x7c] sm:$0xf]
      %v2616 = vld [vmem:[%s879 + $0x80] sm:$0x1]
      %v2617 = vld [vmem:[%s879 + $0x84] sm:$0xf]
      %v2618 = vld [vmem:[%s879 + $0x88] sm:$0xf]
      %v2619 = vld [vmem:[%s879 + $0x8c] sm:$0x1]
      %v2620 = vld [vmem:[%s879 + $0x90] sm:$0xf]
      %v2621 = vld [vmem:[%s879 + $0x94] sm:$0xf]
      %v2622 = vld [vmem:[%s879 + $0x98] sm:$0x1]
      %v2623 = vld [vmem:[%s879 + $0x9c] sm:$0xf]
      %v2624 = vld [vmem:[%s879 + $0xa0] sm:$0xf]
      %v2625 = vld [vmem:[%s879 + $0xa4] sm:$0x1]
      %v2626 = vld [vmem:[%s879 + $0xa8] sm:$0xf]
      %v2627 = vld [vmem:[%s879 + $0xac] sm:$0xf]
      %v2628 = vld [vmem:[%s879 + $0xb0] sm:$0x1]
      %v2629 = vld [vmem:[%s879 + $0xb4] sm:$0xf]
      %v2630 = vld [vmem:[%s879 + $0xb8] sm:$0xf]
      %v2631 = vld [vmem:[%s879 + $0xbc] sm:$0x1]
      %s2632 = scalar_lea.vmem %s3, 96
      %v2633 = vld [vmem:[%s2632] sm:$0xf]
      %v2634 = vld [vmem:[%s2632 + $0x4] sm:$0xf]
      %v2635 = vld [vmem:[%s2632 + $0x8] sm:$0xf]
      %v2636 = vld [vmem:[%s2632 + $0xc] sm:$0xf]
      %v2637 = vld [vmem:[%s2632 + $0x10] sm:$0xf]
      %v2638 = vld [vmem:[%s2632 + $0x14] sm:$0xf]
      %v2639 = vld [vmem:[%s2632 + $0x18] sm:$0xf]
      %v2640 = vld [vmem:[%s2632 + $0x1c] sm:$0xf]
      %v2673 = vunpack.c.l.b16 %v2584
      %v2674 = vunpack.c.l.b16 %v2585
      %v2675 = vunpack.c.l.b16 %v2587
      %v2676 = vunpack.c.l.b16 %v2588
      %v2677 = vunpack.c.l.b16 %v2590
      %v2678 = vunpack.c.l.b16 %v2591
      %v2679 = vunpack.c.l.b16 %v2593
      %v2680 = vunpack.c.l.b16 %v2594
      %v2681 = vunpack.c.l.b16 %v2596
      %v2682 = vunpack.c.l.b16 %v2597
      %v2683 = vunpack.c.l.b16 %v2599
      %v2684 = vunpack.c.l.b16 %v2600
      %v2685 = vunpack.c.l.b16 %v2602
      %v2686 = vunpack.c.l.b16 %v2603
      %v2687 = vunpack.c.l.b16 %v2605
      %v2688 = vunpack.c.l.b16 %v2606
      %v2689 = vunpack.c.l.b16 %v2608
      %v2690 = vunpack.c.l.b16 %v2609
      %v2691 = vunpack.c.l.b16 %v2611
      %v2692 = vunpack.c.l.b16 %v2612
      %v2693 = vunpack.c.l.b16 %v2614
      %v2694 = vunpack.c.l.b16 %v2615
      %v2695 = vunpack.c.l.b16 %v2617
      %v2696 = vunpack.c.l.b16 %v2618
      %v2697 = vunpack.c.l.b16 %v2620
      %v2698 = vunpack.c.l.b16 %v2621
      %v2699 = vunpack.c.l.b16 %v2623
      %v2700 = vunpack.c.l.b16 %v2624
      %v2701 = vunpack.c.l.b16 %v2626
      %v2702 = vunpack.c.l.b16 %v2627
      %v2703 = vunpack.c.l.b16 %v2629
      %v2704 = vunpack.c.l.b16 %v2630
      %v2705 = vpack.c.b16 %v2674, %v2673
      %v2706 = vpack.c.b16 %v2676, %v2675
      %v2707 = vpack.c.b16 %v2678, %v2677
      %v2708 = vpack.c.b16 %v2680, %v2679
      %v2709 = vpack.c.b16 %v2682, %v2681
      %v2710 = vpack.c.b16 %v2684, %v2683
      %v2711 = vpack.c.b16 %v2686, %v2685
      %v2712 = vpack.c.b16 %v2688, %v2687
      %v2713 = vpack.c.b16 %v2690, %v2689
      %v2714 = vpack.c.b16 %v2692, %v2691
      %v2715 = vpack.c.b16 %v2694, %v2693
      %v2716 = vpack.c.b16 %v2696, %v2695
      %v2717 = vpack.c.b16 %v2698, %v2697
      %v2718 = vpack.c.b16 %v2700, %v2699
      %v2719 = vpack.c.b16 %v2702, %v2701
      %v2720 = vpack.c.b16 %v2704, %v2703
      %v2729 = vunpack.c.l.b16 %v2633
      %v2730 = vunpack.c.l.b16 %v2634
      %v2731 = vunpack.c.l.b16 %v2635
      %v2732 = vunpack.c.l.b16 %v2636
      %v2733 = vunpack.c.l.b16 %v2637
      %v2734 = vunpack.c.l.b16 %v2638
      %v2735 = vunpack.c.l.b16 %v2639
      %v2736 = vunpack.c.l.b16 %v2640
      %v2737 = vpack.c.b16 %v2730, %v2729
      %v2738 = vpack.c.b16 %v2732, %v2731
      %v2739 = vpack.c.b16 %v2734, %v2733
      %v2740 = vpack.c.b16 %v2736, %v2735
      %v2746 = vsel %vm1608, %v2705, 0
      %v2749 = vsel %vm1608, %v2706, 0
      %v2752 = vsel %vm1608, %v2707, 0
      %v2755 = vsel %vm1608, %v2708, 0
      %v2758 = vsel %vm1608, %v2709, 0
      %v2761 = vsel %vm1608, %v2710, 0
      %v2764 = vsel %vm1608, %v2711, 0
      %v2767 = vsel %vm1608, %v2712, 0
      %v2770 = vsel %vm1608, %v2713, 0
      %v2773 = vsel %vm1608, %v2714, 0
      %v2776 = vsel %vm1608, %v2715, 0
      %v2779 = vsel %vm1608, %v2716, 0
      %v2782 = vsel %vm1608, %v2717, 0
      %v2785 = vsel %vm1608, %v2718, 0
      %v2788 = vsel %vm1608, %v2719, 0
      %v2791 = vsel %vm1608, %v2720, 0
      %2793 = vmatprep.subr.bf16.mxu0 0
      %2794 = vmatpush1.bf16.msra.mxu0 0
      %2795 = vmatprep.subr.bf16.mxu0 0
      %2796 = vmatpush1.bf16.msra.mxu0 0
      %2797 = vmatprep.subr.bf16.mxu0 0
      %2798 = vmatpush1.bf16.msra.mxu0 0
      %2799 = vmatprep.subr.bf16.mxu0 0
      %2800 = vmatpush1.bf16.msra.mxu0 0
      %2801 = vmatprep.subr.bf16.mxu0 0
      %2802 = vmatpush1.bf16.msra.mxu0 %v2740
      %2803 = vmatprep.subr.bf16.mxu0 0
      %2804 = vmatpush1.bf16.msra.mxu0 %v2739
      %2805 = vmatprep.subr.bf16.mxu0 0
      %2806 = vmatpush1.bf16.msra.mxu0 %v2738
      %2807 = vmatprep.subr.bf16.mxu0 0
      %2808 = vmatpush1.bf16.msra.mxu0 %v2737
      %2809 = vmatprep.subr.bf16.mxu0 0
      %2810 = vmatpush2.bf16.msra.mxu0 0
      %2811 = vmatprep.subr.bf16.mxu0 0
      %2812 = vmatpush2.bf16.msra.mxu0 0
      %2813 = vmatprep.subr.bf16.mxu0 0
      %2814 = vmatpush2.bf16.msra.mxu0 0
      %2815 = vmatprep.subr.bf16.mxu0 0
      %2816 = vmatpush2.bf16.msra.mxu0 0
      %2817 = vmatprep.subr.bf16.mxu0 0
      %2818 = vmatpush2.bf16.msra.mxu0 0
      %2819 = vmatprep.subr.bf16.mxu0 0
      %2820 = vmatpush2.bf16.msra.mxu0 0
      %2821 = vmatprep.subr.bf16.mxu0 0
      %2822 = vmatpush2.bf16.msra.mxu0 0
      %2823 = vmatprep.subr.bf16.mxu0 0
      %2824 = vmatpush2.bf16.msra.mxu0 0
      %2825 = vmatprep.mubr.bf16.mxu0 0
      %2826 = vmatmul.mubr.bf16.gmra.mxu0 %v2746
      %v2827 = vpop.f32.mrf.mxu0
      %v2828 = vadd.f32 0.0, %v2827
      %v2829 = vpop.f32.mrf.mxu0
      %v2830 = vpop.f32.mrf.mxu0
      %v2831 = vadd.f32 0.0, %v2830
      %v2832 = vpop.f32.mrf.mxu0
      %2833 = vmatprep.mubr.bf16.mxu0 0
      %2834 = vmatmul.mubr.bf16.gmra.mxu0 %v2749
      %v2835 = vpop.f32.mrf.mxu0
      %v2836 = vadd.f32 0.0, %v2835
      %v2837 = vpop.f32.mrf.mxu0
      %v2838 = vpop.f32.mrf.mxu0
      %v2839 = vadd.f32 0.0, %v2838
      %v2840 = vpop.f32.mrf.mxu0
      %2841 = vmatprep.mubr.bf16.mxu0 0
      %2842 = vmatmul.mubr.bf16.gmra.mxu0 %v2752
      %v2843 = vpop.f32.mrf.mxu0
      %v2844 = vadd.f32 0.0, %v2843
      %v2845 = vpop.f32.mrf.mxu0
      %v2846 = vpop.f32.mrf.mxu0
      %v2847 = vadd.f32 0.0, %v2846
      %v2848 = vpop.f32.mrf.mxu0
      %2849 = vmatprep.mubr.bf16.mxu0 0
      %2850 = vmatmul.mubr.bf16.gmra.mxu0 %v2755
      %v2851 = vpop.f32.mrf.mxu0
      %v2852 = vadd.f32 0.0, %v2851
      %v2853 = vpop.f32.mrf.mxu0
      %v2854 = vpop.f32.mrf.mxu0
      %v2855 = vadd.f32 0.0, %v2854
      %v2856 = vpop.f32.mrf.mxu0
      %2857 = vmatprep.mubr.bf16.mxu0 0
      %2858 = vmatmul.mubr.bf16.gmra.mxu0 %v2758
      %v2859 = vpop.f32.mrf.mxu0
      %v2860 = vadd.f32 0.0, %v2859
      %v2861 = vpop.f32.mrf.mxu0
      %v2862 = vpop.f32.mrf.mxu0
      %v2863 = vadd.f32 0.0, %v2862
      %v2864 = vpop.f32.mrf.mxu0
      %2865 = vmatprep.mubr.bf16.mxu0 0
      %2866 = vmatmul.mubr.bf16.gmra.mxu0 %v2761
      %v2867 = vpop.f32.mrf.mxu0
      %v2868 = vadd.f32 0.0, %v2867
      %v2869 = vpop.f32.mrf.mxu0
      %v2870 = vpop.f32.mrf.mxu0
      %v2871 = vadd.f32 0.0, %v2870
      %v2872 = vpop.f32.mrf.mxu0
      %2873 = vmatprep.mubr.bf16.mxu0 0
      %2874 = vmatmul.mubr.bf16.gmra.mxu0 %v2764
      %v2875 = vpop.f32.mrf.mxu0
      %v2876 = vadd.f32 0.0, %v2875
      %v2877 = vpop.f32.mrf.mxu0
      %v2878 = vpop.f32.mrf.mxu0
      %v2879 = vadd.f32 0.0, %v2878
      %v2880 = vpop.f32.mrf.mxu0
      %2881 = vmatprep.mubr.bf16.mxu0 0
      %2882 = vmatmul.mubr.bf16.gmra.mxu0 %v2767
      %v2883 = vpop.f32.mrf.mxu0
      %v2884 = vadd.f32 0.0, %v2883
      %v2885 = vpop.f32.mrf.mxu0
      %v2886 = vpop.f32.mrf.mxu0
      %v2887 = vadd.f32 0.0, %v2886
      %v2888 = vpop.f32.mrf.mxu0
      %2889 = vmatprep.mubr.bf16.mxu0 0
      %2890 = vmatmul.mubr.bf16.gmra.mxu0 %v2770
      %v2891 = vpop.f32.mrf.mxu0
      %v2892 = vadd.f32 0.0, %v2891
      %v2893 = vpop.f32.mrf.mxu0
      %v2894 = vpop.f32.mrf.mxu0
      %v2895 = vadd.f32 0.0, %v2894
      %v2896 = vpop.f32.mrf.mxu0
      %2897 = vmatprep.mubr.bf16.mxu0 0
      %2898 = vmatmul.mubr.bf16.gmra.mxu0 %v2773
      %v2899 = vpop.f32.mrf.mxu0
      %v2900 = vadd.f32 0.0, %v2899
      %v2901 = vpop.f32.mrf.mxu0
      %v2902 = vpop.f32.mrf.mxu0
      %v2903 = vadd.f32 0.0, %v2902
      %v2904 = vpop.f32.mrf.mxu0
      %2905 = vmatprep.mubr.bf16.mxu0 0
      %2906 = vmatmul.mubr.bf16.gmra.mxu0 %v2776
      %v2907 = vpop.f32.mrf.mxu0
      %v2908 = vadd.f32 0.0, %v2907
      %v2909 = vpop.f32.mrf.mxu0
      %v2910 = vpop.f32.mrf.mxu0
      %v2911 = vadd.f32 0.0, %v2910
      %v2912 = vpop.f32.mrf.mxu0
      %2913 = vmatprep.mubr.bf16.mxu0 0
      %2914 = vmatmul.mubr.bf16.gmra.mxu0 %v2779
      %v2915 = vpop.f32.mrf.mxu0
      %v2916 = vadd.f32 0.0, %v2915
      %v2917 = vpop.f32.mrf.mxu0
      %v2918 = vpop.f32.mrf.mxu0
      %v2919 = vadd.f32 0.0, %v2918
      %v2920 = vpop.f32.mrf.mxu0
      %2921 = vmatprep.mubr.bf16.mxu0 0
      %2922 = vmatmul.mubr.bf16.gmra.mxu0 %v2782
      %v2923 = vpop.f32.mrf.mxu0
      %v2924 = vadd.f32 0.0, %v2923
      %v2925 = vpop.f32.mrf.mxu0
      %v2926 = vpop.f32.mrf.mxu0
      %v2927 = vadd.f32 0.0, %v2926
      %v2928 = vpop.f32.mrf.mxu0
      %2929 = vmatprep.mubr.bf16.mxu0 0
      %2930 = vmatmul.mubr.bf16.gmra.mxu0 %v2785
      %v2931 = vpop.f32.mrf.mxu0
      %v2932 = vadd.f32 0.0, %v2931
      %v2933 = vpop.f32.mrf.mxu0
      %v2934 = vpop.f32.mrf.mxu0
      %v2935 = vadd.f32 0.0, %v2934
      %v2936 = vpop.f32.mrf.mxu0
      %2937 = vmatprep.mubr.bf16.mxu0 0
      %2938 = vmatmul.mubr.bf16.gmra.mxu0 %v2788
      %v2939 = vpop.f32.mrf.mxu0
      %v2940 = vadd.f32 0.0, %v2939
      %v2941 = vpop.f32.mrf.mxu0
      %v2942 = vpop.f32.mrf.mxu0
      %v2943 = vadd.f32 0.0, %v2942
      %v2944 = vpop.f32.mrf.mxu0
      %2945 = vmatprep.mubr.bf16.mxu0 0
      %2946 = vmatmul.mubr.bf16.gmra.mxu0 %v2791
      %v2947 = vpop.f32.mrf.mxu0
      %v2948 = vadd.f32 0.0, %v2947
      %v2949 = vpop.f32.mrf.mxu0
      %v2950 = vpop.f32.mrf.mxu0
      %v2951 = vadd.f32 0.0, %v2950
      %v2952 = vpop.f32.mrf.mxu0
      %2953 = vdwg.mxu0
      %v2954 = vadd.f32 %v2552, %v2828
      %v2955 = vadd.f32 %v2553, %v2831
      %v2956 = vadd.f32 %v2554, %v2836
      %v2957 = vadd.f32 %v2555, %v2839
      %v2958 = vadd.f32 %v2556, %v2844
      %v2959 = vadd.f32 %v2557, %v2847
      %v2960 = vadd.f32 %v2558, %v2852
      %v2961 = vadd.f32 %v2559, %v2855
      %v2962 = vadd.f32 %v2560, %v2860
      %v2963 = vadd.f32 %v2561, %v2863
      %v2964 = vadd.f32 %v2562, %v2868
      %v2965 = vadd.f32 %v2563, %v2871
      %v2966 = vadd.f32 %v2564, %v2876
      %v2967 = vadd.f32 %v2565, %v2879
      %v2968 = vadd.f32 %v2566, %v2884
      %v2969 = vadd.f32 %v2567, %v2887
      %v2970 = vadd.f32 %v2568, %v2892
      %v2971 = vadd.f32 %v2569, %v2895
      %v2972 = vadd.f32 %v2570, %v2900
      %v2973 = vadd.f32 %v2571, %v2903
      %v2974 = vadd.f32 %v2572, %v2908
      %v2975 = vadd.f32 %v2573, %v2911
      %v2976 = vadd.f32 %v2574, %v2916
      %v2977 = vadd.f32 %v2575, %v2919
      %v2978 = vadd.f32 %v2576, %v2924
      %v2979 = vadd.f32 %v2577, %v2927
      %v2980 = vadd.f32 %v2578, %v2932
      %v2981 = vadd.f32 %v2579, %v2935
      %v2982 = vadd.f32 %v2580, %v2940
      %v2983 = vadd.f32 %v2581, %v2943
      %v2984 = vadd.f32 %v2582, %v2948
      %v2985 = vadd.f32 %v2583, %v2951
      %v2987 = vshrl.u32 %v2584, 16
      %v2989 = vrot.slane %v2987, 4
      %v2990 = vshll.u32 %v2584, 16
      %v2992 = vrot.slane %v2990, 5
      %v2993 = vor.u32 %v2989, %v2992
      %v2994 = vrot.slane %v2993, 4
      %v2996 = vshll.u32 %v2585, 16
      %v2998 = vrot.slane %v2996, 5
      %v2999 = vsel %vm1142, %v2994, %v2998
      %v3000 = vshrl.u32 %v2585, 16
      %v3002 = vrot.slane %v3000, 4
      %v3003 = vor.u32 %v3002, %v2998
      %v3004 = vrot.slane %v3003, 4
      %v3006 = vshll.u32 %v2586, 16
      %v3008 = vrot.slane %v3006, 5
      %v3009 = vsel %vm1142, %v3004, %v3008
      %v3011 = vshrl.u32 %v2587, 16
      %v3013 = vrot.slane %v3011, 4
      %v3014 = vshll.u32 %v2587, 16
      %v3016 = vrot.slane %v3014, 5
      %v3017 = vor.u32 %v3013, %v3016
      %v3018 = vrot.slane %v3017, 4
      %v3020 = vshll.u32 %v2588, 16
      %v3022 = vrot.slane %v3020, 5
      %v3023 = vsel %vm1142, %v3018, %v3022
      %v3024 = vshrl.u32 %v2588, 16
      %v3026 = vrot.slane %v3024, 4
      %v3027 = vor.u32 %v3026, %v3022
      %v3028 = vrot.slane %v3027, 4
      %v3030 = vshll.u32 %v2589, 16
      %v3032 = vrot.slane %v3030, 5
      %v3033 = vsel %vm1142, %v3028, %v3032
      %v3035 = vshrl.u32 %v2590, 16
      %v3037 = vrot.slane %v3035, 4
      %v3038 = vshll.u32 %v2590, 16
      %v3040 = vrot.slane %v3038, 5
      %v3041 = vor.u32 %v3037, %v3040
      %v3042 = vrot.slane %v3041, 4
      %v3044 = vshll.u32 %v2591, 16
      %v3046 = vrot.slane %v3044, 5
      %v3047 = vsel %vm1142, %v3042, %v3046
      %v3048 = vshrl.u32 %v2591, 16
      %v3050 = vrot.slane %v3048, 4
      %v3051 = vor.u32 %v3050, %v3046
      %v3052 = vrot.slane %v3051, 4
      %v3054 = vshll.u32 %v2592, 16
      %v3056 = vrot.slane %v3054, 5
      %v3057 = vsel %vm1142, %v3052, %v3056
      %v3059 = vshrl.u32 %v2593, 16
      %v3061 = vrot.slane %v3059, 4
      %v3062 = vshll.u32 %v2593, 16
      %v3064 = vrot.slane %v3062, 5
      %v3065 = vor.u32 %v3061, %v3064
      %v3066 = vrot.slane %v3065, 4
      %v3068 = vshll.u32 %v2594, 16
      %v3070 = vrot.slane %v3068, 5
      %v3071 = vsel %vm1142, %v3066, %v3070
      %v3072 = vshrl.u32 %v2594, 16
      %v3074 = vrot.slane %v3072, 4
      %v3075 = vor.u32 %v3074, %v3070
      %v3076 = vrot.slane %v3075, 4
      %v3078 = vshll.u32 %v2595, 16
      %v3080 = vrot.slane %v3078, 5
      %v3081 = vsel %vm1142, %v3076, %v3080
      %v3083 = vshrl.u32 %v2596, 16
      %v3085 = vrot.slane %v3083, 4
      %v3086 = vshll.u32 %v2596, 16
      %v3088 = vrot.slane %v3086, 5
      %v3089 = vor.u32 %v3085, %v3088
      %v3090 = vrot.slane %v3089, 4
      %v3092 = vshll.u32 %v2597, 16
      %v3094 = vrot.slane %v3092, 5
      %v3095 = vsel %vm1142, %v3090, %v3094
      %v3096 = vshrl.u32 %v2597, 16
      %v3098 = vrot.slane %v3096, 4
      %v3099 = vor.u32 %v3098, %v3094
      %v3100 = vrot.slane %v3099, 4
      %v3102 = vshll.u32 %v2598, 16
      %v3104 = vrot.slane %v3102, 5
      %v3105 = vsel %vm1142, %v3100, %v3104
      %v3107 = vshrl.u32 %v2599, 16
      %v3109 = vrot.slane %v3107, 4
      %v3110 = vshll.u32 %v2599, 16
      %v3112 = vrot.slane %v3110, 5
      %v3113 = vor.u32 %v3109, %v3112
      %v3114 = vrot.slane %v3113, 4
      %v3116 = vshll.u32 %v2600, 16
      %v3118 = vrot.slane %v3116, 5
      %v3119 = vsel %vm1142, %v3114, %v3118
      %v3120 = vshrl.u32 %v2600, 16
      %v3122 = vrot.slane %v3120, 4
      %v3123 = vor.u32 %v3122, %v3118
      %v3124 = vrot.slane %v3123, 4
      %v3126 = vshll.u32 %v2601, 16
      %v3128 = vrot.slane %v3126, 5
      %v3129 = vsel %vm1142, %v3124, %v3128
      %v3131 = vshrl.u32 %v2602, 16
      %v3133 = vrot.slane %v3131, 4
      %v3134 = vshll.u32 %v2602, 16
      %v3136 = vrot.slane %v3134, 5
      %v3137 = vor.u32 %v3133, %v3136
      %v3138 = vrot.slane %v3137, 4
      %v3140 = vshll.u32 %v2603, 16
      %v3142 = vrot.slane %v3140, 5
      %v3143 = vsel %vm1142, %v3138, %v3142
      %v3144 = vshrl.u32 %v2603, 16
      %v3146 = vrot.slane %v3144, 4
      %v3147 = vor.u32 %v3146, %v3142
      %v3148 = vrot.slane %v3147, 4
      %v3150 = vshll.u32 %v2604, 16
      %v3152 = vrot.slane %v3150, 5
      %v3153 = vsel %vm1142, %v3148, %v3152
      %v3155 = vshrl.u32 %v2605, 16
      %v3157 = vrot.slane %v3155, 4
      %v3158 = vshll.u32 %v2605, 16
      %v3160 = vrot.slane %v3158, 5
      %v3161 = vor.u32 %v3157, %v3160
      %v3162 = vrot.slane %v3161, 4
      %v3164 = vshll.u32 %v2606, 16
      %v3166 = vrot.slane %v3164, 5
      %v3167 = vsel %vm1142, %v3162, %v3166
      %v3168 = vshrl.u32 %v2606, 16
      %v3170 = vrot.slane %v3168, 4
      %v3171 = vor.u32 %v3170, %v3166
      %v3172 = vrot.slane %v3171, 4
      %v3174 = vshll.u32 %v2607, 16
      %v3176 = vrot.slane %v3174, 5
      %v3177 = vsel %vm1142, %v3172, %v3176
      %v3179 = vshrl.u32 %v2608, 16
      %v3181 = vrot.slane %v3179, 4
      %v3182 = vshll.u32 %v2608, 16
      %v3184 = vrot.slane %v3182, 5
      %v3185 = vor.u32 %v3181, %v3184
      %v3186 = vrot.slane %v3185, 4
      %v3188 = vshll.u32 %v2609, 16
      %v3190 = vrot.slane %v3188, 5
      %v3191 = vsel %vm1142, %v3186, %v3190
      %v3192 = vshrl.u32 %v2609, 16
      %v3194 = vrot.slane %v3192, 4
      %v3195 = vor.u32 %v3194, %v3190
      %v3196 = vrot.slane %v3195, 4
      %v3198 = vshll.u32 %v2610, 16
      %v3200 = vrot.slane %v3198, 5
      %v3201 = vsel %vm1142, %v3196, %v3200
      %v3203 = vshrl.u32 %v2611, 16
      %v3205 = vrot.slane %v3203, 4
      %v3206 = vshll.u32 %v2611, 16
      %v3208 = vrot.slane %v3206, 5
      %v3209 = vor.u32 %v3205, %v3208
      %v3210 = vrot.slane %v3209, 4
      %v3212 = vshll.u32 %v2612, 16
      %v3214 = vrot.slane %v3212, 5
      %v3215 = vsel %vm1142, %v3210, %v3214
      %v3216 = vshrl.u32 %v2612, 16
      %v3218 = vrot.slane %v3216, 4
      %v3219 = vor.u32 %v3218, %v3214
      %v3220 = vrot.slane %v3219, 4
      %v3222 = vshll.u32 %v2613, 16
      %v3224 = vrot.slane %v3222, 5
      %v3225 = vsel %vm1142, %v3220, %v3224
      %v3227 = vshrl.u32 %v2614, 16
      %v3229 = vrot.slane %v3227, 4
      %v3230 = vshll.u32 %v2614, 16
      %v3232 = vrot.slane %v3230, 5
      %v3233 = vor.u32 %v3229, %v3232
      %v3234 = vrot.slane %v3233, 4
      %v3236 = vshll.u32 %v2615, 16
      %v3238 = vrot.slane %v3236, 5
      %v3239 = vsel %vm1142, %v3234, %v3238
      %v3240 = vshrl.u32 %v2615, 16
      %v3242 = vrot.slane %v3240, 4
      %v3243 = vor.u32 %v3242, %v3238
      %v3244 = vrot.slane %v3243, 4
      %v3246 = vshll.u32 %v2616, 16
      %v3248 = vrot.slane %v3246, 5
      %v3249 = vsel %vm1142, %v3244, %v3248
      %v3251 = vshrl.u32 %v2617, 16
      %v3253 = vrot.slane %v3251, 4
      %v3254 = vshll.u32 %v2617, 16
      %v3256 = vrot.slane %v3254, 5
      %v3257 = vor.u32 %v3253, %v3256
      %v3258 = vrot.slane %v3257, 4
      %v3260 = vshll.u32 %v2618, 16
      %v3262 = vrot.slane %v3260, 5
      %v3263 = vsel %vm1142, %v3258, %v3262
      %v3264 = vshrl.u32 %v2618, 16
      %v3266 = vrot.slane %v3264, 4
      %v3267 = vor.u32 %v3266, %v3262
      %v3268 = vrot.slane %v3267, 4
      %v3270 = vshll.u32 %v2619, 16
      %v3272 = vrot.slane %v3270, 5
      %v3273 = vsel %vm1142, %v3268, %v3272
      %v3275 = vshrl.u32 %v2620, 16
      %v3277 = vrot.slane %v3275, 4
      %v3278 = vshll.u32 %v2620, 16
      %v3280 = vrot.slane %v3278, 5
      %v3281 = vor.u32 %v3277, %v3280
      %v3282 = vrot.slane %v3281, 4
      %v3284 = vshll.u32 %v2621, 16
      %v3286 = vrot.slane %v3284, 5
      %v3287 = vsel %vm1142, %v3282, %v3286
      %v3288 = vshrl.u32 %v2621, 16
      %v3290 = vrot.slane %v3288, 4
      %v3291 = vor.u32 %v3290, %v3286
      %v3292 = vrot.slane %v3291, 4
      %v3294 = vshll.u32 %v2622, 16
      %v3296 = vrot.slane %v3294, 5
      %v3297 = vsel %vm1142, %v3292, %v3296
      %v3299 = vshrl.u32 %v2623, 16
      %v3301 = vrot.slane %v3299, 4
      %v3302 = vshll.u32 %v2623, 16
      %v3304 = vrot.slane %v3302, 5
      %v3305 = vor.u32 %v3301, %v3304
      %v3306 = vrot.slane %v3305, 4
      %v3308 = vshll.u32 %v2624, 16
      %v3310 = vrot.slane %v3308, 5
      %v3311 = vsel %vm1142, %v3306, %v3310
      %v3312 = vshrl.u32 %v2624, 16
      %v3314 = vrot.slane %v3312, 4
      %v3315 = vor.u32 %v3314, %v3310
      %v3316 = vrot.slane %v3315, 4
      %v3318 = vshll.u32 %v2625, 16
      %v3320 = vrot.slane %v3318, 5
      %v3321 = vsel %vm1142, %v3316, %v3320
      %v3323 = vshrl.u32 %v2626, 16
      %v3325 = vrot.slane %v3323, 4
      %v3326 = vshll.u32 %v2626, 16
      %v3328 = vrot.slane %v3326, 5
      %v3329 = vor.u32 %v3325, %v3328
      %v3330 = vrot.slane %v3329, 4
      %v3332 = vshll.u32 %v2627, 16
      %v3334 = vrot.slane %v3332, 5
      %v3335 = vsel %vm1142, %v3330, %v3334
      %v3336 = vshrl.u32 %v2627, 16
      %v3338 = vrot.slane %v3336, 4
      %v3339 = vor.u32 %v3338, %v3334
      %v3340 = vrot.slane %v3339, 4
      %v3342 = vshll.u32 %v2628, 16
      %v3344 = vrot.slane %v3342, 5
      %v3345 = vsel %vm1142, %v3340, %v3344
      %v3347 = vshrl.u32 %v2629, 16
      %v3349 = vrot.slane %v3347, 4
      %v3350 = vshll.u32 %v2629, 16
      %v3352 = vrot.slane %v3350, 5
      %v3353 = vor.u32 %v3349, %v3352
      %v3354 = vrot.slane %v3353, 4
      %v3356 = vshll.u32 %v2630, 16
      %v3358 = vrot.slane %v3356, 5
      %v3359 = vsel %vm1142, %v3354, %v3358
      %v3360 = vshrl.u32 %v2630, 16
      %v3362 = vrot.slane %v3360, 4
      %v3363 = vor.u32 %v3362, %v3358
      %v3364 = vrot.slane %v3363, 4
      %v3366 = vshll.u32 %v2631, 16
      %v3368 = vrot.slane %v3366, 5
      %v3369 = vsel %vm1142, %v3364, %v3368
      %s3370 = scalar_lea.vmem %s3, 128
      %v3371 = vld [vmem:[%s3370] sm:$0xf]
      %v3372 = vld [vmem:[%s3370 + $0x4] sm:$0xf]
      %v3373 = vld [vmem:[%s3370 + $0x8] sm:$0xf]
      %v3374 = vld [vmem:[%s3370 + $0xc] sm:$0xf]
      %v3375 = vld [vmem:[%s3370 + $0x10] sm:$0xf]
      %v3376 = vld [vmem:[%s3370 + $0x14] sm:$0xf]
      %v3377 = vld [vmem:[%s3370 + $0x18] sm:$0xf]
      %v3378 = vld [vmem:[%s3370 + $0x1c] sm:$0xf]
      %v3379 = vunpack.c.l.b16 %v2999
      %v3380 = vunpack.c.l.b16 %v3009
      %v3381 = vunpack.c.l.b16 %v3023
      %v3382 = vunpack.c.l.b16 %v3033
      %v3383 = vunpack.c.l.b16 %v3047
      %v3384 = vunpack.c.l.b16 %v3057
      %v3385 = vunpack.c.l.b16 %v3071
      %v3386 = vunpack.c.l.b16 %v3081
      %v3387 = vunpack.c.l.b16 %v3095
      %v3388 = vunpack.c.l.b16 %v3105
      %v3389 = vunpack.c.l.b16 %v3119
      %v3390 = vunpack.c.l.b16 %v3129
      %v3391 = vunpack.c.l.b16 %v3143
      %v3392 = vunpack.c.l.b16 %v3153
      %v3393 = vunpack.c.l.b16 %v3167
      %v3394 = vunpack.c.l.b16 %v3177
      %v3395 = vunpack.c.l.b16 %v3191
      %v3396 = vunpack.c.l.b16 %v3201
      %v3397 = vunpack.c.l.b16 %v3215
      %v3398 = vunpack.c.l.b16 %v3225
      %v3399 = vunpack.c.l.b16 %v3239
      %v3400 = vunpack.c.l.b16 %v3249
      %v3401 = vunpack.c.l.b16 %v3263
      %v3402 = vunpack.c.l.b16 %v3273
      %v3403 = vunpack.c.l.b16 %v3287
      %v3404 = vunpack.c.l.b16 %v3297
      %v3405 = vunpack.c.l.b16 %v3311
      %v3406 = vunpack.c.l.b16 %v3321
      %v3407 = vunpack.c.l.b16 %v3335
      %v3408 = vunpack.c.l.b16 %v3345
      %v3409 = vunpack.c.l.b16 %v3359
      %v3410 = vunpack.c.l.b16 %v3369
      %v3411 = vpack.c.b16 %v3380, %v3379
      %v3412 = vpack.c.b16 %v3382, %v3381
      %v3413 = vpack.c.b16 %v3384, %v3383
      %v3414 = vpack.c.b16 %v3386, %v3385
      %v3415 = vpack.c.b16 %v3388, %v3387
      %v3416 = vpack.c.b16 %v3390, %v3389
      %v3417 = vpack.c.b16 %v3392, %v3391
      %v3418 = vpack.c.b16 %v3394, %v3393
      %v3419 = vpack.c.b16 %v3396, %v3395
      %v3420 = vpack.c.b16 %v3398, %v3397
      %v3421 = vpack.c.b16 %v3400, %v3399
      %v3422 = vpack.c.b16 %v3402, %v3401
      %v3423 = vpack.c.b16 %v3404, %v3403
      %v3424 = vpack.c.b16 %v3406, %v3405
      %v3425 = vpack.c.b16 %v3408, %v3407
      %v3426 = vpack.c.b16 %v3410, %v3409
      %v3435 = vunpack.c.l.b16 %v3371
      %v3436 = vunpack.c.l.b16 %v3372
      %v3437 = vunpack.c.l.b16 %v3373
      %v3438 = vunpack.c.l.b16 %v3374
      %v3439 = vunpack.c.l.b16 %v3375
      %v3440 = vunpack.c.l.b16 %v3376
      %v3441 = vunpack.c.l.b16 %v3377
      %v3442 = vunpack.c.l.b16 %v3378
      %v3443 = vpack.c.b16 %v3436, %v3435
      %v3444 = vpack.c.b16 %v3438, %v3437
      %v3445 = vpack.c.b16 %v3440, %v3439
      %v3446 = vpack.c.b16 %v3442, %v3441
      %v3452 = vsel %vm1608, %v3411, 0
      %v3455 = vsel %vm1608, %v3412, 0
      %v3458 = vsel %vm1608, %v3413, 0
      %v3461 = vsel %vm1608, %v3414, 0
      %v3464 = vsel %vm1608, %v3415, 0
      %v3467 = vsel %vm1608, %v3416, 0
      %v3470 = vsel %vm1608, %v3417, 0
      %v3473 = vsel %vm1608, %v3418, 0
      %v3476 = vsel %vm1608, %v3419, 0
      %v3479 = vsel %vm1608, %v3420, 0
      %v3482 = vsel %vm1608, %v3421, 0
      %v3485 = vsel %vm1608, %v3422, 0
      %v3488 = vsel %vm1608, %v3423, 0
      %v3491 = vsel %vm1608, %v3424, 0
      %v3494 = vsel %vm1608, %v3425, 0
      %v3497 = vsel %vm1608, %v3426, 0
      %3499 = vmatprep.subr.bf16.mxu0 0
      %3500 = vmatpush1.bf16.msra.mxu0 0
      %3501 = vmatprep.subr.bf16.mxu0 0
      %3502 = vmatpush1.bf16.msra.mxu0 0
      %3503 = vmatprep.subr.bf16.mxu0 0
      %3504 = vmatpush1.bf16.msra.mxu0 0
      %3505 = vmatprep.subr.bf16.mxu0 0
      %3506 = vmatpush1.bf16.msra.mxu0 0
      %3507 = vmatprep.subr.bf16.mxu0 0
      %3508 = vmatpush1.bf16.msra.mxu0 %v3446
      %3509 = vmatprep.subr.bf16.mxu0 0
      %3510 = vmatpush1.bf16.msra.mxu0 %v3445
      %3511 = vmatprep.subr.bf16.mxu0 0
      %3512 = vmatpush1.bf16.msra.mxu0 %v3444
      %3513 = vmatprep.subr.bf16.mxu0 0
      %3514 = vmatpush1.bf16.msra.mxu0 %v3443
      %3515 = vmatprep.subr.bf16.mxu0 0
      %3516 = vmatpush2.bf16.msra.mxu0 0
      %3517 = vmatprep.subr.bf16.mxu0 0
      %3518 = vmatpush2.bf16.msra.mxu0 0
      %3519 = vmatprep.subr.bf16.mxu0 0
      %3520 = vmatpush2.bf16.msra.mxu0 0
      %3521 = vmatprep.subr.bf16.mxu0 0
      %3522 = vmatpush2.bf16.msra.mxu0 0
      %3523 = vmatprep.subr.bf16.mxu0 0
      %3524 = vmatpush2.bf16.msra.mxu0 0
      %3525 = vmatprep.subr.bf16.mxu0 0
      %3526 = vmatpush2.bf16.msra.mxu0 0
      %3527 = vmatprep.subr.bf16.mxu0 0
      %3528 = vmatpush2.bf16.msra.mxu0 0
      %3529 = vmatprep.subr.bf16.mxu0 0
      %3530 = vmatpush2.bf16.msra.mxu0 0
      %3531 = vmatprep.mubr.bf16.mxu0 0
      %3532 = vmatmul.mubr.bf16.gmra.mxu0 %v3452
      %v3533 = vpop.f32.mrf.mxu0
      %v3534 = vadd.f32 0.0, %v3533
      %v3535 = vpop.f32.mrf.mxu0
      %v3536 = vpop.f32.mrf.mxu0
      %v3537 = vadd.f32 0.0, %v3536
      %v3538 = vpop.f32.mrf.mxu0
      %3539 = vmatprep.mubr.bf16.mxu0 0
      %3540 = vmatmul.mubr.bf16.gmra.mxu0 %v3455
      %v3541 = vpop.f32.mrf.mxu0
      %v3542 = vadd.f32 0.0, %v3541
      %v3543 = vpop.f32.mrf.mxu0
      %v3544 = vpop.f32.mrf.mxu0
      %v3545 = vadd.f32 0.0, %v3544
      %v3546 = vpop.f32.mrf.mxu0
      %3547 = vmatprep.mubr.bf16.mxu0 0
      %3548 = vmatmul.mubr.bf16.gmra.mxu0 %v3458
      %v3549 = vpop.f32.mrf.mxu0
      %v3550 = vadd.f32 0.0, %v3549
      %v3551 = vpop.f32.mrf.mxu0
      %v3552 = vpop.f32.mrf.mxu0
      %v3553 = vadd.f32 0.0, %v3552
      %v3554 = vpop.f32.mrf.mxu0
      %3555 = vmatprep.mubr.bf16.mxu0 0
      %3556 = vmatmul.mubr.bf16.gmra.mxu0 %v3461
      %v3557 = vpop.f32.mrf.mxu0
      %v3558 = vadd.f32 0.0, %v3557
      %v3559 = vpop.f32.mrf.mxu0
      %v3560 = vpop.f32.mrf.mxu0
      %v3561 = vadd.f32 0.0, %v3560
      %v3562 = vpop.f32.mrf.mxu0
      %3563 = vmatprep.mubr.bf16.mxu0 0
      %3564 = vmatmul.mubr.bf16.gmra.mxu0 %v3464
      %v3565 = vpop.f32.mrf.mxu0
      %v3566 = vadd.f32 0.0, %v3565
      %v3567 = vpop.f32.mrf.mxu0
      %v3568 = vpop.f32.mrf.mxu0
      %v3569 = vadd.f32 0.0, %v3568
      %v3570 = vpop.f32.mrf.mxu0
      %3571 = vmatprep.mubr.bf16.mxu0 0
      %3572 = vmatmul.mubr.bf16.gmra.mxu0 %v3467
      %v3573 = vpop.f32.mrf.mxu0
      %v3574 = vadd.f32 0.0, %v3573
      %v3575 = vpop.f32.mrf.mxu0
      %v3576 = vpop.f32.mrf.mxu0
      %v3577 = vadd.f32 0.0, %v3576
      %v3578 = vpop.f32.mrf.mxu0
      %3579 = vmatprep.mubr.bf16.mxu0 0
      %3580 = vmatmul.mubr.bf16.gmra.mxu0 %v3470
      %v3581 = vpop.f32.mrf.mxu0
      %v3582 = vadd.f32 0.0, %v3581
      %v3583 = vpop.f32.mrf.mxu0
      %v3584 = vpop.f32.mrf.mxu0
      %v3585 = vadd.f32 0.0, %v3584
      %v3586 = vpop.f32.mrf.mxu0
      %3587 = vmatprep.mubr.bf16.mxu0 0
      %3588 = vmatmul.mubr.bf16.gmra.mxu0 %v3473
      %v3589 = vpop.f32.mrf.mxu0
      %v3590 = vadd.f32 0.0, %v3589
      %v3591 = vpop.f32.mrf.mxu0
      %v3592 = vpop.f32.mrf.mxu0
      %v3593 = vadd.f32 0.0, %v3592
      %v3594 = vpop.f32.mrf.mxu0
      %3595 = vmatprep.mubr.bf16.mxu0 0
      %3596 = vmatmul.mubr.bf16.gmra.mxu0 %v3476
      %v3597 = vpop.f32.mrf.mxu0
      %v3598 = vadd.f32 0.0, %v3597
      %v3599 = vpop.f32.mrf.mxu0
      %v3600 = vpop.f32.mrf.mxu0
      %v3601 = vadd.f32 0.0, %v3600
      %v3602 = vpop.f32.mrf.mxu0
      %3603 = vmatprep.mubr.bf16.mxu0 0
      %3604 = vmatmul.mubr.bf16.gmra.mxu0 %v3479
      %v3605 = vpop.f32.mrf.mxu0
      %v3606 = vadd.f32 0.0, %v3605
      %v3607 = vpop.f32.mrf.mxu0
      %v3608 = vpop.f32.mrf.mxu0
      %v3609 = vadd.f32 0.0, %v3608
      %v3610 = vpop.f32.mrf.mxu0
      %3611 = vmatprep.mubr.bf16.mxu0 0
      %3612 = vmatmul.mubr.bf16.gmra.mxu0 %v3482
      %v3613 = vpop.f32.mrf.mxu0
      %v3614 = vadd.f32 0.0, %v3613
      %v3615 = vpop.f32.mrf.mxu0
      %v3616 = vpop.f32.mrf.mxu0
      %v3617 = vadd.f32 0.0, %v3616
      %v3618 = vpop.f32.mrf.mxu0
      %3619 = vmatprep.mubr.bf16.mxu0 0
      %3620 = vmatmul.mubr.bf16.gmra.mxu0 %v3485
      %v3621 = vpop.f32.mrf.mxu0
      %v3622 = vadd.f32 0.0, %v3621
      %v3623 = vpop.f32.mrf.mxu0
      %v3624 = vpop.f32.mrf.mxu0
      %v3625 = vadd.f32 0.0, %v3624
      %v3626 = vpop.f32.mrf.mxu0
      %3627 = vmatprep.mubr.bf16.mxu0 0
      %3628 = vmatmul.mubr.bf16.gmra.mxu0 %v3488
      %v3629 = vpop.f32.mrf.mxu0
      %v3630 = vadd.f32 0.0, %v3629
      %v3631 = vpop.f32.mrf.mxu0
      %v3632 = vpop.f32.mrf.mxu0
      %v3633 = vadd.f32 0.0, %v3632
      %v3634 = vpop.f32.mrf.mxu0
      %3635 = vmatprep.mubr.bf16.mxu0 0
      %3636 = vmatmul.mubr.bf16.gmra.mxu0 %v3491
      %v3637 = vpop.f32.mrf.mxu0
      %v3638 = vadd.f32 0.0, %v3637
      %v3639 = vpop.f32.mrf.mxu0
      %v3640 = vpop.f32.mrf.mxu0
      %v3641 = vadd.f32 0.0, %v3640
      %v3642 = vpop.f32.mrf.mxu0
      %3643 = vmatprep.mubr.bf16.mxu0 0
      %3644 = vmatmul.mubr.bf16.gmra.mxu0 %v3494
      %v3645 = vpop.f32.mrf.mxu0
      %v3646 = vadd.f32 0.0, %v3645
      %v3647 = vpop.f32.mrf.mxu0
      %v3648 = vpop.f32.mrf.mxu0
      %v3649 = vadd.f32 0.0, %v3648
      %v3650 = vpop.f32.mrf.mxu0
      %3651 = vmatprep.mubr.bf16.mxu0 0
      %3652 = vmatmul.mubr.bf16.gmra.mxu0 %v3497
      %v3653 = vpop.f32.mrf.mxu0
      %v3654 = vadd.f32 0.0, %v3653
      %v3655 = vpop.f32.mrf.mxu0
      %v3656 = vpop.f32.mrf.mxu0
      %v3657 = vadd.f32 0.0, %v3656
      %v3658 = vpop.f32.mrf.mxu0
      %3659 = vdwg.mxu0
      %v3660 = vadd.f32 %v2954, %v3534
      %v3661 = vadd.f32 %v2955, %v3537
      %v3662 = vadd.f32 %v2956, %v3542
      %v3663 = vadd.f32 %v2957, %v3545
      %v3664 = vadd.f32 %v2958, %v3550
      %v3665 = vadd.f32 %v2959, %v3553
      %v3666 = vadd.f32 %v2960, %v3558
      %v3667 = vadd.f32 %v2961, %v3561
      %v3668 = vadd.f32 %v2962, %v3566
      %v3669 = vadd.f32 %v2963, %v3569
      %v3670 = vadd.f32 %v2964, %v3574
      %v3671 = vadd.f32 %v2965, %v3577
      %v3672 = vadd.f32 %v2966, %v3582
      %v3673 = vadd.f32 %v2967, %v3585
      %v3674 = vadd.f32 %v2968, %v3590
      %v3675 = vadd.f32 %v2969, %v3593
      %v3676 = vadd.f32 %v2970, %v3598
      %v3677 = vadd.f32 %v2971, %v3601
      %v3678 = vadd.f32 %v2972, %v3606
      %v3679 = vadd.f32 %v2973, %v3609
      %v3680 = vadd.f32 %v2974, %v3614
      %v3681 = vadd.f32 %v2975, %v3617
      %v3682 = vadd.f32 %v2976, %v3622
      %v3683 = vadd.f32 %v2977, %v3625
      %v3684 = vadd.f32 %v2978, %v3630
      %v3685 = vadd.f32 %v2979, %v3633
      %v3686 = vadd.f32 %v2980, %v3638
      %v3687 = vadd.f32 %v2981, %v3641
      %v3688 = vadd.f32 %v2982, %v3646
      %v3689 = vadd.f32 %v2983, %v3649
      %v3690 = vadd.f32 %v2984, %v3654
      %v3691 = vadd.f32 %v2985, %v3657
      %v3708 = vrot.slane %v2584, 5
      %v3709 = vrot.slane %v3708, 4
      %v3710 = vrot.slane %v2585, 5
      %v3711 = vsel %vm2149, %v3709, %v3710
      %v3712 = vrot.slane %v3710, 4
      %v3713 = vrot.slane %v2586, 5
      %v3714 = vsel %vm2149, %v3712, %v3713
      %v3715 = vrot.slane %v2587, 5
      %v3716 = vrot.slane %v3715, 4
      %v3717 = vrot.slane %v2588, 5
      %v3718 = vsel %vm2149, %v3716, %v3717
      %v3719 = vrot.slane %v3717, 4
      %v3720 = vrot.slane %v2589, 5
      %v3721 = vsel %vm2149, %v3719, %v3720
      %v3722 = vrot.slane %v2590, 5
      %v3723 = vrot.slane %v3722, 4
      %v3724 = vrot.slane %v2591, 5
      %v3725 = vsel %vm2149, %v3723, %v3724
      %v3726 = vrot.slane %v3724, 4
      %v3727 = vrot.slane %v2592, 5
      %v3728 = vsel %vm2149, %v3726, %v3727
      %v3729 = vrot.slane %v2593, 5
      %v3730 = vrot.slane %v3729, 4
      %v3731 = vrot.slane %v2594, 5
      %v3732 = vsel %vm2149, %v3730, %v3731
      %v3733 = vrot.slane %v3731, 4
      %v3734 = vrot.slane %v2595, 5
      %v3735 = vsel %vm2149, %v3733, %v3734
      %v3736 = vrot.slane %v2596, 5
      %v3737 = vrot.slane %v3736, 4
      %v3738 = vrot.slane %v2597, 5
      %v3739 = vsel %vm2149, %v3737, %v3738
      %v3740 = vrot.slane %v3738, 4
      %v3741 = vrot.slane %v2598, 5
      %v3742 = vsel %vm2149, %v3740, %v3741
      %v3743 = vrot.slane %v2599, 5
      %v3744 = vrot.slane %v3743, 4
      %v3745 = vrot.slane %v2600, 5
      %v3746 = vsel %vm2149, %v3744, %v3745
      %v3747 = vrot.slane %v3745, 4
      %v3748 = vrot.slane %v2601, 5
      %v3749 = vsel %vm2149, %v3747, %v3748
      %v3750 = vrot.slane %v2602, 5
      %v3751 = vrot.slane %v3750, 4
      %v3752 = vrot.slane %v2603, 5
      %v3753 = vsel %vm2149, %v3751, %v3752
      %v3754 = vrot.slane %v3752, 4
      %v3755 = vrot.slane %v2604, 5
      %v3756 = vsel %vm2149, %v3754, %v3755
      %v3757 = vrot.slane %v2605, 5
      %v3758 = vrot.slane %v3757, 4
      %v3759 = vrot.slane %v2606, 5
      %v3760 = vsel %vm2149, %v3758, %v3759
      %v3761 = vrot.slane %v3759, 4
      %v3762 = vrot.slane %v2607, 5
      %v3763 = vsel %vm2149, %v3761, %v3762
      %v3764 = vrot.slane %v2608, 5
      %v3765 = vrot.slane %v3764, 4
      %v3766 = vrot.slane %v2609, 5
      %v3767 = vsel %vm2149, %v3765, %v3766
      %v3768 = vrot.slane %v3766, 4
      %v3769 = vrot.slane %v2610, 5
      %v3770 = vsel %vm2149, %v3768, %v3769
      %v3771 = vrot.slane %v2611, 5
      %v3772 = vrot.slane %v3771, 4
      %v3773 = vrot.slane %v2612, 5
      %v3774 = vsel %vm2149, %v3772, %v3773
      %v3775 = vrot.slane %v3773, 4
      %v3776 = vrot.slane %v2613, 5
      %v3777 = vsel %vm2149, %v3775, %v3776
      %v3778 = vrot.slane %v2614, 5
      %v3779 = vrot.slane %v3778, 4
      %v3780 = vrot.slane %v2615, 5
      %v3781 = vsel %vm2149, %v3779, %v3780
      %v3782 = vrot.slane %v3780, 4
      %v3783 = vrot.slane %v2616, 5
      %v3784 = vsel %vm2149, %v3782, %v3783
      %v3785 = vrot.slane %v2617, 5
      %v3786 = vrot.slane %v3785, 4
      %v3787 = vrot.slane %v2618, 5
      %v3788 = vsel %vm2149, %v3786, %v3787
      %v3789 = vrot.slane %v3787, 4
      %v3790 = vrot.slane %v2619, 5
      %v3791 = vsel %vm2149, %v3789, %v3790
      %v3792 = vrot.slane %v2620, 5
      %v3793 = vrot.slane %v3792, 4
      %v3794 = vrot.slane %v2621, 5
      %v3795 = vsel %vm2149, %v3793, %v3794
      %v3796 = vrot.slane %v3794, 4
      %v3797 = vrot.slane %v2622, 5
      %v3798 = vsel %vm2149, %v3796, %v3797
      %v3799 = vrot.slane %v2623, 5
      %v3800 = vrot.slane %v3799, 4
      %v3801 = vrot.slane %v2624, 5
      %v3802 = vsel %vm2149, %v3800, %v3801
      %v3803 = vrot.slane %v3801, 4
      %v3804 = vrot.slane %v2625, 5
      %v3805 = vsel %vm2149, %v3803, %v3804
      %v3806 = vrot.slane %v2626, 5
      %v3807 = vrot.slane %v3806, 4
      %v3808 = vrot.slane %v2627, 5
      %v3809 = vsel %vm2149, %v3807, %v3808
      %v3810 = vrot.slane %v3808, 4
      %v3811 = vrot.slane %v2628, 5
      %v3812 = vsel %vm2149, %v3810, %v3811
      %v3813 = vrot.slane %v2629, 5
      %v3814 = vrot.slane %v3813, 4
      %v3815 = vrot.slane %v2630, 5
      %v3816 = vsel %vm2149, %v3814, %v3815
      %v3817 = vrot.slane %v3815, 4
      %v3818 = vrot.slane %v2631, 5
      %v3819 = vsel %vm2149, %v3817, %v3818
      %s3820 = scalar_lea.vmem %s3, 160
      %v3821 = vld [vmem:[%s3820] sm:$0xf]
      %v3822 = vld [vmem:[%s3820 + $0x4] sm:$0xf]
      %v3823 = vld [vmem:[%s3820 + $0x8] sm:$0xf]
      %v3824 = vld [vmem:[%s3820 + $0xc] sm:$0xf]
      %v3825 = vld [vmem:[%s3820 + $0x10] sm:$0xf]
      %v3826 = vld [vmem:[%s3820 + $0x14] sm:$0xf]
      %v3827 = vld [vmem:[%s3820 + $0x18] sm:$0xf]
      %v3828 = vld [vmem:[%s3820 + $0x1c] sm:$0xf]
      %v3829 = vunpack.c.l.b16 %v3711
      %v3830 = vunpack.c.l.b16 %v3714
      %v3831 = vunpack.c.l.b16 %v3718
      %v3832 = vunpack.c.l.b16 %v3721
      %v3833 = vunpack.c.l.b16 %v3725
      %v3834 = vunpack.c.l.b16 %v3728
      %v3835 = vunpack.c.l.b16 %v3732
      %v3836 = vunpack.c.l.b16 %v3735
      %v3837 = vunpack.c.l.b16 %v3739
      %v3838 = vunpack.c.l.b16 %v3742
      %v3839 = vunpack.c.l.b16 %v3746
      %v3840 = vunpack.c.l.b16 %v3749
      %v3841 = vunpack.c.l.b16 %v3753
      %v3842 = vunpack.c.l.b16 %v3756
      %v3843 = vunpack.c.l.b16 %v3760
      %v3844 = vunpack.c.l.b16 %v3763
      %v3845 = vunpack.c.l.b16 %v3767
      %v3846 = vunpack.c.l.b16 %v3770
      %v3847 = vunpack.c.l.b16 %v3774
      %v3848 = vunpack.c.l.b16 %v3777
      %v3849 = vunpack.c.l.b16 %v3781
      %v3850 = vunpack.c.l.b16 %v3784
      %v3851 = vunpack.c.l.b16 %v3788
      %v3852 = vunpack.c.l.b16 %v3791
      %v3853 = vunpack.c.l.b16 %v3795
      %v3854 = vunpack.c.l.b16 %v3798
      %v3855 = vunpack.c.l.b16 %v3802
      %v3856 = vunpack.c.l.b16 %v3805
      %v3857 = vunpack.c.l.b16 %v3809
      %v3858 = vunpack.c.l.b16 %v3812
      %v3859 = vunpack.c.l.b16 %v3816
      %v3860 = vunpack.c.l.b16 %v3819
      %v3861 = vpack.c.b16 %v3830, %v3829
      %v3862 = vpack.c.b16 %v3832, %v3831
      %v3863 = vpack.c.b16 %v3834, %v3833
      %v3864 = vpack.c.b16 %v3836, %v3835
      %v3865 = vpack.c.b16 %v3838, %v3837
      %v3866 = vpack.c.b16 %v3840, %v3839
      %v3867 = vpack.c.b16 %v3842, %v3841
      %v3868 = vpack.c.b16 %v3844, %v3843
      %v3869 = vpack.c.b16 %v3846, %v3845
      %v3870 = vpack.c.b16 %v3848, %v3847
      %v3871 = vpack.c.b16 %v3850, %v3849
      %v3872 = vpack.c.b16 %v3852, %v3851
      %v3873 = vpack.c.b16 %v3854, %v3853
      %v3874 = vpack.c.b16 %v3856, %v3855
      %v3875 = vpack.c.b16 %v3858, %v3857
      %v3876 = vpack.c.b16 %v3860, %v3859
      %v3885 = vunpack.c.l.b16 %v3821
      %v3886 = vunpack.c.l.b16 %v3822
      %v3887 = vunpack.c.l.b16 %v3823
      %v3888 = vunpack.c.l.b16 %v3824
      %v3889 = vunpack.c.l.b16 %v3825
      %v3890 = vunpack.c.l.b16 %v3826
      %v3891 = vunpack.c.l.b16 %v3827
      %v3892 = vunpack.c.l.b16 %v3828
      %v3893 = vpack.c.b16 %v3886, %v3885
      %v3894 = vpack.c.b16 %v3888, %v3887
      %v3895 = vpack.c.b16 %v3890, %v3889
      %v3896 = vpack.c.b16 %v3892, %v3891
      %v3902 = vsel %vm1608, %v3861, 0
      %v3905 = vsel %vm1608, %v3862, 0
      %v3908 = vsel %vm1608, %v3863, 0
      %v3911 = vsel %vm1608, %v3864, 0
      %v3914 = vsel %vm1608, %v3865, 0
      %v3917 = vsel %vm1608, %v3866, 0
      %v3920 = vsel %vm1608, %v3867, 0
      %v3923 = vsel %vm1608, %v3868, 0
      %v3926 = vsel %vm1608, %v3869, 0
      %v3929 = vsel %vm1608, %v3870, 0
      %v3932 = vsel %vm1608, %v3871, 0
      %v3935 = vsel %vm1608, %v3872, 0
      %v3938 = vsel %vm1608, %v3873, 0
      %v3941 = vsel %vm1608, %v3874, 0
      %v3944 = vsel %vm1608, %v3875, 0
      %v3947 = vsel %vm1608, %v3876, 0
      %3949 = vmatprep.subr.bf16.mxu0 0
      %3950 = vmatpush1.bf16.msra.mxu0 0
      %3951 = vmatprep.subr.bf16.mxu0 0
      %3952 = vmatpush1.bf16.msra.mxu0 0
      %3953 = vmatprep.subr.bf16.mxu0 0
      %3954 = vmatpush1.bf16.msra.mxu0 0
      %3955 = vmatprep.subr.bf16.mxu0 0
      %3956 = vmatpush1.bf16.msra.mxu0 0
      %3957 = vmatprep.subr.bf16.mxu0 0
      %3958 = vmatpush1.bf16.msra.mxu0 %v3896
      %3959 = vmatprep.subr.bf16.mxu0 0
      %3960 = vmatpush1.bf16.msra.mxu0 %v3895
      %3961 = vmatprep.subr.bf16.mxu0 0
      %3962 = vmatpush1.bf16.msra.mxu0 %v3894
      %3963 = vmatprep.subr.bf16.mxu0 0
      %3964 = vmatpush1.bf16.msra.mxu0 %v3893
      %3965 = vmatprep.subr.bf16.mxu0 0
      %3966 = vmatpush2.bf16.msra.mxu0 0
      %3967 = vmatprep.subr.bf16.mxu0 0
      %3968 = vmatpush2.bf16.msra.mxu0 0
      %3969 = vmatprep.subr.bf16.mxu0 0
      %3970 = vmatpush2.bf16.msra.mxu0 0
      %3971 = vmatprep.subr.bf16.mxu0 0
      %3972 = vmatpush2.bf16.msra.mxu0 0
      %3973 = vmatprep.subr.bf16.mxu0 0
      %3974 = vmatpush2.bf16.msra.mxu0 0
      %3975 = vmatprep.subr.bf16.mxu0 0
      %3976 = vmatpush2.bf16.msra.mxu0 0
      %3977 = vmatprep.subr.bf16.mxu0 0
      %3978 = vmatpush2.bf16.msra.mxu0 0
      %3979 = vmatprep.subr.bf16.mxu0 0
      %3980 = vmatpush2.bf16.msra.mxu0 0
      %3981 = vmatprep.mubr.bf16.mxu0 0
      %3982 = vmatmul.mubr.bf16.gmra.mxu0 %v3902
      %v3983 = vpop.f32.mrf.mxu0
      %v3984 = vadd.f32 0.0, %v3983
      %v3985 = vpop.f32.mrf.mxu0
      %v3986 = vpop.f32.mrf.mxu0
      %v3987 = vadd.f32 0.0, %v3986
      %v3988 = vpop.f32.mrf.mxu0
      %3989 = vmatprep.mubr.bf16.mxu0 0
      %3990 = vmatmul.mubr.bf16.gmra.mxu0 %v3905
      %v3991 = vpop.f32.mrf.mxu0
      %v3992 = vadd.f32 0.0, %v3991
      %v3993 = vpop.f32.mrf.mxu0
      %v3994 = vpop.f32.mrf.mxu0
      %v3995 = vadd.f32 0.0, %v3994
      %v3996 = vpop.f32.mrf.mxu0
      %3997 = vmatprep.mubr.bf16.mxu0 0
      %3998 = vmatmul.mubr.bf16.gmra.mxu0 %v3908
      %v3999 = vpop.f32.mrf.mxu0
      %v4000 = vadd.f32 0.0, %v3999
      %v4001 = vpop.f32.mrf.mxu0
      %v4002 = vpop.f32.mrf.mxu0
      %v4003 = vadd.f32 0.0, %v4002
      %v4004 = vpop.f32.mrf.mxu0
      %4005 = vmatprep.mubr.bf16.mxu0 0
      %4006 = vmatmul.mubr.bf16.gmra.mxu0 %v3911
      %v4007 = vpop.f32.mrf.mxu0
      %v4008 = vadd.f32 0.0, %v4007
      %v4009 = vpop.f32.mrf.mxu0
      %v4010 = vpop.f32.mrf.mxu0
      %v4011 = vadd.f32 0.0, %v4010
      %v4012 = vpop.f32.mrf.mxu0
      %4013 = vmatprep.mubr.bf16.mxu0 0
      %4014 = vmatmul.mubr.bf16.gmra.mxu0 %v3914
      %v4015 = vpop.f32.mrf.mxu0
      %v4016 = vadd.f32 0.0, %v4015
      %v4017 = vpop.f32.mrf.mxu0
      %v4018 = vpop.f32.mrf.mxu0
      %v4019 = vadd.f32 0.0, %v4018
      %v4020 = vpop.f32.mrf.mxu0
      %4021 = vmatprep.mubr.bf16.mxu0 0
      %4022 = vmatmul.mubr.bf16.gmra.mxu0 %v3917
      %v4023 = vpop.f32.mrf.mxu0
      %v4024 = vadd.f32 0.0, %v4023
      %v4025 = vpop.f32.mrf.mxu0
      %v4026 = vpop.f32.mrf.mxu0
      %v4027 = vadd.f32 0.0, %v4026
      %v4028 = vpop.f32.mrf.mxu0
      %4029 = vmatprep.mubr.bf16.mxu0 0
      %4030 = vmatmul.mubr.bf16.gmra.mxu0 %v3920
      %v4031 = vpop.f32.mrf.mxu0
      %v4032 = vadd.f32 0.0, %v4031
      %v4033 = vpop.f32.mrf.mxu0
      %v4034 = vpop.f32.mrf.mxu0
      %v4035 = vadd.f32 0.0, %v4034
      %v4036 = vpop.f32.mrf.mxu0
      %4037 = vmatprep.mubr.bf16.mxu0 0
      %4038 = vmatmul.mubr.bf16.gmra.mxu0 %v3923
      %v4039 = vpop.f32.mrf.mxu0
      %v4040 = vadd.f32 0.0, %v4039
      %v4041 = vpop.f32.mrf.mxu0
      %v4042 = vpop.f32.mrf.mxu0
      %v4043 = vadd.f32 0.0, %v4042
      %v4044 = vpop.f32.mrf.mxu0
      %4045 = vmatprep.mubr.bf16.mxu0 0
      %4046 = vmatmul.mubr.bf16.gmra.mxu0 %v3926
      %v4047 = vpop.f32.mrf.mxu0
      %v4048 = vadd.f32 0.0, %v4047
      %v4049 = vpop.f32.mrf.mxu0
      %v4050 = vpop.f32.mrf.mxu0
      %v4051 = vadd.f32 0.0, %v4050
      %v4052 = vpop.f32.mrf.mxu0
      %4053 = vmatprep.mubr.bf16.mxu0 0
      %4054 = vmatmul.mubr.bf16.gmra.mxu0 %v3929
      %v4055 = vpop.f32.mrf.mxu0
      %v4056 = vadd.f32 0.0, %v4055
      %v4057 = vpop.f32.mrf.mxu0
      %v4058 = vpop.f32.mrf.mxu0
      %v4059 = vadd.f32 0.0, %v4058
      %v4060 = vpop.f32.mrf.mxu0
      %4061 = vmatprep.mubr.bf16.mxu0 0
      %4062 = vmatmul.mubr.bf16.gmra.mxu0 %v3932
      %v4063 = vpop.f32.mrf.mxu0
      %v4064 = vadd.f32 0.0, %v4063
      %v4065 = vpop.f32.mrf.mxu0
      %v4066 = vpop.f32.mrf.mxu0
      %v4067 = vadd.f32 0.0, %v4066
      %v4068 = vpop.f32.mrf.mxu0
      %4069 = vmatprep.mubr.bf16.mxu0 0
      %4070 = vmatmul.mubr.bf16.gmra.mxu0 %v3935
      %v4071 = vpop.f32.mrf.mxu0
      %v4072 = vadd.f32 0.0, %v4071
      %v4073 = vpop.f32.mrf.mxu0
      %v4074 = vpop.f32.mrf.mxu0
      %v4075 = vadd.f32 0.0, %v4074
      %v4076 = vpop.f32.mrf.mxu0
      %4077 = vmatprep.mubr.bf16.mxu0 0
      %4078 = vmatmul.mubr.bf16.gmra.mxu0 %v3938
      %v4079 = vpop.f32.mrf.mxu0
      %v4080 = vadd.f32 0.0, %v4079
      %v4081 = vpop.f32.mrf.mxu0
      %v4082 = vpop.f32.mrf.mxu0
      %v4083 = vadd.f32 0.0, %v4082
      %v4084 = vpop.f32.mrf.mxu0
      %4085 = vmatprep.mubr.bf16.mxu0 0
      %4086 = vmatmul.mubr.bf16.gmra.mxu0 %v3941
      %v4087 = vpop.f32.mrf.mxu0
      %v4088 = vadd.f32 0.0, %v4087
      %v4089 = vpop.f32.mrf.mxu0
      %v4090 = vpop.f32.mrf.mxu0
      %v4091 = vadd.f32 0.0, %v4090
      %v4092 = vpop.f32.mrf.mxu0
      %4093 = vmatprep.mubr.bf16.mxu0 0
      %4094 = vmatmul.mubr.bf16.gmra.mxu0 %v3944
      %v4095 = vpop.f32.mrf.mxu0
      %v4096 = vadd.f32 0.0, %v4095
      %v4097 = vpop.f32.mrf.mxu0
      %v4098 = vpop.f32.mrf.mxu0
      %v4099 = vadd.f32 0.0, %v4098
      %v4100 = vpop.f32.mrf.mxu0
      %4101 = vmatprep.mubr.bf16.mxu0 0
      %4102 = vmatmul.mubr.bf16.gmra.mxu0 %v3947
      %v4103 = vpop.f32.mrf.mxu0
      %v4104 = vadd.f32 0.0, %v4103
      %v4105 = vpop.f32.mrf.mxu0
      %v4106 = vpop.f32.mrf.mxu0
      %v4107 = vadd.f32 0.0, %v4106
      %v4108 = vpop.f32.mrf.mxu0
      %4109 = vdwg.mxu0
      %v4110 = vadd.f32 %v3660, %v3984
      %v4111 = vadd.f32 %v3661, %v3987
      %v4112 = vadd.f32 %v3662, %v3992
      %v4113 = vadd.f32 %v3663, %v3995
      %v4114 = vadd.f32 %v3664, %v4000
      %v4115 = vadd.f32 %v3665, %v4003
      %v4116 = vadd.f32 %v3666, %v4008
      %v4117 = vadd.f32 %v3667, %v4011
      %v4118 = vadd.f32 %v3668, %v4016
      %v4119 = vadd.f32 %v3669, %v4019
      %v4120 = vadd.f32 %v3670, %v4024
      %v4121 = vadd.f32 %v3671, %v4027
      %v4122 = vadd.f32 %v3672, %v4032
      %v4123 = vadd.f32 %v3673, %v4035
      %v4124 = vadd.f32 %v3674, %v4040
      %v4125 = vadd.f32 %v3675, %v4043
      %v4126 = vadd.f32 %v3676, %v4048
      %v4127 = vadd.f32 %v3677, %v4051
      %v4128 = vadd.f32 %v3678, %v4056
      %v4129 = vadd.f32 %v3679, %v4059
      %v4130 = vadd.f32 %v3680, %v4064
      %v4131 = vadd.f32 %v3681, %v4067
      %v4132 = vadd.f32 %v3682, %v4072
      %v4133 = vadd.f32 %v3683, %v4075
      %v4134 = vadd.f32 %v3684, %v4080
      %v4135 = vadd.f32 %v3685, %v4083
      %v4136 = vadd.f32 %v3686, %v4088
      %v4137 = vadd.f32 %v3687, %v4091
      %v4138 = vadd.f32 %v3688, %v4096
      %v4139 = vadd.f32 %v3689, %v4099
      %v4140 = vadd.f32 %v3690, %v4104
      %v4141 = vadd.f32 %v3691, %v4107
      %s4142 = scalar_lea.vmem [#allocation2], 24
      %v4143 = vld [vmem:[%s4142] sm:$0xf]
      %v4144 = vld [vmem:[%s4142 + $0x4] sm:$0xf]
      %v4145 = vld [vmem:[%s4142 + $0x8] sm:$0x1]
      %v4146 = vld [vmem:[%s4142 + $0xc] sm:$0xf]
      %v4147 = vld [vmem:[%s4142 + $0x10] sm:$0xf]
      %v4148 = vld [vmem:[%s4142 + $0x14] sm:$0x1]
      %v4149 = vld [vmem:[%s4142 + $0x18] sm:$0xf]
      %v4150 = vld [vmem:[%s4142 + $0x1c] sm:$0xf]
      %v4151 = vld [vmem:[%s4142 + $0x20] sm:$0x1]
      %v4152 = vld [vmem:[%s4142 + $0x24] sm:$0xf]
      %v4153 = vld [vmem:[%s4142 + $0x28] sm:$0xf]
      %v4154 = vld [vmem:[%s4142 + $0x2c] sm:$0x1]
      %v4155 = vld [vmem:[%s4142 + $0x30] sm:$0xf]
      %v4156 = vld [vmem:[%s4142 + $0x34] sm:$0xf]
      %v4157 = vld [vmem:[%s4142 + $0x38] sm:$0x1]
      %v4158 = vld [vmem:[%s4142 + $0x3c] sm:$0xf]
      %v4159 = vld [vmem:[%s4142 + $0x40] sm:$0xf]
      %v4160 = vld [vmem:[%s4142 + $0x44] sm:$0x1]
      %v4161 = vld [vmem:[%s4142 + $0x48] sm:$0xf]
      %v4162 = vld [vmem:[%s4142 + $0x4c] sm:$0xf]
      %v4163 = vld [vmem:[%s4142 + $0x50] sm:$0x1]
      %v4164 = vld [vmem:[%s4142 + $0x54] sm:$0xf]
      %v4165 = vld [vmem:[%s4142 + $0x58] sm:$0xf]
      %v4166 = vld [vmem:[%s4142 + $0x5c] sm:$0x1]
      %v4167 = vld [vmem:[%s4142 + $0x60] sm:$0xf]
      %v4168 = vld [vmem:[%s4142 + $0x64] sm:$0xf]
      %v4169 = vld [vmem:[%s4142 + $0x68] sm:$0x1]
      %v4170 = vld [vmem:[%s4142 + $0x6c] sm:$0xf]
      %v4171 = vld [vmem:[%s4142 + $0x70] sm:$0xf]
      %v4172 = vld [vmem:[%s4142 + $0x74] sm:$0x1]
      %v4173 = vld [vmem:[%s4142 + $0x78] sm:$0xf]
      %v4174 = vld [vmem:[%s4142 + $0x7c] sm:$0xf]
      %v4175 = vld [vmem:[%s4142 + $0x80] sm:$0x1]
      %v4176 = vld [vmem:[%s4142 + $0x84] sm:$0xf]
      %v4177 = vld [vmem:[%s4142 + $0x88] sm:$0xf]
      %v4178 = vld [vmem:[%s4142 + $0x8c] sm:$0x1]
      %v4179 = vld [vmem:[%s4142 + $0x90] sm:$0xf]
      %v4180 = vld [vmem:[%s4142 + $0x94] sm:$0xf]
      %v4181 = vld [vmem:[%s4142 + $0x98] sm:$0x1]
      %v4182 = vld [vmem:[%s4142 + $0x9c] sm:$0xf]
      %v4183 = vld [vmem:[%s4142 + $0xa0] sm:$0xf]
      %v4184 = vld [vmem:[%s4142 + $0xa4] sm:$0x1]
      %v4185 = vld [vmem:[%s4142 + $0xa8] sm:$0xf]
      %v4186 = vld [vmem:[%s4142 + $0xac] sm:$0xf]
      %v4187 = vld [vmem:[%s4142 + $0xb0] sm:$0x1]
      %v4188 = vld [vmem:[%s4142 + $0xb4] sm:$0xf]
      %v4189 = vld [vmem:[%s4142 + $0xb8] sm:$0xf]
      %v4190 = vld [vmem:[%s4142 + $0xbc] sm:$0x1]
      %s4191 = scalar_lea.vmem %s3, 192
      %v4192 = vld [vmem:[%s4191] sm:$0xf]
      %v4193 = vld [vmem:[%s4191 + $0x4] sm:$0xf]
      %v4194 = vld [vmem:[%s4191 + $0x8] sm:$0xf]
      %v4195 = vld [vmem:[%s4191 + $0xc] sm:$0xf]
      %v4196 = vld [vmem:[%s4191 + $0x10] sm:$0xf]
      %v4197 = vld [vmem:[%s4191 + $0x14] sm:$0xf]
      %v4198 = vld [vmem:[%s4191 + $0x18] sm:$0xf]
      %v4199 = vld [vmem:[%s4191 + $0x1c] sm:$0xf]
      %v4232 = vunpack.c.l.b16 %v4143
      %v4233 = vunpack.c.l.b16 %v4144
      %v4234 = vunpack.c.l.b16 %v4146
      %v4235 = vunpack.c.l.b16 %v4147
      %v4236 = vunpack.c.l.b16 %v4149
      %v4237 = vunpack.c.l.b16 %v4150
      %v4238 = vunpack.c.l.b16 %v4152
      %v4239 = vunpack.c.l.b16 %v4153
      %v4240 = vunpack.c.l.b16 %v4155
      %v4241 = vunpack.c.l.b16 %v4156
      %v4242 = vunpack.c.l.b16 %v4158
      %v4243 = vunpack.c.l.b16 %v4159
      %v4244 = vunpack.c.l.b16 %v4161
      %v4245 = vunpack.c.l.b16 %v4162
      %v4246 = vunpack.c.l.b16 %v4164
      %v4247 = vunpack.c.l.b16 %v4165
      %v4248 = vunpack.c.l.b16 %v4167
      %v4249 = vunpack.c.l.b16 %v4168
      %v4250 = vunpack.c.l.b16 %v4170
      %v4251 = vunpack.c.l.b16 %v4171
      %v4252 = vunpack.c.l.b16 %v4173
      %v4253 = vunpack.c.l.b16 %v4174
      %v4254 = vunpack.c.l.b16 %v4176
      %v4255 = vunpack.c.l.b16 %v4177
      %v4256 = vunpack.c.l.b16 %v4179
      %v4257 = vunpack.c.l.b16 %v4180
      %v4258 = vunpack.c.l.b16 %v4182
      %v4259 = vunpack.c.l.b16 %v4183
      %v4260 = vunpack.c.l.b16 %v4185
      %v4261 = vunpack.c.l.b16 %v4186
      %v4262 = vunpack.c.l.b16 %v4188
      %v4263 = vunpack.c.l.b16 %v4189
      %v4264 = vpack.c.b16 %v4233, %v4232
      %v4265 = vpack.c.b16 %v4235, %v4234
      %v4266 = vpack.c.b16 %v4237, %v4236
      %v4267 = vpack.c.b16 %v4239, %v4238
      %v4268 = vpack.c.b16 %v4241, %v4240
      %v4269 = vpack.c.b16 %v4243, %v4242
      %v4270 = vpack.c.b16 %v4245, %v4244
      %v4271 = vpack.c.b16 %v4247, %v4246
      %v4272 = vpack.c.b16 %v4249, %v4248
      %v4273 = vpack.c.b16 %v4251, %v4250
      %v4274 = vpack.c.b16 %v4253, %v4252
      %v4275 = vpack.c.b16 %v4255, %v4254
      %v4276 = vpack.c.b16 %v4257, %v4256
      %v4277 = vpack.c.b16 %v4259, %v4258
      %v4278 = vpack.c.b16 %v4261, %v4260
      %v4279 = vpack.c.b16 %v4263, %v4262
      %v4288 = vunpack.c.l.b16 %v4192
      %v4289 = vunpack.c.l.b16 %v4193
      %v4290 = vunpack.c.l.b16 %v4194
      %v4291 = vunpack.c.l.b16 %v4195
      %v4292 = vunpack.c.l.b16 %v4196
      %v4293 = vunpack.c.l.b16 %v4197
      %v4294 = vunpack.c.l.b16 %v4198
      %v4295 = vunpack.c.l.b16 %v4199
      %v4296 = vpack.c.b16 %v4289, %v4288
      %v4297 = vpack.c.b16 %v4291, %v4290
      %v4298 = vpack.c.b16 %v4293, %v4292
      %v4299 = vpack.c.b16 %v4295, %v4294
      %v4305 = vsel %vm1608, %v4264, 0
      %v4308 = vsel %vm1608, %v4265, 0
      %v4311 = vsel %vm1608, %v4266, 0
      %v4314 = vsel %vm1608, %v4267, 0
      %v4317 = vsel %vm1608, %v4268, 0
      %v4320 = vsel %vm1608, %v4269, 0
      %v4323 = vsel %vm1608, %v4270, 0
      %v4326 = vsel %vm1608, %v4271, 0
      %v4329 = vsel %vm1608, %v4272, 0
      %v4332 = vsel %vm1608, %v4273, 0
      %v4335 = vsel %vm1608, %v4274, 0
      %v4338 = vsel %vm1608, %v4275, 0
      %v4341 = vsel %vm1608, %v4276, 0
      %v4344 = vsel %vm1608, %v4277, 0
      %v4347 = vsel %vm1608, %v4278, 0
      %v4350 = vsel %vm1608, %v4279, 0
      %4352 = vmatprep.subr.bf16.mxu0 0
      %4353 = vmatpush1.bf16.msra.mxu0 0
      %4354 = vmatprep.subr.bf16.mxu0 0
      %4355 = vmatpush1.bf16.msra.mxu0 0
      %4356 = vmatprep.subr.bf16.mxu0 0
      %4357 = vmatpush1.bf16.msra.mxu0 0
      %4358 = vmatprep.subr.bf16.mxu0 0
      %4359 = vmatpush1.bf16.msra.mxu0 0
      %4360 = vmatprep.subr.bf16.mxu0 0
      %4361 = vmatpush1.bf16.msra.mxu0 %v4299
      %4362 = vmatprep.subr.bf16.mxu0 0
      %4363 = vmatpush1.bf16.msra.mxu0 %v4298
      %4364 = vmatprep.subr.bf16.mxu0 0
      %4365 = vmatpush1.bf16.msra.mxu0 %v4297
      %4366 = vmatprep.subr.bf16.mxu0 0
      %4367 = vmatpush1.bf16.msra.mxu0 %v4296
      %4368 = vmatprep.subr.bf16.mxu0 0
      %4369 = vmatpush2.bf16.msra.mxu0 0
      %4370 = vmatprep.subr.bf16.mxu0 0
      %4371 = vmatpush2.bf16.msra.mxu0 0
      %4372 = vmatprep.subr.bf16.mxu0 0
      %4373 = vmatpush2.bf16.msra.mxu0 0
      %4374 = vmatprep.subr.bf16.mxu0 0
      %4375 = vmatpush2.bf16.msra.mxu0 0
      %4376 = vmatprep.subr.bf16.mxu0 0
      %4377 = vmatpush2.bf16.msra.mxu0 0
      %4378 = vmatprep.subr.bf16.mxu0 0
      %4379 = vmatpush2.bf16.msra.mxu0 0
      %4380 = vmatprep.subr.bf16.mxu0 0
      %4381 = vmatpush2.bf16.msra.mxu0 0
      %4382 = vmatprep.subr.bf16.mxu0 0
      %4383 = vmatpush2.bf16.msra.mxu0 0
      %4384 = vmatprep.mubr.bf16.mxu0 0
      %4385 = vmatmul.mubr.bf16.gmra.mxu0 %v4305
      %v4386 = vpop.f32.mrf.mxu0
      %v4387 = vadd.f32 0.0, %v4386
      %v4388 = vpop.f32.mrf.mxu0
      %v4389 = vpop.f32.mrf.mxu0
      %v4390 = vadd.f32 0.0, %v4389
      %v4391 = vpop.f32.mrf.mxu0
      %4392 = vmatprep.mubr.bf16.mxu0 0
      %4393 = vmatmul.mubr.bf16.gmra.mxu0 %v4308
      %v4394 = vpop.f32.mrf.mxu0
      %v4395 = vadd.f32 0.0, %v4394
      %v4396 = vpop.f32.mrf.mxu0
      %v4397 = vpop.f32.mrf.mxu0
      %v4398 = vadd.f32 0.0, %v4397
      %v4399 = vpop.f32.mrf.mxu0
      %4400 = vmatprep.mubr.bf16.mxu0 0
      %4401 = vmatmul.mubr.bf16.gmra.mxu0 %v4311
      %v4402 = vpop.f32.mrf.mxu0
      %v4403 = vadd.f32 0.0, %v4402
      %v4404 = vpop.f32.mrf.mxu0
      %v4405 = vpop.f32.mrf.mxu0
      %v4406 = vadd.f32 0.0, %v4405
      %v4407 = vpop.f32.mrf.mxu0
      %4408 = vmatprep.mubr.bf16.mxu0 0
      %4409 = vmatmul.mubr.bf16.gmra.mxu0 %v4314
      %v4410 = vpop.f32.mrf.mxu0
      %v4411 = vadd.f32 0.0, %v4410
      %v4412 = vpop.f32.mrf.mxu0
      %v4413 = vpop.f32.mrf.mxu0
      %v4414 = vadd.f32 0.0, %v4413
      %v4415 = vpop.f32.mrf.mxu0
      %4416 = vmatprep.mubr.bf16.mxu0 0
      %4417 = vmatmul.mubr.bf16.gmra.mxu0 %v4317
      %v4418 = vpop.f32.mrf.mxu0
      %v4419 = vadd.f32 0.0, %v4418
      %v4420 = vpop.f32.mrf.mxu0
      %v4421 = vpop.f32.mrf.mxu0
      %v4422 = vadd.f32 0.0, %v4421
      %v4423 = vpop.f32.mrf.mxu0
      %4424 = vmatprep.mubr.bf16.mxu0 0
      %4425 = vmatmul.mubr.bf16.gmra.mxu0 %v4320
      %v4426 = vpop.f32.mrf.mxu0
      %v4427 = vadd.f32 0.0, %v4426
      %v4428 = vpop.f32.mrf.mxu0
      %v4429 = vpop.f32.mrf.mxu0
      %v4430 = vadd.f32 0.0, %v4429
      %v4431 = vpop.f32.mrf.mxu0
      %4432 = vmatprep.mubr.bf16.mxu0 0
      %4433 = vmatmul.mubr.bf16.gmra.mxu0 %v4323
      %v4434 = vpop.f32.mrf.mxu0
      %v4435 = vadd.f32 0.0, %v4434
      %v4436 = vpop.f32.mrf.mxu0
      %v4437 = vpop.f32.mrf.mxu0
      %v4438 = vadd.f32 0.0, %v4437
      %v4439 = vpop.f32.mrf.mxu0
      %4440 = vmatprep.mubr.bf16.mxu0 0
      %4441 = vmatmul.mubr.bf16.gmra.mxu0 %v4326
      %v4442 = vpop.f32.mrf.mxu0
      %v4443 = vadd.f32 0.0, %v4442
      %v4444 = vpop.f32.mrf.mxu0
      %v4445 = vpop.f32.mrf.mxu0
      %v4446 = vadd.f32 0.0, %v4445
      %v4447 = vpop.f32.mrf.mxu0
      %4448 = vmatprep.mubr.bf16.mxu0 0
      %4449 = vmatmul.mubr.bf16.gmra.mxu0 %v4329
      %v4450 = vpop.f32.mrf.mxu0
      %v4451 = vadd.f32 0.0, %v4450
      %v4452 = vpop.f32.mrf.mxu0
      %v4453 = vpop.f32.mrf.mxu0
      %v4454 = vadd.f32 0.0, %v4453
      %v4455 = vpop.f32.mrf.mxu0
      %4456 = vmatprep.mubr.bf16.mxu0 0
      %4457 = vmatmul.mubr.bf16.gmra.mxu0 %v4332
      %v4458 = vpop.f32.mrf.mxu0
      %v4459 = vadd.f32 0.0, %v4458
      %v4460 = vpop.f32.mrf.mxu0
      %v4461 = vpop.f32.mrf.mxu0
      %v4462 = vadd.f32 0.0, %v4461
      %v4463 = vpop.f32.mrf.mxu0
      %4464 = vmatprep.mubr.bf16.mxu0 0
      %4465 = vmatmul.mubr.bf16.gmra.mxu0 %v4335
      %v4466 = vpop.f32.mrf.mxu0
      %v4467 = vadd.f32 0.0, %v4466
      %v4468 = vpop.f32.mrf.mxu0
      %v4469 = vpop.f32.mrf.mxu0
      %v4470 = vadd.f32 0.0, %v4469
      %v4471 = vpop.f32.mrf.mxu0
      %4472 = vmatprep.mubr.bf16.mxu0 0
      %4473 = vmatmul.mubr.bf16.gmra.mxu0 %v4338
      %v4474 = vpop.f32.mrf.mxu0
      %v4475 = vadd.f32 0.0, %v4474
      %v4476 = vpop.f32.mrf.mxu0
      %v4477 = vpop.f32.mrf.mxu0
      %v4478 = vadd.f32 0.0, %v4477
      %v4479 = vpop.f32.mrf.mxu0
      %4480 = vmatprep.mubr.bf16.mxu0 0
      %4481 = vmatmul.mubr.bf16.gmra.mxu0 %v4341
      %v4482 = vpop.f32.mrf.mxu0
      %v4483 = vadd.f32 0.0, %v4482
      %v4484 = vpop.f32.mrf.mxu0
      %v4485 = vpop.f32.mrf.mxu0
      %v4486 = vadd.f32 0.0, %v4485
      %v4487 = vpop.f32.mrf.mxu0
      %4488 = vmatprep.mubr.bf16.mxu0 0
      %4489 = vmatmul.mubr.bf16.gmra.mxu0 %v4344
      %v4490 = vpop.f32.mrf.mxu0
      %v4491 = vadd.f32 0.0, %v4490
      %v4492 = vpop.f32.mrf.mxu0
      %v4493 = vpop.f32.mrf.mxu0
      %v4494 = vadd.f32 0.0, %v4493
      %v4495 = vpop.f32.mrf.mxu0
      %4496 = vmatprep.mubr.bf16.mxu0 0
      %4497 = vmatmul.mubr.bf16.gmra.mxu0 %v4347
      %v4498 = vpop.f32.mrf.mxu0
      %v4499 = vadd.f32 0.0, %v4498
      %v4500 = vpop.f32.mrf.mxu0
      %v4501 = vpop.f32.mrf.mxu0
      %v4502 = vadd.f32 0.0, %v4501
      %v4503 = vpop.f32.mrf.mxu0
      %4504 = vmatprep.mubr.bf16.mxu0 0
      %4505 = vmatmul.mubr.bf16.gmra.mxu0 %v4350
      %v4506 = vpop.f32.mrf.mxu0
      %v4507 = vadd.f32 0.0, %v4506
      %v4508 = vpop.f32.mrf.mxu0
      %v4509 = vpop.f32.mrf.mxu0
      %v4510 = vadd.f32 0.0, %v4509
      %v4511 = vpop.f32.mrf.mxu0
      %4512 = vdwg.mxu0
      %v4513 = vadd.f32 %v4110, %v4387
      %v4514 = vadd.f32 %v4111, %v4390
      %v4515 = vadd.f32 %v4112, %v4395
      %v4516 = vadd.f32 %v4113, %v4398
      %v4517 = vadd.f32 %v4114, %v4403
      %v4518 = vadd.f32 %v4115, %v4406
      %v4519 = vadd.f32 %v4116, %v4411
      %v4520 = vadd.f32 %v4117, %v4414
      %v4521 = vadd.f32 %v4118, %v4419
      %v4522 = vadd.f32 %v4119, %v4422
      %v4523 = vadd.f32 %v4120, %v4427
      %v4524 = vadd.f32 %v4121, %v4430
      %v4525 = vadd.f32 %v4122, %v4435
      %v4526 = vadd.f32 %v4123, %v4438
      %v4527 = vadd.f32 %v4124, %v4443
      %v4528 = vadd.f32 %v4125, %v4446
      %v4529 = vadd.f32 %v4126, %v4451
      %v4530 = vadd.f32 %v4127, %v4454
      %v4531 = vadd.f32 %v4128, %v4459
      %v4532 = vadd.f32 %v4129, %v4462
      %v4533 = vadd.f32 %v4130, %v4467
      %v4534 = vadd.f32 %v4131, %v4470
      %v4535 = vadd.f32 %v4132, %v4475
      %v4536 = vadd.f32 %v4133, %v4478
      %v4537 = vadd.f32 %v4134, %v4483
      %v4538 = vadd.f32 %v4135, %v4486
      %v4539 = vadd.f32 %v4136, %v4491
      %v4540 = vadd.f32 %v4137, %v4494
      %v4541 = vadd.f32 %v4138, %v4499
      %v4542 = vadd.f32 %v4139, %v4502
      %v4543 = vadd.f32 %v4140, %v4507
      %v4544 = vadd.f32 %v4141, %v4510
      %v4546 = vshrl.u32 %v4143, 16
      %v4548 = vrot.slane %v4546, 4
      %v4549 = vshll.u32 %v4143, 16
      %v4551 = vrot.slane %v4549, 5
      %v4552 = vor.u32 %v4548, %v4551
      %v4553 = vrot.slane %v4552, 4
      %v4555 = vshll.u32 %v4144, 16
      %v4557 = vrot.slane %v4555, 5
      %v4558 = vsel %vm1142, %v4553, %v4557
      %v4559 = vshrl.u32 %v4144, 16
      %v4561 = vrot.slane %v4559, 4
      %v4562 = vor.u32 %v4561, %v4557
      %v4563 = vrot.slane %v4562, 4
      %v4565 = vshll.u32 %v4145, 16
      %v4567 = vrot.slane %v4565, 5
      %v4568 = vsel %vm1142, %v4563, %v4567
      %v4570 = vshrl.u32 %v4146, 16
      %v4572 = vrot.slane %v4570, 4
      %v4573 = vshll.u32 %v4146, 16
      %v4575 = vrot.slane %v4573, 5
      %v4576 = vor.u32 %v4572, %v4575
      %v4577 = vrot.slane %v4576, 4
      %v4579 = vshll.u32 %v4147, 16
      %v4581 = vrot.slane %v4579, 5
      %v4582 = vsel %vm1142, %v4577, %v4581
      %v4583 = vshrl.u32 %v4147, 16
      %v4585 = vrot.slane %v4583, 4
      %v4586 = vor.u32 %v4585, %v4581
      %v4587 = vrot.slane %v4586, 4
      %v4589 = vshll.u32 %v4148, 16
      %v4591 = vrot.slane %v4589, 5
      %v4592 = vsel %vm1142, %v4587, %v4591
      %v4594 = vshrl.u32 %v4149, 16
      %v4596 = vrot.slane %v4594, 4
      %v4597 = vshll.u32 %v4149, 16
      %v4599 = vrot.slane %v4597, 5
      %v4600 = vor.u32 %v4596, %v4599
      %v4601 = vrot.slane %v4600, 4
      %v4603 = vshll.u32 %v4150, 16
      %v4605 = vrot.slane %v4603, 5
      %v4606 = vsel %vm1142, %v4601, %v4605
      %v4607 = vshrl.u32 %v4150, 16
      %v4609 = vrot.slane %v4607, 4
      %v4610 = vor.u32 %v4609, %v4605
      %v4611 = vrot.slane %v4610, 4
      %v4613 = vshll.u32 %v4151, 16
      %v4615 = vrot.slane %v4613, 5
      %v4616 = vsel %vm1142, %v4611, %v4615
      %v4618 = vshrl.u32 %v4152, 16
      %v4620 = vrot.slane %v4618, 4
      %v4621 = vshll.u32 %v4152, 16
      %v4623 = vrot.slane %v4621, 5
      %v4624 = vor.u32 %v4620, %v4623
      %v4625 = vrot.slane %v4624, 4
      %v4627 = vshll.u32 %v4153, 16
      %v4629 = vrot.slane %v4627, 5
      %v4630 = vsel %vm1142, %v4625, %v4629
      %v4631 = vshrl.u32 %v4153, 16
      %v4633 = vrot.slane %v4631, 4
      %v4634 = vor.u32 %v4633, %v4629
      %v4635 = vrot.slane %v4634, 4
      %v4637 = vshll.u32 %v4154, 16
      %v4639 = vrot.slane %v4637, 5
      %v4640 = vsel %vm1142, %v4635, %v4639
      %v4642 = vshrl.u32 %v4155, 16
      %v4644 = vrot.slane %v4642, 4
      %v4645 = vshll.u32 %v4155, 16
      %v4647 = vrot.slane %v4645, 5
      %v4648 = vor.u32 %v4644, %v4647
      %v4649 = vrot.slane %v4648, 4
      %v4651 = vshll.u32 %v4156, 16
      %v4653 = vrot.slane %v4651, 5
      %v4654 = vsel %vm1142, %v4649, %v4653
      %v4655 = vshrl.u32 %v4156, 16
      %v4657 = vrot.slane %v4655, 4
      %v4658 = vor.u32 %v4657, %v4653
      %v4659 = vrot.slane %v4658, 4
      %v4661 = vshll.u32 %v4157, 16
      %v4663 = vrot.slane %v4661, 5
      %v4664 = vsel %vm1142, %v4659, %v4663
      %v4666 = vshrl.u32 %v4158, 16
      %v4668 = vrot.slane %v4666, 4
      %v4669 = vshll.u32 %v4158, 16
      %v4671 = vrot.slane %v4669, 5
      %v4672 = vor.u32 %v4668, %v4671
      %v4673 = vrot.slane %v4672, 4
      %v4675 = vshll.u32 %v4159, 16
      %v4677 = vrot.slane %v4675, 5
      %v4678 = vsel %vm1142, %v4673, %v4677
      %v4679 = vshrl.u32 %v4159, 16
      %v4681 = vrot.slane %v4679, 4
      %v4682 = vor.u32 %v4681, %v4677
      %v4683 = vrot.slane %v4682, 4
      %v4685 = vshll.u32 %v4160, 16
      %v4687 = vrot.slane %v4685, 5
      %v4688 = vsel %vm1142, %v4683, %v4687
      %v4690 = vshrl.u32 %v4161, 16
      %v4692 = vrot.slane %v4690, 4
      %v4693 = vshll.u32 %v4161, 16
      %v4695 = vrot.slane %v4693, 5
      %v4696 = vor.u32 %v4692, %v4695
      %v4697 = vrot.slane %v4696, 4
      %v4699 = vshll.u32 %v4162, 16
      %v4701 = vrot.slane %v4699, 5
      %v4702 = vsel %vm1142, %v4697, %v4701
      %v4703 = vshrl.u32 %v4162, 16
      %v4705 = vrot.slane %v4703, 4
      %v4706 = vor.u32 %v4705, %v4701
      %v4707 = vrot.slane %v4706, 4
      %v4709 = vshll.u32 %v4163, 16
      %v4711 = vrot.slane %v4709, 5
      %v4712 = vsel %vm1142, %v4707, %v4711
      %v4714 = vshrl.u32 %v4164, 16
      %v4716 = vrot.slane %v4714, 4
      %v4717 = vshll.u32 %v4164, 16
      %v4719 = vrot.slane %v4717, 5
      %v4720 = vor.u32 %v4716, %v4719
      %v4721 = vrot.slane %v4720, 4
      %v4723 = vshll.u32 %v4165, 16
      %v4725 = vrot.slane %v4723, 5
      %v4726 = vsel %vm1142, %v4721, %v4725
      %v4727 = vshrl.u32 %v4165, 16
      %v4729 = vrot.slane %v4727, 4
      %v4730 = vor.u32 %v4729, %v4725
      %v4731 = vrot.slane %v4730, 4
      %v4733 = vshll.u32 %v4166, 16
      %v4735 = vrot.slane %v4733, 5
      %v4736 = vsel %vm1142, %v4731, %v4735
      %v4738 = vshrl.u32 %v4167, 16
      %v4740 = vrot.slane %v4738, 4
      %v4741 = vshll.u32 %v4167, 16
      %v4743 = vrot.slane %v4741, 5
      %v4744 = vor.u32 %v4740, %v4743
      %v4745 = vrot.slane %v4744, 4
      %v4747 = vshll.u32 %v4168, 16
      %v4749 = vrot.slane %v4747, 5
      %v4750 = vsel %vm1142, %v4745, %v4749
      %v4751 = vshrl.u32 %v4168, 16
      %v4753 = vrot.slane %v4751, 4
      %v4754 = vor.u32 %v4753, %v4749
      %v4755 = vrot.slane %v4754, 4
      %v4757 = vshll.u32 %v4169, 16
      %v4759 = vrot.slane %v4757, 5
      %v4760 = vsel %vm1142, %v4755, %v4759
      %v4762 = vshrl.u32 %v4170, 16
      %v4764 = vrot.slane %v4762, 4
      %v4765 = vshll.u32 %v4170, 16
      %v4767 = vrot.slane %v4765, 5
      %v4768 = vor.u32 %v4764, %v4767
      %v4769 = vrot.slane %v4768, 4
      %v4771 = vshll.u32 %v4171, 16
      %v4773 = vrot.slane %v4771, 5
      %v4774 = vsel %vm1142, %v4769, %v4773
      %v4775 = vshrl.u32 %v4171, 16
      %v4777 = vrot.slane %v4775, 4
      %v4778 = vor.u32 %v4777, %v4773
      %v4779 = vrot.slane %v4778, 4
      %v4781 = vshll.u32 %v4172, 16
      %v4783 = vrot.slane %v4781, 5
      %v4784 = vsel %vm1142, %v4779, %v4783
      %v4786 = vshrl.u32 %v4173, 16
      %v4788 = vrot.slane %v4786, 4
      %v4789 = vshll.u32 %v4173, 16
      %v4791 = vrot.slane %v4789, 5
      %v4792 = vor.u32 %v4788, %v4791
      %v4793 = vrot.slane %v4792, 4
      %v4795 = vshll.u32 %v4174, 16
      %v4797 = vrot.slane %v4795, 5
      %v4798 = vsel %vm1142, %v4793, %v4797
      %v4799 = vshrl.u32 %v4174, 16
      %v4801 = vrot.slane %v4799, 4
      %v4802 = vor.u32 %v4801, %v4797
      %v4803 = vrot.slane %v4802, 4
      %v4805 = vshll.u32 %v4175, 16
      %v4807 = vrot.slane %v4805, 5
      %v4808 = vsel %vm1142, %v4803, %v4807
      %v4810 = vshrl.u32 %v4176, 16
      %v4812 = vrot.slane %v4810, 4
      %v4813 = vshll.u32 %v4176, 16
      %v4815 = vrot.slane %v4813, 5
      %v4816 = vor.u32 %v4812, %v4815
      %v4817 = vrot.slane %v4816, 4
      %v4819 = vshll.u32 %v4177, 16
      %v4821 = vrot.slane %v4819, 5
      %v4822 = vsel %vm1142, %v4817, %v4821
      %v4823 = vshrl.u32 %v4177, 16
      %v4825 = vrot.slane %v4823, 4
      %v4826 = vor.u32 %v4825, %v4821
      %v4827 = vrot.slane %v4826, 4
      %v4829 = vshll.u32 %v4178, 16
      %v4831 = vrot.slane %v4829, 5
      %v4832 = vsel %vm1142, %v4827, %v4831
      %v4834 = vshrl.u32 %v4179, 16
      %v4836 = vrot.slane %v4834, 4
      %v4837 = vshll.u32 %v4179, 16
      %v4839 = vrot.slane %v4837, 5
      %v4840 = vor.u32 %v4836, %v4839
      %v4841 = vrot.slane %v4840, 4
      %v4843 = vshll.u32 %v4180, 16
      %v4845 = vrot.slane %v4843, 5
      %v4846 = vsel %vm1142, %v4841, %v4845
      %v4847 = vshrl.u32 %v4180, 16
      %v4849 = vrot.slane %v4847, 4
      %v4850 = vor.u32 %v4849, %v4845
      %v4851 = vrot.slane %v4850, 4
      %v4853 = vshll.u32 %v4181, 16
      %v4855 = vrot.slane %v4853, 5
      %v4856 = vsel %vm1142, %v4851, %v4855
      %v4858 = vshrl.u32 %v4182, 16
      %v4860 = vrot.slane %v4858, 4
      %v4861 = vshll.u32 %v4182, 16
      %v4863 = vrot.slane %v4861, 5
      %v4864 = vor.u32 %v4860, %v4863
      %v4865 = vrot.slane %v4864, 4
      %v4867 = vshll.u32 %v4183, 16
      %v4869 = vrot.slane %v4867, 5
      %v4870 = vsel %vm1142, %v4865, %v4869
      %v4871 = vshrl.u32 %v4183, 16
      %v4873 = vrot.slane %v4871, 4
      %v4874 = vor.u32 %v4873, %v4869
      %v4875 = vrot.slane %v4874, 4
      %v4877 = vshll.u32 %v4184, 16
      %v4879 = vrot.slane %v4877, 5
      %v4880 = vsel %vm1142, %v4875, %v4879
      %v4882 = vshrl.u32 %v4185, 16
      %v4884 = vrot.slane %v4882, 4
      %v4885 = vshll.u32 %v4185, 16
      %v4887 = vrot.slane %v4885, 5
      %v4888 = vor.u32 %v4884, %v4887
      %v4889 = vrot.slane %v4888, 4
      %v4891 = vshll.u32 %v4186, 16
      %v4893 = vrot.slane %v4891, 5
      %v4894 = vsel %vm1142, %v4889, %v4893
      %v4895 = vshrl.u32 %v4186, 16
      %v4897 = vrot.slane %v4895, 4
      %v4898 = vor.u32 %v4897, %v4893
      %v4899 = vrot.slane %v4898, 4
      %v4901 = vshll.u32 %v4187, 16
      %v4903 = vrot.slane %v4901, 5
      %v4904 = vsel %vm1142, %v4899, %v4903
      %v4906 = vshrl.u32 %v4188, 16
      %v4908 = vrot.slane %v4906, 4
      %v4909 = vshll.u32 %v4188, 16
      %v4911 = vrot.slane %v4909, 5
      %v4912 = vor.u32 %v4908, %v4911
      %v4913 = vrot.slane %v4912, 4
      %v4915 = vshll.u32 %v4189, 16
      %v4917 = vrot.slane %v4915, 5
      %v4918 = vsel %vm1142, %v4913, %v4917
      %v4919 = vshrl.u32 %v4189, 16
      %v4921 = vrot.slane %v4919, 4
      %v4922 = vor.u32 %v4921, %v4917
      %v4923 = vrot.slane %v4922, 4
      %v4925 = vshll.u32 %v4190, 16
      %v4927 = vrot.slane %v4925, 5
      %v4928 = vsel %vm1142, %v4923, %v4927
      %s4929 = scalar_lea.vmem %s3, 224
      %v4930 = vld [vmem:[%s4929] sm:$0xf]
      %v4931 = vld [vmem:[%s4929 + $0x4] sm:$0xf]
      %v4932 = vld [vmem:[%s4929 + $0x8] sm:$0xf]
      %v4933 = vld [vmem:[%s4929 + $0xc] sm:$0xf]
      %v4934 = vld [vmem:[%s4929 + $0x10] sm:$0xf]
      %v4935 = vld [vmem:[%s4929 + $0x14] sm:$0xf]
      %v4936 = vld [vmem:[%s4929 + $0x18] sm:$0xf]
      %v4937 = vld [vmem:[%s4929 + $0x1c] sm:$0xf]
      %v4938 = vunpack.c.l.b16 %v4558
      %v4939 = vunpack.c.l.b16 %v4568
      %v4940 = vunpack.c.l.b16 %v4582
      %v4941 = vunpack.c.l.b16 %v4592
      %v4942 = vunpack.c.l.b16 %v4606
      %v4943 = vunpack.c.l.b16 %v4616
      %v4944 = vunpack.c.l.b16 %v4630
      %v4945 = vunpack.c.l.b16 %v4640
      %v4946 = vunpack.c.l.b16 %v4654
      %v4947 = vunpack.c.l.b16 %v4664
      %v4948 = vunpack.c.l.b16 %v4678
      %v4949 = vunpack.c.l.b16 %v4688
      %v4950 = vunpack.c.l.b16 %v4702
      %v4951 = vunpack.c.l.b16 %v4712
      %v4952 = vunpack.c.l.b16 %v4726
      %v4953 = vunpack.c.l.b16 %v4736
      %v4954 = vunpack.c.l.b16 %v4750
      %v4955 = vunpack.c.l.b16 %v4760
      %v4956 = vunpack.c.l.b16 %v4774
      %v4957 = vunpack.c.l.b16 %v4784
      %v4958 = vunpack.c.l.b16 %v4798
      %v4959 = vunpack.c.l.b16 %v4808
      %v4960 = vunpack.c.l.b16 %v4822
      %v4961 = vunpack.c.l.b16 %v4832
      %v4962 = vunpack.c.l.b16 %v4846
      %v4963 = vunpack.c.l.b16 %v4856
      %v4964 = vunpack.c.l.b16 %v4870
      %v4965 = vunpack.c.l.b16 %v4880
      %v4966 = vunpack.c.l.b16 %v4894
      %v4967 = vunpack.c.l.b16 %v4904
      %v4968 = vunpack.c.l.b16 %v4918
      %v4969 = vunpack.c.l.b16 %v4928
      %v4970 = vpack.c.b16 %v4939, %v4938
      %v4971 = vpack.c.b16 %v4941, %v4940
      %v4972 = vpack.c.b16 %v4943, %v4942
      %v4973 = vpack.c.b16 %v4945, %v4944
      %v4974 = vpack.c.b16 %v4947, %v4946
      %v4975 = vpack.c.b16 %v4949, %v4948
      %v4976 = vpack.c.b16 %v4951, %v4950
      %v4977 = vpack.c.b16 %v4953, %v4952
      %v4978 = vpack.c.b16 %v4955, %v4954
      %v4979 = vpack.c.b16 %v4957, %v4956
      %v4980 = vpack.c.b16 %v4959, %v4958
      %v4981 = vpack.c.b16 %v4961, %v4960
      %v4982 = vpack.c.b16 %v4963, %v4962
      %v4983 = vpack.c.b16 %v4965, %v4964
      %v4984 = vpack.c.b16 %v4967, %v4966
      %v4985 = vpack.c.b16 %v4969, %v4968
      %v4994 = vunpack.c.l.b16 %v4930
      %v4995 = vunpack.c.l.b16 %v4931
      %v4996 = vunpack.c.l.b16 %v4932
      %v4997 = vunpack.c.l.b16 %v4933
      %v4998 = vunpack.c.l.b16 %v4934
      %v4999 = vunpack.c.l.b16 %v4935
      %v5000 = vunpack.c.l.b16 %v4936
      %v5001 = vunpack.c.l.b16 %v4937
      %v5002 = vpack.c.b16 %v4995, %v4994
      %v5003 = vpack.c.b16 %v4997, %v4996
      %v5004 = vpack.c.b16 %v4999, %v4998
      %v5005 = vpack.c.b16 %v5001, %v5000
      %v5011 = vsel %vm1608, %v4970, 0
      %v5014 = vsel %vm1608, %v4971, 0
      %v5017 = vsel %vm1608, %v4972, 0
      %v5020 = vsel %vm1608, %v4973, 0
      %v5023 = vsel %vm1608, %v4974, 0
      %v5026 = vsel %vm1608, %v4975, 0
      %v5029 = vsel %vm1608, %v4976, 0
      %v5032 = vsel %vm1608, %v4977, 0
      %v5035 = vsel %vm1608, %v4978, 0
      %v5038 = vsel %vm1608, %v4979, 0
      %v5041 = vsel %vm1608, %v4980, 0
      %v5044 = vsel %vm1608, %v4981, 0
      %v5047 = vsel %vm1608, %v4982, 0
      %v5050 = vsel %vm1608, %v4983, 0
      %v5053 = vsel %vm1608, %v4984, 0
      %v5056 = vsel %vm1608, %v4985, 0
      %5058 = vmatprep.subr.bf16.mxu0 0
      %5059 = vmatpush1.bf16.msra.mxu0 0
      %5060 = vmatprep.subr.bf16.mxu0 0
      %5061 = vmatpush1.bf16.msra.mxu0 0
      %5062 = vmatprep.subr.bf16.mxu0 0
      %5063 = vmatpush1.bf16.msra.mxu0 0
      %5064 = vmatprep.subr.bf16.mxu0 0
      %5065 = vmatpush1.bf16.msra.mxu0 0
      %5066 = vmatprep.subr.bf16.mxu0 0
      %5067 = vmatpush1.bf16.msra.mxu0 %v5005
      %5068 = vmatprep.subr.bf16.mxu0 0
      %5069 = vmatpush1.bf16.msra.mxu0 %v5004
      %5070 = vmatprep.subr.bf16.mxu0 0
      %5071 = vmatpush1.bf16.msra.mxu0 %v5003
      %5072 = vmatprep.subr.bf16.mxu0 0
      %5073 = vmatpush1.bf16.msra.mxu0 %v5002
      %5074 = vmatprep.subr.bf16.mxu0 0
      %5075 = vmatpush2.bf16.msra.mxu0 0
      %5076 = vmatprep.subr.bf16.mxu0 0
      %5077 = vmatpush2.bf16.msra.mxu0 0
      %5078 = vmatprep.subr.bf16.mxu0 0
      %5079 = vmatpush2.bf16.msra.mxu0 0
      %5080 = vmatprep.subr.bf16.mxu0 0
      %5081 = vmatpush2.bf16.msra.mxu0 0
      %5082 = vmatprep.subr.bf16.mxu0 0
      %5083 = vmatpush2.bf16.msra.mxu0 0
      %5084 = vmatprep.subr.bf16.mxu0 0
      %5085 = vmatpush2.bf16.msra.mxu0 0
      %5086 = vmatprep.subr.bf16.mxu0 0
      %5087 = vmatpush2.bf16.msra.mxu0 0
      %5088 = vmatprep.subr.bf16.mxu0 0
      %5089 = vmatpush2.bf16.msra.mxu0 0
      %5090 = vmatprep.mubr.bf16.mxu0 0
      %5091 = vmatmul.mubr.bf16.gmra.mxu0 %v5011
      %v5092 = vpop.f32.mrf.mxu0
      %v5093 = vadd.f32 0.0, %v5092
      %v5094 = vpop.f32.mrf.mxu0
      %v5095 = vpop.f32.mrf.mxu0
      %v5096 = vadd.f32 0.0, %v5095
      %v5097 = vpop.f32.mrf.mxu0
      %5098 = vmatprep.mubr.bf16.mxu0 0
      %5099 = vmatmul.mubr.bf16.gmra.mxu0 %v5014
      %v5100 = vpop.f32.mrf.mxu0
      %v5101 = vadd.f32 0.0, %v5100
      %v5102 = vpop.f32.mrf.mxu0
      %v5103 = vpop.f32.mrf.mxu0
      %v5104 = vadd.f32 0.0, %v5103
      %v5105 = vpop.f32.mrf.mxu0
      %5106 = vmatprep.mubr.bf16.mxu0 0
      %5107 = vmatmul.mubr.bf16.gmra.mxu0 %v5017
      %v5108 = vpop.f32.mrf.mxu0
      %v5109 = vadd.f32 0.0, %v5108
      %v5110 = vpop.f32.mrf.mxu0
      %v5111 = vpop.f32.mrf.mxu0
      %v5112 = vadd.f32 0.0, %v5111
      %v5113 = vpop.f32.mrf.mxu0
      %5114 = vmatprep.mubr.bf16.mxu0 0
      %5115 = vmatmul.mubr.bf16.gmra.mxu0 %v5020
      %v5116 = vpop.f32.mrf.mxu0
      %v5117 = vadd.f32 0.0, %v5116
      %v5118 = vpop.f32.mrf.mxu0
      %v5119 = vpop.f32.mrf.mxu0
      %v5120 = vadd.f32 0.0, %v5119
      %v5121 = vpop.f32.mrf.mxu0
      %5122 = vmatprep.mubr.bf16.mxu0 0
      %5123 = vmatmul.mubr.bf16.gmra.mxu0 %v5023
      %v5124 = vpop.f32.mrf.mxu0
      %v5125 = vadd.f32 0.0, %v5124
      %v5126 = vpop.f32.mrf.mxu0
      %v5127 = vpop.f32.mrf.mxu0
      %v5128 = vadd.f32 0.0, %v5127
      %v5129 = vpop.f32.mrf.mxu0
      %5130 = vmatprep.mubr.bf16.mxu0 0
      %5131 = vmatmul.mubr.bf16.gmra.mxu0 %v5026
      %v5132 = vpop.f32.mrf.mxu0
      %v5133 = vadd.f32 0.0, %v5132
      %v5134 = vpop.f32.mrf.mxu0
      %v5135 = vpop.f32.mrf.mxu0
      %v5136 = vadd.f32 0.0, %v5135
      %v5137 = vpop.f32.mrf.mxu0
      %5138 = vmatprep.mubr.bf16.mxu0 0
      %5139 = vmatmul.mubr.bf16.gmra.mxu0 %v5029
      %v5140 = vpop.f32.mrf.mxu0
      %v5141 = vadd.f32 0.0, %v5140
      %v5142 = vpop.f32.mrf.mxu0
      %v5143 = vpop.f32.mrf.mxu0
      %v5144 = vadd.f32 0.0, %v5143
      %v5145 = vpop.f32.mrf.mxu0
      %5146 = vmatprep.mubr.bf16.mxu0 0
      %5147 = vmatmul.mubr.bf16.gmra.mxu0 %v5032
      %v5148 = vpop.f32.mrf.mxu0
      %v5149 = vadd.f32 0.0, %v5148
      %v5150 = vpop.f32.mrf.mxu0
      %v5151 = vpop.f32.mrf.mxu0
      %v5152 = vadd.f32 0.0, %v5151
      %v5153 = vpop.f32.mrf.mxu0
      %5154 = vmatprep.mubr.bf16.mxu0 0
      %5155 = vmatmul.mubr.bf16.gmra.mxu0 %v5035
      %v5156 = vpop.f32.mrf.mxu0
      %v5157 = vadd.f32 0.0, %v5156
      %v5158 = vpop.f32.mrf.mxu0
      %v5159 = vpop.f32.mrf.mxu0
      %v5160 = vadd.f32 0.0, %v5159
      %v5161 = vpop.f32.mrf.mxu0
      %5162 = vmatprep.mubr.bf16.mxu0 0
      %5163 = vmatmul.mubr.bf16.gmra.mxu0 %v5038
      %v5164 = vpop.f32.mrf.mxu0
      %v5165 = vadd.f32 0.0, %v5164
      %v5166 = vpop.f32.mrf.mxu0
      %v5167 = vpop.f32.mrf.mxu0
      %v5168 = vadd.f32 0.0, %v5167
      %v5169 = vpop.f32.mrf.mxu0
      %5170 = vmatprep.mubr.bf16.mxu0 0
      %5171 = vmatmul.mubr.bf16.gmra.mxu0 %v5041
      %v5172 = vpop.f32.mrf.mxu0
      %v5173 = vadd.f32 0.0, %v5172
      %v5174 = vpop.f32.mrf.mxu0
      %v5175 = vpop.f32.mrf.mxu0
      %v5176 = vadd.f32 0.0, %v5175
      %v5177 = vpop.f32.mrf.mxu0
      %5178 = vmatprep.mubr.bf16.mxu0 0
      %5179 = vmatmul.mubr.bf16.gmra.mxu0 %v5044
      %v5180 = vpop.f32.mrf.mxu0
      %v5181 = vadd.f32 0.0, %v5180
      %v5182 = vpop.f32.mrf.mxu0
      %v5183 = vpop.f32.mrf.mxu0
      %v5184 = vadd.f32 0.0, %v5183
      %v5185 = vpop.f32.mrf.mxu0
      %5186 = vmatprep.mubr.bf16.mxu0 0
      %5187 = vmatmul.mubr.bf16.gmra.mxu0 %v5047
      %v5188 = vpop.f32.mrf.mxu0
      %v5189 = vadd.f32 0.0, %v5188
      %v5190 = vpop.f32.mrf.mxu0
      %v5191 = vpop.f32.mrf.mxu0
      %v5192 = vadd.f32 0.0, %v5191
      %v5193 = vpop.f32.mrf.mxu0
      %5194 = vmatprep.mubr.bf16.mxu0 0
      %5195 = vmatmul.mubr.bf16.gmra.mxu0 %v5050
      %v5196 = vpop.f32.mrf.mxu0
      %v5197 = vadd.f32 0.0, %v5196
      %v5198 = vpop.f32.mrf.mxu0
      %v5199 = vpop.f32.mrf.mxu0
      %v5200 = vadd.f32 0.0, %v5199
      %v5201 = vpop.f32.mrf.mxu0
      %5202 = vmatprep.mubr.bf16.mxu0 0
      %5203 = vmatmul.mubr.bf16.gmra.mxu0 %v5053
      %v5204 = vpop.f32.mrf.mxu0
      %v5205 = vadd.f32 0.0, %v5204
      %v5206 = vpop.f32.mrf.mxu0
      %v5207 = vpop.f32.mrf.mxu0
      %v5208 = vadd.f32 0.0, %v5207
      %v5209 = vpop.f32.mrf.mxu0
      %5210 = vmatprep.mubr.bf16.mxu0 0
      %5211 = vmatmul.mubr.bf16.gmra.mxu0 %v5056
      %v5212 = vpop.f32.mrf.mxu0
      %v5213 = vadd.f32 0.0, %v5212
      %v5214 = vpop.f32.mrf.mxu0
      %v5215 = vpop.f32.mrf.mxu0
      %v5216 = vadd.f32 0.0, %v5215
      %v5217 = vpop.f32.mrf.mxu0
      %5218 = vdwg.mxu0
      %v5219 = vadd.f32 %v4513, %v5093
      %v5220 = vadd.f32 %v4514, %v5096
      %v5221 = vadd.f32 %v4515, %v5101
      %v5222 = vadd.f32 %v4516, %v5104
      %v5223 = vadd.f32 %v4517, %v5109
      %v5224 = vadd.f32 %v4518, %v5112
      %v5225 = vadd.f32 %v4519, %v5117
      %v5226 = vadd.f32 %v4520, %v5120
      %v5227 = vadd.f32 %v4521, %v5125
      %v5228 = vadd.f32 %v4522, %v5128
      %v5229 = vadd.f32 %v4523, %v5133
      %v5230 = vadd.f32 %v4524, %v5136
      %v5231 = vadd.f32 %v4525, %v5141
      %v5232 = vadd.f32 %v4526, %v5144
      %v5233 = vadd.f32 %v4527, %v5149
      %v5234 = vadd.f32 %v4528, %v5152
      %v5235 = vadd.f32 %v4529, %v5157
      %v5236 = vadd.f32 %v4530, %v5160
      %v5237 = vadd.f32 %v4531, %v5165
      %v5238 = vadd.f32 %v4532, %v5168
      %v5239 = vadd.f32 %v4533, %v5173
      %v5240 = vadd.f32 %v4534, %v5176
      %v5241 = vadd.f32 %v4535, %v5181
      %v5242 = vadd.f32 %v4536, %v5184
      %v5243 = vadd.f32 %v4537, %v5189
      %v5244 = vadd.f32 %v4538, %v5192
      %v5245 = vadd.f32 %v4539, %v5197
      %v5246 = vadd.f32 %v4540, %v5200
      %v5247 = vadd.f32 %v4541, %v5205
      %v5248 = vadd.f32 %v4542, %v5208
      %v5249 = vadd.f32 %v4543, %v5213
      %v5250 = vadd.f32 %v4544, %v5216
      %v5267 = vrot.slane %v4143, 5
      %v5268 = vrot.slane %v5267, 4
      %v5269 = vrot.slane %v4144, 5
      %v5270 = vsel %vm2149, %v5268, %v5269
      %v5271 = vrot.slane %v5269, 4
      %v5272 = vrot.slane %v4145, 5
      %v5273 = vsel %vm2149, %v5271, %v5272
      %v5274 = vrot.slane %v4146, 5
      %v5275 = vrot.slane %v5274, 4
      %v5276 = vrot.slane %v4147, 5
      %v5277 = vsel %vm2149, %v5275, %v5276
      %v5278 = vrot.slane %v5276, 4
      %v5279 = vrot.slane %v4148, 5
      %v5280 = vsel %vm2149, %v5278, %v5279
      %v5281 = vrot.slane %v4149, 5
      %v5282 = vrot.slane %v5281, 4
      %v5283 = vrot.slane %v4150, 5
      %v5284 = vsel %vm2149, %v5282, %v5283
      %v5285 = vrot.slane %v5283, 4
      %v5286 = vrot.slane %v4151, 5
      %v5287 = vsel %vm2149, %v5285, %v5286
      %v5288 = vrot.slane %v4152, 5
      %v5289 = vrot.slane %v5288, 4
      %v5290 = vrot.slane %v4153, 5
      %v5291 = vsel %vm2149, %v5289, %v5290
      %v5292 = vrot.slane %v5290, 4
      %v5293 = vrot.slane %v4154, 5
      %v5294 = vsel %vm2149, %v5292, %v5293
      %v5295 = vrot.slane %v4155, 5
      %v5296 = vrot.slane %v5295, 4
      %v5297 = vrot.slane %v4156, 5
      %v5298 = vsel %vm2149, %v5296, %v5297
      %v5299 = vrot.slane %v5297, 4
      %v5300 = vrot.slane %v4157, 5
      %v5301 = vsel %vm2149, %v5299, %v5300
      %v5302 = vrot.slane %v4158, 5
      %v5303 = vrot.slane %v5302, 4
      %v5304 = vrot.slane %v4159, 5
      %v5305 = vsel %vm2149, %v5303, %v5304
      %v5306 = vrot.slane %v5304, 4
      %v5307 = vrot.slane %v4160, 5
      %v5308 = vsel %vm2149, %v5306, %v5307
      %v5309 = vrot.slane %v4161, 5
      %v5310 = vrot.slane %v5309, 4
      %v5311 = vrot.slane %v4162, 5
      %v5312 = vsel %vm2149, %v5310, %v5311
      %v5313 = vrot.slane %v5311, 4
      %v5314 = vrot.slane %v4163, 5
      %v5315 = vsel %vm2149, %v5313, %v5314
      %v5316 = vrot.slane %v4164, 5
      %v5317 = vrot.slane %v5316, 4
      %v5318 = vrot.slane %v4165, 5
      %v5319 = vsel %vm2149, %v5317, %v5318
      %v5320 = vrot.slane %v5318, 4
      %v5321 = vrot.slane %v4166, 5
      %v5322 = vsel %vm2149, %v5320, %v5321
      %v5323 = vrot.slane %v4167, 5
      %v5324 = vrot.slane %v5323, 4
      %v5325 = vrot.slane %v4168, 5
      %v5326 = vsel %vm2149, %v5324, %v5325
      %v5327 = vrot.slane %v5325, 4
      %v5328 = vrot.slane %v4169, 5
      %v5329 = vsel %vm2149, %v5327, %v5328
      %v5330 = vrot.slane %v4170, 5
      %v5331 = vrot.slane %v5330, 4
      %v5332 = vrot.slane %v4171, 5
      %v5333 = vsel %vm2149, %v5331, %v5332
      %v5334 = vrot.slane %v5332, 4
      %v5335 = vrot.slane %v4172, 5
      %v5336 = vsel %vm2149, %v5334, %v5335
      %v5337 = vrot.slane %v4173, 5
      %v5338 = vrot.slane %v5337, 4
      %v5339 = vrot.slane %v4174, 5
      %v5340 = vsel %vm2149, %v5338, %v5339
      %v5341 = vrot.slane %v5339, 4
      %v5342 = vrot.slane %v4175, 5
      %v5343 = vsel %vm2149, %v5341, %v5342
      %v5344 = vrot.slane %v4176, 5
      %v5345 = vrot.slane %v5344, 4
      %v5346 = vrot.slane %v4177, 5
      %v5347 = vsel %vm2149, %v5345, %v5346
      %v5348 = vrot.slane %v5346, 4
      %v5349 = vrot.slane %v4178, 5
      %v5350 = vsel %vm2149, %v5348, %v5349
      %v5351 = vrot.slane %v4179, 5
      %v5352 = vrot.slane %v5351, 4
      %v5353 = vrot.slane %v4180, 5
      %v5354 = vsel %vm2149, %v5352, %v5353
      %v5355 = vrot.slane %v5353, 4
      %v5356 = vrot.slane %v4181, 5
      %v5357 = vsel %vm2149, %v5355, %v5356
      %v5358 = vrot.slane %v4182, 5
      %v5359 = vrot.slane %v5358, 4
      %v5360 = vrot.slane %v4183, 5
      %v5361 = vsel %vm2149, %v5359, %v5360
      %v5362 = vrot.slane %v5360, 4
      %v5363 = vrot.slane %v4184, 5
      %v5364 = vsel %vm2149, %v5362, %v5363
      %v5365 = vrot.slane %v4185, 5
      %v5366 = vrot.slane %v5365, 4
      %v5367 = vrot.slane %v4186, 5
      %v5368 = vsel %vm2149, %v5366, %v5367
      %v5369 = vrot.slane %v5367, 4
      %v5370 = vrot.slane %v4187, 5
      %v5371 = vsel %vm2149, %v5369, %v5370
      %v5372 = vrot.slane %v4188, 5
      %v5373 = vrot.slane %v5372, 4
      %v5374 = vrot.slane %v4189, 5
      %v5375 = vsel %vm2149, %v5373, %v5374
      %v5376 = vrot.slane %v5374, 4
      %v5377 = vrot.slane %v4190, 5
      %v5378 = vsel %vm2149, %v5376, %v5377
      %s5379 = scalar_lea.vmem %s3, 256
      %v5380 = vld [vmem:[%s5379] sm:$0xf]
      %v5381 = vld [vmem:[%s5379 + $0x4] sm:$0xf]
      %v5382 = vld [vmem:[%s5379 + $0x8] sm:$0xf]
      %v5383 = vld [vmem:[%s5379 + $0xc] sm:$0xf]
      %v5384 = vld [vmem:[%s5379 + $0x10] sm:$0xf]
      %v5385 = vld [vmem:[%s5379 + $0x14] sm:$0xf]
      %v5386 = vld [vmem:[%s5379 + $0x18] sm:$0xf]
      %v5387 = vld [vmem:[%s5379 + $0x1c] sm:$0xf]
      %v5388 = vunpack.c.l.b16 %v5270
      %v5389 = vunpack.c.l.b16 %v5273
      %v5390 = vunpack.c.l.b16 %v5277
      %v5391 = vunpack.c.l.b16 %v5280
      %v5392 = vunpack.c.l.b16 %v5284
      %v5393 = vunpack.c.l.b16 %v5287
      %v5394 = vunpack.c.l.b16 %v5291
      %v5395 = vunpack.c.l.b16 %v5294
      %v5396 = vunpack.c.l.b16 %v5298
      %v5397 = vunpack.c.l.b16 %v5301
      %v5398 = vunpack.c.l.b16 %v5305
      %v5399 = vunpack.c.l.b16 %v5308
      %v5400 = vunpack.c.l.b16 %v5312
      %v5401 = vunpack.c.l.b16 %v5315
      %v5402 = vunpack.c.l.b16 %v5319
      %v5403 = vunpack.c.l.b16 %v5322
      %v5404 = vunpack.c.l.b16 %v5326
      %v5405 = vunpack.c.l.b16 %v5329
      %v5406 = vunpack.c.l.b16 %v5333
      %v5407 = vunpack.c.l.b16 %v5336
      %v5408 = vunpack.c.l.b16 %v5340
      %v5409 = vunpack.c.l.b16 %v5343
      %v5410 = vunpack.c.l.b16 %v5347
      %v5411 = vunpack.c.l.b16 %v5350
      %v5412 = vunpack.c.l.b16 %v5354
      %v5413 = vunpack.c.l.b16 %v5357
      %v5414 = vunpack.c.l.b16 %v5361
      %v5415 = vunpack.c.l.b16 %v5364
      %v5416 = vunpack.c.l.b16 %v5368
      %v5417 = vunpack.c.l.b16 %v5371
      %v5418 = vunpack.c.l.b16 %v5375
      %v5419 = vunpack.c.l.b16 %v5378
      %v5420 = vpack.c.b16 %v5389, %v5388
      %v5421 = vpack.c.b16 %v5391, %v5390
      %v5422 = vpack.c.b16 %v5393, %v5392
      %v5423 = vpack.c.b16 %v5395, %v5394
      %v5424 = vpack.c.b16 %v5397, %v5396
      %v5425 = vpack.c.b16 %v5399, %v5398
      %v5426 = vpack.c.b16 %v5401, %v5400
      %v5427 = vpack.c.b16 %v5403, %v5402
      %v5428 = vpack.c.b16 %v5405, %v5404
      %v5429 = vpack.c.b16 %v5407, %v5406
      %v5430 = vpack.c.b16 %v5409, %v5408
      %v5431 = vpack.c.b16 %v5411, %v5410
      %v5432 = vpack.c.b16 %v5413, %v5412
      %v5433 = vpack.c.b16 %v5415, %v5414
      %v5434 = vpack.c.b16 %v5417, %v5416
      %v5435 = vpack.c.b16 %v5419, %v5418
      %v5444 = vunpack.c.l.b16 %v5380
      %v5445 = vunpack.c.l.b16 %v5381
      %v5446 = vunpack.c.l.b16 %v5382
      %v5447 = vunpack.c.l.b16 %v5383
      %v5448 = vunpack.c.l.b16 %v5384
      %v5449 = vunpack.c.l.b16 %v5385
      %v5450 = vunpack.c.l.b16 %v5386
      %v5451 = vunpack.c.l.b16 %v5387
      %v5452 = vpack.c.b16 %v5445, %v5444
      %v5453 = vpack.c.b16 %v5447, %v5446
      %v5454 = vpack.c.b16 %v5449, %v5448
      %v5455 = vpack.c.b16 %v5451, %v5450
      %v5461 = vsel %vm1608, %v5420, 0
      %v5464 = vsel %vm1608, %v5421, 0
      %v5467 = vsel %vm1608, %v5422, 0
      %v5470 = vsel %vm1608, %v5423, 0
      %v5473 = vsel %vm1608, %v5424, 0
      %v5476 = vsel %vm1608, %v5425, 0
      %v5479 = vsel %vm1608, %v5426, 0
      %v5482 = vsel %vm1608, %v5427, 0
      %v5485 = vsel %vm1608, %v5428, 0
      %v5488 = vsel %vm1608, %v5429, 0
      %v5491 = vsel %vm1608, %v5430, 0
      %v5494 = vsel %vm1608, %v5431, 0
      %v5497 = vsel %vm1608, %v5432, 0
      %v5500 = vsel %vm1608, %v5433, 0
      %v5503 = vsel %vm1608, %v5434, 0
      %v5506 = vsel %vm1608, %v5435, 0
      %5508 = vmatprep.subr.bf16.mxu0 0
      %5509 = vmatpush1.bf16.msra.mxu0 0
      %5510 = vmatprep.subr.bf16.mxu0 0
      %5511 = vmatpush1.bf16.msra.mxu0 0
      %5512 = vmatprep.subr.bf16.mxu0 0
      %5513 = vmatpush1.bf16.msra.mxu0 0
      %5514 = vmatprep.subr.bf16.mxu0 0
      %5515 = vmatpush1.bf16.msra.mxu0 0
      %5516 = vmatprep.subr.bf16.mxu0 0
      %5517 = vmatpush1.bf16.msra.mxu0 %v5455
      %5518 = vmatprep.subr.bf16.mxu0 0
      %5519 = vmatpush1.bf16.msra.mxu0 %v5454
      %5520 = vmatprep.subr.bf16.mxu0 0
      %5521 = vmatpush1.bf16.msra.mxu0 %v5453
      %5522 = vmatprep.subr.bf16.mxu0 0
      %5523 = vmatpush1.bf16.msra.mxu0 %v5452
      %5524 = vmatprep.subr.bf16.mxu0 0
      %5525 = vmatpush2.bf16.msra.mxu0 0
      %5526 = vmatprep.subr.bf16.mxu0 0
      %5527 = vmatpush2.bf16.msra.mxu0 0
      %5528 = vmatprep.subr.bf16.mxu0 0
      %5529 = vmatpush2.bf16.msra.mxu0 0
      %5530 = vmatprep.subr.bf16.mxu0 0
      %5531 = vmatpush2.bf16.msra.mxu0 0
      %5532 = vmatprep.subr.bf16.mxu0 0
      %5533 = vmatpush2.bf16.msra.mxu0 0
      %5534 = vmatprep.subr.bf16.mxu0 0
      %5535 = vmatpush2.bf16.msra.mxu0 0
      %5536 = vmatprep.subr.bf16.mxu0 0
      %5537 = vmatpush2.bf16.msra.mxu0 0
      %5538 = vmatprep.subr.bf16.mxu0 0
      %5539 = vmatpush2.bf16.msra.mxu0 0
      %5540 = vmatprep.mubr.bf16.mxu0 0
      %5541 = vmatmul.mubr.bf16.gmra.mxu0 %v5461
      %v5542 = vpop.f32.mrf.mxu0
      %v5543 = vadd.f32 0.0, %v5542
      %v5544 = vpop.f32.mrf.mxu0
      %v5545 = vpop.f32.mrf.mxu0
      %v5546 = vadd.f32 0.0, %v5545
      %v5547 = vpop.f32.mrf.mxu0
      %5548 = vmatprep.mubr.bf16.mxu0 0
      %5549 = vmatmul.mubr.bf16.gmra.mxu0 %v5464
      %v5550 = vpop.f32.mrf.mxu0
      %v5551 = vadd.f32 0.0, %v5550
      %v5552 = vpop.f32.mrf.mxu0
      %v5553 = vpop.f32.mrf.mxu0
      %v5554 = vadd.f32 0.0, %v5553
      %v5555 = vpop.f32.mrf.mxu0
      %5556 = vmatprep.mubr.bf16.mxu0 0
      %5557 = vmatmul.mubr.bf16.gmra.mxu0 %v5467
      %v5558 = vpop.f32.mrf.mxu0
      %v5559 = vadd.f32 0.0, %v5558
      %v5560 = vpop.f32.mrf.mxu0
      %v5561 = vpop.f32.mrf.mxu0
      %v5562 = vadd.f32 0.0, %v5561
      %v5563 = vpop.f32.mrf.mxu0
      %5564 = vmatprep.mubr.bf16.mxu0 0
      %5565 = vmatmul.mubr.bf16.gmra.mxu0 %v5470
      %v5566 = vpop.f32.mrf.mxu0
      %v5567 = vadd.f32 0.0, %v5566
      %v5568 = vpop.f32.mrf.mxu0
      %v5569 = vpop.f32.mrf.mxu0
      %v5570 = vadd.f32 0.0, %v5569
      %v5571 = vpop.f32.mrf.mxu0
      %5572 = vmatprep.mubr.bf16.mxu0 0
      %5573 = vmatmul.mubr.bf16.gmra.mxu0 %v5473
      %v5574 = vpop.f32.mrf.mxu0
      %v5575 = vadd.f32 0.0, %v5574
      %v5576 = vpop.f32.mrf.mxu0
      %v5577 = vpop.f32.mrf.mxu0
      %v5578 = vadd.f32 0.0, %v5577
      %v5579 = vpop.f32.mrf.mxu0
      %5580 = vmatprep.mubr.bf16.mxu0 0
      %5581 = vmatmul.mubr.bf16.gmra.mxu0 %v5476
      %v5582 = vpop.f32.mrf.mxu0
      %v5583 = vadd.f32 0.0, %v5582
      %v5584 = vpop.f32.mrf.mxu0
      %v5585 = vpop.f32.mrf.mxu0
      %v5586 = vadd.f32 0.0, %v5585
      %v5587 = vpop.f32.mrf.mxu0
      %5588 = vmatprep.mubr.bf16.mxu0 0
      %5589 = vmatmul.mubr.bf16.gmra.mxu0 %v5479
      %v5590 = vpop.f32.mrf.mxu0
      %v5591 = vadd.f32 0.0, %v5590
      %v5592 = vpop.f32.mrf.mxu0
      %v5593 = vpop.f32.mrf.mxu0
      %v5594 = vadd.f32 0.0, %v5593
      %v5595 = vpop.f32.mrf.mxu0
      %5596 = vmatprep.mubr.bf16.mxu0 0
      %5597 = vmatmul.mubr.bf16.gmra.mxu0 %v5482
      %v5598 = vpop.f32.mrf.mxu0
      %v5599 = vadd.f32 0.0, %v5598
      %v5600 = vpop.f32.mrf.mxu0
      %v5601 = vpop.f32.mrf.mxu0
      %v5602 = vadd.f32 0.0, %v5601
      %v5603 = vpop.f32.mrf.mxu0
      %5604 = vmatprep.mubr.bf16.mxu0 0
      %5605 = vmatmul.mubr.bf16.gmra.mxu0 %v5485
      %v5606 = vpop.f32.mrf.mxu0
      %v5607 = vadd.f32 0.0, %v5606
      %v5608 = vpop.f32.mrf.mxu0
      %v5609 = vpop.f32.mrf.mxu0
      %v5610 = vadd.f32 0.0, %v5609
      %v5611 = vpop.f32.mrf.mxu0
      %5612 = vmatprep.mubr.bf16.mxu0 0
      %5613 = vmatmul.mubr.bf16.gmra.mxu0 %v5488
      %v5614 = vpop.f32.mrf.mxu0
      %v5615 = vadd.f32 0.0, %v5614
      %v5616 = vpop.f32.mrf.mxu0
      %v5617 = vpop.f32.mrf.mxu0
      %v5618 = vadd.f32 0.0, %v5617
      %v5619 = vpop.f32.mrf.mxu0
      %5620 = vmatprep.mubr.bf16.mxu0 0
      %5621 = vmatmul.mubr.bf16.gmra.mxu0 %v5491
      %v5622 = vpop.f32.mrf.mxu0
      %v5623 = vadd.f32 0.0, %v5622
      %v5624 = vpop.f32.mrf.mxu0
      %v5625 = vpop.f32.mrf.mxu0
      %v5626 = vadd.f32 0.0, %v5625
      %v5627 = vpop.f32.mrf.mxu0
      %5628 = vmatprep.mubr.bf16.mxu0 0
      %5629 = vmatmul.mubr.bf16.gmra.mxu0 %v5494
      %v5630 = vpop.f32.mrf.mxu0
      %v5631 = vadd.f32 0.0, %v5630
      %v5632 = vpop.f32.mrf.mxu0
      %v5633 = vpop.f32.mrf.mxu0
      %v5634 = vadd.f32 0.0, %v5633
      %v5635 = vpop.f32.mrf.mxu0
      %5636 = vmatprep.mubr.bf16.mxu0 0
      %5637 = vmatmul.mubr.bf16.gmra.mxu0 %v5497
      %v5638 = vpop.f32.mrf.mxu0
      %v5639 = vadd.f32 0.0, %v5638
      %v5640 = vpop.f32.mrf.mxu0
      %v5641 = vpop.f32.mrf.mxu0
      %v5642 = vadd.f32 0.0, %v5641
      %v5643 = vpop.f32.mrf.mxu0
      %5644 = vmatprep.mubr.bf16.mxu0 0
      %5645 = vmatmul.mubr.bf16.gmra.mxu0 %v5500
      %v5646 = vpop.f32.mrf.mxu0
      %v5647 = vadd.f32 0.0, %v5646
      %v5648 = vpop.f32.mrf.mxu0
      %v5649 = vpop.f32.mrf.mxu0
      %v5650 = vadd.f32 0.0, %v5649
      %v5651 = vpop.f32.mrf.mxu0
      %5652 = vmatprep.mubr.bf16.mxu0 0
      %5653 = vmatmul.mubr.bf16.gmra.mxu0 %v5503
      %v5654 = vpop.f32.mrf.mxu0
      %v5655 = vadd.f32 0.0, %v5654
      %v5656 = vpop.f32.mrf.mxu0
      %v5657 = vpop.f32.mrf.mxu0
      %v5658 = vadd.f32 0.0, %v5657
      %v5659 = vpop.f32.mrf.mxu0
      %5660 = vmatprep.mubr.bf16.mxu0 0
      %5661 = vmatmul.mubr.bf16.gmra.mxu0 %v5506
      %v5662 = vpop.f32.mrf.mxu0
      %v5663 = vadd.f32 0.0, %v5662
      %v5664 = vpop.f32.mrf.mxu0
      %v5665 = vpop.f32.mrf.mxu0
      %v5666 = vadd.f32 0.0, %v5665
      %v5667 = vpop.f32.mrf.mxu0
      %5668 = vdwg.mxu0
      %v5669 = vadd.f32 %v5219, %v5543
      %v5670 = vadd.f32 %v5220, %v5546
      %v5671 = vadd.f32 %v5221, %v5551
      %v5672 = vadd.f32 %v5222, %v5554
      %v5673 = vadd.f32 %v5223, %v5559
      %v5674 = vadd.f32 %v5224, %v5562
      %v5675 = vadd.f32 %v5225, %v5567
      %v5676 = vadd.f32 %v5226, %v5570
      %v5677 = vadd.f32 %v5227, %v5575
      %v5678 = vadd.f32 %v5228, %v5578
      %v5679 = vadd.f32 %v5229, %v5583
      %v5680 = vadd.f32 %v5230, %v5586
      %v5681 = vadd.f32 %v5231, %v5591
      %v5682 = vadd.f32 %v5232, %v5594
      %v5683 = vadd.f32 %v5233, %v5599
      %v5684 = vadd.f32 %v5234, %v5602
      %v5685 = vadd.f32 %v5235, %v5607
      %v5686 = vadd.f32 %v5236, %v5610
      %v5687 = vadd.f32 %v5237, %v5615
      %v5688 = vadd.f32 %v5238, %v5618
      %v5689 = vadd.f32 %v5239, %v5623
      %v5690 = vadd.f32 %v5240, %v5626
      %v5691 = vadd.f32 %v5241, %v5631
      %v5692 = vadd.f32 %v5242, %v5634
      %v5693 = vadd.f32 %v5243, %v5639
      %v5694 = vadd.f32 %v5244, %v5642
      %v5695 = vadd.f32 %v5245, %v5647
      %v5696 = vadd.f32 %v5246, %v5650
      %v5697 = vadd.f32 %v5247, %v5655
      %v5698 = vadd.f32 %v5248, %v5658
      %v5699 = vadd.f32 %v5249, %v5663
      %v5700 = vadd.f32 %v5250, %v5666
      %v5701 = vpack.c.bf16 %v5670, %v5669
      %v5702 = vpack.c.bf16 %v5672, %v5671
      %v5703 = vpack.c.bf16 %v5674, %v5673
      %v5704 = vpack.c.bf16 %v5676, %v5675
      %v5705 = vpack.c.bf16 %v5678, %v5677
      %v5706 = vpack.c.bf16 %v5680, %v5679
      %v5707 = vpack.c.bf16 %v5682, %v5681
      %v5708 = vpack.c.bf16 %v5684, %v5683
      %v5709 = vpack.c.bf16 %v5686, %v5685
      %v5710 = vpack.c.bf16 %v5688, %v5687
      %v5711 = vpack.c.bf16 %v5690, %v5689
      %v5712 = vpack.c.bf16 %v5692, %v5691
      %v5713 = vpack.c.bf16 %v5694, %v5693
      %v5714 = vpack.c.bf16 %v5696, %v5695
      %v5715 = vpack.c.bf16 %v5698, %v5697
      %v5716 = vpack.c.bf16 %v5700, %v5699
      %v5733 = vunpack.c.l.b16 %v5701
      %v5734 = vunpack.c.h.b16 %v5701
      %v5735 = vunpack.c.l.b16 %v5702
      %v5736 = vunpack.c.h.b16 %v5702
      %v5737 = vunpack.c.l.b16 %v5703
      %v5738 = vunpack.c.h.b16 %v5703
      %v5739 = vunpack.c.l.b16 %v5704
      %v5740 = vunpack.c.h.b16 %v5704
      %v5741 = vunpack.c.l.b16 %v5705
      %v5742 = vunpack.c.h.b16 %v5705
      %v5743 = vunpack.c.l.b16 %v5706
      %v5744 = vunpack.c.h.b16 %v5706
      %v5745 = vunpack.c.l.b16 %v5707
      %v5746 = vunpack.c.h.b16 %v5707
      %v5747 = vunpack.c.l.b16 %v5708
      %v5748 = vunpack.c.h.b16 %v5708
      %v5749 = vunpack.c.l.b16 %v5709
      %v5750 = vunpack.c.h.b16 %v5709
      %v5751 = vunpack.c.l.b16 %v5710
      %v5752 = vunpack.c.h.b16 %v5710
      %v5753 = vunpack.c.l.b16 %v5711
      %v5754 = vunpack.c.h.b16 %v5711
      %v5755 = vunpack.c.l.b16 %v5712
      %v5756 = vunpack.c.h.b16 %v5712
      %v5757 = vunpack.c.l.b16 %v5713
      %v5758 = vunpack.c.h.b16 %v5713
      %v5759 = vunpack.c.l.b16 %v5714
      %v5760 = vunpack.c.h.b16 %v5714
      %v5761 = vunpack.c.l.b16 %v5715
      %v5762 = vunpack.c.h.b16 %v5715
      %v5763 = vunpack.c.l.b16 %v5716
      %v5764 = vunpack.c.h.b16 %v5716
      %v5765 = vpack.c.b16 %v5733, %v5733
      %v5766 = vpack.c.b16 %v5734, %v5734
      %v5767 = vpack.c.b16 %v5735, %v5735
      %v5768 = vpack.c.b16 %v5736, %v5736
      %v5769 = vpack.c.b16 %v5737, %v5737
      %v5770 = vpack.c.b16 %v5738, %v5738
      %v5771 = vpack.c.b16 %v5739, %v5739
      %v5772 = vpack.c.b16 %v5740, %v5740
      %v5773 = vpack.c.b16 %v5741, %v5741
      %v5774 = vpack.c.b16 %v5742, %v5742
      %v5775 = vpack.c.b16 %v5743, %v5743
      %v5776 = vpack.c.b16 %v5744, %v5744
      %v5777 = vpack.c.b16 %v5745, %v5745
      %v5778 = vpack.c.b16 %v5746, %v5746
      %v5779 = vpack.c.b16 %v5747, %v5747
      %v5780 = vpack.c.b16 %v5748, %v5748
      %v5781 = vpack.c.b16 %v5749, %v5749
      %v5782 = vpack.c.b16 %v5750, %v5750
      %v5783 = vpack.c.b16 %v5751, %v5751
      %v5784 = vpack.c.b16 %v5752, %v5752
      %v5785 = vpack.c.b16 %v5753, %v5753
      %v5786 = vpack.c.b16 %v5754, %v5754
      %v5787 = vpack.c.b16 %v5755, %v5755
      %v5788 = vpack.c.b16 %v5756, %v5756
      %v5789 = vpack.c.b16 %v5757, %v5757
      %v5790 = vpack.c.b16 %v5758, %v5758
      %v5791 = vpack.c.b16 %v5759, %v5759
      %v5792 = vpack.c.b16 %v5760, %v5760
      %v5793 = vpack.c.b16 %v5761, %v5761
      %v5794 = vpack.c.b16 %v5762, %v5762
      %v5795 = vpack.c.b16 %v5763, %v5763
      %v5796 = vpack.c.b16 %v5764, %v5764
      %5829 = vst [vmem:[%s402] sm:$0xf] %v5765
      %5830 = vst [vmem:[%s402 + $0x4] sm:$0xf] %v5766
      %5831 = vst [vmem:[%s402 + $0x8] sm:$0xf] %v5767
      %5832 = vst [vmem:[%s402 + $0xc] sm:$0xf] %v5768
      %5833 = vst [vmem:[%s402 + $0x10] sm:$0xf] %v5769
      %5834 = vst [vmem:[%s402 + $0x14] sm:$0xf] %v5770
      %5835 = vst [vmem:[%s402 + $0x18] sm:$0xf] %v5771
      %5836 = vst [vmem:[%s402 + $0x1c] sm:$0xf] %v5772
      %5837 = vst [vmem:[%s402 + $0x20] sm:$0xf] %v5773
      %5838 = vst [vmem:[%s402 + $0x24] sm:$0xf] %v5774
      %5839 = vst [vmem:[%s402 + $0x28] sm:$0xf] %v5775
      %5840 = vst [vmem:[%s402 + $0x2c] sm:$0xf] %v5776
      %5841 = vst [vmem:[%s402 + $0x30] sm:$0xf] %v5777
      %5842 = vst [vmem:[%s402 + $0x34] sm:$0xf] %v5778
      %5843 = vst [vmem:[%s402 + $0x38] sm:$0xf] %v5779
      %5844 = vst [vmem:[%s402 + $0x3c] sm:$0xf] %v5780
      %5845 = vst [vmem:[%s402 + $0x40] sm:$0xf] %v5781
      %5846 = vst [vmem:[%s402 + $0x44] sm:$0xf] %v5782
      %5847 = vst [vmem:[%s402 + $0x48] sm:$0xf] %v5783
      %5848 = vst [vmem:[%s402 + $0x4c] sm:$0xf] %v5784
      %5849 = vst [vmem:[%s402 + $0x50] sm:$0xf] %v5785
      %5850 = vst [vmem:[%s402 + $0x54] sm:$0xf] %v5786
      %5851 = vst [vmem:[%s402 + $0x58] sm:$0xf] %v5787
      %5852 = vst [vmem:[%s402 + $0x5c] sm:$0xf] %v5788
      %5853 = vst [vmem:[%s402 + $0x60] sm:$0xf] %v5789
      %5854 = vst [vmem:[%s402 + $0x64] sm:$0xf] %v5790
      %5855 = vst [vmem:[%s402 + $0x68] sm:$0xf] %v5791
      %5856 = vst [vmem:[%s402 + $0x6c] sm:$0xf] %v5792
      %5857 = vst [vmem:[%s402 + $0x70] sm:$0xf] %v5793
      %5858 = vst [vmem:[%s402 + $0x74] sm:$0xf] %v5794
      %5859 = vst [vmem:[%s402 + $0x78] sm:$0xf] %v5795
      %5860 = vst [vmem:[%s402 + $0x7c] sm:$0xf] %v5796
      %v5861 = vadd.f32 %v5669, %v5670
      %v5862 = vadd.f32 %v5861, %v5671
      %v5863 = vadd.f32 %v5862, %v5672
      %v5864 = vadd.f32 %v5863, %v5673
      %v5865 = vadd.f32 %v5864, %v5674
      %v5866 = vadd.f32 %v5865, %v5675
      %v5867 = vadd.f32 %v5866, %v5676
      %v5868 = vadd.f32 %v5867, %v5677
      %v5869 = vadd.f32 %v5868, %v5678
      %v5870 = vadd.f32 %v5869, %v5679
      %v5871 = vadd.f32 %v5870, %v5680
      %v5872 = vadd.f32 %v5871, %v5681
      %v5873 = vadd.f32 %v5872, %v5682
      %v5874 = vadd.f32 %v5873, %v5683
      %v5875 = vadd.f32 %v5874, %v5684
      %v5876 = vadd.f32 %v5875, %v5685
      %v5877 = vadd.f32 %v5876, %v5686
      %v5878 = vadd.f32 %v5877, %v5687
      %v5879 = vadd.f32 %v5878, %v5688
      %v5880 = vadd.f32 %v5879, %v5689
      %v5881 = vadd.f32 %v5880, %v5690
      %v5882 = vadd.f32 %v5881, %v5691
      %v5883 = vadd.f32 %v5882, %v5692
      %v5884 = vadd.f32 %v5883, %v5693
      %v5885 = vadd.f32 %v5884, %v5694
      %v5886 = vadd.f32 %v5885, %v5695
      %v5887 = vadd.f32 %v5886, %v5696
      %v5888 = vadd.f32 %v5887, %v5697
      %v5889 = vadd.f32 %v5888, %v5698
      %v5890 = vadd.f32 %v5889, %v5699
      %v5891 = vadd.f32 %v5890, %v5700
      %v5892 = vrot.slane %v5891, 4
      %v5893 = vadd.f32 %v5891, %v5892
      %v5894 = vrot.slane %v5893, 2
      %v5895 = vadd.f32 %v5893, %v5894
      %v5896 = vrot.slane %v5895, 1
      %v5897 = vadd.f32 %v5895, %v5896
      %5898 = vst [vmem:[%s410] sm:$0x1] %v5897
      %v5899 = vmul.f32 %v5669, %v5669
      %v5900 = vmul.f32 %v5670, %v5670
      %v5901 = vmul.f32 %v5671, %v5671
      %v5902 = vmul.f32 %v5672, %v5672
      %v5903 = vmul.f32 %v5673, %v5673
      %v5904 = vmul.f32 %v5674, %v5674
      %v5905 = vmul.f32 %v5675, %v5675
      %v5906 = vmul.f32 %v5676, %v5676
      %v5907 = vmul.f32 %v5677, %v5677
      %v5908 = vmul.f32 %v5678, %v5678
      %v5909 = vmul.f32 %v5679, %v5679
      %v5910 = vmul.f32 %v5680, %v5680
      %v5911 = vmul.f32 %v5681, %v5681
      %v5912 = vmul.f32 %v5682, %v5682
      %v5913 = vmul.f32 %v5683, %v5683
      %v5914 = vmul.f32 %v5684, %v5684
      %v5915 = vmul.f32 %v5685, %v5685
      %v5916 = vmul.f32 %v5686, %v5686
      %v5917 = vmul.f32 %v5687, %v5687
      %v5918 = vmul.f32 %v5688, %v5688
      %v5919 = vmul.f32 %v5689, %v5689
      %v5920 = vmul.f32 %v5690, %v5690
      %v5921 = vmul.f32 %v5691, %v5691
      %v5922 = vmul.f32 %v5692, %v5692
      %v5923 = vmul.f32 %v5693, %v5693
      %v5924 = vmul.f32 %v5694, %v5694
      %v5925 = vmul.f32 %v5695, %v5695
      %v5926 = vmul.f32 %v5696, %v5696
      %v5927 = vmul.f32 %v5697, %v5697
      %v5928 = vmul.f32 %v5698, %v5698
      %v5929 = vmul.f32 %v5699, %v5699
      %v5930 = vmul.f32 %v5700, %v5700
      %v5931 = vadd.f32 %v5899, %v5900
      %v5932 = vadd.f32 %v5931, %v5901
      %v5933 = vadd.f32 %v5932, %v5902
      %v5934 = vadd.f32 %v5933, %v5903
      %v5935 = vadd.f32 %v5934, %v5904
      %v5936 = vadd.f32 %v5935, %v5905
      %v5937 = vadd.f32 %v5936, %v5906
      %v5938 = vadd.f32 %v5937, %v5907
      %v5939 = vadd.f32 %v5938, %v5908
      %v5940 = vadd.f32 %v5939, %v5909
      %v5941 = vadd.f32 %v5940, %v5910
      %v5942 = vadd.f32 %v5941, %v5911
      %v5943 = vadd.f32 %v5942, %v5912
      %v5944 = vadd.f32 %v5943, %v5913
      %v5945 = vadd.f32 %v5944, %v5914
      %v5946 = vadd.f32 %v5945, %v5915
      %v5947 = vadd.f32 %v5946, %v5916
      %v5948 = vadd.f32 %v5947, %v5917
      %v5949 = vadd.f32 %v5948, %v5918
      %v5950 = vadd.f32 %v5949, %v5919
      %v5951 = vadd.f32 %v5950, %v5920
      %v5952 = vadd.f32 %v5951, %v5921
      %v5953 = vadd.f32 %v5952, %v5922
      %v5954 = vadd.f32 %v5953, %v5923
      %v5955 = vadd.f32 %v5954, %v5924
      %v5956 = vadd.f32 %v5955, %v5925
      %v5957 = vadd.f32 %v5956, %v5926
      %v5958 = vadd.f32 %v5957, %v5927
      %v5959 = vadd.f32 %v5958, %v5928
      %v5960 = vadd.f32 %v5959, %v5929
      %v5961 = vadd.f32 %v5960, %v5930
      %v5962 = vrot.slane %v5961, 4
      %v5963 = vadd.f32 %v5961, %v5962
      %v5964 = vrot.slane %v5963, 2
      %v5965 = vadd.f32 %v5963, %v5964
      %v5966 = vrot.slane %v5965, 1
      %v5967 = vadd.f32 %v5965, %v5966
      %5968 = vst [vmem:[%s410 + $0x1] sm:$0x1] %v5967
      %s5969 = smul.u32 32, %s22
      %p5970 = scmp.lt.s32.totalorder %s21, 1
      %s5971 = scalar_select %p5970, %s21, 1
      %p5972 = scmp.lt.s32.totalorder %s5969, 31
      %s5973 = scalar_select %p5972, %s5969, 31
      %s5974 = smul.addr %s5971, 32
      %s5975 = sadd.s32 %s5973, %s5974
      %s5976 = smul.addr %s5975, 4
      %s5977 = scalar_lea.vmem %s4, %s5976
      %p5978 = scmp.lt.s32.totalorder %s21, 1
      %s5979 = scalar_select %p5978, %s21, 1
      %p5980 = scmp.lt.s32.totalorder %s22, 0
      %s5981 = scalar_select %p5980, %s22, 0
      %s5982 = sadd.s32 %s5981, %s5979
      %s5983 = smul.addr %s5982, 2
      %s5984 = scalar_lea.vmem %s5, %s5983
      // Predicated region
      $region53: #{doubleconv_forward.3} parent=35 // pred_check
        %p5985 = pneg %p170
      $region54: #{doubleconv_forward.3} parent=35 // pred_check_branch
        %5987 = sbr.rel (%p5985) target = $region56
      $region55: #{doubleconv_forward.3} parent=35 // pred_region
        %s5988 = smul.u32 32, %s22
      $region56: #{doubleconv_forward.3} parent=35 // pred_fallthru
        _
      // Predicated region
      $region57: #{doubleconv_forward.3} parent=35 // pred_check
        %p5989 = pneg %p198
      $region58: #{doubleconv_forward.3} parent=35 // pred_check_branch
        %5991 = sbr.rel (%p5989) target = $region60
      $region59: #{doubleconv_forward.3} parent=35 // pred_region
        _
      $region60: #{doubleconv_forward.3} parent=35 // pred_fallthru
        _
    $region36: #{doubleconv_forward.3} parent=5 // pred_fallthru
      _
    %p5992 = scmp.le.s32.totalorder 2, %s12
    // Predicated region
    $region61: #{doubleconv_forward.3} parent=5 // pred_check
      %p5993 = pneg %p5992
    $region62: #{doubleconv_forward.3} parent=5 // pred_check_branch
      %5995 = sbr.rel (%p5993) target = $region64
    $region63: #{doubleconv_forward.3} parent=5 // pred_region
      %s5996 = ssub.s32 %s12, 2
      // Predicated region
      $region65: #{doubleconv_forward.3} parent=63 // pred_check
        %p5997 = pneg %p176
      $region66: #{doubleconv_forward.3} parent=63 // pred_check_branch
        %5999 = sbr.rel (%p5997) target = $region68
      $region67: #{doubleconv_forward.3} parent=63 // pred_region
        %s6000 = smul.u32 32, %s24
        %p6001 = scmp.lt.s32.totalorder %s23, 1
        %s6002 = scalar_select %p6001, %s23, 1
        %p6003 = scmp.lt.s32.totalorder %s6000, 31
        %s6004 = scalar_select %p6003, %s6000, 31
        %s6005 = smul.addr %s6002, 32
        %s6006 = sadd.s32 %s6004, %s6005
        %s6007 = smul.addr %s6006, 4
        %s6008 = scalar_lea.vmem %s4, %s6007
      $region68: #{doubleconv_forward.3} parent=63 // pred_fallthru
        _
      // Predicated region
      $region69: #{doubleconv_forward.3} parent=63 // pred_check
        %p6009 = pneg %p204
      $region70: #{doubleconv_forward.3} parent=63 // pred_check_branch
        %6011 = sbr.rel (%p6009) target = $region72
      $region71: #{doubleconv_forward.3} parent=63 // pred_region
        %p6012 = scmp.lt.s32.totalorder %s23, 1
        %s6013 = scalar_select %p6012, %s23, 1
        %p6014 = scmp.lt.s32.totalorder %s24, 0
        %s6015 = scalar_select %p6014, %s24, 0
        %s6016 = sadd.s32 %s6015, %s6013
        %s6017 = smul.addr %s6016, 2
        %s6018 = scalar_lea.vmem %s5, %s6017
      $region72: #{doubleconv_forward.3} parent=63 // pred_fallthru
        _
    $region64: #{doubleconv_forward.3} parent=5 // pred_fallthru
      _
  $region6: #{doubleconv_forward.3} parent=0 // loop_footer
    %s16 = sadd.s32 1, %s12
  $region7: #{doubleconv_forward.3} parent=0 // loop_footer_branch
    %11 = sbr.rel target = $region3
  $region8: #{doubleconv_forward.3} parent=0 // loop_exit
    _

// kernel: doubleconv_forward.5
$region0: #{doubleconv_forward.5}
  #allocation0 [shape = 'u32[]', space=smem, size = 0x4, offset = 0x4, fixed_abs, tag = 'smem constant byte address 0x4 - core index']
  #allocation1 [shape = 'u32[144,128]{1,0:T(1,128)}', space=vmem, size = 0x12000, scoped, tag = 'internal scratch']
  %s0 = inlined_call_operand.vmem [shape: bf16[2,256,128], index: 0, kind: input, shape index: {}]
  %s1 = inlined_call_operand.vmem [shape: f32[1,128], index: 1, kind: input, shape index: {}]
  %s2 = inlined_call_operand.vmem [shape: f32[1,128], index: 2, kind: input, shape index: {}]
  %s3 = inlined_call_operand.vmem [shape: f32[2,256,128], index: 3, kind: output, shape index: {}]
  %s4 = sld [smem:[#allocation0]]
  $region45: #{doubleconv_forward.5} parent=0
    _
  %s6 = ssub.s32 1, %s4
  %s7 = scalar_select 0, %s6, %s4
  loop: start=0, step=1, limit=4
  $region2: #{doubleconv_forward.5} parent=0 // loop_pre_header
    _
  $region3: #{doubleconv_forward.5} parent=0 // loop_header
    %s9 = sphi 0, %s13
    %p10 = scmp.ge.s32.totalorder %s9, 4
    %s16 = sphi 0, %s28
    %s17 = sphi 0, %s24
    %s18 = sphi 0, %s16
    %s19 = sphi 0, %s17
    %s20 = sphi 0, %s18
    %s21 = sphi 0, %s19
    %s33 = sphi 0, %s35
    %s36 = sphi 0, %s33
    %s37 = sphi 0, %s36
    %s53 = sphi 0, %s37
    %s57 = sphi 0, %s57
    %s59 = sphi 0, %s57
    %s60 = sphi 0, %s59
    %s74 = sphi 0, %s60
    %s78 = sphi 0, %s78
    %s80 = sphi 0, %s78
    %s81 = sphi 0, %s80
    %s95 = sphi 0, %s81
    %s103 = sphi 0, %s105
    %s106 = sphi 0, %s103
    %s107 = sphi 0, %s106
    %s123 = sphi 0, %s107
  $region4: #{doubleconv_forward.5} parent=0 // loop_header_branch
    %12 = sbr.rel (%p10) target = $region8
  $region5: #{doubleconv_forward.5} parent=0 // loop_body
    %s14 = ssub.s32 %s9, 1
    %s15 = ssub.s32 %s9, 2
    %s22 = sadd.s32 1, %s17
    %p23 = scmp.ge.s32.totalorder %s22, 1
    %s24 = scalar_select %p23, 0, %s22
    %s25 = sadd.s32 1, %s16
    %s26 = scalar_select %p23, %s25, %s16
    %p27 = scmp.ge.s32.totalorder %s26, 2
    %s28 = scalar_select %p27, 0, %s26
    %s29 = ssub.s32 %s16, %s28
    %s30 = ssub.s32 %s17, %s24
    %s31 = sor.u32 %s29, %s30
    %p32 = scmp.eq.s32.totalorder %s31, 0
    %s34 = sadd.s32 %s33, 1
    %s35 = scalar_select %p32, %s33, %s34
    %p38 = pneg %p32
    %p39 = scmp.eq.s32.totalorder %s9, 1
    %p40 = por %p38, %p39
    %p41 = scmp.ne.s32.totalorder %s33, %s36
    %p42 = scmp.eq.s32.totalorder %s9, 0
    %p43 = por %p41, %p42
    %p44 = scmp.ne.s32.totalorder %s33, %s36
    %p45 = scmp.eq.s32.totalorder %s14, 1
    %p46 = por %p44, %p45
    %p47 = scmp.ne.s32.totalorder %s36, %s37
    %p48 = scmp.eq.s32.totalorder %s14, 0
    %p49 = por %p47, %p48
    %p50 = scmp.ne.s32.totalorder %s36, %s37
    %p51 = scmp.eq.s32.totalorder %s15, 1
    %p52 = por %p50, %p51
    %p54 = scmp.ne.s32.totalorder %s37, %s53
    %p55 = scmp.eq.s32.totalorder %s15, 0
    %p56 = por %p54, %p55
    %s58 = sadd.s32 %s57, 1
    %p61 = scmp.eq.s32.totalorder %s9, 1
    %p62 = scmp.ne.s32.totalorder %s57, %s59
    %p63 = scmp.eq.s32.totalorder %s9, 0
    %p64 = por %p62, %p63
    %p65 = scmp.ne.s32.totalorder %s57, %s59
    %p66 = scmp.eq.s32.totalorder %s14, 1
    %p67 = por %p65, %p66
    %p68 = scmp.ne.s32.totalorder %s59, %s60
    %p69 = scmp.eq.s32.totalorder %s14, 0
    %p70 = por %p68, %p69
    %p71 = scmp.ne.s32.totalorder %s59, %s60
    %p72 = scmp.eq.s32.totalorder %s15, 1
    %p73 = por %p71, %p72
    %p75 = scmp.ne.s32.totalorder %s60, %s74
    %p76 = scmp.eq.s32.totalorder %s15, 0
    %p77 = por %p75, %p76
    %s79 = sadd.s32 %s78, 1
    %p82 = scmp.eq.s32.totalorder %s9, 1
    %p83 = scmp.ne.s32.totalorder %s78, %s80
    %p84 = scmp.eq.s32.totalorder %s9, 0
    %p85 = por %p83, %p84
    %p86 = scmp.ne.s32.totalorder %s78, %s80
    %p87 = scmp.eq.s32.totalorder %s14, 1
    %p88 = por %p86, %p87
    %p89 = scmp.ne.s32.totalorder %s80, %s81
    %p90 = scmp.eq.s32.totalorder %s14, 0
    %p91 = por %p89, %p90
    %p92 = scmp.ne.s32.totalorder %s80, %s81
    %p93 = scmp.eq.s32.totalorder %s15, 1
    %p94 = por %p92, %p93
    %p96 = scmp.ne.s32.totalorder %s81, %s95
    %p97 = scmp.eq.s32.totalorder %s15, 0
    %p98 = por %p96, %p97
    %s99 = ssub.s32 %s16, %s28
    %s100 = ssub.s32 %s17, %s24
    %s101 = sor.u32 %s99, %s100
    %p102 = scmp.eq.s32.totalorder %s101, 0
    %s104 = sadd.s32 %s103, 1
    %s105 = scalar_select %p102, %s103, %s104
    %p108 = pneg %p102
    %p109 = scmp.eq.s32.totalorder %s9, 1
    %p110 = por %p108, %p109
    %p111 = scmp.ne.s32.totalorder %s103, %s106
    %p112 = scmp.eq.s32.totalorder %s9, 0
    %p113 = por %p111, %p112
    %p114 = scmp.ne.s32.totalorder %s103, %s106
    %p115 = scmp.eq.s32.totalorder %s14, 1
    %p116 = por %p114, %p115
    %p117 = scmp.ne.s32.totalorder %s106, %s107
    %p118 = scmp.eq.s32.totalorder %s14, 0
    %p119 = por %p117, %p118
    %p120 = scmp.ne.s32.totalorder %s106, %s107
    %p121 = scmp.eq.s32.totalorder %s15, 1
    %p122 = por %p120, %p121
    %p124 = scmp.ne.s32.totalorder %s107, %s123
    %p125 = scmp.eq.s32.totalorder %s15, 0
    %p126 = por %p124, %p125
    %p127 = scmp.le.s32.totalorder 1, %s9
    %p128 = scmp.lt.s32.totalorder %s9, 3
    %p129 = pnand %p127, %p128
    %p130 = pneg %p129
    // Predicated region
    $region9: #{doubleconv_forward.5} parent=5 // pred_check
      _
    $region10: #{doubleconv_forward.5} parent=5 // pred_check_branch
      %132 = sbr.rel (%p129) target = $region12
    $region11: #{doubleconv_forward.5} parent=5 // pred_region
      %s133 = ssub.s32 %s9, 1
      // Predicated region
      $region13: #{doubleconv_forward.5} parent=11 // pred_check
        %p134 = pneg %p70
      $region14: #{doubleconv_forward.5} parent=11 // pred_check_branch
        %136 = sbr.rel (%p134) target = $region16
      $region15: #{doubleconv_forward.5} parent=11 // pred_region
        _
      $region16: #{doubleconv_forward.5} parent=11 // pred_fallthru
        _
      // Predicated region
      $region17: #{doubleconv_forward.5} parent=11 // pred_check
        %p137 = pneg %p91
      $region18: #{doubleconv_forward.5} parent=11 // pred_check_branch
        %139 = sbr.rel (%p137) target = $region20
      $region19: #{doubleconv_forward.5} parent=11 // pred_region
        _
      $region20: #{doubleconv_forward.5} parent=11 // pred_fallthru
        _
    $region12: #{doubleconv_forward.5} parent=5 // pred_fallthru
      _
    %p140 = scmp.lt.s32.totalorder %s9, 2
    // Predicated region
    $region21: #{doubleconv_forward.5} parent=5 // pred_check
      %p141 = pneg %p140
    $region22: #{doubleconv_forward.5} parent=5 // pred_check_branch
      %143 = sbr.rel (%p141) target = $region24
    $region23: #{doubleconv_forward.5} parent=5 // pred_region
      // Predicated region
      $region25: #{doubleconv_forward.5} parent=23 // pred_check
        %p144 = pneg %p43
      $region26: #{doubleconv_forward.5} parent=23 // pred_check_branch
        %146 = sbr.rel (%p144) target = $region28
      $region27: #{doubleconv_forward.5} parent=23 // pred_region
        %s147 = smul.u32 32, %s17
        %p148 = scmp.lt.s32.totalorder %s16, 1
        %s149 = scalar_select %p148, %s16, 1
        %p150 = scmp.lt.s32.totalorder %s147, 31
        %s151 = scalar_select %p150, %s147, 31
        %s152 = smul.addr %s149, 32
        %s153 = sadd.s32 %s151, %s152
        %s154 = smul.addr %s153, 4
        %s155 = scalar_lea.vmem %s0, %s154
        %s156 = smul.u32 32, %s17
      $region28: #{doubleconv_forward.5} parent=23 // pred_fallthru
        _
    $region24: #{doubleconv_forward.5} parent=5 // pred_fallthru
      _
    %p157 = scmp.le.s32.totalorder 1, %s9
    %p158 = scmp.lt.s32.totalorder %s9, 3
    %p159 = pnand %p157, %p158
    %p160 = pneg %p159
    // Predicated region
    $region29: #{doubleconv_forward.5} parent=5 // pred_check
      _
    $region30: #{doubleconv_forward.5} parent=5 // pred_check_branch
      %162 = sbr.rel (%p159) target = $region32
    $region31: #{doubleconv_forward.5} parent=5 // pred_region
      %s163 = ssub.s32 %s9, 1
      %s164 = smul.u32 32, %s19
      %p165 = scmp.lt.s32.totalorder %s18, 1
      %s166 = scalar_select %p165, %s18, 1
      %p167 = scmp.lt.s32.totalorder %s164, 31
      %s168 = scalar_select %p167, %s164, 31
      %s169 = smul.addr %s166, 32
      %s170 = sadd.s32 %s168, %s169
      %s171 = smul.addr %s170, 4
      %s172 = scalar_lea.vmem %s0, %s171
      %p173 = pneg %p49
      %p174 = pneg %p46
      %p175 = pneg %p70
      %p176 = pneg %p67
      %p177 = pneg %p91
      %p178 = pneg %p88
      %p179 = pneg %p119
      %p180 = pneg %p116
      %s181 = smul.u32 32, %s19
      %p182 = scmp.lt.s32.totalorder %s18, 1
      %s183 = scalar_select %p182, %s18, 1
      %p184 = scmp.lt.s32.totalorder %s181, 31
      %s185 = scalar_select %p184, %s181, 31
      %s186 = smul.addr %s183, 32
      %s187 = sadd.s32 %s185, %s186
      %s188 = smul.addr %s187, 8
      %s189 = scalar_lea.vmem %s3, %s188
      %s190 = smul.u32 32, %s19
      %p191 = scmp.lt.s32.totalorder %s18, 1
      %s192 = scalar_select %p191, %s18, 1
      %p193 = scmp.lt.s32.totalorder %s190, 31
      %s194 = scalar_select %p193, %s190, 31
      %s195 = smul.addr %s192, 32
      %s196 = sadd.s32 %s194, %s195
      %s197 = smul.addr %s196, 4
      %s198 = scalar_lea.vmem %s0, %s197
      %s199 = smul.u32 32, %s19
      %s200 = smul.u32 32, %s19
      %p201 = scmp.lt.s32.totalorder %s18, 1
      %s202 = scalar_select %p201, %s18, 1
      %p203 = scmp.lt.s32.totalorder %s200, 31
      %s204 = scalar_select %p203, %s200, 31
      %s205 = smul.addr %s202, 32
      %s206 = sadd.s32 %s204, %s205
      %s207 = smul.addr %s206, 8
      %s208 = scalar_lea.vmem %s3, %s207
      %s209 = smul.u32 32, %s19
      %v210 = vld [vmem:[%s198] sm:$0xf]
      %v211 = vld [vmem:[%s198 + $0x4] sm:$0xf]
      %v212 = vld [vmem:[%s198 + $0x8] sm:$0xf]
      %v213 = vld [vmem:[%s198 + $0xc] sm:$0xf]
      %v214 = vld [vmem:[%s198 + $0x10] sm:$0xf]
      %v215 = vld [vmem:[%s198 + $0x14] sm:$0xf]
      %v216 = vld [vmem:[%s198 + $0x18] sm:$0xf]
      %v217 = vld [vmem:[%s198 + $0x1c] sm:$0xf]
      %v218 = vld [vmem:[%s198 + $0x20] sm:$0xf]
      %v219 = vld [vmem:[%s198 + $0x24] sm:$0xf]
      %v220 = vld [vmem:[%s198 + $0x28] sm:$0xf]
      %v221 = vld [vmem:[%s198 + $0x2c] sm:$0xf]
      %v222 = vld [vmem:[%s198 + $0x30] sm:$0xf]
      %v223 = vld [vmem:[%s198 + $0x34] sm:$0xf]
      %v224 = vld [vmem:[%s198 + $0x38] sm:$0xf]
      %v225 = vld [vmem:[%s198 + $0x3c] sm:$0xf]
      %v226 = vld [vmem:[%s198 + $0x40] sm:$0xf]
      %v227 = vld [vmem:[%s198 + $0x44] sm:$0xf]
      %v228 = vld [vmem:[%s198 + $0x48] sm:$0xf]
      %v229 = vld [vmem:[%s198 + $0x4c] sm:$0xf]
      %v230 = vld [vmem:[%s198 + $0x50] sm:$0xf]
      %v231 = vld [vmem:[%s198 + $0x54] sm:$0xf]
      %v232 = vld [vmem:[%s198 + $0x58] sm:$0xf]
      %v233 = vld [vmem:[%s198 + $0x5c] sm:$0xf]
      %v234 = vld [vmem:[%s198 + $0x60] sm:$0xf]
      %v235 = vld [vmem:[%s198 + $0x64] sm:$0xf]
      %v236 = vld [vmem:[%s198 + $0x68] sm:$0xf]
      %v237 = vld [vmem:[%s198 + $0x6c] sm:$0xf]
      %v238 = vld [vmem:[%s198 + $0x70] sm:$0xf]
      %v239 = vld [vmem:[%s198 + $0x74] sm:$0xf]
      %v240 = vld [vmem:[%s198 + $0x78] sm:$0xf]
      %v241 = vld [vmem:[%s198 + $0x7c] sm:$0xf]
      %v242 = vld [vmem:[%s1] sm:$0x1]
      %v243 = vunpack.c.l.bf16 %v210
      %v244 = vunpack.c.l.bf16 %v211
      %v245 = vunpack.c.l.bf16 %v212
      %v246 = vunpack.c.l.bf16 %v213
      %v247 = vunpack.c.l.bf16 %v214
      %v248 = vunpack.c.l.bf16 %v215
      %v249 = vunpack.c.l.bf16 %v216
      %v250 = vunpack.c.l.bf16 %v217
      %v251 = vunpack.c.l.bf16 %v218
      %v252 = vunpack.c.l.bf16 %v219
      %v253 = vunpack.c.l.bf16 %v220
      %v254 = vunpack.c.l.bf16 %v221
      %v255 = vunpack.c.l.bf16 %v222
      %v256 = vunpack.c.l.bf16 %v223
      %v257 = vunpack.c.l.bf16 %v224
      %v258 = vunpack.c.l.bf16 %v225
      %v259 = vunpack.c.l.bf16 %v226
      %v260 = vunpack.c.l.bf16 %v227
      %v261 = vunpack.c.l.bf16 %v228
      %v262 = vunpack.c.l.bf16 %v229
      %v263 = vunpack.c.l.bf16 %v230
      %v264 = vunpack.c.l.bf16 %v231
      %v265 = vunpack.c.l.bf16 %v232
      %v266 = vunpack.c.l.bf16 %v233
      %v267 = vunpack.c.l.bf16 %v234
      %v268 = vunpack.c.l.bf16 %v235
      %v269 = vunpack.c.l.bf16 %v236
      %v270 = vunpack.c.l.bf16 %v237
      %v271 = vunpack.c.l.bf16 %v238
      %v272 = vunpack.c.l.bf16 %v239
      %v273 = vunpack.c.l.bf16 %v240
      %v274 = vunpack.c.l.bf16 %v241
      %v276 = vlaneseq
      %v277 = vshrl.u32 %v276, 7
      %v278 = vsub.s32 0, %v277
      %v279 = vrot.slane %v242, %v278
      %v281 = vmul.f32 %v243, %v279
      %v282 = vmul.f32 %v244, %v279
      %v283 = vmul.f32 %v245, %v279
      %v284 = vmul.f32 %v246, %v279
      %v285 = vmul.f32 %v247, %v279
      %v286 = vmul.f32 %v248, %v279
      %v287 = vmul.f32 %v249, %v279
      %v288 = vmul.f32 %v250, %v279
      %v289 = vmul.f32 %v251, %v279
      %v290 = vmul.f32 %v252, %v279
      %v291 = vmul.f32 %v253, %v279
      %v292 = vmul.f32 %v254, %v279
      %v293 = vmul.f32 %v255, %v279
      %v294 = vmul.f32 %v256, %v279
      %v295 = vmul.f32 %v257, %v279
      %v296 = vmul.f32 %v258, %v279
      %v297 = vmul.f32 %v259, %v279
      %v298 = vmul.f32 %v260, %v279
      %v299 = vmul.f32 %v261, %v279
      %v300 = vmul.f32 %v262, %v279
      %v301 = vmul.f32 %v263, %v279
      %v302 = vmul.f32 %v264, %v279
      %v303 = vmul.f32 %v265, %v279
      %v304 = vmul.f32 %v266, %v279
      %v305 = vmul.f32 %v267, %v279
      %v306 = vmul.f32 %v268, %v279
      %v307 = vmul.f32 %v269, %v279
      %v308 = vmul.f32 %v270, %v279
      %v309 = vmul.f32 %v271, %v279
      %v310 = vmul.f32 %v272, %v279
      %v311 = vmul.f32 %v273, %v279
      %v312 = vmul.f32 %v274, %v279
      %v313 = vld [vmem:[%s2] sm:$0x1]
      %v315 = vlaneseq
      %v316 = vshrl.u32 %v315, 7
      %v317 = vsub.s32 0, %v316
      %v318 = vrot.slane %v313, %v317
      %v320 = vadd.f32 %v281, %v318
      %v321 = vadd.f32 %v282, %v318
      %v322 = vadd.f32 %v283, %v318
      %v323 = vadd.f32 %v284, %v318
      %v324 = vadd.f32 %v285, %v318
      %v325 = vadd.f32 %v286, %v318
      %v326 = vadd.f32 %v287, %v318
      %v327 = vadd.f32 %v288, %v318
      %v328 = vadd.f32 %v289, %v318
      %v329 = vadd.f32 %v290, %v318
      %v330 = vadd.f32 %v291, %v318
      %v331 = vadd.f32 %v292, %v318
      %v332 = vadd.f32 %v293, %v318
      %v333 = vadd.f32 %v294, %v318
      %v334 = vadd.f32 %v295, %v318
      %v335 = vadd.f32 %v296, %v318
      %v336 = vadd.f32 %v297, %v318
      %v337 = vadd.f32 %v298, %v318
      %v338 = vadd.f32 %v299, %v318
      %v339 = vadd.f32 %v300, %v318
      %v340 = vadd.f32 %v301, %v318
      %v341 = vadd.f32 %v302, %v318
      %v342 = vadd.f32 %v303, %v318
      %v343 = vadd.f32 %v304, %v318
      %v344 = vadd.f32 %v305, %v318
      %v345 = vadd.f32 %v306, %v318
      %v346 = vadd.f32 %v307, %v318
      %v347 = vadd.f32 %v308, %v318
      %v348 = vadd.f32 %v309, %v318
      %v349 = vadd.f32 %v310, %v318
      %v350 = vadd.f32 %v311, %v318
      %v351 = vadd.f32 %v312, %v318
      %v352 = vmax.f32 %v320, 0.0
      %v353 = vmax.f32 %v321, 0.0
      %v354 = vmax.f32 %v322, 0.0
      %v355 = vmax.f32 %v323, 0.0
      %v356 = vmax.f32 %v324, 0.0
      %v357 = vmax.f32 %v325, 0.0
      %v358 = vmax.f32 %v326, 0.0
      %v359 = vmax.f32 %v327, 0.0
      %v360 = vmax.f32 %v328, 0.0
      %v361 = vmax.f32 %v329, 0.0
      %v362 = vmax.f32 %v330, 0.0
      %v363 = vmax.f32 %v331, 0.0
      %v364 = vmax.f32 %v332, 0.0
      %v365 = vmax.f32 %v333, 0.0
      %v366 = vmax.f32 %v334, 0.0
      %v367 = vmax.f32 %v335, 0.0
      %v368 = vmax.f32 %v336, 0.0
      %v369 = vmax.f32 %v337, 0.0
      %v370 = vmax.f32 %v338, 0.0
      %v371 = vmax.f32 %v339, 0.0
      %v372 = vmax.f32 %v340, 0.0
      %v373 = vmax.f32 %v341, 0.0
      %v374 = vmax.f32 %v342, 0.0
      %v375 = vmax.f32 %v343, 0.0
      %v376 = vmax.f32 %v344, 0.0
      %v377 = vmax.f32 %v345, 0.0
      %v378 = vmax.f32 %v346, 0.0
      %v379 = vmax.f32 %v347, 0.0
      %v380 = vmax.f32 %v348, 0.0
      %v381 = vmax.f32 %v349, 0.0
      %v382 = vmax.f32 %v350, 0.0
      %v383 = vmax.f32 %v351, 0.0
      %384 = vst [vmem:[%s208] sm:$0xff] %v352
      %385 = vst [vmem:[%s208 + $0x8] sm:$0xff] %v353
      %386 = vst [vmem:[%s208 + $0x10] sm:$0xff] %v354
      %387 = vst [vmem:[%s208 + $0x18] sm:$0xff] %v355
      %388 = vst [vmem:[%s208 + $0x20] sm:$0xff] %v356
      %389 = vst [vmem:[%s208 + $0x28] sm:$0xff] %v357
      %390 = vst [vmem:[%s208 + $0x30] sm:$0xff] %v358
      %391 = vst [vmem:[%s208 + $0x38] sm:$0xff] %v359
      %392 = vst [vmem:[%s208 + $0x40] sm:$0xff] %v360
      %393 = vst [vmem:[%s208 + $0x48] sm:$0xff] %v361
      %394 = vst [vmem:[%s208 + $0x50] sm:$0xff] %v362
      %395 = vst [vmem:[%s208 + $0x58] sm:$0xff] %v363
      %396 = vst [vmem:[%s208 + $0x60] sm:$0xff] %v364
      %397 = vst [vmem:[%s208 + $0x68] sm:$0xff] %v365
      %398 = vst [vmem:[%s208 + $0x70] sm:$0xff] %v366
      %399 = vst [vmem:[%s208 + $0x78] sm:$0xff] %v367
      %400 = vst [vmem:[%s208 + $0x80] sm:$0xff] %v368
      %401 = vst [vmem:[%s208 + $0x88] sm:$0xff] %v369
      %402 = vst [vmem:[%s208 + $0x90] sm:$0xff] %v370
      %403 = vst [vmem:[%s208 + $0x98] sm:$0xff] %v371
      %404 = vst [vmem:[%s208 + $0xa0] sm:$0xff] %v372
      %405 = vst [vmem:[%s208 + $0xa8] sm:$0xff] %v373
      %406 = vst [vmem:[%s208 + $0xb0] sm:$0xff] %v374
      %407 = vst [vmem:[%s208 + $0xb8] sm:$0xff] %v375
      %408 = vst [vmem:[%s208 + $0xc0] sm:$0xff] %v376
      %409 = vst [vmem:[%s208 + $0xc8] sm:$0xff] %v377
      %410 = vst [vmem:[%s208 + $0xd0] sm:$0xff] %v378
      %411 = vst [vmem:[%s208 + $0xd8] sm:$0xff] %v379
      %412 = vst [vmem:[%s208 + $0xe0] sm:$0xff] %v380
      %413 = vst [vmem:[%s208 + $0xe8] sm:$0xff] %v381
      %414 = vst [vmem:[%s208 + $0xf0] sm:$0xff] %v382
      %415 = vst [vmem:[%s208 + $0xf8] sm:$0xff] %v383
      %s416 = smul.u32 32, %s19
      %p417 = scmp.lt.s32.totalorder %s18, 1
      %s418 = scalar_select %p417, %s18, 1
      %p419 = scmp.lt.s32.totalorder %s416, 31
      %s420 = scalar_select %p419, %s416, 31
      %s421 = smul.addr %s418, 32
      %s422 = sadd.s32 %s420, %s421
      %s423 = smul.addr %s422, 8
      %s424 = scalar_lea.vmem %s3, %s423
      // Predicated region
      $region33: #{doubleconv_forward.5} parent=31 // pred_check
        %p425 = pneg %p116
      $region34: #{doubleconv_forward.5} parent=31 // pred_check_branch
        %427 = sbr.rel (%p425) target = $region36
      $region35: #{doubleconv_forward.5} parent=31 // pred_region
        %s428 = smul.u32 32, %s19
      $region36: #{doubleconv_forward.5} parent=31 // pred_fallthru
        _
    $region32: #{doubleconv_forward.5} parent=5 // pred_fallthru
      _
    %p429 = scmp.le.s32.totalorder 2, %s9
    // Predicated region
    $region37: #{doubleconv_forward.5} parent=5 // pred_check
      %p430 = pneg %p429
    $region38: #{doubleconv_forward.5} parent=5 // pred_check_branch
      %432 = sbr.rel (%p430) target = $region40
    $region39: #{doubleconv_forward.5} parent=5 // pred_region
      %s433 = ssub.s32 %s9, 2
      // Predicated region
      $region41: #{doubleconv_forward.5} parent=39 // pred_check
        %p434 = pneg %p122
      $region42: #{doubleconv_forward.5} parent=39 // pred_check_branch
        %436 = sbr.rel (%p434) target = $region44
      $region43: #{doubleconv_forward.5} parent=39 // pred_region
        %s437 = smul.u32 32, %s21
        %p438 = scmp.lt.s32.totalorder %s20, 1
        %s439 = scalar_select %p438, %s20, 1
        %p440 = scmp.lt.s32.totalorder %s437, 31
        %s441 = scalar_select %p440, %s437, 31
        %s442 = smul.addr %s439, 32
        %s443 = sadd.s32 %s441, %s442
        %s444 = smul.addr %s443, 8
        %s445 = scalar_lea.vmem %s3, %s444
      $region44: #{doubleconv_forward.5} parent=39 // pred_fallthru
        _
    $region40: #{doubleconv_forward.5} parent=5 // pred_fallthru
      _
  $region6: #{doubleconv_forward.5} parent=0 // loop_footer
    %s13 = sadd.s32 1, %s9
  $region7: #{doubleconv_forward.5} parent=0 // loop_footer_branch
    %8 = sbr.rel target = $region3
  $region8: #{doubleconv_forward.5} parent=0 // loop_exit
    _

// kernel: doubleconv_forward.4
$region0: #{doubleconv_forward.4}
  #allocation0 [shape = 'u32[]', space=smem, size = 0x4, offset = 0x4, fixed_abs, tag = 'smem constant byte address 0x4 - core index']
  #allocation1 [shape = 'u32[144,128]{1,0:T(1,128)}', space=vmem, size = 0x12000, scoped, tag = 'internal scratch']
  #allocation2 [shape = 'bf16[18,18,128]{2,1,0:T(8,128)(2,1)}', space=vmem, size = 0x1b000, scoped, tag = 'scratch operand']
  %s0 = inlined_call_operand.vmem [shape: f32[1,128], index: 0, kind: input, shape index: {}]
  %s1 = inlined_call_operand.vmem [shape: f32[1,128], index: 1, kind: input, shape index: {}]
  %s2 = inlined_call_operand.vmem [shape: bf16[2,256,128], index: 2, kind: input, shape index: {}, may-alias: {2,3,4}]
  %s3 = inlined_call_operand.vmem [shape: bf16[2,256,128], index: 3, kind: input, shape index: {}, may-alias: {2,3,4}]
  %s4 = inlined_call_operand.vmem [shape: bf16[2,256,128], index: 4, kind: input, shape index: {}, may-alias: {2,3,4}]
  %s5 = inlined_call_operand.vmem [shape: bf16[9,128,128], index: 5, kind: input, shape index: {}]
  %s6 = inlined_call_operand.vmem [shape: bf16[2,256,128], index: 6, kind: output, shape index: {0}]
  %s7 = inlined_call_operand.vmem [shape: f32[2,1,2,128], index: 7, kind: output, shape index: {1}]
  %8 = xla_tuple %s6, %s7
  %s9 = sld [smem:[#allocation0]]
  $region81: #{doubleconv_forward.4} parent=0
    _
  %s11 = ssub.s32 1, %s9
  %s12 = scalar_select 0, %s11, %s9
  loop: start=0, step=1, limit=4
  $region2: #{doubleconv_forward.4} parent=0 // loop_pre_header
    _
  $region3: #{doubleconv_forward.4} parent=0 // loop_header
    %s14 = sphi 0, %s18
    %p15 = scmp.ge.s32.totalorder %s14, 4
    %s21 = sphi 0, %s33
    %s22 = sphi 0, %s29
    %s23 = sphi 0, %s21
    %s24 = sphi 0, %s22
    %s25 = sphi 0, %s23
    %s26 = sphi 0, %s24
    %s34 = sphi 0, %s34
    %s36 = sphi 0, %s34
    %s37 = sphi 0, %s36
    %s51 = sphi 0, %s37
    %s55 = sphi 0, %s55
    %s57 = sphi 0, %s55
    %s58 = sphi 0, %s57
    %s72 = sphi 0, %s58
    %s80 = sphi 0, %s82
    %s83 = sphi 0, %s80
    %s84 = sphi 0, %s83
    %s100 = sphi 0, %s84
    %s116 = sphi 0, %s118
    %s119 = sphi 0, %s116
    %s120 = sphi 0, %s119
    %s136 = sphi 0, %s120
    %s152 = sphi 0, %s154
    %s155 = sphi 0, %s152
    %s156 = sphi 0, %s155
    %s172 = sphi 0, %s156
    %s176 = sphi 0, %s176
    %s178 = sphi 0, %s176
    %s179 = sphi 0, %s178
    %s193 = sphi 0, %s179
    %s201 = sphi 0, %s203
    %s204 = sphi 0, %s201
    %s205 = sphi 0, %s204
    %s221 = sphi 0, %s205
    %s229 = sphi 0, %s231
    %s232 = sphi 0, %s229
    %s233 = sphi 0, %s232
    %s249 = sphi 0, %s233
  $region4: #{doubleconv_forward.4} parent=0 // loop_header_branch
    %17 = sbr.rel (%p15) target = $region8
  $region5: #{doubleconv_forward.4} parent=0 // loop_body
    %s19 = ssub.s32 %s14, 1
    %s20 = ssub.s32 %s14, 2
    %s27 = sadd.s32 1, %s22
    %p28 = scmp.ge.s32.totalorder %s27, 1
    %s29 = scalar_select %p28, 0, %s27
    %s30 = sadd.s32 1, %s21
    %s31 = scalar_select %p28, %s30, %s21
    %p32 = scmp.ge.s32.totalorder %s31, 2
    %s33 = scalar_select %p32, 0, %s31
    %s35 = sadd.s32 %s34, 1
    %p38 = scmp.eq.s32.totalorder %s14, 1
    %p39 = scmp.ne.s32.totalorder %s34, %s36
    %p40 = scmp.eq.s32.totalorder %s14, 0
    %p41 = por %p39, %p40
    %p42 = scmp.ne.s32.totalorder %s34, %s36
    %p43 = scmp.eq.s32.totalorder %s19, 1
    %p44 = por %p42, %p43
    %p45 = scmp.ne.s32.totalorder %s36, %s37
    %p46 = scmp.eq.s32.totalorder %s19, 0
    %p47 = por %p45, %p46
    %p48 = scmp.ne.s32.totalorder %s36, %s37
    %p49 = scmp.eq.s32.totalorder %s20, 1
    %p50 = por %p48, %p49
    %p52 = scmp.ne.s32.totalorder %s37, %s51
    %p53 = scmp.eq.s32.totalorder %s20, 0
    %p54 = por %p52, %p53
    %s56 = sadd.s32 %s55, 1
    %p59 = scmp.eq.s32.totalorder %s14, 1
    %p60 = scmp.ne.s32.totalorder %s55, %s57
    %p61 = scmp.eq.s32.totalorder %s14, 0
    %p62 = por %p60, %p61
    %p63 = scmp.ne.s32.totalorder %s55, %s57
    %p64 = scmp.eq.s32.totalorder %s19, 1
    %p65 = por %p63, %p64
    %p66 = scmp.ne.s32.totalorder %s57, %s58
    %p67 = scmp.eq.s32.totalorder %s19, 0
    %p68 = por %p66, %p67
    %p69 = scmp.ne.s32.totalorder %s57, %s58
    %p70 = scmp.eq.s32.totalorder %s20, 1
    %p71 = por %p69, %p70
    %p73 = scmp.ne.s32.totalorder %s58, %s72
    %p74 = scmp.eq.s32.totalorder %s20, 0
    %p75 = por %p73, %p74
    %s76 = ssub.s32 %s21, %s33
    %s77 = ssub.s32 %s22, %s29
    %s78 = sor.u32 %s76, %s77
    %p79 = scmp.eq.s32.totalorder %s78, 0
    %s81 = sadd.s32 %s80, 1
    %s82 = scalar_select %p79, %s80, %s81
    %p85 = pneg %p79
    %p86 = scmp.eq.s32.totalorder %s14, 1
    %p87 = por %p85, %p86
    %p88 = scmp.ne.s32.totalorder %s80, %s83
    %p89 = scmp.eq.s32.totalorder %s14, 0
    %p90 = por %p88, %p89
    %p91 = scmp.ne.s32.totalorder %s80, %s83
    %p92 = scmp.eq.s32.totalorder %s19, 1
    %p93 = por %p91, %p92
    %p94 = scmp.ne.s32.totalorder %s83, %s84
    %p95 = scmp.eq.s32.totalorder %s19, 0
    %p96 = por %p94, %p95
    %p97 = scmp.ne.s32.totalorder %s83, %s84
    %p98 = scmp.eq.s32.totalorder %s20, 1
    %p99 = por %p97, %p98
    %p101 = scmp.ne.s32.totalorder %s84, %s100
    %p102 = scmp.eq.s32.totalorder %s20, 0
    %p103 = por %p101, %p102
    %s104 = smul.u32 %s22, 16
    %s105 = ssub.s32 %s104, 1
    %p106 = scmp.gt.s32.totalorder %s105, 0
    %s107 = scalar_select %p106, %s105, 0
    %s108 = smul.u32 %s29, 16
    %s109 = ssub.s32 %s108, 1
    %p110 = scmp.gt.s32.totalorder %s109, 0
    %s111 = scalar_select %p110, %s109, 0
    %s112 = ssub.s32 %s21, %s33
    %s113 = ssub.s32 %s107, %s111
    %s114 = sor.u32 %s112, %s113
    %p115 = scmp.eq.s32.totalorder %s114, 0
    %s117 = sadd.s32 %s116, 1
    %s118 = scalar_select %p115, %s116, %s117
    %p121 = pneg %p115
    %p122 = scmp.eq.s32.totalorder %s14, 1
    %p123 = por %p121, %p122
    %p124 = scmp.ne.s32.totalorder %s116, %s119
    %p125 = scmp.eq.s32.totalorder %s14, 0
    %p126 = por %p124, %p125
    %p127 = scmp.ne.s32.totalorder %s116, %s119
    %p128 = scmp.eq.s32.totalorder %s19, 1
    %p129 = por %p127, %p128
    %p130 = scmp.ne.s32.totalorder %s119, %s120
    %p131 = scmp.eq.s32.totalorder %s19, 0
    %p132 = por %p130, %p131
    %p133 = scmp.ne.s32.totalorder %s119, %s120
    %p134 = scmp.eq.s32.totalorder %s20, 1
    %p135 = por %p133, %p134
    %p137 = scmp.ne.s32.totalorder %s120, %s136
    %p138 = scmp.eq.s32.totalorder %s20, 0
    %p139 = por %p137, %p138
    %s140 = smul.u32 %s22, 16
    %s141 = sadd.s32 %s140, 16
    %p142 = scmp.lt.s32.totalorder %s141, 15
    %s143 = scalar_select %p142, %s141, 15
    %s144 = smul.u32 %s29, 16
    %s145 = sadd.s32 %s144, 16
    %p146 = scmp.lt.s32.totalorder %s145, 15
    %s147 = scalar_select %p146, %s145, 15
    %s148 = ssub.s32 %s21, %s33
    %s149 = ssub.s32 %s143, %s147
    %s150 = sor.u32 %s148, %s149
    %p151 = scmp.eq.s32.totalorder %s150, 0
    %s153 = sadd.s32 %s152, 1
    %s154 = scalar_select %p151, %s152, %s153
    %p157 = pneg %p151
    %p158 = scmp.eq.s32.totalorder %s14, 1
    %p159 = por %p157, %p158
    %p160 = scmp.ne.s32.totalorder %s152, %s155
    %p161 = scmp.eq.s32.totalorder %s14, 0
    %p162 = por %p160, %p161
    %p163 = scmp.ne.s32.totalorder %s152, %s155
    %p164 = scmp.eq.s32.totalorder %s19, 1
    %p165 = por %p163, %p164
    %p166 = scmp.ne.s32.totalorder %s155, %s156
    %p167 = scmp.eq.s32.totalorder %s19, 0
    %p168 = por %p166, %p167
    %p169 = scmp.ne.s32.totalorder %s155, %s156
    %p170 = scmp.eq.s32.totalorder %s20, 1
    %p171 = por %p169, %p170
    %p173 = scmp.ne.s32.totalorder %s156, %s172
    %p174 = scmp.eq.s32.totalorder %s20, 0
    %p175 = por %p173, %p174
    %s177 = sadd.s32 %s176, 1
    %p180 = scmp.eq.s32.totalorder %s14, 1
    %p181 = scmp.ne.s32.totalorder %s176, %s178
    %p182 = scmp.eq.s32.totalorder %s14, 0
    %p183 = por %p181, %p182
    %p184 = scmp.ne.s32.totalorder %s176, %s178
    %p185 = scmp.eq.s32.totalorder %s19, 1
    %p186 = por %p184, %p185
    %p187 = scmp.ne.s32.totalorder %s178, %s179
    %p188 = scmp.eq.s32.totalorder %s19, 0
    %p189 = por %p187, %p188
    %p190 = scmp.ne.s32.totalorder %s178, %s179
    %p191 = scmp.eq.s32.totalorder %s20, 1
    %p192 = por %p190, %p191
    %p194 = scmp.ne.s32.totalorder %s179, %s193
    %p195 = scmp.eq.s32.totalorder %s20, 0
    %p196 = por %p194, %p195
    %s197 = ssub.s32 %s21, %s33
    %s198 = ssub.s32 %s22, %s29
    %s199 = sor.u32 %s197, %s198
    %p200 = scmp.eq.s32.totalorder %s199, 0
    %s202 = sadd.s32 %s201, 1
    %s203 = scalar_select %p200, %s201, %s202
    %p206 = pneg %p200
    %p207 = scmp.eq.s32.totalorder %s14, 1
    %p208 = por %p206, %p207
    %p209 = scmp.ne.s32.totalorder %s201, %s204
    %p210 = scmp.eq.s32.totalorder %s14, 0
    %p211 = por %p209, %p210
    %p212 = scmp.ne.s32.totalorder %s201, %s204
    %p213 = scmp.eq.s32.totalorder %s19, 1
    %p214 = por %p212, %p213
    %p215 = scmp.ne.s32.totalorder %s204, %s205
    %p216 = scmp.eq.s32.totalorder %s19, 0
    %p217 = por %p215, %p216
    %p218 = scmp.ne.s32.totalorder %s204, %s205
    %p219 = scmp.eq.s32.totalorder %s20, 1
    %p220 = por %p218, %p219
    %p222 = scmp.ne.s32.totalorder %s205, %s221
    %p223 = scmp.eq.s32.totalorder %s20, 0
    %p224 = por %p222, %p223
    %s225 = ssub.s32 %s21, %s33
    %s226 = ssub.s32 %s22, %s29
    %s227 = sor.u32 %s225, %s226
    %p228 = scmp.eq.s32.totalorder %s227, 0
    %s230 = sadd.s32 %s229, 1
    %s231 = scalar_select %p228, %s229, %s230
    %p234 = pneg %p228
    %p235 = scmp.eq.s32.totalorder %s14, 1
    %p236 = por %p234, %p235
    %p237 = scmp.ne.s32.totalorder %s229, %s232
    %p238 = scmp.eq.s32.totalorder %s14, 0
    %p239 = por %p237, %p238
    %p240 = scmp.ne.s32.totalorder %s229, %s232
    %p241 = scmp.eq.s32.totalorder %s19, 1
    %p242 = por %p240, %p241
    %p243 = scmp.ne.s32.totalorder %s232, %s233
    %p244 = scmp.eq.s32.totalorder %s19, 0
    %p245 = por %p243, %p244
    %p246 = scmp.ne.s32.totalorder %s232, %s233
    %p247 = scmp.eq.s32.totalorder %s20, 1
    %p248 = por %p246, %p247
    %p250 = scmp.ne.s32.totalorder %s233, %s249
    %p251 = scmp.eq.s32.totalorder %s20, 0
    %p252 = por %p250, %p251
    %p253 = scmp.le.s32.totalorder 1, %s14
    %p254 = scmp.lt.s32.totalorder %s14, 3
    %p255 = pnand %p253, %p254
    %p256 = pneg %p255
    // Predicated region
    $region9: #{doubleconv_forward.4} parent=5 // pred_check
      _
    $region10: #{doubleconv_forward.4} parent=5 // pred_check_branch
      %258 = sbr.rel (%p255) target = $region12
    $region11: #{doubleconv_forward.4} parent=5 // pred_region
      %s259 = ssub.s32 %s14, 1
      // Predicated region
      $region13: #{doubleconv_forward.4} parent=11 // pred_check
        %p260 = pneg %p47
      $region14: #{doubleconv_forward.4} parent=11 // pred_check_branch
        %262 = sbr.rel (%p260) target = $region16
      $region15: #{doubleconv_forward.4} parent=11 // pred_region
        _
      $region16: #{doubleconv_forward.4} parent=11 // pred_fallthru
        _
      // Predicated region
      $region17: #{doubleconv_forward.4} parent=11 // pred_check
        %p263 = pneg %p68
      $region18: #{doubleconv_forward.4} parent=11 // pred_check_branch
        %265 = sbr.rel (%p263) target = $region20
      $region19: #{doubleconv_forward.4} parent=11 // pred_region
        _
      $region20: #{doubleconv_forward.4} parent=11 // pred_fallthru
        _
      // Predicated region
      $region21: #{doubleconv_forward.4} parent=11 // pred_check
        %p266 = pneg %p189
      $region22: #{doubleconv_forward.4} parent=11 // pred_check_branch
        %268 = sbr.rel (%p266) target = $region24
      $region23: #{doubleconv_forward.4} parent=11 // pred_region
        _
      $region24: #{doubleconv_forward.4} parent=11 // pred_fallthru
        _
    $region12: #{doubleconv_forward.4} parent=5 // pred_fallthru
      _
    %p269 = scmp.lt.s32.totalorder %s14, 2
    // Predicated region
    $region25: #{doubleconv_forward.4} parent=5 // pred_check
      %p270 = pneg %p269
    $region26: #{doubleconv_forward.4} parent=5 // pred_check_branch
      %272 = sbr.rel (%p270) target = $region28
    $region27: #{doubleconv_forward.4} parent=5 // pred_region
      // Predicated region
      $region29: #{doubleconv_forward.4} parent=27 // pred_check
        %p273 = pneg %p90
      $region30: #{doubleconv_forward.4} parent=27 // pred_check_branch
        %275 = sbr.rel (%p273) target = $region32
      $region31: #{doubleconv_forward.4} parent=27 // pred_region
        %s276 = smul.u32 32, %s22
        %p277 = scmp.lt.s32.totalorder %s21, 1
        %s278 = scalar_select %p277, %s21, 1
        %p279 = scmp.lt.s32.totalorder %s276, 31
        %s280 = scalar_select %p279, %s276, 31
        %s281 = smul.addr %s278, 32
        %s282 = sadd.s32 %s280, %s281
        %s283 = smul.addr %s282, 4
        %s284 = scalar_lea.vmem %s2, %s283
        %s285 = smul.u32 32, %s22
      $region32: #{doubleconv_forward.4} parent=27 // pred_fallthru
        _
      // Predicated region
      $region33: #{doubleconv_forward.4} parent=27 // pred_check
        %p286 = pneg %p126
      $region34: #{doubleconv_forward.4} parent=27 // pred_check_branch
        %288 = sbr.rel (%p286) target = $region36
      $region35: #{doubleconv_forward.4} parent=27 // pred_region
        %s289 = smul.u32 %s22, 16
        %s290 = ssub.s32 %s289, 1
        %p291 = scmp.gt.s32.totalorder %s290, 0
        %s292 = scalar_select %p291, %s290, 0
        %s293 = smul.u32 2, %s292
        %p294 = scmp.lt.s32.totalorder %s21, 1
        %s295 = scalar_select %p294, %s21, 1
        %p296 = scmp.lt.s32.totalorder %s293, 31
        %s297 = scalar_select %p296, %s293, 31
        %s298 = smul.addr %s295, 32
        %s299 = sadd.s32 %s297, %s298
        %s300 = smul.addr %s299, 4
        %s301 = scalar_lea.vmem %s3, %s300
        %s302 = smul.u32 %s22, 16
        %s303 = ssub.s32 %s302, 1
        %p304 = scmp.gt.s32.totalorder %s303, 0
        %s305 = scalar_select %p304, %s303, 0
        %s306 = smul.u32 2, %s305
      $region36: #{doubleconv_forward.4} parent=27 // pred_fallthru
        _
      // Predicated region
      $region37: #{doubleconv_forward.4} parent=27 // pred_check
        %p307 = pneg %p162
      $region38: #{doubleconv_forward.4} parent=27 // pred_check_branch
        %309 = sbr.rel (%p307) target = $region40
      $region39: #{doubleconv_forward.4} parent=27 // pred_region
        %s310 = smul.u32 %s22, 16
        %s311 = sadd.s32 %s310, 16
        %p312 = scmp.lt.s32.totalorder %s311, 15
        %s313 = scalar_select %p312, %s311, 15
        %s314 = smul.u32 2, %s313
        %p315 = scmp.lt.s32.totalorder %s21, 1
        %s316 = scalar_select %p315, %s21, 1
        %p317 = scmp.lt.s32.totalorder %s314, 31
        %s318 = scalar_select %p317, %s314, 31
        %s319 = smul.addr %s316, 32
        %s320 = sadd.s32 %s318, %s319
        %s321 = smul.addr %s320, 4
        %s322 = scalar_lea.vmem %s4, %s321
        %s323 = smul.u32 %s22, 16
        %s324 = sadd.s32 %s323, 16
        %p325 = scmp.lt.s32.totalorder %s324, 15
        %s326 = scalar_select %p325, %s324, 15
        %s327 = smul.u32 2, %s326
      $region40: #{doubleconv_forward.4} parent=27 // pred_fallthru
        _
    $region28: #{doubleconv_forward.4} parent=5 // pred_fallthru
      _
    %p328 = scmp.le.s32.totalorder 1, %s14
    %p329 = scmp.lt.s32.totalorder %s14, 3
    %p330 = pnand %p328, %p329
    %p331 = pneg %p330
    // Predicated region
    $region41: #{doubleconv_forward.4} parent=5 // pred_check
      _
    $region42: #{doubleconv_forward.4} parent=5 // pred_check_branch
      %333 = sbr.rel (%p330) target = $region44
    $region43: #{doubleconv_forward.4} parent=5 // pred_region
      %s334 = ssub.s32 %s14, 1
      %p335 = pneg %p47
      %p336 = pneg %p44
      %p337 = pneg %p68
      %p338 = pneg %p65
      %s339 = smul.u32 32, %s24
      %p340 = scmp.lt.s32.totalorder %s23, 1
      %s341 = scalar_select %p340, %s23, 1
      %p342 = scmp.lt.s32.totalorder %s339, 31
      %s343 = scalar_select %p342, %s339, 31
      %s344 = smul.addr %s341, 32
      %s345 = sadd.s32 %s343, %s344
      %s346 = smul.addr %s345, 4
      %s347 = scalar_lea.vmem %s2, %s346
      %p348 = pneg %p96
      %p349 = pneg %p93
      %s350 = smul.u32 %s24, 16
      %s351 = ssub.s32 %s350, 1
      %p352 = scmp.gt.s32.totalorder %s351, 0
      %s353 = scalar_select %p352, %s351, 0
      %s354 = smul.u32 2, %s353
      %p355 = scmp.lt.s32.totalorder %s23, 1
      %s356 = scalar_select %p355, %s23, 1
      %p357 = scmp.lt.s32.totalorder %s354, 31
      %s358 = scalar_select %p357, %s354, 31
      %s359 = smul.addr %s356, 32
      %s360 = sadd.s32 %s358, %s359
      %s361 = smul.addr %s360, 4
      %s362 = scalar_lea.vmem %s3, %s361
      %p363 = pneg %p132
      %p364 = pneg %p129
      %s365 = smul.u32 %s24, 16
      %s366 = sadd.s32 %s365, 16
      %p367 = scmp.lt.s32.totalorder %s366, 15
      %s368 = scalar_select %p367, %s366, 15
      %s369 = smul.u32 2, %s368
      %p370 = scmp.lt.s32.totalorder %s23, 1
      %s371 = scalar_select %p370, %s23, 1
      %p372 = scmp.lt.s32.totalorder %s369, 31
      %s373 = scalar_select %p372, %s369, 31
      %s374 = smul.addr %s371, 32
      %s375 = sadd.s32 %s373, %s374
      %s376 = smul.addr %s375, 4
      %s377 = scalar_lea.vmem %s4, %s376
      %p378 = pneg %p168
      %p379 = pneg %p165
      %p380 = pneg %p189
      %p381 = pneg %p186
      %p382 = pneg %p217
      %p383 = pneg %p214
      %s384 = smul.u32 32, %s24
      %p385 = scmp.lt.s32.totalorder %s23, 1
      %s386 = scalar_select %p385, %s23, 1
      %p387 = scmp.lt.s32.totalorder %s384, 31
      %s388 = scalar_select %p387, %s384, 31
      %s389 = smul.addr %s386, 32
      %s390 = sadd.s32 %s388, %s389
      %s391 = smul.addr %s390, 4
      %s392 = scalar_lea.vmem %s6, %s391
      %p393 = pneg %p245
      %p394 = pneg %p242
      %p395 = scmp.lt.s32.totalorder %s23, 1
      %s396 = scalar_select %p395, %s23, 1
      %p397 = scmp.lt.s32.totalorder %s24, 0
      %s398 = scalar_select %p397, %s24, 0
      %s399 = sadd.s32 %s398, %s396
      %s400 = smul.addr %s399, 2
      %s401 = scalar_lea.vmem %s7, %s400
      %s402 = smul.u32 32, %s24
      %p403 = scmp.lt.s32.totalorder %s23, 1
      %s404 = scalar_select %p403, %s23, 1
      %p405 = scmp.lt.s32.totalorder %s402, 31
      %s406 = scalar_select %p405, %s402, 31
      %s407 = smul.addr %s404, 32
      %s408 = sadd.s32 %s406, %s407
      %s409 = smul.addr %s408, 4
      %s410 = scalar_lea.vmem %s2, %s409
      %s411 = smul.u32 32, %s24
      %s412 = smul.u32 %s24, 16
      %s413 = ssub.s32 %s412, 1
      %p414 = scmp.gt.s32.totalorder %s413, 0
      %s415 = scalar_select %p414, %s413, 0
      %s416 = smul.u32 2, %s415
      %p417 = scmp.lt.s32.totalorder %s23, 1
      %s418 = scalar_select %p417, %s23, 1
      %p419 = scmp.lt.s32.totalorder %s416, 31
      %s420 = scalar_select %p419, %s416, 31
      %s421 = smul.addr %s418, 32
      %s422 = sadd.s32 %s420, %s421
      %s423 = smul.addr %s422, 4
      %s424 = scalar_lea.vmem %s3, %s423
      %s425 = smul.u32 %s24, 16
      %s426 = ssub.s32 %s425, 1
      %p427 = scmp.gt.s32.totalorder %s426, 0
      %s428 = scalar_select %p427, %s426, 0
      %s429 = smul.u32 2, %s428
      %s430 = smul.u32 %s24, 16
      %s431 = sadd.s32 %s430, 16
      %p432 = scmp.lt.s32.totalorder %s431, 15
      %s433 = scalar_select %p432, %s431, 15
      %s434 = smul.u32 2, %s433
      %p435 = scmp.lt.s32.totalorder %s23, 1
      %s436 = scalar_select %p435, %s23, 1
      %p437 = scmp.lt.s32.totalorder %s434, 31
      %s438 = scalar_select %p437, %s434, 31
      %s439 = smul.addr %s436, 32
      %s440 = sadd.s32 %s438, %s439
      %s441 = smul.addr %s440, 4
      %s442 = scalar_lea.vmem %s4, %s441
      %s443 = smul.u32 %s24, 16
      %s444 = sadd.s32 %s443, 16
      %p445 = scmp.lt.s32.totalorder %s444, 15
      %s446 = scalar_select %p445, %s444, 15
      %s447 = smul.u32 2, %s446
      %s448 = smul.u32 32, %s24
      %p449 = scmp.lt.s32.totalorder %s23, 1
      %s450 = scalar_select %p449, %s23, 1
      %p451 = scmp.lt.s32.totalorder %s448, 31
      %s452 = scalar_select %p451, %s448, 31
      %s453 = smul.addr %s450, 32
      %s454 = sadd.s32 %s452, %s453
      %s455 = smul.addr %s454, 4
      %s456 = scalar_lea.vmem %s6, %s455
      %s457 = smul.u32 32, %s24
      %p458 = scmp.lt.s32.totalorder %s23, 1
      %s459 = scalar_select %p458, %s23, 1
      %p460 = scmp.lt.s32.totalorder %s24, 0
      %s461 = scalar_select %p460, %s24, 0
      %s462 = sadd.s32 %s461, %s459
      %s463 = smul.addr %s462, 2
      %s464 = scalar_lea.vmem %s7, %s463
      %vm466 = vcmask 1040384
      %vm467 = vsmask.f32 256
      %vm468 = vmand %vm466, %vm467
      %v469 = vld [vmem:[#allocation2] sm:$0x1]
      %v470 = vsel %vm468, 0, %v469
      %471 = vst [vmem:[#allocation2] sm:$0x1] %v470
      %v472 = vld [vmem:[#allocation2 + $0xc] sm:$0x1]
      %v473 = vsel %vm468, 0, %v472
      %474 = vst [vmem:[#allocation2 + $0xc] sm:$0x1] %v473
      %v475 = vld [vmem:[#allocation2 + $0x18] sm:$0x1]
      %v476 = vsel %vm468, 0, %v475
      %477 = vst [vmem:[#allocation2 + $0x18] sm:$0x1] %v476
      %v478 = vld [vmem:[#allocation2 + $0x24] sm:$0x1]
      %v479 = vsel %vm468, 0, %v478
      %480 = vst [vmem:[#allocation2 + $0x24] sm:$0x1] %v479
      %v481 = vld [vmem:[#allocation2 + $0x30] sm:$0x1]
      %v482 = vsel %vm468, 0, %v481
      %483 = vst [vmem:[#allocation2 + $0x30] sm:$0x1] %v482
      %v484 = vld [vmem:[#allocation2 + $0x3c] sm:$0x1]
      %v485 = vsel %vm468, 0, %v484
      %486 = vst [vmem:[#allocation2 + $0x3c] sm:$0x1] %v485
      %v487 = vld [vmem:[#allocation2 + $0x48] sm:$0x1]
      %v488 = vsel %vm468, 0, %v487
      %489 = vst [vmem:[#allocation2 + $0x48] sm:$0x1] %v488
      %v490 = vld [vmem:[#allocation2 + $0x54] sm:$0x1]
      %v491 = vsel %vm468, 0, %v490
      %492 = vst [vmem:[#allocation2 + $0x54] sm:$0x1] %v491
      %v493 = vld [vmem:[#allocation2 + $0x60] sm:$0x1]
      %v494 = vsel %vm468, 0, %v493
      %495 = vst [vmem:[#allocation2 + $0x60] sm:$0x1] %v494
      %v496 = vld [vmem:[#allocation2 + $0x6c] sm:$0x1]
      %v497 = vsel %vm468, 0, %v496
      %498 = vst [vmem:[#allocation2 + $0x6c] sm:$0x1] %v497
      %v499 = vld [vmem:[#allocation2 + $0x78] sm:$0x1]
      %v500 = vsel %vm468, 0, %v499
      %501 = vst [vmem:[#allocation2 + $0x78] sm:$0x1] %v500
      %v502 = vld [vmem:[#allocation2 + $0x84] sm:$0x1]
      %v503 = vsel %vm468, 0, %v502
      %504 = vst [vmem:[#allocation2 + $0x84] sm:$0x1] %v503
      %v505 = vld [vmem:[#allocation2 + $0x90] sm:$0x1]
      %v506 = vsel %vm468, 0, %v505
      %507 = vst [vmem:[#allocation2 + $0x90] sm:$0x1] %v506
      %v508 = vld [vmem:[#allocation2 + $0x9c] sm:$0x1]
      %v509 = vsel %vm468, 0, %v508
      %510 = vst [vmem:[#allocation2 + $0x9c] sm:$0x1] %v509
      %v511 = vld [vmem:[#allocation2 + $0xa8] sm:$0x1]
      %v512 = vsel %vm468, 0, %v511
      %513 = vst [vmem:[#allocation2 + $0xa8] sm:$0x1] %v512
      %v514 = vld [vmem:[#allocation2 + $0xb4] sm:$0x1]
      %v515 = vsel %vm468, 0, %v514
      %516 = vst [vmem:[#allocation2 + $0xb4] sm:$0x1] %v515
      %v517 = vld [vmem:[#allocation2 + $0xc0] sm:$0x1]
      %v518 = vsel %vm468, 0, %v517
      %519 = vst [vmem:[#allocation2 + $0xc0] sm:$0x1] %v518
      %v520 = vld [vmem:[#allocation2 + $0xcc] sm:$0x1]
      %v521 = vsel %vm468, 0, %v520
      %522 = vst [vmem:[#allocation2 + $0xcc] sm:$0x1] %v521
      %vm523 = vsmask.f32 7938
      %vm524 = vmand %vm466, %vm523
      %v525 = vld [vmem:[#allocation2 + $0x8] sm:$0x1]
      %v526 = vsel %vm524, 0, %v525
      %527 = vst [vmem:[#allocation2 + $0x8] sm:$0x1] %v526
      %v528 = vld [vmem:[#allocation2 + $0x14] sm:$0x1]
      %v529 = vsel %vm524, 0, %v528
      %530 = vst [vmem:[#allocation2 + $0x14] sm:$0x1] %v529
      %v531 = vld [vmem:[#allocation2 + $0x20] sm:$0x1]
      %v532 = vsel %vm524, 0, %v531
      %533 = vst [vmem:[#allocation2 + $0x20] sm:$0x1] %v532
      %v534 = vld [vmem:[#allocation2 + $0x2c] sm:$0x1]
      %v535 = vsel %vm524, 0, %v534
      %536 = vst [vmem:[#allocation2 + $0x2c] sm:$0x1] %v535
      %v537 = vld [vmem:[#allocation2 + $0x38] sm:$0x1]
      %v538 = vsel %vm524, 0, %v537
      %539 = vst [vmem:[#allocation2 + $0x38] sm:$0x1] %v538
      %v540 = vld [vmem:[#allocation2 + $0x44] sm:$0x1]
      %v541 = vsel %vm524, 0, %v540
      %542 = vst [vmem:[#allocation2 + $0x44] sm:$0x1] %v541
      %v543 = vld [vmem:[#allocation2 + $0x50] sm:$0x1]
      %v544 = vsel %vm524, 0, %v543
      %545 = vst [vmem:[#allocation2 + $0x50] sm:$0x1] %v544
      %v546 = vld [vmem:[#allocation2 + $0x5c] sm:$0x1]
      %v547 = vsel %vm524, 0, %v546
      %548 = vst [vmem:[#allocation2 + $0x5c] sm:$0x1] %v547
      %v549 = vld [vmem:[#allocation2 + $0x68] sm:$0x1]
      %v550 = vsel %vm524, 0, %v549
      %551 = vst [vmem:[#allocation2 + $0x68] sm:$0x1] %v550
      %v552 = vld [vmem:[#allocation2 + $0x74] sm:$0x1]
      %v553 = vsel %vm524, 0, %v552
      %554 = vst [vmem:[#allocation2 + $0x74] sm:$0x1] %v553
      %v555 = vld [vmem:[#allocation2 + $0x80] sm:$0x1]
      %v556 = vsel %vm524, 0, %v555
      %557 = vst [vmem:[#allocation2 + $0x80] sm:$0x1] %v556
      %v558 = vld [vmem:[#allocation2 + $0x8c] sm:$0x1]
      %v559 = vsel %vm524, 0, %v558
      %560 = vst [vmem:[#allocation2 + $0x8c] sm:$0x1] %v559
      %v561 = vld [vmem:[#allocation2 + $0x98] sm:$0x1]
      %v562 = vsel %vm524, 0, %v561
      %563 = vst [vmem:[#allocation2 + $0x98] sm:$0x1] %v562
      %v564 = vld [vmem:[#allocation2 + $0xa4] sm:$0x1]
      %v565 = vsel %vm524, 0, %v564
      %566 = vst [vmem:[#allocation2 + $0xa4] sm:$0x1] %v565
      %v567 = vld [vmem:[#allocation2 + $0xb0] sm:$0x1]
      %v568 = vsel %vm524, 0, %v567
      %569 = vst [vmem:[#allocation2 + $0xb0] sm:$0x1] %v568
      %v570 = vld [vmem:[#allocation2 + $0xbc] sm:$0x1]
      %v571 = vsel %vm524, 0, %v570
      %572 = vst [vmem:[#allocation2 + $0xbc] sm:$0x1] %v571
      %v573 = vld [vmem:[#allocation2 + $0xc8] sm:$0x1]
      %v574 = vsel %vm524, 0, %v573
      %575 = vst [vmem:[#allocation2 + $0xc8] sm:$0x1] %v574
      %v576 = vld [vmem:[#allocation2 + $0xd4] sm:$0x1]
      %v577 = vsel %vm524, 0, %v576
      %578 = vst [vmem:[#allocation2 + $0xd4] sm:$0x1] %v577
      %v579 = vld [vmem:[%s410] sm:$0xf]
      %v580 = vld [vmem:[%s410 + $0x4] sm:$0xf]
      %v581 = vld [vmem:[%s410 + $0x8] sm:$0xf]
      %v582 = vld [vmem:[%s410 + $0xc] sm:$0xf]
      %v583 = vld [vmem:[%s410 + $0x10] sm:$0xf]
      %v584 = vld [vmem:[%s410 + $0x14] sm:$0xf]
      %v585 = vld [vmem:[%s410 + $0x18] sm:$0xf]
      %v586 = vld [vmem:[%s410 + $0x1c] sm:$0xf]
      %v587 = vld [vmem:[%s410 + $0x20] sm:$0xf]
      %v588 = vld [vmem:[%s410 + $0x24] sm:$0xf]
      %v589 = vld [vmem:[%s410 + $0x28] sm:$0xf]
      %v590 = vld [vmem:[%s410 + $0x2c] sm:$0xf]
      %v591 = vld [vmem:[%s410 + $0x30] sm:$0xf]
      %v592 = vld [vmem:[%s410 + $0x34] sm:$0xf]
      %v593 = vld [vmem:[%s410 + $0x38] sm:$0xf]
      %v594 = vld [vmem:[%s410 + $0x3c] sm:$0xf]
      %v595 = vld [vmem:[%s410 + $0x40] sm:$0xf]
      %v596 = vld [vmem:[%s410 + $0x44] sm:$0xf]
      %v597 = vld [vmem:[%s410 + $0x48] sm:$0xf]
      %v598 = vld [vmem:[%s410 + $0x4c] sm:$0xf]
      %v599 = vld [vmem:[%s410 + $0x50] sm:$0xf]
      %v600 = vld [vmem:[%s410 + $0x54] sm:$0xf]
      %v601 = vld [vmem:[%s410 + $0x58] sm:$0xf]
      %v602 = vld [vmem:[%s410 + $0x5c] sm:$0xf]
      %v603 = vld [vmem:[%s410 + $0x60] sm:$0xf]
      %v604 = vld [vmem:[%s410 + $0x64] sm:$0xf]
      %v605 = vld [vmem:[%s410 + $0x68] sm:$0xf]
      %v606 = vld [vmem:[%s410 + $0x6c] sm:$0xf]
      %v607 = vld [vmem:[%s410 + $0x70] sm:$0xf]
      %v608 = vld [vmem:[%s410 + $0x74] sm:$0xf]
      %v609 = vld [vmem:[%s410 + $0x78] sm:$0xf]
      %v610 = vld [vmem:[%s410 + $0x7c] sm:$0xf]
      %v611 = vld [vmem:[%s0] sm:$0x1]
      %v612 = vunpack.c.l.bf16 %v579
      %v613 = vunpack.c.l.bf16 %v580
      %v614 = vunpack.c.l.bf16 %v581
      %v615 = vunpack.c.l.bf16 %v582
      %v616 = vunpack.c.l.bf16 %v583
      %v617 = vunpack.c.l.bf16 %v584
      %v618 = vunpack.c.l.bf16 %v585
      %v619 = vunpack.c.l.bf16 %v586
      %v620 = vunpack.c.l.bf16 %v587
      %v621 = vunpack.c.l.bf16 %v588
      %v622 = vunpack.c.l.bf16 %v589
      %v623 = vunpack.c.l.bf16 %v590
      %v624 = vunpack.c.l.bf16 %v591
      %v625 = vunpack.c.l.bf16 %v592
      %v626 = vunpack.c.l.bf16 %v593
      %v627 = vunpack.c.l.bf16 %v594
      %v628 = vunpack.c.l.bf16 %v595
      %v629 = vunpack.c.l.bf16 %v596
      %v630 = vunpack.c.l.bf16 %v597
      %v631 = vunpack.c.l.bf16 %v598
      %v632 = vunpack.c.l.bf16 %v599
      %v633 = vunpack.c.l.bf16 %v600
      %v634 = vunpack.c.l.bf16 %v601
      %v635 = vunpack.c.l.bf16 %v602
      %v636 = vunpack.c.l.bf16 %v603
      %v637 = vunpack.c.l.bf16 %v604
      %v638 = vunpack.c.l.bf16 %v605
      %v639 = vunpack.c.l.bf16 %v606
      %v640 = vunpack.c.l.bf16 %v607
      %v641 = vunpack.c.l.bf16 %v608
      %v642 = vunpack.c.l.bf16 %v609
      %v643 = vunpack.c.l.bf16 %v610
      %v645 = vlaneseq
      %v646 = vshrl.u32 %v645, 7
      %v647 = vsub.s32 0, %v646
      %v648 = vrot.slane %v611, %v647
      %v650 = vmul.f32 %v612, %v648
      %v651 = vmul.f32 %v613, %v648
      %v652 = vmul.f32 %v614, %v648
      %v653 = vmul.f32 %v615, %v648
      %v654 = vmul.f32 %v616, %v648
      %v655 = vmul.f32 %v617, %v648
      %v656 = vmul.f32 %v618, %v648
      %v657 = vmul.f32 %v619, %v648
      %v658 = vmul.f32 %v620, %v648
      %v659 = vmul.f32 %v621, %v648
      %v660 = vmul.f32 %v622, %v648
      %v661 = vmul.f32 %v623, %v648
      %v662 = vmul.f32 %v624, %v648
      %v663 = vmul.f32 %v625, %v648
      %v664 = vmul.f32 %v626, %v648
      %v665 = vmul.f32 %v627, %v648
      %v666 = vmul.f32 %v628, %v648
      %v667 = vmul.f32 %v629, %v648
      %v668 = vmul.f32 %v630, %v648
      %v669 = vmul.f32 %v631, %v648
      %v670 = vmul.f32 %v632, %v648
      %v671 = vmul.f32 %v633, %v648
      %v672 = vmul.f32 %v634, %v648
      %v673 = vmul.f32 %v635, %v648
      %v674 = vmul.f32 %v636, %v648
      %v675 = vmul.f32 %v637, %v648
      %v676 = vmul.f32 %v638, %v648
      %v677 = vmul.f32 %v639, %v648
      %v678 = vmul.f32 %v640, %v648
      %v679 = vmul.f32 %v641, %v648
      %v680 = vmul.f32 %v642, %v648
      %v681 = vmul.f32 %v643, %v648
      %v682 = vld [vmem:[%s1] sm:$0x1]
      %v684 = vlaneseq
      %v685 = vshrl.u32 %v684, 7
      %v686 = vsub.s32 0, %v685
      %v687 = vrot.slane %v682, %v686
      %v689 = vadd.f32 %v650, %v687
      %v690 = vadd.f32 %v651, %v687
      %v691 = vadd.f32 %v652, %v687
      %v692 = vadd.f32 %v653, %v687
      %v693 = vadd.f32 %v654, %v687
      %v694 = vadd.f32 %v655, %v687
      %v695 = vadd.f32 %v656, %v687
      %v696 = vadd.f32 %v657, %v687
      %v697 = vadd.f32 %v658, %v687
      %v698 = vadd.f32 %v659, %v687
      %v699 = vadd.f32 %v660, %v687
      %v700 = vadd.f32 %v661, %v687
      %v701 = vadd.f32 %v662, %v687
      %v702 = vadd.f32 %v663, %v687
      %v703 = vadd.f32 %v664, %v687
      %v704 = vadd.f32 %v665, %v687
      %v705 = vadd.f32 %v666, %v687
      %v706 = vadd.f32 %v667, %v687
      %v707 = vadd.f32 %v668, %v687
      %v708 = vadd.f32 %v669, %v687
      %v709 = vadd.f32 %v670, %v687
      %v710 = vadd.f32 %v671, %v687
      %v711 = vadd.f32 %v672, %v687
      %v712 = vadd.f32 %v673, %v687
      %v713 = vadd.f32 %v674, %v687
      %v714 = vadd.f32 %v675, %v687
      %v715 = vadd.f32 %v676, %v687
      %v716 = vadd.f32 %v677, %v687
      %v717 = vadd.f32 %v678, %v687
      %v718 = vadd.f32 %v679, %v687
      %v719 = vadd.f32 %v680, %v687
      %v720 = vadd.f32 %v681, %v687
      %v721 = vmax.f32 %v689, 0.0
      %v722 = vmax.f32 %v690, 0.0
      %v723 = vmax.f32 %v691, 0.0
      %v724 = vmax.f32 %v692, 0.0
      %v725 = vmax.f32 %v693, 0.0
      %v726 = vmax.f32 %v694, 0.0
      %v727 = vmax.f32 %v695, 0.0
      %v728 = vmax.f32 %v696, 0.0
      %v729 = vmax.f32 %v697, 0.0
      %v730 = vmax.f32 %v698, 0.0
      %v731 = vmax.f32 %v699, 0.0
      %v732 = vmax.f32 %v700, 0.0
      %v733 = vmax.f32 %v701, 0.0
      %v734 = vmax.f32 %v702, 0.0
      %v735 = vmax.f32 %v703, 0.0
      %v736 = vmax.f32 %v704, 0.0
      %v737 = vmax.f32 %v705, 0.0
      %v738 = vmax.f32 %v706, 0.0
      %v739 = vmax.f32 %v707, 0.0
      %v740 = vmax.f32 %v708, 0.0
      %v741 = vmax.f32 %v709, 0.0
      %v742 = vmax.f32 %v710, 0.0
      %v743 = vmax.f32 %v711, 0.0
      %v744 = vmax.f32 %v712, 0.0
      %v745 = vmax.f32 %v713, 0.0
      %v746 = vmax.f32 %v714, 0.0
      %v747 = vmax.f32 %v715, 0.0
      %v748 = vmax.f32 %v716, 0.0
      %v749 = vmax.f32 %v717, 0.0
      %v750 = vmax.f32 %v718, 0.0
      %v751 = vmax.f32 %v719, 0.0
      %v752 = vmax.f32 %v720, 0.0
      %v753 = vpack.c.bf16 %v722, %v721
      %v754 = vpack.c.bf16 %v724, %v723
      %v755 = vpack.c.bf16 %v726, %v725
      %v756 = vpack.c.bf16 %v728, %v727
      %v757 = vpack.c.bf16 %v730, %v729
      %v758 = vpack.c.bf16 %v732, %v731
      %v759 = vpack.c.bf16 %v734, %v733
      %v760 = vpack.c.bf16 %v736, %v735
      %v761 = vpack.c.bf16 %v738, %v737
      %v762 = vpack.c.bf16 %v740, %v739
      %v763 = vpack.c.bf16 %v742, %v741
      %v764 = vpack.c.bf16 %v744, %v743
      %v765 = vpack.c.bf16 %v746, %v745
      %v766 = vpack.c.bf16 %v748, %v747
      %v767 = vpack.c.bf16 %v750, %v749
      %v768 = vpack.c.bf16 %v752, %v751
      %v785 = vunpack.c.l.b16 %v753
      %v786 = vunpack.c.h.b16 %v753
      %v787 = vunpack.c.l.b16 %v754
      %v788 = vunpack.c.h.b16 %v754
      %v789 = vunpack.c.l.b16 %v755
      %v790 = vunpack.c.h.b16 %v755
      %v791 = vunpack.c.l.b16 %v756
      %v792 = vunpack.c.h.b16 %v756
      %v793 = vunpack.c.l.b16 %v757
      %v794 = vunpack.c.h.b16 %v757
      %v795 = vunpack.c.l.b16 %v758
      %v796 = vunpack.c.h.b16 %v758
      %v797 = vunpack.c.l.b16 %v759
      %v798 = vunpack.c.h.b16 %v759
      %v799 = vunpack.c.l.b16 %v760
      %v800 = vunpack.c.h.b16 %v760
      %v801 = vunpack.c.l.b16 %v761
      %v802 = vunpack.c.h.b16 %v761
      %v803 = vunpack.c.l.b16 %v762
      %v804 = vunpack.c.h.b16 %v762
      %v805 = vunpack.c.l.b16 %v763
      %v806 = vunpack.c.h.b16 %v763
      %v807 = vunpack.c.l.b16 %v764
      %v808 = vunpack.c.h.b16 %v764
      %v809 = vunpack.c.l.b16 %v765
      %v810 = vunpack.c.h.b16 %v765
      %v811 = vunpack.c.l.b16 %v766
      %v812 = vunpack.c.h.b16 %v766
      %v813 = vunpack.c.l.b16 %v767
      %v814 = vunpack.c.h.b16 %v767
      %v815 = vunpack.c.l.b16 %v768
      %v816 = vunpack.c.h.b16 %v768
      %v817 = vpack.c.b16 %v785, %v785
      %v818 = vpack.c.b16 %v786, %v786
      %v819 = vpack.c.b16 %v787, %v787
      %v820 = vpack.c.b16 %v788, %v788
      %v821 = vpack.c.b16 %v789, %v789
      %v822 = vpack.c.b16 %v790, %v790
      %v823 = vpack.c.b16 %v791, %v791
      %v824 = vpack.c.b16 %v792, %v792
      %v825 = vpack.c.b16 %v793, %v793
      %v826 = vpack.c.b16 %v794, %v794
      %v827 = vpack.c.b16 %v795, %v795
      %v828 = vpack.c.b16 %v796, %v796
      %v829 = vpack.c.b16 %v797, %v797
      %v830 = vpack.c.b16 %v798, %v798
      %v831 = vpack.c.b16 %v799, %v799
      %v832 = vpack.c.b16 %v800, %v800
      %v833 = vpack.c.b16 %v801, %v801
      %v834 = vpack.c.b16 %v802, %v802
      %v835 = vpack.c.b16 %v803, %v803
      %v836 = vpack.c.b16 %v804, %v804
      %v837 = vpack.c.b16 %v805, %v805
      %v838 = vpack.c.b16 %v806, %v806
      %v839 = vpack.c.b16 %v807, %v807
      %v840 = vpack.c.b16 %v808, %v808
      %v841 = vpack.c.b16 %v809, %v809
      %v842 = vpack.c.b16 %v810, %v810
      %v843 = vpack.c.b16 %v811, %v811
      %v844 = vpack.c.b16 %v812, %v812
      %v845 = vpack.c.b16 %v813, %v813
      %v846 = vpack.c.b16 %v814, %v814
      %v847 = vpack.c.b16 %v815, %v815
      %v848 = vpack.c.b16 %v816, %v816
      %vm849 = vsmask.f32 4368
      %vm850 = vmor %vm467, %vm849
      %v852 = vshrl.u32 %v817, 16
      %v854 = vrot.slane %v852, 7
      %v855 = vshll.u32 %v817, 16
      %v857 = vor.u32 %v854, %v855
      %v858 = vrot.slane %v854, 4
      %v860 = vshrl.u32 %v818, 16
      %v862 = vrot.slane %v860, 7
      %v863 = vshll.u32 %v818, 16
      %v865 = vor.u32 %v862, %v863
      %v866 = vsel %vm850, %v858, %v865
      %v867 = vrot.slane %v862, 4
      %v869 = vshrl.u32 %v819, 16
      %v871 = vrot.slane %v869, 7
      %v872 = vshll.u32 %v819, 16
      %v874 = vor.u32 %v871, %v872
      %v875 = vrot.slane %v871, 4
      %v877 = vshrl.u32 %v820, 16
      %v879 = vrot.slane %v877, 7
      %v880 = vshll.u32 %v820, 16
      %v882 = vor.u32 %v879, %v880
      %v883 = vsel %vm850, %v875, %v882
      %v884 = vrot.slane %v879, 4
      %v886 = vshrl.u32 %v821, 16
      %v888 = vrot.slane %v886, 7
      %v889 = vshll.u32 %v821, 16
      %v891 = vor.u32 %v888, %v889
      %v892 = vrot.slane %v888, 4
      %v894 = vshrl.u32 %v822, 16
      %v896 = vrot.slane %v894, 7
      %v897 = vshll.u32 %v822, 16
      %v899 = vor.u32 %v896, %v897
      %v900 = vsel %vm850, %v892, %v899
      %v901 = vrot.slane %v896, 4
      %v903 = vshrl.u32 %v823, 16
      %v905 = vrot.slane %v903, 7
      %v906 = vshll.u32 %v823, 16
      %v908 = vor.u32 %v905, %v906
      %v909 = vrot.slane %v905, 4
      %v911 = vshrl.u32 %v824, 16
      %v913 = vrot.slane %v911, 7
      %v914 = vshll.u32 %v824, 16
      %v916 = vor.u32 %v913, %v914
      %v917 = vsel %vm850, %v909, %v916
      %v918 = vrot.slane %v913, 4
      %v920 = vshrl.u32 %v825, 16
      %v922 = vrot.slane %v920, 7
      %v923 = vshll.u32 %v825, 16
      %v925 = vor.u32 %v922, %v923
      %v926 = vrot.slane %v922, 4
      %v928 = vshrl.u32 %v826, 16
      %v930 = vrot.slane %v928, 7
      %v931 = vshll.u32 %v826, 16
      %v933 = vor.u32 %v930, %v931
      %v934 = vsel %vm850, %v926, %v933
      %v935 = vrot.slane %v930, 4
      %v937 = vshrl.u32 %v827, 16
      %v939 = vrot.slane %v937, 7
      %v940 = vshll.u32 %v827, 16
      %v942 = vor.u32 %v939, %v940
      %v943 = vrot.slane %v939, 4
      %v945 = vshrl.u32 %v828, 16
      %v947 = vrot.slane %v945, 7
      %v948 = vshll.u32 %v828, 16
      %v950 = vor.u32 %v947, %v948
      %v951 = vsel %vm850, %v943, %v950
      %v952 = vrot.slane %v947, 4
      %v954 = vshrl.u32 %v829, 16
      %v956 = vrot.slane %v954, 7
      %v957 = vshll.u32 %v829, 16
      %v959 = vor.u32 %v956, %v957
      %v960 = vrot.slane %v956, 4
      %v962 = vshrl.u32 %v830, 16
      %v964 = vrot.slane %v962, 7
      %v965 = vshll.u32 %v830, 16
      %v967 = vor.u32 %v964, %v965
      %v968 = vsel %vm850, %v960, %v967
      %v969 = vrot.slane %v964, 4
      %v971 = vshrl.u32 %v831, 16
      %v973 = vrot.slane %v971, 7
      %v974 = vshll.u32 %v831, 16
      %v976 = vor.u32 %v973, %v974
      %v977 = vrot.slane %v973, 4
      %v979 = vshrl.u32 %v832, 16
      %v981 = vrot.slane %v979, 7
      %v982 = vshll.u32 %v832, 16
      %v984 = vor.u32 %v981, %v982
      %v985 = vsel %vm850, %v977, %v984
      %v986 = vrot.slane %v981, 4
      %v988 = vshrl.u32 %v833, 16
      %v990 = vrot.slane %v988, 7
      %v991 = vshll.u32 %v833, 16
      %v993 = vor.u32 %v990, %v991
      %v994 = vrot.slane %v990, 4
      %v996 = vshrl.u32 %v834, 16
      %v998 = vrot.slane %v996, 7
      %v999 = vshll.u32 %v834, 16
      %v1001 = vor.u32 %v998, %v999
      %v1002 = vsel %vm850, %v994, %v1001
      %v1003 = vrot.slane %v998, 4
      %v1005 = vshrl.u32 %v835, 16
      %v1007 = vrot.slane %v1005, 7
      %v1008 = vshll.u32 %v835, 16
      %v1010 = vor.u32 %v1007, %v1008
      %v1011 = vrot.slane %v1007, 4
      %v1013 = vshrl.u32 %v836, 16
      %v1015 = vrot.slane %v1013, 7
      %v1016 = vshll.u32 %v836, 16
      %v1018 = vor.u32 %v1015, %v1016
      %v1019 = vsel %vm850, %v1011, %v1018
      %v1020 = vrot.slane %v1015, 4
      %v1022 = vshrl.u32 %v837, 16
      %v1024 = vrot.slane %v1022, 7
      %v1025 = vshll.u32 %v837, 16
      %v1027 = vor.u32 %v1024, %v1025
      %v1028 = vrot.slane %v1024, 4
      %v1030 = vshrl.u32 %v838, 16
      %v1032 = vrot.slane %v1030, 7
      %v1033 = vshll.u32 %v838, 16
      %v1035 = vor.u32 %v1032, %v1033
      %v1036 = vsel %vm850, %v1028, %v1035
      %v1037 = vrot.slane %v1032, 4
      %v1039 = vshrl.u32 %v839, 16
      %v1041 = vrot.slane %v1039, 7
      %v1042 = vshll.u32 %v839, 16
      %v1044 = vor.u32 %v1041, %v1042
      %v1045 = vrot.slane %v1041, 4
      %v1047 = vshrl.u32 %v840, 16
      %v1049 = vrot.slane %v1047, 7
      %v1050 = vshll.u32 %v840, 16
      %v1052 = vor.u32 %v1049, %v1050
      %v1053 = vsel %vm850, %v1045, %v1052
      %v1054 = vrot.slane %v1049, 4
      %v1056 = vshrl.u32 %v841, 16
      %v1058 = vrot.slane %v1056, 7
      %v1059 = vshll.u32 %v841, 16
      %v1061 = vor.u32 %v1058, %v1059
      %v1062 = vrot.slane %v1058, 4
      %v1064 = vshrl.u32 %v842, 16
      %v1066 = vrot.slane %v1064, 7
      %v1067 = vshll.u32 %v842, 16
      %v1069 = vor.u32 %v1066, %v1067
      %v1070 = vsel %vm850, %v1062, %v1069
      %v1071 = vrot.slane %v1066, 4
      %v1073 = vshrl.u32 %v843, 16
      %v1075 = vrot.slane %v1073, 7
      %v1076 = vshll.u32 %v843, 16
      %v1078 = vor.u32 %v1075, %v1076
      %v1079 = vrot.slane %v1075, 4
      %v1081 = vshrl.u32 %v844, 16
      %v1083 = vrot.slane %v1081, 7
      %v1084 = vshll.u32 %v844, 16
      %v1086 = vor.u32 %v1083, %v1084
      %v1087 = vsel %vm850, %v1079, %v1086
      %v1088 = vrot.slane %v1083, 4
      %v1090 = vshrl.u32 %v845, 16
      %v1092 = vrot.slane %v1090, 7
      %v1093 = vshll.u32 %v845, 16
      %v1095 = vor.u32 %v1092, %v1093
      %v1096 = vrot.slane %v1092, 4
      %v1098 = vshrl.u32 %v846, 16
      %v1100 = vrot.slane %v1098, 7
      %v1101 = vshll.u32 %v846, 16
      %v1103 = vor.u32 %v1100, %v1101
      %v1104 = vsel %vm850, %v1096, %v1103
      %v1105 = vrot.slane %v1100, 4
      %v1107 = vshrl.u32 %v847, 16
      %v1109 = vrot.slane %v1107, 7
      %v1110 = vshll.u32 %v847, 16
      %v1112 = vor.u32 %v1109, %v1110
      %v1113 = vrot.slane %v1109, 4
      %v1115 = vshrl.u32 %v848, 16
      %v1117 = vrot.slane %v1115, 7
      %v1118 = vshll.u32 %v848, 16
      %v1120 = vor.u32 %v1117, %v1118
      %v1121 = vsel %vm850, %v1113, %v1120
      %v1122 = vrot.slane %v1117, 4
      %s1171 = scalar_lea.vmem [#allocation2], 12
      %vm1172 = vcmask 1043456
      %vm1173 = vmand %vm1172, %vm523
      %v1174 = vld [vmem:[%s1171] sm:$0xf]
      %v1175 = vsel %vm1173, %v857, %v1174
      %1176 = vst [vmem:[%s1171] sm:$0xf] %v1175
      %1177 = vst [vmem:[%s1171 + $0x4] sm:$0xf] %v866
      %v1178 = vld [vmem:[%s1171 + $0x8] sm:$0x1]
      %v1179 = vsel %vm468, %v867, %v1178
      %1180 = vst [vmem:[%s1171 + $0x8] sm:$0x1] %v1179
      %v1181 = vld [vmem:[%s1171 + $0xc] sm:$0xf]
      %v1182 = vsel %vm1173, %v874, %v1181
      %1183 = vst [vmem:[%s1171 + $0xc] sm:$0xf] %v1182
      %1184 = vst [vmem:[%s1171 + $0x10] sm:$0xf] %v883
      %v1185 = vld [vmem:[%s1171 + $0x14] sm:$0x1]
      %v1186 = vsel %vm468, %v884, %v1185
      %1187 = vst [vmem:[%s1171 + $0x14] sm:$0x1] %v1186
      %v1188 = vld [vmem:[%s1171 + $0x18] sm:$0xf]
      %v1189 = vsel %vm1173, %v891, %v1188
      %1190 = vst [vmem:[%s1171 + $0x18] sm:$0xf] %v1189
      %1191 = vst [vmem:[%s1171 + $0x1c] sm:$0xf] %v900
      %v1192 = vld [vmem:[%s1171 + $0x20] sm:$0x1]
      %v1193 = vsel %vm468, %v901, %v1192
      %1194 = vst [vmem:[%s1171 + $0x20] sm:$0x1] %v1193
      %v1195 = vld [vmem:[%s1171 + $0x24] sm:$0xf]
      %v1196 = vsel %vm1173, %v908, %v1195
      %1197 = vst [vmem:[%s1171 + $0x24] sm:$0xf] %v1196
      %1198 = vst [vmem:[%s1171 + $0x28] sm:$0xf] %v917
      %v1199 = vld [vmem:[%s1171 + $0x2c] sm:$0x1]
      %v1200 = vsel %vm468, %v918, %v1199
      %1201 = vst [vmem:[%s1171 + $0x2c] sm:$0x1] %v1200
      %v1202 = vld [vmem:[%s1171 + $0x30] sm:$0xf]
      %v1203 = vsel %vm1173, %v925, %v1202
      %1204 = vst [vmem:[%s1171 + $0x30] sm:$0xf] %v1203
      %1205 = vst [vmem:[%s1171 + $0x34] sm:$0xf] %v934
      %v1206 = vld [vmem:[%s1171 + $0x38] sm:$0x1]
      %v1207 = vsel %vm468, %v935, %v1206
      %1208 = vst [vmem:[%s1171 + $0x38] sm:$0x1] %v1207
      %v1209 = vld [vmem:[%s1171 + $0x3c] sm:$0xf]
      %v1210 = vsel %vm1173, %v942, %v1209
      %1211 = vst [vmem:[%s1171 + $0x3c] sm:$0xf] %v1210
      %1212 = vst [vmem:[%s1171 + $0x40] sm:$0xf] %v951
      %v1213 = vld [vmem:[%s1171 + $0x44] sm:$0x1]
      %v1214 = vsel %vm468, %v952, %v1213
      %1215 = vst [vmem:[%s1171 + $0x44] sm:$0x1] %v1214
      %v1216 = vld [vmem:[%s1171 + $0x48] sm:$0xf]
      %v1217 = vsel %vm1173, %v959, %v1216
      %1218 = vst [vmem:[%s1171 + $0x48] sm:$0xf] %v1217
      %1219 = vst [vmem:[%s1171 + $0x4c] sm:$0xf] %v968
      %v1220 = vld [vmem:[%s1171 + $0x50] sm:$0x1]
      %v1221 = vsel %vm468, %v969, %v1220
      %1222 = vst [vmem:[%s1171 + $0x50] sm:$0x1] %v1221
      %v1223 = vld [vmem:[%s1171 + $0x54] sm:$0xf]
      %v1224 = vsel %vm1173, %v976, %v1223
      %1225 = vst [vmem:[%s1171 + $0x54] sm:$0xf] %v1224
      %1226 = vst [vmem:[%s1171 + $0x58] sm:$0xf] %v985
      %v1227 = vld [vmem:[%s1171 + $0x5c] sm:$0x1]
      %v1228 = vsel %vm468, %v986, %v1227
      %1229 = vst [vmem:[%s1171 + $0x5c] sm:$0x1] %v1228
      %v1230 = vld [vmem:[%s1171 + $0x60] sm:$0xf]
      %v1231 = vsel %vm1173, %v993, %v1230
      %1232 = vst [vmem:[%s1171 + $0x60] sm:$0xf] %v1231
      %1233 = vst [vmem:[%s1171 + $0x64] sm:$0xf] %v1002
      %v1234 = vld [vmem:[%s1171 + $0x68] sm:$0x1]
      %v1235 = vsel %vm468, %v1003, %v1234
      %1236 = vst [vmem:[%s1171 + $0x68] sm:$0x1] %v1235
      %v1237 = vld [vmem:[%s1171 + $0x6c] sm:$0xf]
      %v1238 = vsel %vm1173, %v1010, %v1237
      %1239 = vst [vmem:[%s1171 + $0x6c] sm:$0xf] %v1238
      %1240 = vst [vmem:[%s1171 + $0x70] sm:$0xf] %v1019
      %v1241 = vld [vmem:[%s1171 + $0x74] sm:$0x1]
      %v1242 = vsel %vm468, %v1020, %v1241
      %1243 = vst [vmem:[%s1171 + $0x74] sm:$0x1] %v1242
      %v1244 = vld [vmem:[%s1171 + $0x78] sm:$0xf]
      %v1245 = vsel %vm1173, %v1027, %v1244
      %1246 = vst [vmem:[%s1171 + $0x78] sm:$0xf] %v1245
      %1247 = vst [vmem:[%s1171 + $0x7c] sm:$0xf] %v1036
      %v1248 = vld [vmem:[%s1171 + $0x80] sm:$0x1]
      %v1249 = vsel %vm468, %v1037, %v1248
      %1250 = vst [vmem:[%s1171 + $0x80] sm:$0x1] %v1249
      %v1251 = vld [vmem:[%s1171 + $0x84] sm:$0xf]
      %v1252 = vsel %vm1173, %v1044, %v1251
      %1253 = vst [vmem:[%s1171 + $0x84] sm:$0xf] %v1252
      %1254 = vst [vmem:[%s1171 + $0x88] sm:$0xf] %v1053
      %v1255 = vld [vmem:[%s1171 + $0x8c] sm:$0x1]
      %v1256 = vsel %vm468, %v1054, %v1255
      %1257 = vst [vmem:[%s1171 + $0x8c] sm:$0x1] %v1256
      %v1258 = vld [vmem:[%s1171 + $0x90] sm:$0xf]
      %v1259 = vsel %vm1173, %v1061, %v1258
      %1260 = vst [vmem:[%s1171 + $0x90] sm:$0xf] %v1259
      %1261 = vst [vmem:[%s1171 + $0x94] sm:$0xf] %v1070
      %v1262 = vld [vmem:[%s1171 + $0x98] sm:$0x1]
      %v1263 = vsel %vm468, %v1071, %v1262
      %1264 = vst [vmem:[%s1171 + $0x98] sm:$0x1] %v1263
      %v1265 = vld [vmem:[%s1171 + $0x9c] sm:$0xf]
      %v1266 = vsel %vm1173, %v1078, %v1265
      %1267 = vst [vmem:[%s1171 + $0x9c] sm:$0xf] %v1266
      %1268 = vst [vmem:[%s1171 + $0xa0] sm:$0xf] %v1087
      %v1269 = vld [vmem:[%s1171 + $0xa4] sm:$0x1]
      %v1270 = vsel %vm468, %v1088, %v1269
      %1271 = vst [vmem:[%s1171 + $0xa4] sm:$0x1] %v1270
      %v1272 = vld [vmem:[%s1171 + $0xa8] sm:$0xf]
      %v1273 = vsel %vm1173, %v1095, %v1272
      %1274 = vst [vmem:[%s1171 + $0xa8] sm:$0xf] %v1273
      %1275 = vst [vmem:[%s1171 + $0xac] sm:$0xf] %v1104
      %v1276 = vld [vmem:[%s1171 + $0xb0] sm:$0x1]
      %v1277 = vsel %vm468, %v1105, %v1276
      %1278 = vst [vmem:[%s1171 + $0xb0] sm:$0x1] %v1277
      %v1279 = vld [vmem:[%s1171 + $0xb4] sm:$0xf]
      %v1280 = vsel %vm1173, %v1112, %v1279
      %1281 = vst [vmem:[%s1171 + $0xb4] sm:$0xf] %v1280
      %1282 = vst [vmem:[%s1171 + $0xb8] sm:$0xf] %v1121
      %v1283 = vld [vmem:[%s1171 + $0xbc] sm:$0x1]
      %v1284 = vsel %vm468, %v1122, %v1283
      %1285 = vst [vmem:[%s1171 + $0xbc] sm:$0x1] %v1284
      %p1286 = scmp.gt.s32.totalorder %s24, 0
      // Predicated region
      $region45: #{doubleconv_forward.4} parent=43 // pred_check
        %p1287 = pneg %p1286
      $region46: #{doubleconv_forward.4} parent=43 // pred_check_branch
        %1289 = sbr.rel (%p1287) target = $region48
      $region47: #{doubleconv_forward.4} parent=43 // pred_region
        %v1290 = vld [vmem:[%s424] sm:$0xf]
        %v1291 = vld [vmem:[%s424 + $0x4] sm:$0xf]
        %v1292 = vld [vmem:[%s0] sm:$0x1]
        %v1293 = vunpack.c.l.bf16 %v1290
        %v1294 = vunpack.c.l.bf16 %v1291
        %v1296 = vlaneseq
        %v1297 = vshrl.u32 %v1296, 7
        %v1298 = vsub.s32 0, %v1297
        %v1299 = vrot.slane %v1292, %v1298
        %v1301 = vmul.f32 %v1293, %v1299
        %v1302 = vmul.f32 %v1294, %v1299
        %v1303 = vld [vmem:[%s1] sm:$0x1]
        %v1305 = vlaneseq
        %v1306 = vshrl.u32 %v1305, 7
        %v1307 = vsub.s32 0, %v1306
        %v1308 = vrot.slane %v1303, %v1307
        %v1310 = vadd.f32 %v1301, %v1308
        %v1311 = vadd.f32 %v1302, %v1308
        %v1312 = vmax.f32 %v1310, 0.0
        %v1313 = vmax.f32 %v1311, 0.0
        %v1314 = vpack.c.bf16 %v1313, %v1312
        %v1316 = vunpack.c.l.b16 %v1314
        %v1317 = vunpack.c.h.b16 %v1314
        %v1318 = vpack.c.b16 %v1316, %v1316
        %v1319 = vpack.c.b16 %v1317, %v1317
        %v1321 = vshrl.u32 %v1318, 16
        %v1323 = vrot.slane %v1321, 7
        %v1324 = vshll.u32 %v1318, 16
        %v1326 = vor.u32 %v1323, %v1324
        %v1327 = vrot.slane %v1323, 4
        %v1329 = vshrl.u32 %v1319, 16
        %v1331 = vrot.slane %v1329, 7
        %v1332 = vshll.u32 %v1319, 16
        %v1334 = vor.u32 %v1331, %v1332
        %v1335 = vsel %vm850, %v1327, %v1334
        %v1336 = vrot.slane %v1331, 4
        %v1340 = vld [vmem:[#allocation2] sm:$0xf]
        %v1341 = vsel %vm1173, %v1326, %v1340
        %1342 = vst [vmem:[#allocation2] sm:$0xf] %v1341
        %1343 = vst [vmem:[#allocation2 + $0x4] sm:$0xf] %v1335
        %v1344 = vld [vmem:[#allocation2 + $0x8] sm:$0x1]
        %v1345 = vsel %vm468, %v1336, %v1344
        %1346 = vst [vmem:[#allocation2 + $0x8] sm:$0x1] %v1345
      $region48: #{doubleconv_forward.4} parent=43 // pred_fallthru
        _
      %p1347 = scmp.eq.s32.totalorder %s24, 0
      // Predicated region
      $region49: #{doubleconv_forward.4} parent=43 // pred_check
        %p1348 = pneg %p1347
      $region50: #{doubleconv_forward.4} parent=43 // pred_check_branch
        %1350 = sbr.rel (%p1348) target = $region52
      $region51: #{doubleconv_forward.4} parent=43 // pred_region
        %v1351 = vld [vmem:[#allocation2] sm:$0xf]
        %v1352 = vsel %vm1173, 0, %v1351
        %1353 = vst [vmem:[#allocation2] sm:$0xf] %v1352
        %1354 = vst [vmem:[#allocation2 + $0x4] sm:$0xf] 0
        %v1355 = vld [vmem:[#allocation2 + $0x8] sm:$0x1]
        %v1356 = vsel %vm468, 0, %v1355
        %1357 = vst [vmem:[#allocation2 + $0x8] sm:$0x1] %v1356
      $region52: #{doubleconv_forward.4} parent=43 // pred_fallthru
        _
      %p1358 = scmp.lt.s32.totalorder %s24, 0
      // Predicated region
      $region53: #{doubleconv_forward.4} parent=43 // pred_check
        %p1359 = pneg %p1358
      $region54: #{doubleconv_forward.4} parent=43 // pred_check_branch
        %1361 = sbr.rel (%p1359) target = $region56
      $region55: #{doubleconv_forward.4} parent=43 // pred_region
        %v1362 = vld [vmem:[%s442] sm:$0xf]
        %v1363 = vld [vmem:[%s442 + $0x4] sm:$0xf]
        %v1364 = vld [vmem:[%s0] sm:$0x1]
        %v1365 = vunpack.c.l.bf16 %v1362
        %v1366 = vunpack.c.l.bf16 %v1363
        %v1368 = vlaneseq
        %v1369 = vshrl.u32 %v1368, 7
        %v1370 = vsub.s32 0, %v1369
        %v1371 = vrot.slane %v1364, %v1370
        %v1373 = vmul.f32 %v1365, %v1371
        %v1374 = vmul.f32 %v1366, %v1371
        %v1375 = vld [vmem:[%s1] sm:$0x1]
        %v1377 = vlaneseq
        %v1378 = vshrl.u32 %v1377, 7
        %v1379 = vsub.s32 0, %v1378
        %v1380 = vrot.slane %v1375, %v1379
        %v1382 = vadd.f32 %v1373, %v1380
        %v1383 = vadd.f32 %v1374, %v1380
        %v1384 = vmax.f32 %v1382, 0.0
        %v1385 = vmax.f32 %v1383, 0.0
        %v1386 = vpack.c.bf16 %v1385, %v1384
        %v1388 = vunpack.c.l.b16 %v1386
        %v1389 = vunpack.c.h.b16 %v1386
        %v1390 = vpack.c.b16 %v1388, %v1388
        %v1391 = vpack.c.b16 %v1389, %v1389
        %v1393 = vshrl.u32 %v1390, 16
        %v1395 = vrot.slane %v1393, 7
        %v1396 = vshll.u32 %v1390, 16
        %v1398 = vor.u32 %v1395, %v1396
        %v1399 = vrot.slane %v1395, 4
        %v1401 = vshrl.u32 %v1391, 16
        %v1403 = vrot.slane %v1401, 7
        %v1404 = vshll.u32 %v1391, 16
        %v1406 = vor.u32 %v1403, %v1404
        %v1407 = vsel %vm850, %v1399, %v1406
        %v1408 = vrot.slane %v1403, 4
        %s1412 = scalar_lea.vmem [#allocation2], 204
        %v1413 = vld [vmem:[%s1412] sm:$0xf]
        %v1414 = vsel %vm1173, %v1398, %v1413
        %1415 = vst [vmem:[%s1412] sm:$0xf] %v1414
        %1416 = vst [vmem:[%s1412 + $0x4] sm:$0xf] %v1407
        %v1417 = vld [vmem:[%s1412 + $0x8] sm:$0x1]
        %v1418 = vsel %vm468, %v1408, %v1417
        %1419 = vst [vmem:[%s1412 + $0x8] sm:$0x1] %v1418
      $region56: #{doubleconv_forward.4} parent=43 // pred_fallthru
        _
      // Predicated region
      $region57: #{doubleconv_forward.4} parent=43 // pred_check
        %p1420 = pneg %p1347
      $region58: #{doubleconv_forward.4} parent=43 // pred_check_branch
        %1422 = sbr.rel (%p1420) target = $region60
      $region59: #{doubleconv_forward.4} parent=43 // pred_region
        %s1423 = scalar_lea.vmem [#allocation2], 204
        %v1424 = vld [vmem:[%s1423] sm:$0xf]
        %v1425 = vsel %vm1173, 0, %v1424
        %1426 = vst [vmem:[%s1423] sm:$0xf] %v1425
        %1427 = vst [vmem:[%s1423 + $0x4] sm:$0xf] 0
        %v1428 = vld [vmem:[%s1423 + $0x8] sm:$0x1]
        %v1429 = vsel %vm468, 0, %v1428
        %1430 = vst [vmem:[%s1423 + $0x8] sm:$0x1] %v1429
      $region60: #{doubleconv_forward.4} parent=43 // pred_fallthru
        _
      %v1431 = vld [vmem:[#allocation2] sm:$0xf]
      %v1432 = vld [vmem:[#allocation2 + $0x4] sm:$0xf]
      %v1433 = vld [vmem:[#allocation2 + $0x8] sm:$0x1]
      %v1434 = vld [vmem:[#allocation2 + $0xc] sm:$0xf]
      %v1435 = vld [vmem:[#allocation2 + $0x10] sm:$0xf]
      %v1436 = vld [vmem:[#allocation2 + $0x14] sm:$0x1]
      %v1437 = vld [vmem:[#allocation2 + $0x18] sm:$0xf]
      %v1438 = vld [vmem:[#allocation2 + $0x1c] sm:$0xf]
      %v1439 = vld [vmem:[#allocation2 + $0x20] sm:$0x1]
      %v1440 = vld [vmem:[#allocation2 + $0x24] sm:$0xf]
      %v1441 = vld [vmem:[#allocation2 + $0x28] sm:$0xf]
      %v1442 = vld [vmem:[#allocation2 + $0x2c] sm:$0x1]
      %v1443 = vld [vmem:[#allocation2 + $0x30] sm:$0xf]
      %v1444 = vld [vmem:[#allocation2 + $0x34] sm:$0xf]
      %v1445 = vld [vmem:[#allocation2 + $0x38] sm:$0x1]
      %v1446 = vld [vmem:[#allocation2 + $0x3c] sm:$0xf]
      %v1447 = vld [vmem:[#allocation2 + $0x40] sm:$0xf]
      %v1448 = vld [vmem:[#allocation2 + $0x44] sm:$0x1]
      %v1449 = vld [vmem:[#allocation2 + $0x48] sm:$0xf]
      %v1450 = vld [vmem:[#allocation2 + $0x4c] sm:$0xf]
      %v1451 = vld [vmem:[#allocation2 + $0x50] sm:$0x1]
      %v1452 = vld [vmem:[#allocation2 + $0x54] sm:$0xf]
      %v1453 = vld [vmem:[#allocation2 + $0x58] sm:$0xf]
      %v1454 = vld [vmem:[#allocation2 + $0x5c] sm:$0x1]
      %v1455 = vld [vmem:[#allocation2 + $0x60] sm:$0xf]
      %v1456 = vld [vmem:[#allocation2 + $0x64] sm:$0xf]
      %v1457 = vld [vmem:[#allocation2 + $0x68] sm:$0x1]
      %v1458 = vld [vmem:[#allocation2 + $0x6c] sm:$0xf]
      %v1459 = vld [vmem:[#allocation2 + $0x70] sm:$0xf]
      %v1460 = vld [vmem:[#allocation2 + $0x74] sm:$0x1]
      %v1461 = vld [vmem:[#allocation2 + $0x78] sm:$0xf]
      %v1462 = vld [vmem:[#allocation2 + $0x7c] sm:$0xf]
      %v1463 = vld [vmem:[#allocation2 + $0x80] sm:$0x1]
      %v1464 = vld [vmem:[#allocation2 + $0x84] sm:$0xf]
      %v1465 = vld [vmem:[#allocation2 + $0x88] sm:$0xf]
      %v1466 = vld [vmem:[#allocation2 + $0x8c] sm:$0x1]
      %v1467 = vld [vmem:[#allocation2 + $0x90] sm:$0xf]
      %v1468 = vld [vmem:[#allocation2 + $0x94] sm:$0xf]
      %v1469 = vld [vmem:[#allocation2 + $0x98] sm:$0x1]
      %v1470 = vld [vmem:[#allocation2 + $0x9c] sm:$0xf]
      %v1471 = vld [vmem:[#allocation2 + $0xa0] sm:$0xf]
      %v1472 = vld [vmem:[#allocation2 + $0xa4] sm:$0x1]
      %v1473 = vld [vmem:[#allocation2 + $0xa8] sm:$0xf]
      %v1474 = vld [vmem:[#allocation2 + $0xac] sm:$0xf]
      %v1475 = vld [vmem:[#allocation2 + $0xb0] sm:$0x1]
      %v1476 = vld [vmem:[#allocation2 + $0xb4] sm:$0xf]
      %v1477 = vld [vmem:[#allocation2 + $0xb8] sm:$0xf]
      %v1478 = vld [vmem:[#allocation2 + $0xbc] sm:$0x1]
      %v1479 = vld [vmem:[%s5] sm:$0xf]
      %v1480 = vld [vmem:[%s5 + $0x4] sm:$0xf]
      %v1481 = vld [vmem:[%s5 + $0x8] sm:$0xf]
      %v1482 = vld [vmem:[%s5 + $0xc] sm:$0xf]
      %v1483 = vld [vmem:[%s5 + $0x10] sm:$0xf]
      %v1484 = vld [vmem:[%s5 + $0x14] sm:$0xf]
      %v1485 = vld [vmem:[%s5 + $0x18] sm:$0xf]
      %v1486 = vld [vmem:[%s5 + $0x1c] sm:$0xf]
      %v1487 = vld [vmem:[%s5 + $0x20] sm:$0xf]
      %v1488 = vld [vmem:[%s5 + $0x24] sm:$0xf]
      %v1489 = vld [vmem:[%s5 + $0x28] sm:$0xf]
      %v1490 = vld [vmem:[%s5 + $0x2c] sm:$0xf]
      %v1491 = vld [vmem:[%s5 + $0x30] sm:$0xf]
      %v1492 = vld [vmem:[%s5 + $0x34] sm:$0xf]
      %v1493 = vld [vmem:[%s5 + $0x38] sm:$0xf]
      %v1494 = vld [vmem:[%s5 + $0x3c] sm:$0xf]
      %vm1495 = vsmask.f32 3328
      %vm1496 = vsmask.f32 7440
      %vm1497 = vmor %vm1495, %vm1496
      %v1499 = vshrl.u32 %v1431, 16
      %v1501 = vrot.slane %v1499, 4
      %v1502 = vshll.u32 %v1431, 16
      %v1504 = vrot.slane %v1502, 5
      %v1505 = vor.u32 %v1501, %v1504
      %v1506 = vrot.slane %v1505, 4
      %v1508 = vshll.u32 %v1432, 16
      %v1510 = vrot.slane %v1508, 5
      %v1511 = vsel %vm1497, %v1506, %v1510
      %v1512 = vshrl.u32 %v1432, 16
      %v1514 = vrot.slane %v1512, 4
      %v1515 = vor.u32 %v1514, %v1510
      %v1516 = vrot.slane %v1515, 4
      %v1518 = vshll.u32 %v1433, 16
      %v1520 = vrot.slane %v1518, 5
      %v1521 = vsel %vm1497, %v1516, %v1520
      %v1523 = vshrl.u32 %v1434, 16
      %v1525 = vrot.slane %v1523, 4
      %v1526 = vshll.u32 %v1434, 16
      %v1528 = vrot.slane %v1526, 5
      %v1529 = vor.u32 %v1525, %v1528
      %v1530 = vrot.slane %v1529, 4
      %v1532 = vshll.u32 %v1435, 16
      %v1534 = vrot.slane %v1532, 5
      %v1535 = vsel %vm1497, %v1530, %v1534
      %v1536 = vshrl.u32 %v1435, 16
      %v1538 = vrot.slane %v1536, 4
      %v1539 = vor.u32 %v1538, %v1534
      %v1540 = vrot.slane %v1539, 4
      %v1542 = vshll.u32 %v1436, 16
      %v1544 = vrot.slane %v1542, 5
      %v1545 = vsel %vm1497, %v1540, %v1544
      %v1547 = vshrl.u32 %v1437, 16
      %v1549 = vrot.slane %v1547, 4
      %v1550 = vshll.u32 %v1437, 16
      %v1552 = vrot.slane %v1550, 5
      %v1553 = vor.u32 %v1549, %v1552
      %v1554 = vrot.slane %v1553, 4
      %v1556 = vshll.u32 %v1438, 16
      %v1558 = vrot.slane %v1556, 5
      %v1559 = vsel %vm1497, %v1554, %v1558
      %v1560 = vshrl.u32 %v1438, 16
      %v1562 = vrot.slane %v1560, 4
      %v1563 = vor.u32 %v1562, %v1558
      %v1564 = vrot.slane %v1563, 4
      %v1566 = vshll.u32 %v1439, 16
      %v1568 = vrot.slane %v1566, 5
      %v1569 = vsel %vm1497, %v1564, %v1568
      %v1571 = vshrl.u32 %v1440, 16
      %v1573 = vrot.slane %v1571, 4
      %v1574 = vshll.u32 %v1440, 16
      %v1576 = vrot.slane %v1574, 5
      %v1577 = vor.u32 %v1573, %v1576
      %v1578 = vrot.slane %v1577, 4
      %v1580 = vshll.u32 %v1441, 16
      %v1582 = vrot.slane %v1580, 5
      %v1583 = vsel %vm1497, %v1578, %v1582
      %v1584 = vshrl.u32 %v1441, 16
      %v1586 = vrot.slane %v1584, 4
      %v1587 = vor.u32 %v1586, %v1582
      %v1588 = vrot.slane %v1587, 4
      %v1590 = vshll.u32 %v1442, 16
      %v1592 = vrot.slane %v1590, 5
      %v1593 = vsel %vm1497, %v1588, %v1592
      %v1595 = vshrl.u32 %v1443, 16
      %v1597 = vrot.slane %v1595, 4
      %v1598 = vshll.u32 %v1443, 16
      %v1600 = vrot.slane %v1598, 5
      %v1601 = vor.u32 %v1597, %v1600
      %v1602 = vrot.slane %v1601, 4
      %v1604 = vshll.u32 %v1444, 16
      %v1606 = vrot.slane %v1604, 5
      %v1607 = vsel %vm1497, %v1602, %v1606
      %v1608 = vshrl.u32 %v1444, 16
      %v1610 = vrot.slane %v1608, 4
      %v1611 = vor.u32 %v1610, %v1606
      %v1612 = vrot.slane %v1611, 4
      %v1614 = vshll.u32 %v1445, 16
      %v1616 = vrot.slane %v1614, 5
      %v1617 = vsel %vm1497, %v1612, %v1616
      %v1619 = vshrl.u32 %v1446, 16
      %v1621 = vrot.slane %v1619, 4
      %v1622 = vshll.u32 %v1446, 16
      %v1624 = vrot.slane %v1622, 5
      %v1625 = vor.u32 %v1621, %v1624
      %v1626 = vrot.slane %v1625, 4
      %v1628 = vshll.u32 %v1447, 16
      %v1630 = vrot.slane %v1628, 5
      %v1631 = vsel %vm1497, %v1626, %v1630
      %v1632 = vshrl.u32 %v1447, 16
      %v1634 = vrot.slane %v1632, 4
      %v1635 = vor.u32 %v1634, %v1630
      %v1636 = vrot.slane %v1635, 4
      %v1638 = vshll.u32 %v1448, 16
      %v1640 = vrot.slane %v1638, 5
      %v1641 = vsel %vm1497, %v1636, %v1640
      %v1643 = vshrl.u32 %v1449, 16
      %v1645 = vrot.slane %v1643, 4
      %v1646 = vshll.u32 %v1449, 16
      %v1648 = vrot.slane %v1646, 5
      %v1649 = vor.u32 %v1645, %v1648
      %v1650 = vrot.slane %v1649, 4
      %v1652 = vshll.u32 %v1450, 16
      %v1654 = vrot.slane %v1652, 5
      %v1655 = vsel %vm1497, %v1650, %v1654
      %v1656 = vshrl.u32 %v1450, 16
      %v1658 = vrot.slane %v1656, 4
      %v1659 = vor.u32 %v1658, %v1654
      %v1660 = vrot.slane %v1659, 4
      %v1662 = vshll.u32 %v1451, 16
      %v1664 = vrot.slane %v1662, 5
      %v1665 = vsel %vm1497, %v1660, %v1664
      %v1667 = vshrl.u32 %v1452, 16
      %v1669 = vrot.slane %v1667, 4
      %v1670 = vshll.u32 %v1452, 16
      %v1672 = vrot.slane %v1670, 5
      %v1673 = vor.u32 %v1669, %v1672
      %v1674 = vrot.slane %v1673, 4
      %v1676 = vshll.u32 %v1453, 16
      %v1678 = vrot.slane %v1676, 5
      %v1679 = vsel %vm1497, %v1674, %v1678
      %v1680 = vshrl.u32 %v1453, 16
      %v1682 = vrot.slane %v1680, 4
      %v1683 = vor.u32 %v1682, %v1678
      %v1684 = vrot.slane %v1683, 4
      %v1686 = vshll.u32 %v1454, 16
      %v1688 = vrot.slane %v1686, 5
      %v1689 = vsel %vm1497, %v1684, %v1688
      %v1691 = vshrl.u32 %v1455, 16
      %v1693 = vrot.slane %v1691, 4
      %v1694 = vshll.u32 %v1455, 16
      %v1696 = vrot.slane %v1694, 5
      %v1697 = vor.u32 %v1693, %v1696
      %v1698 = vrot.slane %v1697, 4
      %v1700 = vshll.u32 %v1456, 16
      %v1702 = vrot.slane %v1700, 5
      %v1703 = vsel %vm1497, %v1698, %v1702
      %v1704 = vshrl.u32 %v1456, 16
      %v1706 = vrot.slane %v1704, 4
      %v1707 = vor.u32 %v1706, %v1702
      %v1708 = vrot.slane %v1707, 4
      %v1710 = vshll.u32 %v1457, 16
      %v1712 = vrot.slane %v1710, 5
      %v1713 = vsel %vm1497, %v1708, %v1712
      %v1715 = vshrl.u32 %v1458, 16
      %v1717 = vrot.slane %v1715, 4
      %v1718 = vshll.u32 %v1458, 16
      %v1720 = vrot.slane %v1718, 5
      %v1721 = vor.u32 %v1717, %v1720
      %v1722 = vrot.slane %v1721, 4
      %v1724 = vshll.u32 %v1459, 16
      %v1726 = vrot.slane %v1724, 5
      %v1727 = vsel %vm1497, %v1722, %v1726
      %v1728 = vshrl.u32 %v1459, 16
      %v1730 = vrot.slane %v1728, 4
      %v1731 = vor.u32 %v1730, %v1726
      %v1732 = vrot.slane %v1731, 4
      %v1734 = vshll.u32 %v1460, 16
      %v1736 = vrot.slane %v1734, 5
      %v1737 = vsel %vm1497, %v1732, %v1736
      %v1739 = vshrl.u32 %v1461, 16
      %v1741 = vrot.slane %v1739, 4
      %v1742 = vshll.u32 %v1461, 16
      %v1744 = vrot.slane %v1742, 5
      %v1745 = vor.u32 %v1741, %v1744
      %v1746 = vrot.slane %v1745, 4
      %v1748 = vshll.u32 %v1462, 16
      %v1750 = vrot.slane %v1748, 5
      %v1751 = vsel %vm1497, %v1746, %v1750
      %v1752 = vshrl.u32 %v1462, 16
      %v1754 = vrot.slane %v1752, 4
      %v1755 = vor.u32 %v1754, %v1750
      %v1756 = vrot.slane %v1755, 4
      %v1758 = vshll.u32 %v1463, 16
      %v1760 = vrot.slane %v1758, 5
      %v1761 = vsel %vm1497, %v1756, %v1760
      %v1763 = vshrl.u32 %v1464, 16
      %v1765 = vrot.slane %v1763, 4
      %v1766 = vshll.u32 %v1464, 16
      %v1768 = vrot.slane %v1766, 5
      %v1769 = vor.u32 %v1765, %v1768
      %v1770 = vrot.slane %v1769, 4
      %v1772 = vshll.u32 %v1465, 16
      %v1774 = vrot.slane %v1772, 5
      %v1775 = vsel %vm1497, %v1770, %v1774
      %v1776 = vshrl.u32 %v1465, 16
      %v1778 = vrot.slane %v1776, 4
      %v1779 = vor.u32 %v1778, %v1774
      %v1780 = vrot.slane %v1779, 4
      %v1782 = vshll.u32 %v1466, 16
      %v1784 = vrot.slane %v1782, 5
      %v1785 = vsel %vm1497, %v1780, %v1784
      %v1787 = vshrl.u32 %v1467, 16
      %v1789 = vrot.slane %v1787, 4
      %v1790 = vshll.u32 %v1467, 16
      %v1792 = vrot.slane %v1790, 5
      %v1793 = vor.u32 %v1789, %v1792
      %v1794 = vrot.slane %v1793, 4
      %v1796 = vshll.u32 %v1468, 16
      %v1798 = vrot.slane %v1796, 5
      %v1799 = vsel %vm1497, %v1794, %v1798
      %v1800 = vshrl.u32 %v1468, 16
      %v1802 = vrot.slane %v1800, 4
      %v1803 = vor.u32 %v1802, %v1798
      %v1804 = vrot.slane %v1803, 4
      %v1806 = vshll.u32 %v1469, 16
      %v1808 = vrot.slane %v1806, 5
      %v1809 = vsel %vm1497, %v1804, %v1808
      %v1811 = vshrl.u32 %v1470, 16
      %v1813 = vrot.slane %v1811, 4
      %v1814 = vshll.u32 %v1470, 16
      %v1816 = vrot.slane %v1814, 5
      %v1817 = vor.u32 %v1813, %v1816
      %v1818 = vrot.slane %v1817, 4
      %v1820 = vshll.u32 %v1471, 16
      %v1822 = vrot.slane %v1820, 5
      %v1823 = vsel %vm1497, %v1818, %v1822
      %v1824 = vshrl.u32 %v1471, 16
      %v1826 = vrot.slane %v1824, 4
      %v1827 = vor.u32 %v1826, %v1822
      %v1828 = vrot.slane %v1827, 4
      %v1830 = vshll.u32 %v1472, 16
      %v1832 = vrot.slane %v1830, 5
      %v1833 = vsel %vm1497, %v1828, %v1832
      %v1835 = vshrl.u32 %v1473, 16
      %v1837 = vrot.slane %v1835, 4
      %v1838 = vshll.u32 %v1473, 16
      %v1840 = vrot.slane %v1838, 5
      %v1841 = vor.u32 %v1837, %v1840
      %v1842 = vrot.slane %v1841, 4
      %v1844 = vshll.u32 %v1474, 16
      %v1846 = vrot.slane %v1844, 5
      %v1847 = vsel %vm1497, %v1842, %v1846
      %v1848 = vshrl.u32 %v1474, 16
      %v1850 = vrot.slane %v1848, 4
      %v1851 = vor.u32 %v1850, %v1846
      %v1852 = vrot.slane %v1851, 4
      %v1854 = vshll.u32 %v1475, 16
      %v1856 = vrot.slane %v1854, 5
      %v1857 = vsel %vm1497, %v1852, %v1856
      %v1859 = vshrl.u32 %v1476, 16
      %v1861 = vrot.slane %v1859, 4
      %v1862 = vshll.u32 %v1476, 16
      %v1864 = vrot.slane %v1862, 5
      %v1865 = vor.u32 %v1861, %v1864
      %v1866 = vrot.slane %v1865, 4
      %v1868 = vshll.u32 %v1477, 16
      %v1870 = vrot.slane %v1868, 5
      %v1871 = vsel %vm1497, %v1866, %v1870
      %v1872 = vshrl.u32 %v1477, 16
      %v1874 = vrot.slane %v1872, 4
      %v1875 = vor.u32 %v1874, %v1870
      %v1876 = vrot.slane %v1875, 4
      %v1878 = vshll.u32 %v1478, 16
      %v1880 = vrot.slane %v1878, 5
      %v1881 = vsel %vm1497, %v1876, %v1880
      %s1882 = scalar_lea.vmem %s5, 64
      %v1883 = vld [vmem:[%s1882] sm:$0xf]
      %v1884 = vld [vmem:[%s1882 + $0x4] sm:$0xf]
      %v1885 = vld [vmem:[%s1882 + $0x8] sm:$0xf]
      %v1886 = vld [vmem:[%s1882 + $0xc] sm:$0xf]
      %v1887 = vld [vmem:[%s1882 + $0x10] sm:$0xf]
      %v1888 = vld [vmem:[%s1882 + $0x14] sm:$0xf]
      %v1889 = vld [vmem:[%s1882 + $0x18] sm:$0xf]
      %v1890 = vld [vmem:[%s1882 + $0x1c] sm:$0xf]
      %v1891 = vld [vmem:[%s1882 + $0x20] sm:$0xf]
      %v1892 = vld [vmem:[%s1882 + $0x24] sm:$0xf]
      %v1893 = vld [vmem:[%s1882 + $0x28] sm:$0xf]
      %v1894 = vld [vmem:[%s1882 + $0x2c] sm:$0xf]
      %v1895 = vld [vmem:[%s1882 + $0x30] sm:$0xf]
      %v1896 = vld [vmem:[%s1882 + $0x34] sm:$0xf]
      %v1897 = vld [vmem:[%s1882 + $0x38] sm:$0xf]
      %v1898 = vld [vmem:[%s1882 + $0x3c] sm:$0xf]
      %v1899 = vunpack.c.l.b16 %v1511
      %v1900 = vunpack.c.l.b16 %v1521
      %v1901 = vunpack.c.l.b16 %v1535
      %v1902 = vunpack.c.l.b16 %v1545
      %v1903 = vunpack.c.l.b16 %v1559
      %v1904 = vunpack.c.l.b16 %v1569
      %v1905 = vunpack.c.l.b16 %v1583
      %v1906 = vunpack.c.l.b16 %v1593
      %v1907 = vunpack.c.l.b16 %v1607
      %v1908 = vunpack.c.l.b16 %v1617
      %v1909 = vunpack.c.l.b16 %v1631
      %v1910 = vunpack.c.l.b16 %v1641
      %v1911 = vunpack.c.l.b16 %v1655
      %v1912 = vunpack.c.l.b16 %v1665
      %v1913 = vunpack.c.l.b16 %v1679
      %v1914 = vunpack.c.l.b16 %v1689
      %v1915 = vunpack.c.l.b16 %v1703
      %v1916 = vunpack.c.l.b16 %v1713
      %v1917 = vunpack.c.l.b16 %v1727
      %v1918 = vunpack.c.l.b16 %v1737
      %v1919 = vunpack.c.l.b16 %v1751
      %v1920 = vunpack.c.l.b16 %v1761
      %v1921 = vunpack.c.l.b16 %v1775
      %v1922 = vunpack.c.l.b16 %v1785
      %v1923 = vunpack.c.l.b16 %v1799
      %v1924 = vunpack.c.l.b16 %v1809
      %v1925 = vunpack.c.l.b16 %v1823
      %v1926 = vunpack.c.l.b16 %v1833
      %v1927 = vunpack.c.l.b16 %v1847
      %v1928 = vunpack.c.l.b16 %v1857
      %v1929 = vunpack.c.l.b16 %v1871
      %v1930 = vunpack.c.l.b16 %v1881
      %v1931 = vpack.c.b16 %v1900, %v1899
      %v1932 = vpack.c.b16 %v1902, %v1901
      %v1933 = vpack.c.b16 %v1904, %v1903
      %v1934 = vpack.c.b16 %v1906, %v1905
      %v1935 = vpack.c.b16 %v1908, %v1907
      %v1936 = vpack.c.b16 %v1910, %v1909
      %v1937 = vpack.c.b16 %v1912, %v1911
      %v1938 = vpack.c.b16 %v1914, %v1913
      %v1939 = vpack.c.b16 %v1916, %v1915
      %v1940 = vpack.c.b16 %v1918, %v1917
      %v1941 = vpack.c.b16 %v1920, %v1919
      %v1942 = vpack.c.b16 %v1922, %v1921
      %v1943 = vpack.c.b16 %v1924, %v1923
      %v1944 = vpack.c.b16 %v1926, %v1925
      %v1945 = vpack.c.b16 %v1928, %v1927
      %v1946 = vpack.c.b16 %v1930, %v1929
      %v1979 = vunpack.c.l.b16 %v1883
      %v1980 = vunpack.c.l.b16 %v1884
      %v1981 = vunpack.c.l.b16 %v1885
      %v1982 = vunpack.c.l.b16 %v1886
      %v1983 = vunpack.c.l.b16 %v1887
      %v1984 = vunpack.c.l.b16 %v1888
      %v1985 = vunpack.c.l.b16 %v1889
      %v1986 = vunpack.c.l.b16 %v1890
      %v1987 = vunpack.c.l.b16 %v1891
      %v1988 = vunpack.c.l.b16 %v1892
      %v1989 = vunpack.c.l.b16 %v1893
      %v1990 = vunpack.c.l.b16 %v1894
      %v1991 = vunpack.c.l.b16 %v1895
      %v1992 = vunpack.c.l.b16 %v1896
      %v1993 = vunpack.c.l.b16 %v1897
      %v1994 = vunpack.c.l.b16 %v1898
      %v1995 = vpack.c.b16 %v1980, %v1979
      %v1996 = vpack.c.b16 %v1982, %v1981
      %v1997 = vpack.c.b16 %v1984, %v1983
      %v1998 = vpack.c.b16 %v1986, %v1985
      %v1999 = vpack.c.b16 %v1988, %v1987
      %v2000 = vpack.c.b16 %v1990, %v1989
      %v2001 = vpack.c.b16 %v1992, %v1991
      %v2002 = vpack.c.b16 %v1994, %v1993
      %2011 = vmatprep.subr.bf16.mxu0 0
      %2012 = vmatpush1.bf16.msra.mxu0 %v2002
      %2013 = vmatprep.subr.bf16.mxu0 0
      %2014 = vmatpush1.bf16.msra.mxu0 %v2001
      %2015 = vmatprep.subr.bf16.mxu0 0
      %2016 = vmatpush1.bf16.msra.mxu0 %v2000
      %2017 = vmatprep.subr.bf16.mxu0 0
      %2018 = vmatpush1.bf16.msra.mxu0 %v1999
      %2019 = vmatprep.subr.bf16.mxu0 0
      %2020 = vmatpush1.bf16.msra.mxu0 %v1998
      %2021 = vmatprep.subr.bf16.mxu0 0
      %2022 = vmatpush1.bf16.msra.mxu0 %v1997
      %2023 = vmatprep.subr.bf16.mxu0 0
      %2024 = vmatpush1.bf16.msra.mxu0 %v1996
      %2025 = vmatprep.subr.bf16.mxu0 0
      %2026 = vmatpush1.bf16.msra.mxu0 %v1995
      %2027 = vmatprep.subr.bf16.mxu0 0
      %2028 = vmatpush2.bf16.msra.mxu0 0
      %2029 = vmatprep.subr.bf16.mxu0 0
      %2030 = vmatpush2.bf16.msra.mxu0 0
      %2031 = vmatprep.subr.bf16.mxu0 0
      %2032 = vmatpush2.bf16.msra.mxu0 0
      %2033 = vmatprep.subr.bf16.mxu0 0
      %2034 = vmatpush2.bf16.msra.mxu0 0
      %2035 = vmatprep.subr.bf16.mxu0 0
      %2036 = vmatpush2.bf16.msra.mxu0 0
      %2037 = vmatprep.subr.bf16.mxu0 0
      %2038 = vmatpush2.bf16.msra.mxu0 0
      %2039 = vmatprep.subr.bf16.mxu0 0
      %2040 = vmatpush2.bf16.msra.mxu0 0
      %2041 = vmatprep.subr.bf16.mxu0 0
      %2042 = vmatpush2.bf16.msra.mxu0 0
      %2043 = vmatprep.mubr.bf16.mxu0 0
      %2044 = vmatmul.mubr.bf16.gmra.mxu0 %v1931
      %v2045 = vpop.f32.mrf.mxu0
      %v2046 = vadd.f32 0.0, %v2045
      %v2047 = vpop.f32.mrf.mxu0
      %v2048 = vpop.f32.mrf.mxu0
      %v2049 = vadd.f32 0.0, %v2048
      %v2050 = vpop.f32.mrf.mxu0
      %2051 = vmatprep.mubr.bf16.mxu0 0
      %2052 = vmatmul.mubr.bf16.gmra.mxu0 %v1932
      %v2053 = vpop.f32.mrf.mxu0
      %v2054 = vadd.f32 0.0, %v2053
      %v2055 = vpop.f32.mrf.mxu0
      %v2056 = vpop.f32.mrf.mxu0
      %v2057 = vadd.f32 0.0, %v2056
      %v2058 = vpop.f32.mrf.mxu0
      %2059 = vmatprep.mubr.bf16.mxu0 0
      %2060 = vmatmul.mubr.bf16.gmra.mxu0 %v1933
      %v2061 = vpop.f32.mrf.mxu0
      %v2062 = vadd.f32 0.0, %v2061
      %v2063 = vpop.f32.mrf.mxu0
      %v2064 = vpop.f32.mrf.mxu0
      %v2065 = vadd.f32 0.0, %v2064
      %v2066 = vpop.f32.mrf.mxu0
      %2067 = vmatprep.mubr.bf16.mxu0 0
      %2068 = vmatmul.mubr.bf16.gmra.mxu0 %v1934
      %v2069 = vpop.f32.mrf.mxu0
      %v2070 = vadd.f32 0.0, %v2069
      %v2071 = vpop.f32.mrf.mxu0
      %v2072 = vpop.f32.mrf.mxu0
      %v2073 = vadd.f32 0.0, %v2072
      %v2074 = vpop.f32.mrf.mxu0
      %2075 = vmatprep.mubr.bf16.mxu0 0
      %2076 = vmatmul.mubr.bf16.gmra.mxu0 %v1935
      %v2077 = vpop.f32.mrf.mxu0
      %v2078 = vadd.f32 0.0, %v2077
      %v2079 = vpop.f32.mrf.mxu0
      %v2080 = vpop.f32.mrf.mxu0
      %v2081 = vadd.f32 0.0, %v2080
      %v2082 = vpop.f32.mrf.mxu0
      %2083 = vmatprep.mubr.bf16.mxu0 0
      %2084 = vmatmul.mubr.bf16.gmra.mxu0 %v1936
      %v2085 = vpop.f32.mrf.mxu0
      %v2086 = vadd.f32 0.0, %v2085
      %v2087 = vpop.f32.mrf.mxu0
      %v2088 = vpop.f32.mrf.mxu0
      %v2089 = vadd.f32 0.0, %v2088
      %v2090 = vpop.f32.mrf.mxu0
      %2091 = vmatprep.mubr.bf16.mxu0 0
      %2092 = vmatmul.mubr.bf16.gmra.mxu0 %v1937
      %v2093 = vpop.f32.mrf.mxu0
      %v2094 = vadd.f32 0.0, %v2093
      %v2095 = vpop.f32.mrf.mxu0
      %v2096 = vpop.f32.mrf.mxu0
      %v2097 = vadd.f32 0.0, %v2096
      %v2098 = vpop.f32.mrf.mxu0
      %2099 = vmatprep.mubr.bf16.mxu0 0
      %2100 = vmatmul.mubr.bf16.gmra.mxu0 %v1938
      %v2101 = vpop.f32.mrf.mxu0
      %v2102 = vadd.f32 0.0, %v2101
      %v2103 = vpop.f32.mrf.mxu0
      %v2104 = vpop.f32.mrf.mxu0
      %v2105 = vadd.f32 0.0, %v2104
      %v2106 = vpop.f32.mrf.mxu0
      %2107 = vmatprep.mubr.bf16.mxu0 0
      %2108 = vmatmul.mubr.bf16.gmra.mxu0 %v1939
      %v2109 = vpop.f32.mrf.mxu0
      %v2110 = vadd.f32 0.0, %v2109
      %v2111 = vpop.f32.mrf.mxu0
      %v2112 = vpop.f32.mrf.mxu0
      %v2113 = vadd.f32 0.0, %v2112
      %v2114 = vpop.f32.mrf.mxu0
      %2115 = vmatprep.mubr.bf16.mxu0 0
      %2116 = vmatmul.mubr.bf16.gmra.mxu0 %v1940
      %v2117 = vpop.f32.mrf.mxu0
      %v2118 = vadd.f32 0.0, %v2117
      %v2119 = vpop.f32.mrf.mxu0
      %v2120 = vpop.f32.mrf.mxu0
      %v2121 = vadd.f32 0.0, %v2120
      %v2122 = vpop.f32.mrf.mxu0
      %2123 = vmatprep.mubr.bf16.mxu0 0
      %2124 = vmatmul.mubr.bf16.gmra.mxu0 %v1941
      %v2125 = vpop.f32.mrf.mxu0
      %v2126 = vadd.f32 0.0, %v2125
      %v2127 = vpop.f32.mrf.mxu0
      %v2128 = vpop.f32.mrf.mxu0
      %v2129 = vadd.f32 0.0, %v2128
      %v2130 = vpop.f32.mrf.mxu0
      %2131 = vmatprep.mubr.bf16.mxu0 0
      %2132 = vmatmul.mubr.bf16.gmra.mxu0 %v1942
      %v2133 = vpop.f32.mrf.mxu0
      %v2134 = vadd.f32 0.0, %v2133
      %v2135 = vpop.f32.mrf.mxu0
      %v2136 = vpop.f32.mrf.mxu0
      %v2137 = vadd.f32 0.0, %v2136
      %v2138 = vpop.f32.mrf.mxu0
      %2139 = vmatprep.mubr.bf16.mxu0 0
      %2140 = vmatmul.mubr.bf16.gmra.mxu0 %v1943
      %v2141 = vpop.f32.mrf.mxu0
      %v2142 = vadd.f32 0.0, %v2141
      %v2143 = vpop.f32.mrf.mxu0
      %v2144 = vpop.f32.mrf.mxu0
      %v2145 = vadd.f32 0.0, %v2144
      %v2146 = vpop.f32.mrf.mxu0
      %2147 = vmatprep.mubr.bf16.mxu0 0
      %2148 = vmatmul.mubr.bf16.gmra.mxu0 %v1944
      %v2149 = vpop.f32.mrf.mxu0
      %v2150 = vadd.f32 0.0, %v2149
      %v2151 = vpop.f32.mrf.mxu0
      %v2152 = vpop.f32.mrf.mxu0
      %v2153 = vadd.f32 0.0, %v2152
      %v2154 = vpop.f32.mrf.mxu0
      %2155 = vmatprep.mubr.bf16.mxu0 0
      %2156 = vmatmul.mubr.bf16.gmra.mxu0 %v1945
      %v2157 = vpop.f32.mrf.mxu0
      %v2158 = vadd.f32 0.0, %v2157
      %v2159 = vpop.f32.mrf.mxu0
      %v2160 = vpop.f32.mrf.mxu0
      %v2161 = vadd.f32 0.0, %v2160
      %v2162 = vpop.f32.mrf.mxu0
      %2163 = vmatprep.mubr.bf16.mxu0 0
      %2164 = vmatmul.mubr.bf16.gmra.mxu0 %v1946
      %v2165 = vpop.f32.mrf.mxu0
      %v2166 = vadd.f32 0.0, %v2165
      %v2167 = vpop.f32.mrf.mxu0
      %v2168 = vpop.f32.mrf.mxu0
      %v2169 = vadd.f32 0.0, %v2168
      %v2170 = vpop.f32.mrf.mxu0
      %2171 = vdwg.mxu0
      %v2204 = vunpack.c.l.b16 %v1431
      %v2205 = vunpack.c.l.b16 %v1432
      %v2206 = vunpack.c.l.b16 %v1434
      %v2207 = vunpack.c.l.b16 %v1435
      %v2208 = vunpack.c.l.b16 %v1437
      %v2209 = vunpack.c.l.b16 %v1438
      %v2210 = vunpack.c.l.b16 %v1440
      %v2211 = vunpack.c.l.b16 %v1441
      %v2212 = vunpack.c.l.b16 %v1443
      %v2213 = vunpack.c.l.b16 %v1444
      %v2214 = vunpack.c.l.b16 %v1446
      %v2215 = vunpack.c.l.b16 %v1447
      %v2216 = vunpack.c.l.b16 %v1449
      %v2217 = vunpack.c.l.b16 %v1450
      %v2218 = vunpack.c.l.b16 %v1452
      %v2219 = vunpack.c.l.b16 %v1453
      %v2220 = vunpack.c.l.b16 %v1455
      %v2221 = vunpack.c.l.b16 %v1456
      %v2222 = vunpack.c.l.b16 %v1458
      %v2223 = vunpack.c.l.b16 %v1459
      %v2224 = vunpack.c.l.b16 %v1461
      %v2225 = vunpack.c.l.b16 %v1462
      %v2226 = vunpack.c.l.b16 %v1464
      %v2227 = vunpack.c.l.b16 %v1465
      %v2228 = vunpack.c.l.b16 %v1467
      %v2229 = vunpack.c.l.b16 %v1468
      %v2230 = vunpack.c.l.b16 %v1470
      %v2231 = vunpack.c.l.b16 %v1471
      %v2232 = vunpack.c.l.b16 %v1473
      %v2233 = vunpack.c.l.b16 %v1474
      %v2234 = vunpack.c.l.b16 %v1476
      %v2235 = vunpack.c.l.b16 %v1477
      %v2236 = vpack.c.b16 %v2205, %v2204
      %v2237 = vpack.c.b16 %v2207, %v2206
      %v2238 = vpack.c.b16 %v2209, %v2208
      %v2239 = vpack.c.b16 %v2211, %v2210
      %v2240 = vpack.c.b16 %v2213, %v2212
      %v2241 = vpack.c.b16 %v2215, %v2214
      %v2242 = vpack.c.b16 %v2217, %v2216
      %v2243 = vpack.c.b16 %v2219, %v2218
      %v2244 = vpack.c.b16 %v2221, %v2220
      %v2245 = vpack.c.b16 %v2223, %v2222
      %v2246 = vpack.c.b16 %v2225, %v2224
      %v2247 = vpack.c.b16 %v2227, %v2226
      %v2248 = vpack.c.b16 %v2229, %v2228
      %v2249 = vpack.c.b16 %v2231, %v2230
      %v2250 = vpack.c.b16 %v2233, %v2232
      %v2251 = vpack.c.b16 %v2235, %v2234
      %v2284 = vunpack.c.l.b16 %v1479
      %v2285 = vunpack.c.l.b16 %v1480
      %v2286 = vunpack.c.l.b16 %v1481
      %v2287 = vunpack.c.l.b16 %v1482
      %v2288 = vunpack.c.l.b16 %v1483
      %v2289 = vunpack.c.l.b16 %v1484
      %v2290 = vunpack.c.l.b16 %v1485
      %v2291 = vunpack.c.l.b16 %v1486
      %v2292 = vunpack.c.l.b16 %v1487
      %v2293 = vunpack.c.l.b16 %v1488
      %v2294 = vunpack.c.l.b16 %v1489
      %v2295 = vunpack.c.l.b16 %v1490
      %v2296 = vunpack.c.l.b16 %v1491
      %v2297 = vunpack.c.l.b16 %v1492
      %v2298 = vunpack.c.l.b16 %v1493
      %v2299 = vunpack.c.l.b16 %v1494
      %v2300 = vpack.c.b16 %v2285, %v2284
      %v2301 = vpack.c.b16 %v2287, %v2286
      %v2302 = vpack.c.b16 %v2289, %v2288
      %v2303 = vpack.c.b16 %v2291, %v2290
      %v2304 = vpack.c.b16 %v2293, %v2292
      %v2305 = vpack.c.b16 %v2295, %v2294
      %v2306 = vpack.c.b16 %v2297, %v2296
      %v2307 = vpack.c.b16 %v2299, %v2298
      %2316 = vmatprep.subr.bf16.mxu0 0
      %2317 = vmatpush1.bf16.msra.mxu0 %v2307
      %2318 = vmatprep.subr.bf16.mxu0 0
      %2319 = vmatpush1.bf16.msra.mxu0 %v2306
      %2320 = vmatprep.subr.bf16.mxu0 0
      %2321 = vmatpush1.bf16.msra.mxu0 %v2305
      %2322 = vmatprep.subr.bf16.mxu0 0
      %2323 = vmatpush1.bf16.msra.mxu0 %v2304
      %2324 = vmatprep.subr.bf16.mxu0 0
      %2325 = vmatpush1.bf16.msra.mxu0 %v2303
      %2326 = vmatprep.subr.bf16.mxu0 0
      %2327 = vmatpush1.bf16.msra.mxu0 %v2302
      %2328 = vmatprep.subr.bf16.mxu0 0
      %2329 = vmatpush1.bf16.msra.mxu0 %v2301
      %2330 = vmatprep.subr.bf16.mxu0 0
      %2331 = vmatpush1.bf16.msra.mxu0 %v2300
      %2332 = vmatprep.subr.bf16.mxu0 0
      %2333 = vmatpush2.bf16.msra.mxu0 0
      %2334 = vmatprep.subr.bf16.mxu0 0
      %2335 = vmatpush2.bf16.msra.mxu0 0
      %2336 = vmatprep.subr.bf16.mxu0 0
      %2337 = vmatpush2.bf16.msra.mxu0 0
      %2338 = vmatprep.subr.bf16.mxu0 0
      %2339 = vmatpush2.bf16.msra.mxu0 0
      %2340 = vmatprep.subr.bf16.mxu0 0
      %2341 = vmatpush2.bf16.msra.mxu0 0
      %2342 = vmatprep.subr.bf16.mxu0 0
      %2343 = vmatpush2.bf16.msra.mxu0 0
      %2344 = vmatprep.subr.bf16.mxu0 0
      %2345 = vmatpush2.bf16.msra.mxu0 0
      %2346 = vmatprep.subr.bf16.mxu0 0
      %2347 = vmatpush2.bf16.msra.mxu0 0
      %2348 = vmatprep.mubr.bf16.mxu0 0
      %2349 = vmatmul.mubr.bf16.gmra.mxu0 %v2236
      %v2350 = vpop.f32.mrf.mxu0
      %v2351 = vadd.f32 %v2046, %v2350
      %v2352 = vpop.f32.mrf.mxu0
      %v2353 = vpop.f32.mrf.mxu0
      %v2354 = vadd.f32 %v2049, %v2353
      %v2355 = vpop.f32.mrf.mxu0
      %2356 = vmatprep.mubr.bf16.mxu0 0
      %2357 = vmatmul.mubr.bf16.gmra.mxu0 %v2237
      %v2358 = vpop.f32.mrf.mxu0
      %v2359 = vadd.f32 %v2054, %v2358
      %v2360 = vpop.f32.mrf.mxu0
      %v2361 = vpop.f32.mrf.mxu0
      %v2362 = vadd.f32 %v2057, %v2361
      %v2363 = vpop.f32.mrf.mxu0
      %2364 = vmatprep.mubr.bf16.mxu0 0
      %2365 = vmatmul.mubr.bf16.gmra.mxu0 %v2238
      %v2366 = vpop.f32.mrf.mxu0
      %v2367 = vadd.f32 %v2062, %v2366
      %v2368 = vpop.f32.mrf.mxu0
      %v2369 = vpop.f32.mrf.mxu0
      %v2370 = vadd.f32 %v2065, %v2369
      %v2371 = vpop.f32.mrf.mxu0
      %2372 = vmatprep.mubr.bf16.mxu0 0
      %2373 = vmatmul.mubr.bf16.gmra.mxu0 %v2239
      %v2374 = vpop.f32.mrf.mxu0
      %v2375 = vadd.f32 %v2070, %v2374
      %v2376 = vpop.f32.mrf.mxu0
      %v2377 = vpop.f32.mrf.mxu0
      %v2378 = vadd.f32 %v2073, %v2377
      %v2379 = vpop.f32.mrf.mxu0
      %2380 = vmatprep.mubr.bf16.mxu0 0
      %2381 = vmatmul.mubr.bf16.gmra.mxu0 %v2240
      %v2382 = vpop.f32.mrf.mxu0
      %v2383 = vadd.f32 %v2078, %v2382
      %v2384 = vpop.f32.mrf.mxu0
      %v2385 = vpop.f32.mrf.mxu0
      %v2386 = vadd.f32 %v2081, %v2385
      %v2387 = vpop.f32.mrf.mxu0
      %2388 = vmatprep.mubr.bf16.mxu0 0
      %2389 = vmatmul.mubr.bf16.gmra.mxu0 %v2241
      %v2390 = vpop.f32.mrf.mxu0
      %v2391 = vadd.f32 %v2086, %v2390
      %v2392 = vpop.f32.mrf.mxu0
      %v2393 = vpop.f32.mrf.mxu0
      %v2394 = vadd.f32 %v2089, %v2393
      %v2395 = vpop.f32.mrf.mxu0
      %2396 = vmatprep.mubr.bf16.mxu0 0
      %2397 = vmatmul.mubr.bf16.gmra.mxu0 %v2242
      %v2398 = vpop.f32.mrf.mxu0
      %v2399 = vadd.f32 %v2094, %v2398
      %v2400 = vpop.f32.mrf.mxu0
      %v2401 = vpop.f32.mrf.mxu0
      %v2402 = vadd.f32 %v2097, %v2401
      %v2403 = vpop.f32.mrf.mxu0
      %2404 = vmatprep.mubr.bf16.mxu0 0
      %2405 = vmatmul.mubr.bf16.gmra.mxu0 %v2243
      %v2406 = vpop.f32.mrf.mxu0
      %v2407 = vadd.f32 %v2102, %v2406
      %v2408 = vpop.f32.mrf.mxu0
      %v2409 = vpop.f32.mrf.mxu0
      %v2410 = vadd.f32 %v2105, %v2409
      %v2411 = vpop.f32.mrf.mxu0
      %2412 = vmatprep.mubr.bf16.mxu0 0
      %2413 = vmatmul.mubr.bf16.gmra.mxu0 %v2244
      %v2414 = vpop.f32.mrf.mxu0
      %v2415 = vadd.f32 %v2110, %v2414
      %v2416 = vpop.f32.mrf.mxu0
      %v2417 = vpop.f32.mrf.mxu0
      %v2418 = vadd.f32 %v2113, %v2417
      %v2419 = vpop.f32.mrf.mxu0
      %2420 = vmatprep.mubr.bf16.mxu0 0
      %2421 = vmatmul.mubr.bf16.gmra.mxu0 %v2245
      %v2422 = vpop.f32.mrf.mxu0
      %v2423 = vadd.f32 %v2118, %v2422
      %v2424 = vpop.f32.mrf.mxu0
      %v2425 = vpop.f32.mrf.mxu0
      %v2426 = vadd.f32 %v2121, %v2425
      %v2427 = vpop.f32.mrf.mxu0
      %2428 = vmatprep.mubr.bf16.mxu0 0
      %2429 = vmatmul.mubr.bf16.gmra.mxu0 %v2246
      %v2430 = vpop.f32.mrf.mxu0
      %v2431 = vadd.f32 %v2126, %v2430
      %v2432 = vpop.f32.mrf.mxu0
      %v2433 = vpop.f32.mrf.mxu0
      %v2434 = vadd.f32 %v2129, %v2433
      %v2435 = vpop.f32.mrf.mxu0
      %2436 = vmatprep.mubr.bf16.mxu0 0
      %2437 = vmatmul.mubr.bf16.gmra.mxu0 %v2247
      %v2438 = vpop.f32.mrf.mxu0
      %v2439 = vadd.f32 %v2134, %v2438
      %v2440 = vpop.f32.mrf.mxu0
      %v2441 = vpop.f32.mrf.mxu0
      %v2442 = vadd.f32 %v2137, %v2441
      %v2443 = vpop.f32.mrf.mxu0
      %2444 = vmatprep.mubr.bf16.mxu0 0
      %2445 = vmatmul.mubr.bf16.gmra.mxu0 %v2248
      %v2446 = vpop.f32.mrf.mxu0
      %v2447 = vadd.f32 %v2142, %v2446
      %v2448 = vpop.f32.mrf.mxu0
      %v2449 = vpop.f32.mrf.mxu0
      %v2450 = vadd.f32 %v2145, %v2449
      %v2451 = vpop.f32.mrf.mxu0
      %2452 = vmatprep.mubr.bf16.mxu0 0
      %2453 = vmatmul.mubr.bf16.gmra.mxu0 %v2249
      %v2454 = vpop.f32.mrf.mxu0
      %v2455 = vadd.f32 %v2150, %v2454
      %v2456 = vpop.f32.mrf.mxu0
      %v2457 = vpop.f32.mrf.mxu0
      %v2458 = vadd.f32 %v2153, %v2457
      %v2459 = vpop.f32.mrf.mxu0
      %2460 = vmatprep.mubr.bf16.mxu0 0
      %2461 = vmatmul.mubr.bf16.gmra.mxu0 %v2250
      %v2462 = vpop.f32.mrf.mxu0
      %v2463 = vadd.f32 %v2158, %v2462
      %v2464 = vpop.f32.mrf.mxu0
      %v2465 = vpop.f32.mrf.mxu0
      %v2466 = vadd.f32 %v2161, %v2465
      %v2467 = vpop.f32.mrf.mxu0
      %2468 = vmatprep.mubr.bf16.mxu0 0
      %2469 = vmatmul.mubr.bf16.gmra.mxu0 %v2251
      %v2470 = vpop.f32.mrf.mxu0
      %v2471 = vadd.f32 %v2166, %v2470
      %v2472 = vpop.f32.mrf.mxu0
      %v2473 = vpop.f32.mrf.mxu0
      %v2474 = vadd.f32 %v2169, %v2473
      %v2475 = vpop.f32.mrf.mxu0
      %2476 = vdwg.mxu0
      %vm2493 = vcmask 1042432
      %vm2494 = vcmask 1046532
      %vm2495 = vmor %vm2493, %vm2494
      %v2496 = vrot.slane %v1431, 5
      %v2497 = vrot.slane %v2496, 4
      %v2498 = vrot.slane %v1432, 5
      %v2499 = vsel %vm2495, %v2497, %v2498
      %v2500 = vrot.slane %v2498, 4
      %v2501 = vrot.slane %v1433, 5
      %v2502 = vsel %vm2495, %v2500, %v2501
      %v2503 = vrot.slane %v1434, 5
      %v2504 = vrot.slane %v2503, 4
      %v2505 = vrot.slane %v1435, 5
      %v2506 = vsel %vm2495, %v2504, %v2505
      %v2507 = vrot.slane %v2505, 4
      %v2508 = vrot.slane %v1436, 5
      %v2509 = vsel %vm2495, %v2507, %v2508
      %v2510 = vrot.slane %v1437, 5
      %v2511 = vrot.slane %v2510, 4
      %v2512 = vrot.slane %v1438, 5
      %v2513 = vsel %vm2495, %v2511, %v2512
      %v2514 = vrot.slane %v2512, 4
      %v2515 = vrot.slane %v1439, 5
      %v2516 = vsel %vm2495, %v2514, %v2515
      %v2517 = vrot.slane %v1440, 5
      %v2518 = vrot.slane %v2517, 4
      %v2519 = vrot.slane %v1441, 5
      %v2520 = vsel %vm2495, %v2518, %v2519
      %v2521 = vrot.slane %v2519, 4
      %v2522 = vrot.slane %v1442, 5
      %v2523 = vsel %vm2495, %v2521, %v2522
      %v2524 = vrot.slane %v1443, 5
      %v2525 = vrot.slane %v2524, 4
      %v2526 = vrot.slane %v1444, 5
      %v2527 = vsel %vm2495, %v2525, %v2526
      %v2528 = vrot.slane %v2526, 4
      %v2529 = vrot.slane %v1445, 5
      %v2530 = vsel %vm2495, %v2528, %v2529
      %v2531 = vrot.slane %v1446, 5
      %v2532 = vrot.slane %v2531, 4
      %v2533 = vrot.slane %v1447, 5
      %v2534 = vsel %vm2495, %v2532, %v2533
      %v2535 = vrot.slane %v2533, 4
      %v2536 = vrot.slane %v1448, 5
      %v2537 = vsel %vm2495, %v2535, %v2536
      %v2538 = vrot.slane %v1449, 5
      %v2539 = vrot.slane %v2538, 4
      %v2540 = vrot.slane %v1450, 5
      %v2541 = vsel %vm2495, %v2539, %v2540
      %v2542 = vrot.slane %v2540, 4
      %v2543 = vrot.slane %v1451, 5
      %v2544 = vsel %vm2495, %v2542, %v2543
      %v2545 = vrot.slane %v1452, 5
      %v2546 = vrot.slane %v2545, 4
      %v2547 = vrot.slane %v1453, 5
      %v2548 = vsel %vm2495, %v2546, %v2547
      %v2549 = vrot.slane %v2547, 4
      %v2550 = vrot.slane %v1454, 5
      %v2551 = vsel %vm2495, %v2549, %v2550
      %v2552 = vrot.slane %v1455, 5
      %v2553 = vrot.slane %v2552, 4
      %v2554 = vrot.slane %v1456, 5
      %v2555 = vsel %vm2495, %v2553, %v2554
      %v2556 = vrot.slane %v2554, 4
      %v2557 = vrot.slane %v1457, 5
      %v2558 = vsel %vm2495, %v2556, %v2557
      %v2559 = vrot.slane %v1458, 5
      %v2560 = vrot.slane %v2559, 4
      %v2561 = vrot.slane %v1459, 5
      %v2562 = vsel %vm2495, %v2560, %v2561
      %v2563 = vrot.slane %v2561, 4
      %v2564 = vrot.slane %v1460, 5
      %v2565 = vsel %vm2495, %v2563, %v2564
      %v2566 = vrot.slane %v1461, 5
      %v2567 = vrot.slane %v2566, 4
      %v2568 = vrot.slane %v1462, 5
      %v2569 = vsel %vm2495, %v2567, %v2568
      %v2570 = vrot.slane %v2568, 4
      %v2571 = vrot.slane %v1463, 5
      %v2572 = vsel %vm2495, %v2570, %v2571
      %v2573 = vrot.slane %v1464, 5
      %v2574 = vrot.slane %v2573, 4
      %v2575 = vrot.slane %v1465, 5
      %v2576 = vsel %vm2495, %v2574, %v2575
      %v2577 = vrot.slane %v2575, 4
      %v2578 = vrot.slane %v1466, 5
      %v2579 = vsel %vm2495, %v2577, %v2578
      %v2580 = vrot.slane %v1467, 5
      %v2581 = vrot.slane %v2580, 4
      %v2582 = vrot.slane %v1468, 5
      %v2583 = vsel %vm2495, %v2581, %v2582
      %v2584 = vrot.slane %v2582, 4
      %v2585 = vrot.slane %v1469, 5
      %v2586 = vsel %vm2495, %v2584, %v2585
      %v2587 = vrot.slane %v1470, 5
      %v2588 = vrot.slane %v2587, 4
      %v2589 = vrot.slane %v1471, 5
      %v2590 = vsel %vm2495, %v2588, %v2589
      %v2591 = vrot.slane %v2589, 4
      %v2592 = vrot.slane %v1472, 5
      %v2593 = vsel %vm2495, %v2591, %v2592
      %v2594 = vrot.slane %v1473, 5
      %v2595 = vrot.slane %v2594, 4
      %v2596 = vrot.slane %v1474, 5
      %v2597 = vsel %vm2495, %v2595, %v2596
      %v2598 = vrot.slane %v2596, 4
      %v2599 = vrot.slane %v1475, 5
      %v2600 = vsel %vm2495, %v2598, %v2599
      %v2601 = vrot.slane %v1476, 5
      %v2602 = vrot.slane %v2601, 4
      %v2603 = vrot.slane %v1477, 5
      %v2604 = vsel %vm2495, %v2602, %v2603
      %v2605 = vrot.slane %v2603, 4
      %v2606 = vrot.slane %v1478, 5
      %v2607 = vsel %vm2495, %v2605, %v2606
      %s2608 = scalar_lea.vmem %s5, 128
      %v2609 = vld [vmem:[%s2608] sm:$0xf]
      %v2610 = vld [vmem:[%s2608 + $0x4] sm:$0xf]
      %v2611 = vld [vmem:[%s2608 + $0x8] sm:$0xf]
      %v2612 = vld [vmem:[%s2608 + $0xc] sm:$0xf]
      %v2613 = vld [vmem:[%s2608 + $0x10] sm:$0xf]
      %v2614 = vld [vmem:[%s2608 + $0x14] sm:$0xf]
      %v2615 = vld [vmem:[%s2608 + $0x18] sm:$0xf]
      %v2616 = vld [vmem:[%s2608 + $0x1c] sm:$0xf]
      %v2617 = vld [vmem:[%s2608 + $0x20] sm:$0xf]
      %v2618 = vld [vmem:[%s2608 + $0x24] sm:$0xf]
      %v2619 = vld [vmem:[%s2608 + $0x28] sm:$0xf]
      %v2620 = vld [vmem:[%s2608 + $0x2c] sm:$0xf]
      %v2621 = vld [vmem:[%s2608 + $0x30] sm:$0xf]
      %v2622 = vld [vmem:[%s2608 + $0x34] sm:$0xf]
      %v2623 = vld [vmem:[%s2608 + $0x38] sm:$0xf]
      %v2624 = vld [vmem:[%s2608 + $0x3c] sm:$0xf]
      %v2625 = vunpack.c.l.b16 %v2499
      %v2626 = vunpack.c.l.b16 %v2502
      %v2627 = vunpack.c.l.b16 %v2506
      %v2628 = vunpack.c.l.b16 %v2509
      %v2629 = vunpack.c.l.b16 %v2513
      %v2630 = vunpack.c.l.b16 %v2516
      %v2631 = vunpack.c.l.b16 %v2520
      %v2632 = vunpack.c.l.b16 %v2523
      %v2633 = vunpack.c.l.b16 %v2527
      %v2634 = vunpack.c.l.b16 %v2530
      %v2635 = vunpack.c.l.b16 %v2534
      %v2636 = vunpack.c.l.b16 %v2537
      %v2637 = vunpack.c.l.b16 %v2541
      %v2638 = vunpack.c.l.b16 %v2544
      %v2639 = vunpack.c.l.b16 %v2548
      %v2640 = vunpack.c.l.b16 %v2551
      %v2641 = vunpack.c.l.b16 %v2555
      %v2642 = vunpack.c.l.b16 %v2558
      %v2643 = vunpack.c.l.b16 %v2562
      %v2644 = vunpack.c.l.b16 %v2565
      %v2645 = vunpack.c.l.b16 %v2569
      %v2646 = vunpack.c.l.b16 %v2572
      %v2647 = vunpack.c.l.b16 %v2576
      %v2648 = vunpack.c.l.b16 %v2579
      %v2649 = vunpack.c.l.b16 %v2583
      %v2650 = vunpack.c.l.b16 %v2586
      %v2651 = vunpack.c.l.b16 %v2590
      %v2652 = vunpack.c.l.b16 %v2593
      %v2653 = vunpack.c.l.b16 %v2597
      %v2654 = vunpack.c.l.b16 %v2600
      %v2655 = vunpack.c.l.b16 %v2604
      %v2656 = vunpack.c.l.b16 %v2607
      %v2657 = vpack.c.b16 %v2626, %v2625
      %v2658 = vpack.c.b16 %v2628, %v2627
      %v2659 = vpack.c.b16 %v2630, %v2629
      %v2660 = vpack.c.b16 %v2632, %v2631
      %v2661 = vpack.c.b16 %v2634, %v2633
      %v2662 = vpack.c.b16 %v2636, %v2635
      %v2663 = vpack.c.b16 %v2638, %v2637
      %v2664 = vpack.c.b16 %v2640, %v2639
      %v2665 = vpack.c.b16 %v2642, %v2641
      %v2666 = vpack.c.b16 %v2644, %v2643
      %v2667 = vpack.c.b16 %v2646, %v2645
      %v2668 = vpack.c.b16 %v2648, %v2647
      %v2669 = vpack.c.b16 %v2650, %v2649
      %v2670 = vpack.c.b16 %v2652, %v2651
      %v2671 = vpack.c.b16 %v2654, %v2653
      %v2672 = vpack.c.b16 %v2656, %v2655
      %v2705 = vunpack.c.l.b16 %v2609
      %v2706 = vunpack.c.l.b16 %v2610
      %v2707 = vunpack.c.l.b16 %v2611
      %v2708 = vunpack.c.l.b16 %v2612
      %v2709 = vunpack.c.l.b16 %v2613
      %v2710 = vunpack.c.l.b16 %v2614
      %v2711 = vunpack.c.l.b16 %v2615
      %v2712 = vunpack.c.l.b16 %v2616
      %v2713 = vunpack.c.l.b16 %v2617
      %v2714 = vunpack.c.l.b16 %v2618
      %v2715 = vunpack.c.l.b16 %v2619
      %v2716 = vunpack.c.l.b16 %v2620
      %v2717 = vunpack.c.l.b16 %v2621
      %v2718 = vunpack.c.l.b16 %v2622
      %v2719 = vunpack.c.l.b16 %v2623
      %v2720 = vunpack.c.l.b16 %v2624
      %v2721 = vpack.c.b16 %v2706, %v2705
      %v2722 = vpack.c.b16 %v2708, %v2707
      %v2723 = vpack.c.b16 %v2710, %v2709
      %v2724 = vpack.c.b16 %v2712, %v2711
      %v2725 = vpack.c.b16 %v2714, %v2713
      %v2726 = vpack.c.b16 %v2716, %v2715
      %v2727 = vpack.c.b16 %v2718, %v2717
      %v2728 = vpack.c.b16 %v2720, %v2719
      %2737 = vmatprep.subr.bf16.mxu0 0
      %2738 = vmatpush1.bf16.msra.mxu0 %v2728
      %2739 = vmatprep.subr.bf16.mxu0 0
      %2740 = vmatpush1.bf16.msra.mxu0 %v2727
      %2741 = vmatprep.subr.bf16.mxu0 0
      %2742 = vmatpush1.bf16.msra.mxu0 %v2726
      %2743 = vmatprep.subr.bf16.mxu0 0
      %2744 = vmatpush1.bf16.msra.mxu0 %v2725
      %2745 = vmatprep.subr.bf16.mxu0 0
      %2746 = vmatpush1.bf16.msra.mxu0 %v2724
      %2747 = vmatprep.subr.bf16.mxu0 0
      %2748 = vmatpush1.bf16.msra.mxu0 %v2723
      %2749 = vmatprep.subr.bf16.mxu0 0
      %2750 = vmatpush1.bf16.msra.mxu0 %v2722
      %2751 = vmatprep.subr.bf16.mxu0 0
      %2752 = vmatpush1.bf16.msra.mxu0 %v2721
      %2753 = vmatprep.subr.bf16.mxu0 0
      %2754 = vmatpush2.bf16.msra.mxu0 0
      %2755 = vmatprep.subr.bf16.mxu0 0
      %2756 = vmatpush2.bf16.msra.mxu0 0
      %2757 = vmatprep.subr.bf16.mxu0 0
      %2758 = vmatpush2.bf16.msra.mxu0 0
      %2759 = vmatprep.subr.bf16.mxu0 0
      %2760 = vmatpush2.bf16.msra.mxu0 0
      %2761 = vmatprep.subr.bf16.mxu0 0
      %2762 = vmatpush2.bf16.msra.mxu0 0
      %2763 = vmatprep.subr.bf16.mxu0 0
      %2764 = vmatpush2.bf16.msra.mxu0 0
      %2765 = vmatprep.subr.bf16.mxu0 0
      %2766 = vmatpush2.bf16.msra.mxu0 0
      %2767 = vmatprep.subr.bf16.mxu0 0
      %2768 = vmatpush2.bf16.msra.mxu0 0
      %2769 = vmatprep.mubr.bf16.mxu0 0
      %2770 = vmatmul.mubr.bf16.gmra.mxu0 %v2657
      %v2771 = vpop.f32.mrf.mxu0
      %v2772 = vadd.f32 0.0, %v2771
      %v2773 = vpop.f32.mrf.mxu0
      %v2774 = vpop.f32.mrf.mxu0
      %v2775 = vadd.f32 0.0, %v2774
      %v2776 = vpop.f32.mrf.mxu0
      %2777 = vmatprep.mubr.bf16.mxu0 0
      %2778 = vmatmul.mubr.bf16.gmra.mxu0 %v2658
      %v2779 = vpop.f32.mrf.mxu0
      %v2780 = vadd.f32 0.0, %v2779
      %v2781 = vpop.f32.mrf.mxu0
      %v2782 = vpop.f32.mrf.mxu0
      %v2783 = vadd.f32 0.0, %v2782
      %v2784 = vpop.f32.mrf.mxu0
      %2785 = vmatprep.mubr.bf16.mxu0 0
      %2786 = vmatmul.mubr.bf16.gmra.mxu0 %v2659
      %v2787 = vpop.f32.mrf.mxu0
      %v2788 = vadd.f32 0.0, %v2787
      %v2789 = vpop.f32.mrf.mxu0
      %v2790 = vpop.f32.mrf.mxu0
      %v2791 = vadd.f32 0.0, %v2790
      %v2792 = vpop.f32.mrf.mxu0
      %2793 = vmatprep.mubr.bf16.mxu0 0
      %2794 = vmatmul.mubr.bf16.gmra.mxu0 %v2660
      %v2795 = vpop.f32.mrf.mxu0
      %v2796 = vadd.f32 0.0, %v2795
      %v2797 = vpop.f32.mrf.mxu0
      %v2798 = vpop.f32.mrf.mxu0
      %v2799 = vadd.f32 0.0, %v2798
      %v2800 = vpop.f32.mrf.mxu0
      %2801 = vmatprep.mubr.bf16.mxu0 0
      %2802 = vmatmul.mubr.bf16.gmra.mxu0 %v2661
      %v2803 = vpop.f32.mrf.mxu0
      %v2804 = vadd.f32 0.0, %v2803
      %v2805 = vpop.f32.mrf.mxu0
      %v2806 = vpop.f32.mrf.mxu0
      %v2807 = vadd.f32 0.0, %v2806
      %v2808 = vpop.f32.mrf.mxu0
      %2809 = vmatprep.mubr.bf16.mxu0 0
      %2810 = vmatmul.mubr.bf16.gmra.mxu0 %v2662
      %v2811 = vpop.f32.mrf.mxu0
      %v2812 = vadd.f32 0.0, %v2811
      %v2813 = vpop.f32.mrf.mxu0
      %v2814 = vpop.f32.mrf.mxu0
      %v2815 = vadd.f32 0.0, %v2814
      %v2816 = vpop.f32.mrf.mxu0
      %2817 = vmatprep.mubr.bf16.mxu0 0
      %2818 = vmatmul.mubr.bf16.gmra.mxu0 %v2663
      %v2819 = vpop.f32.mrf.mxu0
      %v2820 = vadd.f32 0.0, %v2819
      %v2821 = vpop.f32.mrf.mxu0
      %v2822 = vpop.f32.mrf.mxu0
      %v2823 = vadd.f32 0.0, %v2822
      %v2824 = vpop.f32.mrf.mxu0
      %2825 = vmatprep.mubr.bf16.mxu0 0
      %2826 = vmatmul.mubr.bf16.gmra.mxu0 %v2664
      %v2827 = vpop.f32.mrf.mxu0
      %v2828 = vadd.f32 0.0, %v2827
      %v2829 = vpop.f32.mrf.mxu0
      %v2830 = vpop.f32.mrf.mxu0
      %v2831 = vadd.f32 0.0, %v2830
      %v2832 = vpop.f32.mrf.mxu0
      %2833 = vmatprep.mubr.bf16.mxu0 0
      %2834 = vmatmul.mubr.bf16.gmra.mxu0 %v2665
      %v2835 = vpop.f32.mrf.mxu0
      %v2836 = vadd.f32 0.0, %v2835
      %v2837 = vpop.f32.mrf.mxu0
      %v2838 = vpop.f32.mrf.mxu0
      %v2839 = vadd.f32 0.0, %v2838
      %v2840 = vpop.f32.mrf.mxu0
      %2841 = vmatprep.mubr.bf16.mxu0 0
      %2842 = vmatmul.mubr.bf16.gmra.mxu0 %v2666
      %v2843 = vpop.f32.mrf.mxu0
      %v2844 = vadd.f32 0.0, %v2843
      %v2845 = vpop.f32.mrf.mxu0
      %v2846 = vpop.f32.mrf.mxu0
      %v2847 = vadd.f32 0.0, %v2846
      %v2848 = vpop.f32.mrf.mxu0
      %2849 = vmatprep.mubr.bf16.mxu0 0
      %2850 = vmatmul.mubr.bf16.gmra.mxu0 %v2667
      %v2851 = vpop.f32.mrf.mxu0
      %v2852 = vadd.f32 0.0, %v2851
      %v2853 = vpop.f32.mrf.mxu0
      %v2854 = vpop.f32.mrf.mxu0
      %v2855 = vadd.f32 0.0, %v2854
      %v2856 = vpop.f32.mrf.mxu0
      %2857 = vmatprep.mubr.bf16.mxu0 0
      %2858 = vmatmul.mubr.bf16.gmra.mxu0 %v2668
      %v2859 = vpop.f32.mrf.mxu0
      %v2860 = vadd.f32 0.0, %v2859
      %v2861 = vpop.f32.mrf.mxu0
      %v2862 = vpop.f32.mrf.mxu0
      %v2863 = vadd.f32 0.0, %v2862
      %v2864 = vpop.f32.mrf.mxu0
      %2865 = vmatprep.mubr.bf16.mxu0 0
      %2866 = vmatmul.mubr.bf16.gmra.mxu0 %v2669
      %v2867 = vpop.f32.mrf.mxu0
      %v2868 = vadd.f32 0.0, %v2867
      %v2869 = vpop.f32.mrf.mxu0
      %v2870 = vpop.f32.mrf.mxu0
      %v2871 = vadd.f32 0.0, %v2870
      %v2872 = vpop.f32.mrf.mxu0
      %2873 = vmatprep.mubr.bf16.mxu0 0
      %2874 = vmatmul.mubr.bf16.gmra.mxu0 %v2670
      %v2875 = vpop.f32.mrf.mxu0
      %v2876 = vadd.f32 0.0, %v2875
      %v2877 = vpop.f32.mrf.mxu0
      %v2878 = vpop.f32.mrf.mxu0
      %v2879 = vadd.f32 0.0, %v2878
      %v2880 = vpop.f32.mrf.mxu0
      %2881 = vmatprep.mubr.bf16.mxu0 0
      %2882 = vmatmul.mubr.bf16.gmra.mxu0 %v2671
      %v2883 = vpop.f32.mrf.mxu0
      %v2884 = vadd.f32 0.0, %v2883
      %v2885 = vpop.f32.mrf.mxu0
      %v2886 = vpop.f32.mrf.mxu0
      %v2887 = vadd.f32 0.0, %v2886
      %v2888 = vpop.f32.mrf.mxu0
      %2889 = vmatprep.mubr.bf16.mxu0 0
      %2890 = vmatmul.mubr.bf16.gmra.mxu0 %v2672
      %v2891 = vpop.f32.mrf.mxu0
      %v2892 = vadd.f32 0.0, %v2891
      %v2893 = vpop.f32.mrf.mxu0
      %v2894 = vpop.f32.mrf.mxu0
      %v2895 = vadd.f32 0.0, %v2894
      %v2896 = vpop.f32.mrf.mxu0
      %2897 = vdwg.mxu0
      %v2898 = vadd.f32 %v2351, %v2772
      %v2899 = vadd.f32 %v2354, %v2775
      %v2900 = vadd.f32 %v2359, %v2780
      %v2901 = vadd.f32 %v2362, %v2783
      %v2902 = vadd.f32 %v2367, %v2788
      %v2903 = vadd.f32 %v2370, %v2791
      %v2904 = vadd.f32 %v2375, %v2796
      %v2905 = vadd.f32 %v2378, %v2799
      %v2906 = vadd.f32 %v2383, %v2804
      %v2907 = vadd.f32 %v2386, %v2807
      %v2908 = vadd.f32 %v2391, %v2812
      %v2909 = vadd.f32 %v2394, %v2815
      %v2910 = vadd.f32 %v2399, %v2820
      %v2911 = vadd.f32 %v2402, %v2823
      %v2912 = vadd.f32 %v2407, %v2828
      %v2913 = vadd.f32 %v2410, %v2831
      %v2914 = vadd.f32 %v2415, %v2836
      %v2915 = vadd.f32 %v2418, %v2839
      %v2916 = vadd.f32 %v2423, %v2844
      %v2917 = vadd.f32 %v2426, %v2847
      %v2918 = vadd.f32 %v2431, %v2852
      %v2919 = vadd.f32 %v2434, %v2855
      %v2920 = vadd.f32 %v2439, %v2860
      %v2921 = vadd.f32 %v2442, %v2863
      %v2922 = vadd.f32 %v2447, %v2868
      %v2923 = vadd.f32 %v2450, %v2871
      %v2924 = vadd.f32 %v2455, %v2876
      %v2925 = vadd.f32 %v2458, %v2879
      %v2926 = vadd.f32 %v2463, %v2884
      %v2927 = vadd.f32 %v2466, %v2887
      %v2928 = vadd.f32 %v2471, %v2892
      %v2929 = vadd.f32 %v2474, %v2895
      %v2930 = vld [vmem:[%s1171] sm:$0xf]
      %v2931 = vld [vmem:[%s1171 + $0x4] sm:$0xf]
      %v2932 = vld [vmem:[%s1171 + $0x8] sm:$0x1]
      %v2933 = vld [vmem:[%s1171 + $0xc] sm:$0xf]
      %v2934 = vld [vmem:[%s1171 + $0x10] sm:$0xf]
      %v2935 = vld [vmem:[%s1171 + $0x14] sm:$0x1]
      %v2936 = vld [vmem:[%s1171 + $0x18] sm:$0xf]
      %v2937 = vld [vmem:[%s1171 + $0x1c] sm:$0xf]
      %v2938 = vld [vmem:[%s1171 + $0x20] sm:$0x1]
      %v2939 = vld [vmem:[%s1171 + $0x24] sm:$0xf]
      %v2940 = vld [vmem:[%s1171 + $0x28] sm:$0xf]
      %v2941 = vld [vmem:[%s1171 + $0x2c] sm:$0x1]
      %v2942 = vld [vmem:[%s1171 + $0x30] sm:$0xf]
      %v2943 = vld [vmem:[%s1171 + $0x34] sm:$0xf]
      %v2944 = vld [vmem:[%s1171 + $0x38] sm:$0x1]
      %v2945 = vld [vmem:[%s1171 + $0x3c] sm:$0xf]
      %v2946 = vld [vmem:[%s1171 + $0x40] sm:$0xf]
      %v2947 = vld [vmem:[%s1171 + $0x44] sm:$0x1]
      %v2948 = vld [vmem:[%s1171 + $0x48] sm:$0xf]
      %v2949 = vld [vmem:[%s1171 + $0x4c] sm:$0xf]
      %v2950 = vld [vmem:[%s1171 + $0x50] sm:$0x1]
      %v2951 = vld [vmem:[%s1171 + $0x54] sm:$0xf]
      %v2952 = vld [vmem:[%s1171 + $0x58] sm:$0xf]
      %v2953 = vld [vmem:[%s1171 + $0x5c] sm:$0x1]
      %v2954 = vld [vmem:[%s1171 + $0x60] sm:$0xf]
      %v2955 = vld [vmem:[%s1171 + $0x64] sm:$0xf]
      %v2956 = vld [vmem:[%s1171 + $0x68] sm:$0x1]
      %v2957 = vld [vmem:[%s1171 + $0x6c] sm:$0xf]
      %v2958 = vld [vmem:[%s1171 + $0x70] sm:$0xf]
      %v2959 = vld [vmem:[%s1171 + $0x74] sm:$0x1]
      %v2960 = vld [vmem:[%s1171 + $0x78] sm:$0xf]
      %v2961 = vld [vmem:[%s1171 + $0x7c] sm:$0xf]
      %v2962 = vld [vmem:[%s1171 + $0x80] sm:$0x1]
      %v2963 = vld [vmem:[%s1171 + $0x84] sm:$0xf]
      %v2964 = vld [vmem:[%s1171 + $0x88] sm:$0xf]
      %v2965 = vld [vmem:[%s1171 + $0x8c] sm:$0x1]
      %v2966 = vld [vmem:[%s1171 + $0x90] sm:$0xf]
      %v2967 = vld [vmem:[%s1171 + $0x94] sm:$0xf]
      %v2968 = vld [vmem:[%s1171 + $0x98] sm:$0x1]
      %v2969 = vld [vmem:[%s1171 + $0x9c] sm:$0xf]
      %v2970 = vld [vmem:[%s1171 + $0xa0] sm:$0xf]
      %v2971 = vld [vmem:[%s1171 + $0xa4] sm:$0x1]
      %v2972 = vld [vmem:[%s1171 + $0xa8] sm:$0xf]
      %v2973 = vld [vmem:[%s1171 + $0xac] sm:$0xf]
      %v2974 = vld [vmem:[%s1171 + $0xb0] sm:$0x1]
      %v2975 = vld [vmem:[%s1171 + $0xb4] sm:$0xf]
      %v2976 = vld [vmem:[%s1171 + $0xb8] sm:$0xf]
      %v2977 = vld [vmem:[%s1171 + $0xbc] sm:$0x1]
      %s2978 = scalar_lea.vmem %s5, 192
      %v2979 = vld [vmem:[%s2978] sm:$0xf]
      %v2980 = vld [vmem:[%s2978 + $0x4] sm:$0xf]
      %v2981 = vld [vmem:[%s2978 + $0x8] sm:$0xf]
      %v2982 = vld [vmem:[%s2978 + $0xc] sm:$0xf]
      %v2983 = vld [vmem:[%s2978 + $0x10] sm:$0xf]
      %v2984 = vld [vmem:[%s2978 + $0x14] sm:$0xf]
      %v2985 = vld [vmem:[%s2978 + $0x18] sm:$0xf]
      %v2986 = vld [vmem:[%s2978 + $0x1c] sm:$0xf]
      %v2987 = vld [vmem:[%s2978 + $0x20] sm:$0xf]
      %v2988 = vld [vmem:[%s2978 + $0x24] sm:$0xf]
      %v2989 = vld [vmem:[%s2978 + $0x28] sm:$0xf]
      %v2990 = vld [vmem:[%s2978 + $0x2c] sm:$0xf]
      %v2991 = vld [vmem:[%s2978 + $0x30] sm:$0xf]
      %v2992 = vld [vmem:[%s2978 + $0x34] sm:$0xf]
      %v2993 = vld [vmem:[%s2978 + $0x38] sm:$0xf]
      %v2994 = vld [vmem:[%s2978 + $0x3c] sm:$0xf]
      %v3027 = vunpack.c.l.b16 %v2930
      %v3028 = vunpack.c.l.b16 %v2931
      %v3029 = vunpack.c.l.b16 %v2933
      %v3030 = vunpack.c.l.b16 %v2934
      %v3031 = vunpack.c.l.b16 %v2936
      %v3032 = vunpack.c.l.b16 %v2937
      %v3033 = vunpack.c.l.b16 %v2939
      %v3034 = vunpack.c.l.b16 %v2940
      %v3035 = vunpack.c.l.b16 %v2942
      %v3036 = vunpack.c.l.b16 %v2943
      %v3037 = vunpack.c.l.b16 %v2945
      %v3038 = vunpack.c.l.b16 %v2946
      %v3039 = vunpack.c.l.b16 %v2948
      %v3040 = vunpack.c.l.b16 %v2949
      %v3041 = vunpack.c.l.b16 %v2951
      %v3042 = vunpack.c.l.b16 %v2952
      %v3043 = vunpack.c.l.b16 %v2954
      %v3044 = vunpack.c.l.b16 %v2955
      %v3045 = vunpack.c.l.b16 %v2957
      %v3046 = vunpack.c.l.b16 %v2958
      %v3047 = vunpack.c.l.b16 %v2960
      %v3048 = vunpack.c.l.b16 %v2961
      %v3049 = vunpack.c.l.b16 %v2963
      %v3050 = vunpack.c.l.b16 %v2964
      %v3051 = vunpack.c.l.b16 %v2966
      %v3052 = vunpack.c.l.b16 %v2967
      %v3053 = vunpack.c.l.b16 %v2969
      %v3054 = vunpack.c.l.b16 %v2970
      %v3055 = vunpack.c.l.b16 %v2972
      %v3056 = vunpack.c.l.b16 %v2973
      %v3057 = vunpack.c.l.b16 %v2975
      %v3058 = vunpack.c.l.b16 %v2976
      %v3059 = vpack.c.b16 %v3028, %v3027
      %v3060 = vpack.c.b16 %v3030, %v3029
      %v3061 = vpack.c.b16 %v3032, %v3031
      %v3062 = vpack.c.b16 %v3034, %v3033
      %v3063 = vpack.c.b16 %v3036, %v3035
      %v3064 = vpack.c.b16 %v3038, %v3037
      %v3065 = vpack.c.b16 %v3040, %v3039
      %v3066 = vpack.c.b16 %v3042, %v3041
      %v3067 = vpack.c.b16 %v3044, %v3043
      %v3068 = vpack.c.b16 %v3046, %v3045
      %v3069 = vpack.c.b16 %v3048, %v3047
      %v3070 = vpack.c.b16 %v3050, %v3049
      %v3071 = vpack.c.b16 %v3052, %v3051
      %v3072 = vpack.c.b16 %v3054, %v3053
      %v3073 = vpack.c.b16 %v3056, %v3055
      %v3074 = vpack.c.b16 %v3058, %v3057
      %v3107 = vunpack.c.l.b16 %v2979
      %v3108 = vunpack.c.l.b16 %v2980
      %v3109 = vunpack.c.l.b16 %v2981
      %v3110 = vunpack.c.l.b16 %v2982
      %v3111 = vunpack.c.l.b16 %v2983
      %v3112 = vunpack.c.l.b16 %v2984
      %v3113 = vunpack.c.l.b16 %v2985
      %v3114 = vunpack.c.l.b16 %v2986
      %v3115 = vunpack.c.l.b16 %v2987
      %v3116 = vunpack.c.l.b16 %v2988
      %v3117 = vunpack.c.l.b16 %v2989
      %v3118 = vunpack.c.l.b16 %v2990
      %v3119 = vunpack.c.l.b16 %v2991
      %v3120 = vunpack.c.l.b16 %v2992
      %v3121 = vunpack.c.l.b16 %v2993
      %v3122 = vunpack.c.l.b16 %v2994
      %v3123 = vpack.c.b16 %v3108, %v3107
      %v3124 = vpack.c.b16 %v3110, %v3109
      %v3125 = vpack.c.b16 %v3112, %v3111
      %v3126 = vpack.c.b16 %v3114, %v3113
      %v3127 = vpack.c.b16 %v3116, %v3115
      %v3128 = vpack.c.b16 %v3118, %v3117
      %v3129 = vpack.c.b16 %v3120, %v3119
      %v3130 = vpack.c.b16 %v3122, %v3121
      %3139 = vmatprep.subr.bf16.mxu0 0
      %3140 = vmatpush1.bf16.msra.mxu0 %v3130
      %3141 = vmatprep.subr.bf16.mxu0 0
      %3142 = vmatpush1.bf16.msra.mxu0 %v3129
      %3143 = vmatprep.subr.bf16.mxu0 0
      %3144 = vmatpush1.bf16.msra.mxu0 %v3128
      %3145 = vmatprep.subr.bf16.mxu0 0
      %3146 = vmatpush1.bf16.msra.mxu0 %v3127
      %3147 = vmatprep.subr.bf16.mxu0 0
      %3148 = vmatpush1.bf16.msra.mxu0 %v3126
      %3149 = vmatprep.subr.bf16.mxu0 0
      %3150 = vmatpush1.bf16.msra.mxu0 %v3125
      %3151 = vmatprep.subr.bf16.mxu0 0
      %3152 = vmatpush1.bf16.msra.mxu0 %v3124
      %3153 = vmatprep.subr.bf16.mxu0 0
      %3154 = vmatpush1.bf16.msra.mxu0 %v3123
      %3155 = vmatprep.subr.bf16.mxu0 0
      %3156 = vmatpush2.bf16.msra.mxu0 0
      %3157 = vmatprep.subr.bf16.mxu0 0
      %3158 = vmatpush2.bf16.msra.mxu0 0
      %3159 = vmatprep.subr.bf16.mxu0 0
      %3160 = vmatpush2.bf16.msra.mxu0 0
      %3161 = vmatprep.subr.bf16.mxu0 0
      %3162 = vmatpush2.bf16.msra.mxu0 0
      %3163 = vmatprep.subr.bf16.mxu0 0
      %3164 = vmatpush2.bf16.msra.mxu0 0
      %3165 = vmatprep.subr.bf16.mxu0 0
      %3166 = vmatpush2.bf16.msra.mxu0 0
      %3167 = vmatprep.subr.bf16.mxu0 0
      %3168 = vmatpush2.bf16.msra.mxu0 0
      %3169 = vmatprep.subr.bf16.mxu0 0
      %3170 = vmatpush2.bf16.msra.mxu0 0
      %3171 = vmatprep.mubr.bf16.mxu0 0
      %3172 = vmatmul.mubr.bf16.gmra.mxu0 %v3059
      %v3173 = vpop.f32.mrf.mxu0
      %v3174 = vadd.f32 0.0, %v3173
      %v3175 = vpop.f32.mrf.mxu0
      %v3176 = vpop.f32.mrf.mxu0
      %v3177 = vadd.f32 0.0, %v3176
      %v3178 = vpop.f32.mrf.mxu0
      %3179 = vmatprep.mubr.bf16.mxu0 0
      %3180 = vmatmul.mubr.bf16.gmra.mxu0 %v3060
      %v3181 = vpop.f32.mrf.mxu0
      %v3182 = vadd.f32 0.0, %v3181
      %v3183 = vpop.f32.mrf.mxu0
      %v3184 = vpop.f32.mrf.mxu0
      %v3185 = vadd.f32 0.0, %v3184
      %v3186 = vpop.f32.mrf.mxu0
      %3187 = vmatprep.mubr.bf16.mxu0 0
      %3188 = vmatmul.mubr.bf16.gmra.mxu0 %v3061
      %v3189 = vpop.f32.mrf.mxu0
      %v3190 = vadd.f32 0.0, %v3189
      %v3191 = vpop.f32.mrf.mxu0
      %v3192 = vpop.f32.mrf.mxu0
      %v3193 = vadd.f32 0.0, %v3192
      %v3194 = vpop.f32.mrf.mxu0
      %3195 = vmatprep.mubr.bf16.mxu0 0
      %3196 = vmatmul.mubr.bf16.gmra.mxu0 %v3062
      %v3197 = vpop.f32.mrf.mxu0
      %v3198 = vadd.f32 0.0, %v3197
      %v3199 = vpop.f32.mrf.mxu0
      %v3200 = vpop.f32.mrf.mxu0
      %v3201 = vadd.f32 0.0, %v3200
      %v3202 = vpop.f32.mrf.mxu0
      %3203 = vmatprep.mubr.bf16.mxu0 0
      %3204 = vmatmul.mubr.bf16.gmra.mxu0 %v3063
      %v3205 = vpop.f32.mrf.mxu0
      %v3206 = vadd.f32 0.0, %v3205
      %v3207 = vpop.f32.mrf.mxu0
      %v3208 = vpop.f32.mrf.mxu0
      %v3209 = vadd.f32 0.0, %v3208
      %v3210 = vpop.f32.mrf.mxu0
      %3211 = vmatprep.mubr.bf16.mxu0 0
      %3212 = vmatmul.mubr.bf16.gmra.mxu0 %v3064
      %v3213 = vpop.f32.mrf.mxu0
      %v3214 = vadd.f32 0.0, %v3213
      %v3215 = vpop.f32.mrf.mxu0
      %v3216 = vpop.f32.mrf.mxu0
      %v3217 = vadd.f32 0.0, %v3216
      %v3218 = vpop.f32.mrf.mxu0
      %3219 = vmatprep.mubr.bf16.mxu0 0
      %3220 = vmatmul.mubr.bf16.gmra.mxu0 %v3065
      %v3221 = vpop.f32.mrf.mxu0
      %v3222 = vadd.f32 0.0, %v3221
      %v3223 = vpop.f32.mrf.mxu0
      %v3224 = vpop.f32.mrf.mxu0
      %v3225 = vadd.f32 0.0, %v3224
      %v3226 = vpop.f32.mrf.mxu0
      %3227 = vmatprep.mubr.bf16.mxu0 0
      %3228 = vmatmul.mubr.bf16.gmra.mxu0 %v3066
      %v3229 = vpop.f32.mrf.mxu0
      %v3230 = vadd.f32 0.0, %v3229
      %v3231 = vpop.f32.mrf.mxu0
      %v3232 = vpop.f32.mrf.mxu0
      %v3233 = vadd.f32 0.0, %v3232
      %v3234 = vpop.f32.mrf.mxu0
      %3235 = vmatprep.mubr.bf16.mxu0 0
      %3236 = vmatmul.mubr.bf16.gmra.mxu0 %v3067
      %v3237 = vpop.f32.mrf.mxu0
      %v3238 = vadd.f32 0.0, %v3237
      %v3239 = vpop.f32.mrf.mxu0
      %v3240 = vpop.f32.mrf.mxu0
      %v3241 = vadd.f32 0.0, %v3240
      %v3242 = vpop.f32.mrf.mxu0
      %3243 = vmatprep.mubr.bf16.mxu0 0
      %3244 = vmatmul.mubr.bf16.gmra.mxu0 %v3068
      %v3245 = vpop.f32.mrf.mxu0
      %v3246 = vadd.f32 0.0, %v3245
      %v3247 = vpop.f32.mrf.mxu0
      %v3248 = vpop.f32.mrf.mxu0
      %v3249 = vadd.f32 0.0, %v3248
      %v3250 = vpop.f32.mrf.mxu0
      %3251 = vmatprep.mubr.bf16.mxu0 0
      %3252 = vmatmul.mubr.bf16.gmra.mxu0 %v3069
      %v3253 = vpop.f32.mrf.mxu0
      %v3254 = vadd.f32 0.0, %v3253
      %v3255 = vpop.f32.mrf.mxu0
      %v3256 = vpop.f32.mrf.mxu0
      %v3257 = vadd.f32 0.0, %v3256
      %v3258 = vpop.f32.mrf.mxu0
      %3259 = vmatprep.mubr.bf16.mxu0 0
      %3260 = vmatmul.mubr.bf16.gmra.mxu0 %v3070
      %v3261 = vpop.f32.mrf.mxu0
      %v3262 = vadd.f32 0.0, %v3261
      %v3263 = vpop.f32.mrf.mxu0
      %v3264 = vpop.f32.mrf.mxu0
      %v3265 = vadd.f32 0.0, %v3264
      %v3266 = vpop.f32.mrf.mxu0
      %3267 = vmatprep.mubr.bf16.mxu0 0
      %3268 = vmatmul.mubr.bf16.gmra.mxu0 %v3071
      %v3269 = vpop.f32.mrf.mxu0
      %v3270 = vadd.f32 0.0, %v3269
      %v3271 = vpop.f32.mrf.mxu0
      %v3272 = vpop.f32.mrf.mxu0
      %v3273 = vadd.f32 0.0, %v3272
      %v3274 = vpop.f32.mrf.mxu0
      %3275 = vmatprep.mubr.bf16.mxu0 0
      %3276 = vmatmul.mubr.bf16.gmra.mxu0 %v3072
      %v3277 = vpop.f32.mrf.mxu0
      %v3278 = vadd.f32 0.0, %v3277
      %v3279 = vpop.f32.mrf.mxu0
      %v3280 = vpop.f32.mrf.mxu0
      %v3281 = vadd.f32 0.0, %v3280
      %v3282 = vpop.f32.mrf.mxu0
      %3283 = vmatprep.mubr.bf16.mxu0 0
      %3284 = vmatmul.mubr.bf16.gmra.mxu0 %v3073
      %v3285 = vpop.f32.mrf.mxu0
      %v3286 = vadd.f32 0.0, %v3285
      %v3287 = vpop.f32.mrf.mxu0
      %v3288 = vpop.f32.mrf.mxu0
      %v3289 = vadd.f32 0.0, %v3288
      %v3290 = vpop.f32.mrf.mxu0
      %3291 = vmatprep.mubr.bf16.mxu0 0
      %3292 = vmatmul.mubr.bf16.gmra.mxu0 %v3074
      %v3293 = vpop.f32.mrf.mxu0
      %v3294 = vadd.f32 0.0, %v3293
      %v3295 = vpop.f32.mrf.mxu0
      %v3296 = vpop.f32.mrf.mxu0
      %v3297 = vadd.f32 0.0, %v3296
      %v3298 = vpop.f32.mrf.mxu0
      %3299 = vdwg.mxu0
      %v3300 = vadd.f32 %v2898, %v3174
      %v3301 = vadd.f32 %v2899, %v3177
      %v3302 = vadd.f32 %v2900, %v3182
      %v3303 = vadd.f32 %v2901, %v3185
      %v3304 = vadd.f32 %v2902, %v3190
      %v3305 = vadd.f32 %v2903, %v3193
      %v3306 = vadd.f32 %v2904, %v3198
      %v3307 = vadd.f32 %v2905, %v3201
      %v3308 = vadd.f32 %v2906, %v3206
      %v3309 = vadd.f32 %v2907, %v3209
      %v3310 = vadd.f32 %v2908, %v3214
      %v3311 = vadd.f32 %v2909, %v3217
      %v3312 = vadd.f32 %v2910, %v3222
      %v3313 = vadd.f32 %v2911, %v3225
      %v3314 = vadd.f32 %v2912, %v3230
      %v3315 = vadd.f32 %v2913, %v3233
      %v3316 = vadd.f32 %v2914, %v3238
      %v3317 = vadd.f32 %v2915, %v3241
      %v3318 = vadd.f32 %v2916, %v3246
      %v3319 = vadd.f32 %v2917, %v3249
      %v3320 = vadd.f32 %v2918, %v3254
      %v3321 = vadd.f32 %v2919, %v3257
      %v3322 = vadd.f32 %v2920, %v3262
      %v3323 = vadd.f32 %v2921, %v3265
      %v3324 = vadd.f32 %v2922, %v3270
      %v3325 = vadd.f32 %v2923, %v3273
      %v3326 = vadd.f32 %v2924, %v3278
      %v3327 = vadd.f32 %v2925, %v3281
      %v3328 = vadd.f32 %v2926, %v3286
      %v3329 = vadd.f32 %v2927, %v3289
      %v3330 = vadd.f32 %v2928, %v3294
      %v3331 = vadd.f32 %v2929, %v3297
      %v3333 = vshrl.u32 %v2930, 16
      %v3335 = vrot.slane %v3333, 4
      %v3336 = vshll.u32 %v2930, 16
      %v3338 = vrot.slane %v3336, 5
      %v3339 = vor.u32 %v3335, %v3338
      %v3340 = vrot.slane %v3339, 4
      %v3342 = vshll.u32 %v2931, 16
      %v3344 = vrot.slane %v3342, 5
      %v3345 = vsel %vm1497, %v3340, %v3344
      %v3346 = vshrl.u32 %v2931, 16
      %v3348 = vrot.slane %v3346, 4
      %v3349 = vor.u32 %v3348, %v3344
      %v3350 = vrot.slane %v3349, 4
      %v3352 = vshll.u32 %v2932, 16
      %v3354 = vrot.slane %v3352, 5
      %v3355 = vsel %vm1497, %v3350, %v3354
      %v3357 = vshrl.u32 %v2933, 16
      %v3359 = vrot.slane %v3357, 4
      %v3360 = vshll.u32 %v2933, 16
      %v3362 = vrot.slane %v3360, 5
      %v3363 = vor.u32 %v3359, %v3362
      %v3364 = vrot.slane %v3363, 4
      %v3366 = vshll.u32 %v2934, 16
      %v3368 = vrot.slane %v3366, 5
      %v3369 = vsel %vm1497, %v3364, %v3368
      %v3370 = vshrl.u32 %v2934, 16
      %v3372 = vrot.slane %v3370, 4
      %v3373 = vor.u32 %v3372, %v3368
      %v3374 = vrot.slane %v3373, 4
      %v3376 = vshll.u32 %v2935, 16
      %v3378 = vrot.slane %v3376, 5
      %v3379 = vsel %vm1497, %v3374, %v3378
      %v3381 = vshrl.u32 %v2936, 16
      %v3383 = vrot.slane %v3381, 4
      %v3384 = vshll.u32 %v2936, 16
      %v3386 = vrot.slane %v3384, 5
      %v3387 = vor.u32 %v3383, %v3386
      %v3388 = vrot.slane %v3387, 4
      %v3390 = vshll.u32 %v2937, 16
      %v3392 = vrot.slane %v3390, 5
      %v3393 = vsel %vm1497, %v3388, %v3392
      %v3394 = vshrl.u32 %v2937, 16
      %v3396 = vrot.slane %v3394, 4
      %v3397 = vor.u32 %v3396, %v3392
      %v3398 = vrot.slane %v3397, 4
      %v3400 = vshll.u32 %v2938, 16
      %v3402 = vrot.slane %v3400, 5
      %v3403 = vsel %vm1497, %v3398, %v3402
      %v3405 = vshrl.u32 %v2939, 16
      %v3407 = vrot.slane %v3405, 4
      %v3408 = vshll.u32 %v2939, 16
      %v3410 = vrot.slane %v3408, 5
      %v3411 = vor.u32 %v3407, %v3410
      %v3412 = vrot.slane %v3411, 4
      %v3414 = vshll.u32 %v2940, 16
      %v3416 = vrot.slane %v3414, 5
      %v3417 = vsel %vm1497, %v3412, %v3416
      %v3418 = vshrl.u32 %v2940, 16
      %v3420 = vrot.slane %v3418, 4
      %v3421 = vor.u32 %v3420, %v3416
      %v3422 = vrot.slane %v3421, 4
      %v3424 = vshll.u32 %v2941, 16
      %v3426 = vrot.slane %v3424, 5
      %v3427 = vsel %vm1497, %v3422, %v3426
      %v3429 = vshrl.u32 %v2942, 16
      %v3431 = vrot.slane %v3429, 4
      %v3432 = vshll.u32 %v2942, 16
      %v3434 = vrot.slane %v3432, 5
      %v3435 = vor.u32 %v3431, %v3434
      %v3436 = vrot.slane %v3435, 4
      %v3438 = vshll.u32 %v2943, 16
      %v3440 = vrot.slane %v3438, 5
      %v3441 = vsel %vm1497, %v3436, %v3440
      %v3442 = vshrl.u32 %v2943, 16
      %v3444 = vrot.slane %v3442, 4
      %v3445 = vor.u32 %v3444, %v3440
      %v3446 = vrot.slane %v3445, 4
      %v3448 = vshll.u32 %v2944, 16
      %v3450 = vrot.slane %v3448, 5
      %v3451 = vsel %vm1497, %v3446, %v3450
      %v3453 = vshrl.u32 %v2945, 16
      %v3455 = vrot.slane %v3453, 4
      %v3456 = vshll.u32 %v2945, 16
      %v3458 = vrot.slane %v3456, 5
      %v3459 = vor.u32 %v3455, %v3458
      %v3460 = vrot.slane %v3459, 4
      %v3462 = vshll.u32 %v2946, 16
      %v3464 = vrot.slane %v3462, 5
      %v3465 = vsel %vm1497, %v3460, %v3464
      %v3466 = vshrl.u32 %v2946, 16
      %v3468 = vrot.slane %v3466, 4
      %v3469 = vor.u32 %v3468, %v3464
      %v3470 = vrot.slane %v3469, 4
      %v3472 = vshll.u32 %v2947, 16
      %v3474 = vrot.slane %v3472, 5
      %v3475 = vsel %vm1497, %v3470, %v3474
      %v3477 = vshrl.u32 %v2948, 16
      %v3479 = vrot.slane %v3477, 4
      %v3480 = vshll.u32 %v2948, 16
      %v3482 = vrot.slane %v3480, 5
      %v3483 = vor.u32 %v3479, %v3482
      %v3484 = vrot.slane %v3483, 4
      %v3486 = vshll.u32 %v2949, 16
      %v3488 = vrot.slane %v3486, 5
      %v3489 = vsel %vm1497, %v3484, %v3488
      %v3490 = vshrl.u32 %v2949, 16
      %v3492 = vrot.slane %v3490, 4
      %v3493 = vor.u32 %v3492, %v3488
      %v3494 = vrot.slane %v3493, 4
      %v3496 = vshll.u32 %v2950, 16
      %v3498 = vrot.slane %v3496, 5
      %v3499 = vsel %vm1497, %v3494, %v3498
      %v3501 = vshrl.u32 %v2951, 16
      %v3503 = vrot.slane %v3501, 4
      %v3504 = vshll.u32 %v2951, 16
      %v3506 = vrot.slane %v3504, 5
      %v3507 = vor.u32 %v3503, %v3506
      %v3508 = vrot.slane %v3507, 4
      %v3510 = vshll.u32 %v2952, 16
      %v3512 = vrot.slane %v3510, 5
      %v3513 = vsel %vm1497, %v3508, %v3512
      %v3514 = vshrl.u32 %v2952, 16
      %v3516 = vrot.slane %v3514, 4
      %v3517 = vor.u32 %v3516, %v3512
      %v3518 = vrot.slane %v3517, 4
      %v3520 = vshll.u32 %v2953, 16
      %v3522 = vrot.slane %v3520, 5
      %v3523 = vsel %vm1497, %v3518, %v3522
      %v3525 = vshrl.u32 %v2954, 16
      %v3527 = vrot.slane %v3525, 4
      %v3528 = vshll.u32 %v2954, 16
      %v3530 = vrot.slane %v3528, 5
      %v3531 = vor.u32 %v3527, %v3530
      %v3532 = vrot.slane %v3531, 4
      %v3534 = vshll.u32 %v2955, 16
      %v3536 = vrot.slane %v3534, 5
      %v3537 = vsel %vm1497, %v3532, %v3536
      %v3538 = vshrl.u32 %v2955, 16
      %v3540 = vrot.slane %v3538, 4
      %v3541 = vor.u32 %v3540, %v3536
      %v3542 = vrot.slane %v3541, 4
      %v3544 = vshll.u32 %v2956, 16
      %v3546 = vrot.slane %v3544, 5
      %v3547 = vsel %vm1497, %v3542, %v3546
      %v3549 = vshrl.u32 %v2957, 16
      %v3551 = vrot.slane %v3549, 4
      %v3552 = vshll.u32 %v2957, 16
      %v3554 = vrot.slane %v3552, 5
      %v3555 = vor.u32 %v3551, %v3554
      %v3556 = vrot.slane %v3555, 4
      %v3558 = vshll.u32 %v2958, 16
      %v3560 = vrot.slane %v3558, 5
      %v3561 = vsel %vm1497, %v3556, %v3560
      %v3562 = vshrl.u32 %v2958, 16
      %v3564 = vrot.slane %v3562, 4
      %v3565 = vor.u32 %v3564, %v3560
      %v3566 = vrot.slane %v3565, 4
      %v3568 = vshll.u32 %v2959, 16
      %v3570 = vrot.slane %v3568, 5
      %v3571 = vsel %vm1497, %v3566, %v3570
      %v3573 = vshrl.u32 %v2960, 16
      %v3575 = vrot.slane %v3573, 4
      %v3576 = vshll.u32 %v2960, 16
      %v3578 = vrot.slane %v3576, 5
      %v3579 = vor.u32 %v3575, %v3578
      %v3580 = vrot.slane %v3579, 4
      %v3582 = vshll.u32 %v2961, 16
      %v3584 = vrot.slane %v3582, 5
      %v3585 = vsel %vm1497, %v3580, %v3584
      %v3586 = vshrl.u32 %v2961, 16
      %v3588 = vrot.slane %v3586, 4
      %v3589 = vor.u32 %v3588, %v3584
      %v3590 = vrot.slane %v3589, 4
      %v3592 = vshll.u32 %v2962, 16
      %v3594 = vrot.slane %v3592, 5
      %v3595 = vsel %vm1497, %v3590, %v3594
      %v3597 = vshrl.u32 %v2963, 16
      %v3599 = vrot.slane %v3597, 4
      %v3600 = vshll.u32 %v2963, 16
      %v3602 = vrot.slane %v3600, 5
      %v3603 = vor.u32 %v3599, %v3602
      %v3604 = vrot.slane %v3603, 4
      %v3606 = vshll.u32 %v2964, 16
      %v3608 = vrot.slane %v3606, 5
      %v3609 = vsel %vm1497, %v3604, %v3608
      %v3610 = vshrl.u32 %v2964, 16
      %v3612 = vrot.slane %v3610, 4
      %v3613 = vor.u32 %v3612, %v3608
      %v3614 = vrot.slane %v3613, 4
      %v3616 = vshll.u32 %v2965, 16
      %v3618 = vrot.slane %v3616, 5
      %v3619 = vsel %vm1497, %v3614, %v3618
      %v3621 = vshrl.u32 %v2966, 16
      %v3623 = vrot.slane %v3621, 4
      %v3624 = vshll.u32 %v2966, 16
      %v3626 = vrot.slane %v3624, 5
      %v3627 = vor.u32 %v3623, %v3626
      %v3628 = vrot.slane %v3627, 4
      %v3630 = vshll.u32 %v2967, 16
      %v3632 = vrot.slane %v3630, 5
      %v3633 = vsel %vm1497, %v3628, %v3632
      %v3634 = vshrl.u32 %v2967, 16
      %v3636 = vrot.slane %v3634, 4
      %v3637 = vor.u32 %v3636, %v3632
      %v3638 = vrot.slane %v3637, 4
      %v3640 = vshll.u32 %v2968, 16
      %v3642 = vrot.slane %v3640, 5
      %v3643 = vsel %vm1497, %v3638, %v3642
      %v3645 = vshrl.u32 %v2969, 16
      %v3647 = vrot.slane %v3645, 4
      %v3648 = vshll.u32 %v2969, 16
      %v3650 = vrot.slane %v3648, 5
      %v3651 = vor.u32 %v3647, %v3650
      %v3652 = vrot.slane %v3651, 4
      %v3654 = vshll.u32 %v2970, 16
      %v3656 = vrot.slane %v3654, 5
      %v3657 = vsel %vm1497, %v3652, %v3656
      %v3658 = vshrl.u32 %v2970, 16
      %v3660 = vrot.slane %v3658, 4
      %v3661 = vor.u32 %v3660, %v3656
      %v3662 = vrot.slane %v3661, 4
      %v3664 = vshll.u32 %v2971, 16
      %v3666 = vrot.slane %v3664, 5
      %v3667 = vsel %vm1497, %v3662, %v3666
      %v3669 = vshrl.u32 %v2972, 16
      %v3671 = vrot.slane %v3669, 4
      %v3672 = vshll.u32 %v2972, 16
      %v3674 = vrot.slane %v3672, 5
      %v3675 = vor.u32 %v3671, %v3674
      %v3676 = vrot.slane %v3675, 4
      %v3678 = vshll.u32 %v2973, 16
      %v3680 = vrot.slane %v3678, 5
      %v3681 = vsel %vm1497, %v3676, %v3680
      %v3682 = vshrl.u32 %v2973, 16
      %v3684 = vrot.slane %v3682, 4
      %v3685 = vor.u32 %v3684, %v3680
      %v3686 = vrot.slane %v3685, 4
      %v3688 = vshll.u32 %v2974, 16
      %v3690 = vrot.slane %v3688, 5
      %v3691 = vsel %vm1497, %v3686, %v3690
      %v3693 = vshrl.u32 %v2975, 16
      %v3695 = vrot.slane %v3693, 4
      %v3696 = vshll.u32 %v2975, 16
      %v3698 = vrot.slane %v3696, 5
      %v3699 = vor.u32 %v3695, %v3698
      %v3700 = vrot.slane %v3699, 4
      %v3702 = vshll.u32 %v2976, 16
      %v3704 = vrot.slane %v3702, 5
      %v3705 = vsel %vm1497, %v3700, %v3704
      %v3706 = vshrl.u32 %v2976, 16
      %v3708 = vrot.slane %v3706, 4
      %v3709 = vor.u32 %v3708, %v3704
      %v3710 = vrot.slane %v3709, 4
      %v3712 = vshll.u32 %v2977, 16
      %v3714 = vrot.slane %v3712, 5
      %v3715 = vsel %vm1497, %v3710, %v3714
      %s3716 = scalar_lea.vmem %s5, 256
      %v3717 = vld [vmem:[%s3716] sm:$0xf]
      %v3718 = vld [vmem:[%s3716 + $0x4] sm:$0xf]
      %v3719 = vld [vmem:[%s3716 + $0x8] sm:$0xf]
      %v3720 = vld [vmem:[%s3716 + $0xc] sm:$0xf]
      %v3721 = vld [vmem:[%s3716 + $0x10] sm:$0xf]
      %v3722 = vld [vmem:[%s3716 + $0x14] sm:$0xf]
      %v3723 = vld [vmem:[%s3716 + $0x18] sm:$0xf]
      %v3724 = vld [vmem:[%s3716 + $0x1c] sm:$0xf]
      %v3725 = vld [vmem:[%s3716 + $0x20] sm:$0xf]
      %v3726 = vld [vmem:[%s3716 + $0x24] sm:$0xf]
      %v3727 = vld [vmem:[%s3716 + $0x28] sm:$0xf]
      %v3728 = vld [vmem:[%s3716 + $0x2c] sm:$0xf]
      %v3729 = vld [vmem:[%s3716 + $0x30] sm:$0xf]
      %v3730 = vld [vmem:[%s3716 + $0x34] sm:$0xf]
      %v3731 = vld [vmem:[%s3716 + $0x38] sm:$0xf]
      %v3732 = vld [vmem:[%s3716 + $0x3c] sm:$0xf]
      %v3733 = vunpack.c.l.b16 %v3345
      %v3734 = vunpack.c.l.b16 %v3355
      %v3735 = vunpack.c.l.b16 %v3369
      %v3736 = vunpack.c.l.b16 %v3379
      %v3737 = vunpack.c.l.b16 %v3393
      %v3738 = vunpack.c.l.b16 %v3403
      %v3739 = vunpack.c.l.b16 %v3417
      %v3740 = vunpack.c.l.b16 %v3427
      %v3741 = vunpack.c.l.b16 %v3441
      %v3742 = vunpack.c.l.b16 %v3451
      %v3743 = vunpack.c.l.b16 %v3465
      %v3744 = vunpack.c.l.b16 %v3475
      %v3745 = vunpack.c.l.b16 %v3489
      %v3746 = vunpack.c.l.b16 %v3499
      %v3747 = vunpack.c.l.b16 %v3513
      %v3748 = vunpack.c.l.b16 %v3523
      %v3749 = vunpack.c.l.b16 %v3537
      %v3750 = vunpack.c.l.b16 %v3547
      %v3751 = vunpack.c.l.b16 %v3561
      %v3752 = vunpack.c.l.b16 %v3571
      %v3753 = vunpack.c.l.b16 %v3585
      %v3754 = vunpack.c.l.b16 %v3595
      %v3755 = vunpack.c.l.b16 %v3609
      %v3756 = vunpack.c.l.b16 %v3619
      %v3757 = vunpack.c.l.b16 %v3633
      %v3758 = vunpack.c.l.b16 %v3643
      %v3759 = vunpack.c.l.b16 %v3657
      %v3760 = vunpack.c.l.b16 %v3667
      %v3761 = vunpack.c.l.b16 %v3681
      %v3762 = vunpack.c.l.b16 %v3691
      %v3763 = vunpack.c.l.b16 %v3705
      %v3764 = vunpack.c.l.b16 %v3715
      %v3765 = vpack.c.b16 %v3734, %v3733
      %v3766 = vpack.c.b16 %v3736, %v3735
      %v3767 = vpack.c.b16 %v3738, %v3737
      %v3768 = vpack.c.b16 %v3740, %v3739
      %v3769 = vpack.c.b16 %v3742, %v3741
      %v3770 = vpack.c.b16 %v3744, %v3743
      %v3771 = vpack.c.b16 %v3746, %v3745
      %v3772 = vpack.c.b16 %v3748, %v3747
      %v3773 = vpack.c.b16 %v3750, %v3749
      %v3774 = vpack.c.b16 %v3752, %v3751
      %v3775 = vpack.c.b16 %v3754, %v3753
      %v3776 = vpack.c.b16 %v3756, %v3755
      %v3777 = vpack.c.b16 %v3758, %v3757
      %v3778 = vpack.c.b16 %v3760, %v3759
      %v3779 = vpack.c.b16 %v3762, %v3761
      %v3780 = vpack.c.b16 %v3764, %v3763
      %v3813 = vunpack.c.l.b16 %v3717
      %v3814 = vunpack.c.l.b16 %v3718
      %v3815 = vunpack.c.l.b16 %v3719
      %v3816 = vunpack.c.l.b16 %v3720
      %v3817 = vunpack.c.l.b16 %v3721
      %v3818 = vunpack.c.l.b16 %v3722
      %v3819 = vunpack.c.l.b16 %v3723
      %v3820 = vunpack.c.l.b16 %v3724
      %v3821 = vunpack.c.l.b16 %v3725
      %v3822 = vunpack.c.l.b16 %v3726
      %v3823 = vunpack.c.l.b16 %v3727
      %v3824 = vunpack.c.l.b16 %v3728
      %v3825 = vunpack.c.l.b16 %v3729
      %v3826 = vunpack.c.l.b16 %v3730
      %v3827 = vunpack.c.l.b16 %v3731
      %v3828 = vunpack.c.l.b16 %v3732
      %v3829 = vpack.c.b16 %v3814, %v3813
      %v3830 = vpack.c.b16 %v3816, %v3815
      %v3831 = vpack.c.b16 %v3818, %v3817
      %v3832 = vpack.c.b16 %v3820, %v3819
      %v3833 = vpack.c.b16 %v3822, %v3821
      %v3834 = vpack.c.b16 %v3824, %v3823
      %v3835 = vpack.c.b16 %v3826, %v3825
      %v3836 = vpack.c.b16 %v3828, %v3827
      %3845 = vmatprep.subr.bf16.mxu0 0
      %3846 = vmatpush1.bf16.msra.mxu0 %v3836
      %3847 = vmatprep.subr.bf16.mxu0 0
      %3848 = vmatpush1.bf16.msra.mxu0 %v3835
      %3849 = vmatprep.subr.bf16.mxu0 0
      %3850 = vmatpush1.bf16.msra.mxu0 %v3834
      %3851 = vmatprep.subr.bf16.mxu0 0
      %3852 = vmatpush1.bf16.msra.mxu0 %v3833
      %3853 = vmatprep.subr.bf16.mxu0 0
      %3854 = vmatpush1.bf16.msra.mxu0 %v3832
      %3855 = vmatprep.subr.bf16.mxu0 0
      %3856 = vmatpush1.bf16.msra.mxu0 %v3831
      %3857 = vmatprep.subr.bf16.mxu0 0
      %3858 = vmatpush1.bf16.msra.mxu0 %v3830
      %3859 = vmatprep.subr.bf16.mxu0 0
      %3860 = vmatpush1.bf16.msra.mxu0 %v3829
      %3861 = vmatprep.subr.bf16.mxu0 0
      %3862 = vmatpush2.bf16.msra.mxu0 0
      %3863 = vmatprep.subr.bf16.mxu0 0
      %3864 = vmatpush2.bf16.msra.mxu0 0
      %3865 = vmatprep.subr.bf16.mxu0 0
      %3866 = vmatpush2.bf16.msra.mxu0 0
      %3867 = vmatprep.subr.bf16.mxu0 0
      %3868 = vmatpush2.bf16.msra.mxu0 0
      %3869 = vmatprep.subr.bf16.mxu0 0
      %3870 = vmatpush2.bf16.msra.mxu0 0
      %3871 = vmatprep.subr.bf16.mxu0 0
      %3872 = vmatpush2.bf16.msra.mxu0 0
      %3873 = vmatprep.subr.bf16.mxu0 0
      %3874 = vmatpush2.bf16.msra.mxu0 0
      %3875 = vmatprep.subr.bf16.mxu0 0
      %3876 = vmatpush2.bf16.msra.mxu0 0
      %3877 = vmatprep.mubr.bf16.mxu0 0
      %3878 = vmatmul.mubr.bf16.gmra.mxu0 %v3765
      %v3879 = vpop.f32.mrf.mxu0
      %v3880 = vadd.f32 0.0, %v3879
      %v3881 = vpop.f32.mrf.mxu0
      %v3882 = vpop.f32.mrf.mxu0
      %v3883 = vadd.f32 0.0, %v3882
      %v3884 = vpop.f32.mrf.mxu0
      %3885 = vmatprep.mubr.bf16.mxu0 0
      %3886 = vmatmul.mubr.bf16.gmra.mxu0 %v3766
      %v3887 = vpop.f32.mrf.mxu0
      %v3888 = vadd.f32 0.0, %v3887
      %v3889 = vpop.f32.mrf.mxu0
      %v3890 = vpop.f32.mrf.mxu0
      %v3891 = vadd.f32 0.0, %v3890
      %v3892 = vpop.f32.mrf.mxu0
      %3893 = vmatprep.mubr.bf16.mxu0 0
      %3894 = vmatmul.mubr.bf16.gmra.mxu0 %v3767
      %v3895 = vpop.f32.mrf.mxu0
      %v3896 = vadd.f32 0.0, %v3895
      %v3897 = vpop.f32.mrf.mxu0
      %v3898 = vpop.f32.mrf.mxu0
      %v3899 = vadd.f32 0.0, %v3898
      %v3900 = vpop.f32.mrf.mxu0
      %3901 = vmatprep.mubr.bf16.mxu0 0
      %3902 = vmatmul.mubr.bf16.gmra.mxu0 %v3768
      %v3903 = vpop.f32.mrf.mxu0
      %v3904 = vadd.f32 0.0, %v3903
      %v3905 = vpop.f32.mrf.mxu0
      %v3906 = vpop.f32.mrf.mxu0
      %v3907 = vadd.f32 0.0, %v3906
      %v3908 = vpop.f32.mrf.mxu0
      %3909 = vmatprep.mubr.bf16.mxu0 0
      %3910 = vmatmul.mubr.bf16.gmra.mxu0 %v3769
      %v3911 = vpop.f32.mrf.mxu0
      %v3912 = vadd.f32 0.0, %v3911
      %v3913 = vpop.f32.mrf.mxu0
      %v3914 = vpop.f32.mrf.mxu0
      %v3915 = vadd.f32 0.0, %v3914
      %v3916 = vpop.f32.mrf.mxu0
      %3917 = vmatprep.mubr.bf16.mxu0 0
      %3918 = vmatmul.mubr.bf16.gmra.mxu0 %v3770
      %v3919 = vpop.f32.mrf.mxu0
      %v3920 = vadd.f32 0.0, %v3919
      %v3921 = vpop.f32.mrf.mxu0
      %v3922 = vpop.f32.mrf.mxu0
      %v3923 = vadd.f32 0.0, %v3922
      %v3924 = vpop.f32.mrf.mxu0
      %3925 = vmatprep.mubr.bf16.mxu0 0
      %3926 = vmatmul.mubr.bf16.gmra.mxu0 %v3771
      %v3927 = vpop.f32.mrf.mxu0
      %v3928 = vadd.f32 0.0, %v3927
      %v3929 = vpop.f32.mrf.mxu0
      %v3930 = vpop.f32.mrf.mxu0
      %v3931 = vadd.f32 0.0, %v3930
      %v3932 = vpop.f32.mrf.mxu0
      %3933 = vmatprep.mubr.bf16.mxu0 0
      %3934 = vmatmul.mubr.bf16.gmra.mxu0 %v3772
      %v3935 = vpop.f32.mrf.mxu0
      %v3936 = vadd.f32 0.0, %v3935
      %v3937 = vpop.f32.mrf.mxu0
      %v3938 = vpop.f32.mrf.mxu0
      %v3939 = vadd.f32 0.0, %v3938
      %v3940 = vpop.f32.mrf.mxu0
      %3941 = vmatprep.mubr.bf16.mxu0 0
      %3942 = vmatmul.mubr.bf16.gmra.mxu0 %v3773
      %v3943 = vpop.f32.mrf.mxu0
      %v3944 = vadd.f32 0.0, %v3943
      %v3945 = vpop.f32.mrf.mxu0
      %v3946 = vpop.f32.mrf.mxu0
      %v3947 = vadd.f32 0.0, %v3946
      %v3948 = vpop.f32.mrf.mxu0
      %3949 = vmatprep.mubr.bf16.mxu0 0
      %3950 = vmatmul.mubr.bf16.gmra.mxu0 %v3774
      %v3951 = vpop.f32.mrf.mxu0
      %v3952 = vadd.f32 0.0, %v3951
      %v3953 = vpop.f32.mrf.mxu0
      %v3954 = vpop.f32.mrf.mxu0
      %v3955 = vadd.f32 0.0, %v3954
      %v3956 = vpop.f32.mrf.mxu0
      %3957 = vmatprep.mubr.bf16.mxu0 0
      %3958 = vmatmul.mubr.bf16.gmra.mxu0 %v3775
      %v3959 = vpop.f32.mrf.mxu0
      %v3960 = vadd.f32 0.0, %v3959
      %v3961 = vpop.f32.mrf.mxu0
      %v3962 = vpop.f32.mrf.mxu0
      %v3963 = vadd.f32 0.0, %v3962
      %v3964 = vpop.f32.mrf.mxu0
      %3965 = vmatprep.mubr.bf16.mxu0 0
      %3966 = vmatmul.mubr.bf16.gmra.mxu0 %v3776
      %v3967 = vpop.f32.mrf.mxu0
      %v3968 = vadd.f32 0.0, %v3967
      %v3969 = vpop.f32.mrf.mxu0
      %v3970 = vpop.f32.mrf.mxu0
      %v3971 = vadd.f32 0.0, %v3970
      %v3972 = vpop.f32.mrf.mxu0
      %3973 = vmatprep.mubr.bf16.mxu0 0
      %3974 = vmatmul.mubr.bf16.gmra.mxu0 %v3777
      %v3975 = vpop.f32.mrf.mxu0
      %v3976 = vadd.f32 0.0, %v3975
      %v3977 = vpop.f32.mrf.mxu0
      %v3978 = vpop.f32.mrf.mxu0
      %v3979 = vadd.f32 0.0, %v3978
      %v3980 = vpop.f32.mrf.mxu0
      %3981 = vmatprep.mubr.bf16.mxu0 0
      %3982 = vmatmul.mubr.bf16.gmra.mxu0 %v3778
      %v3983 = vpop.f32.mrf.mxu0
      %v3984 = vadd.f32 0.0, %v3983
      %v3985 = vpop.f32.mrf.mxu0
      %v3986 = vpop.f32.mrf.mxu0
      %v3987 = vadd.f32 0.0, %v3986
      %v3988 = vpop.f32.mrf.mxu0
      %3989 = vmatprep.mubr.bf16.mxu0 0
      %3990 = vmatmul.mubr.bf16.gmra.mxu0 %v3779
      %v3991 = vpop.f32.mrf.mxu0
      %v3992 = vadd.f32 0.0, %v3991
      %v3993 = vpop.f32.mrf.mxu0
      %v3994 = vpop.f32.mrf.mxu0
      %v3995 = vadd.f32 0.0, %v3994
      %v3996 = vpop.f32.mrf.mxu0
      %3997 = vmatprep.mubr.bf16.mxu0 0
      %3998 = vmatmul.mubr.bf16.gmra.mxu0 %v3780
      %v3999 = vpop.f32.mrf.mxu0
      %v4000 = vadd.f32 0.0, %v3999
      %v4001 = vpop.f32.mrf.mxu0
      %v4002 = vpop.f32.mrf.mxu0
      %v4003 = vadd.f32 0.0, %v4002
      %v4004 = vpop.f32.mrf.mxu0
      %4005 = vdwg.mxu0
      %v4006 = vadd.f32 %v3300, %v3880
      %v4007 = vadd.f32 %v3301, %v3883
      %v4008 = vadd.f32 %v3302, %v3888
      %v4009 = vadd.f32 %v3303, %v3891
      %v4010 = vadd.f32 %v3304, %v3896
      %v4011 = vadd.f32 %v3305, %v3899
      %v4012 = vadd.f32 %v3306, %v3904
      %v4013 = vadd.f32 %v3307, %v3907
      %v4014 = vadd.f32 %v3308, %v3912
      %v4015 = vadd.f32 %v3309, %v3915
      %v4016 = vadd.f32 %v3310, %v3920
      %v4017 = vadd.f32 %v3311, %v3923
      %v4018 = vadd.f32 %v3312, %v3928
      %v4019 = vadd.f32 %v3313, %v3931
      %v4020 = vadd.f32 %v3314, %v3936
      %v4021 = vadd.f32 %v3315, %v3939
      %v4022 = vadd.f32 %v3316, %v3944
      %v4023 = vadd.f32 %v3317, %v3947
      %v4024 = vadd.f32 %v3318, %v3952
      %v4025 = vadd.f32 %v3319, %v3955
      %v4026 = vadd.f32 %v3320, %v3960
      %v4027 = vadd.f32 %v3321, %v3963
      %v4028 = vadd.f32 %v3322, %v3968
      %v4029 = vadd.f32 %v3323, %v3971
      %v4030 = vadd.f32 %v3324, %v3976
      %v4031 = vadd.f32 %v3325, %v3979
      %v4032 = vadd.f32 %v3326, %v3984
      %v4033 = vadd.f32 %v3327, %v3987
      %v4034 = vadd.f32 %v3328, %v3992
      %v4035 = vadd.f32 %v3329, %v3995
      %v4036 = vadd.f32 %v3330, %v4000
      %v4037 = vadd.f32 %v3331, %v4003
      %v4054 = vrot.slane %v2930, 5
      %v4055 = vrot.slane %v4054, 4
      %v4056 = vrot.slane %v2931, 5
      %v4057 = vsel %vm2495, %v4055, %v4056
      %v4058 = vrot.slane %v4056, 4
      %v4059 = vrot.slane %v2932, 5
      %v4060 = vsel %vm2495, %v4058, %v4059
      %v4061 = vrot.slane %v2933, 5
      %v4062 = vrot.slane %v4061, 4
      %v4063 = vrot.slane %v2934, 5
      %v4064 = vsel %vm2495, %v4062, %v4063
      %v4065 = vrot.slane %v4063, 4
      %v4066 = vrot.slane %v2935, 5
      %v4067 = vsel %vm2495, %v4065, %v4066
      %v4068 = vrot.slane %v2936, 5
      %v4069 = vrot.slane %v4068, 4
      %v4070 = vrot.slane %v2937, 5
      %v4071 = vsel %vm2495, %v4069, %v4070
      %v4072 = vrot.slane %v4070, 4
      %v4073 = vrot.slane %v2938, 5
      %v4074 = vsel %vm2495, %v4072, %v4073
      %v4075 = vrot.slane %v2939, 5
      %v4076 = vrot.slane %v4075, 4
      %v4077 = vrot.slane %v2940, 5
      %v4078 = vsel %vm2495, %v4076, %v4077
      %v4079 = vrot.slane %v4077, 4
      %v4080 = vrot.slane %v2941, 5
      %v4081 = vsel %vm2495, %v4079, %v4080
      %v4082 = vrot.slane %v2942, 5
      %v4083 = vrot.slane %v4082, 4
      %v4084 = vrot.slane %v2943, 5
      %v4085 = vsel %vm2495, %v4083, %v4084
      %v4086 = vrot.slane %v4084, 4
      %v4087 = vrot.slane %v2944, 5
      %v4088 = vsel %vm2495, %v4086, %v4087
      %v4089 = vrot.slane %v2945, 5
      %v4090 = vrot.slane %v4089, 4
      %v4091 = vrot.slane %v2946, 5
      %v4092 = vsel %vm2495, %v4090, %v4091
      %v4093 = vrot.slane %v4091, 4
      %v4094 = vrot.slane %v2947, 5
      %v4095 = vsel %vm2495, %v4093, %v4094
      %v4096 = vrot.slane %v2948, 5
      %v4097 = vrot.slane %v4096, 4
      %v4098 = vrot.slane %v2949, 5
      %v4099 = vsel %vm2495, %v4097, %v4098
      %v4100 = vrot.slane %v4098, 4
      %v4101 = vrot.slane %v2950, 5
      %v4102 = vsel %vm2495, %v4100, %v4101
      %v4103 = vrot.slane %v2951, 5
      %v4104 = vrot.slane %v4103, 4
      %v4105 = vrot.slane %v2952, 5
      %v4106 = vsel %vm2495, %v4104, %v4105
      %v4107 = vrot.slane %v4105, 4
      %v4108 = vrot.slane %v2953, 5
      %v4109 = vsel %vm2495, %v4107, %v4108
      %v4110 = vrot.slane %v2954, 5
      %v4111 = vrot.slane %v4110, 4
      %v4112 = vrot.slane %v2955, 5
      %v4113 = vsel %vm2495, %v4111, %v4112
      %v4114 = vrot.slane %v4112, 4
      %v4115 = vrot.slane %v2956, 5
      %v4116 = vsel %vm2495, %v4114, %v4115
      %v4117 = vrot.slane %v2957, 5
      %v4118 = vrot.slane %v4117, 4
      %v4119 = vrot.slane %v2958, 5
      %v4120 = vsel %vm2495, %v4118, %v4119
      %v4121 = vrot.slane %v4119, 4
      %v4122 = vrot.slane %v2959, 5
      %v4123 = vsel %vm2495, %v4121, %v4122
      %v4124 = vrot.slane %v2960, 5
      %v4125 = vrot.slane %v4124, 4
      %v4126 = vrot.slane %v2961, 5
      %v4127 = vsel %vm2495, %v4125, %v4126
      %v4128 = vrot.slane %v4126, 4
      %v4129 = vrot.slane %v2962, 5
      %v4130 = vsel %vm2495, %v4128, %v4129
      %v4131 = vrot.slane %v2963, 5
      %v4132 = vrot.slane %v4131, 4
      %v4133 = vrot.slane %v2964, 5
      %v4134 = vsel %vm2495, %v4132, %v4133
      %v4135 = vrot.slane %v4133, 4
      %v4136 = vrot.slane %v2965, 5
      %v4137 = vsel %vm2495, %v4135, %v4136
      %v4138 = vrot.slane %v2966, 5
      %v4139 = vrot.slane %v4138, 4
      %v4140 = vrot.slane %v2967, 5
      %v4141 = vsel %vm2495, %v4139, %v4140
      %v4142 = vrot.slane %v4140, 4
      %v4143 = vrot.slane %v2968, 5
      %v4144 = vsel %vm2495, %v4142, %v4143
      %v4145 = vrot.slane %v2969, 5
      %v4146 = vrot.slane %v4145, 4
      %v4147 = vrot.slane %v2970, 5
      %v4148 = vsel %vm2495, %v4146, %v4147
      %v4149 = vrot.slane %v4147, 4
      %v4150 = vrot.slane %v2971, 5
      %v4151 = vsel %vm2495, %v4149, %v4150
      %v4152 = vrot.slane %v2972, 5
      %v4153 = vrot.slane %v4152, 4
      %v4154 = vrot.slane %v2973, 5
      %v4155 = vsel %vm2495, %v4153, %v4154
      %v4156 = vrot.slane %v4154, 4
      %v4157 = vrot.slane %v2974, 5
      %v4158 = vsel %vm2495, %v4156, %v4157
      %v4159 = vrot.slane %v2975, 5
      %v4160 = vrot.slane %v4159, 4
      %v4161 = vrot.slane %v2976, 5
      %v4162 = vsel %vm2495, %v4160, %v4161
      %v4163 = vrot.slane %v4161, 4
      %v4164 = vrot.slane %v2977, 5
      %v4165 = vsel %vm2495, %v4163, %v4164
      %s4166 = scalar_lea.vmem %s5, 320
      %v4167 = vld [vmem:[%s4166] sm:$0xf]
      %v4168 = vld [vmem:[%s4166 + $0x4] sm:$0xf]
      %v4169 = vld [vmem:[%s4166 + $0x8] sm:$0xf]
      %v4170 = vld [vmem:[%s4166 + $0xc] sm:$0xf]
      %v4171 = vld [vmem:[%s4166 + $0x10] sm:$0xf]
      %v4172 = vld [vmem:[%s4166 + $0x14] sm:$0xf]
      %v4173 = vld [vmem:[%s4166 + $0x18] sm:$0xf]
      %v4174 = vld [vmem:[%s4166 + $0x1c] sm:$0xf]
      %v4175 = vld [vmem:[%s4166 + $0x20] sm:$0xf]
      %v4176 = vld [vmem:[%s4166 + $0x24] sm:$0xf]
      %v4177 = vld [vmem:[%s4166 + $0x28] sm:$0xf]
      %v4178 = vld [vmem:[%s4166 + $0x2c] sm:$0xf]
      %v4179 = vld [vmem:[%s4166 + $0x30] sm:$0xf]
      %v4180 = vld [vmem:[%s4166 + $0x34] sm:$0xf]
      %v4181 = vld [vmem:[%s4166 + $0x38] sm:$0xf]
      %v4182 = vld [vmem:[%s4166 + $0x3c] sm:$0xf]
      %v4183 = vunpack.c.l.b16 %v4057
      %v4184 = vunpack.c.l.b16 %v4060
      %v4185 = vunpack.c.l.b16 %v4064
      %v4186 = vunpack.c.l.b16 %v4067
      %v4187 = vunpack.c.l.b16 %v4071
      %v4188 = vunpack.c.l.b16 %v4074
      %v4189 = vunpack.c.l.b16 %v4078
      %v4190 = vunpack.c.l.b16 %v4081
      %v4191 = vunpack.c.l.b16 %v4085
      %v4192 = vunpack.c.l.b16 %v4088
      %v4193 = vunpack.c.l.b16 %v4092
      %v4194 = vunpack.c.l.b16 %v4095
      %v4195 = vunpack.c.l.b16 %v4099
      %v4196 = vunpack.c.l.b16 %v4102
      %v4197 = vunpack.c.l.b16 %v4106
      %v4198 = vunpack.c.l.b16 %v4109
      %v4199 = vunpack.c.l.b16 %v4113
      %v4200 = vunpack.c.l.b16 %v4116
      %v4201 = vunpack.c.l.b16 %v4120
      %v4202 = vunpack.c.l.b16 %v4123
      %v4203 = vunpack.c.l.b16 %v4127
      %v4204 = vunpack.c.l.b16 %v4130
      %v4205 = vunpack.c.l.b16 %v4134
      %v4206 = vunpack.c.l.b16 %v4137
      %v4207 = vunpack.c.l.b16 %v4141
      %v4208 = vunpack.c.l.b16 %v4144
      %v4209 = vunpack.c.l.b16 %v4148
      %v4210 = vunpack.c.l.b16 %v4151
      %v4211 = vunpack.c.l.b16 %v4155
      %v4212 = vunpack.c.l.b16 %v4158
      %v4213 = vunpack.c.l.b16 %v4162
      %v4214 = vunpack.c.l.b16 %v4165
      %v4215 = vpack.c.b16 %v4184, %v4183
      %v4216 = vpack.c.b16 %v4186, %v4185
      %v4217 = vpack.c.b16 %v4188, %v4187
      %v4218 = vpack.c.b16 %v4190, %v4189
      %v4219 = vpack.c.b16 %v4192, %v4191
      %v4220 = vpack.c.b16 %v4194, %v4193
      %v4221 = vpack.c.b16 %v4196, %v4195
      %v4222 = vpack.c.b16 %v4198, %v4197
      %v4223 = vpack.c.b16 %v4200, %v4199
      %v4224 = vpack.c.b16 %v4202, %v4201
      %v4225 = vpack.c.b16 %v4204, %v4203
      %v4226 = vpack.c.b16 %v4206, %v4205
      %v4227 = vpack.c.b16 %v4208, %v4207
      %v4228 = vpack.c.b16 %v4210, %v4209
      %v4229 = vpack.c.b16 %v4212, %v4211
      %v4230 = vpack.c.b16 %v4214, %v4213
      %v4263 = vunpack.c.l.b16 %v4167
      %v4264 = vunpack.c.l.b16 %v4168
      %v4265 = vunpack.c.l.b16 %v4169
      %v4266 = vunpack.c.l.b16 %v4170
      %v4267 = vunpack.c.l.b16 %v4171
      %v4268 = vunpack.c.l.b16 %v4172
      %v4269 = vunpack.c.l.b16 %v4173
      %v4270 = vunpack.c.l.b16 %v4174
      %v4271 = vunpack.c.l.b16 %v4175
      %v4272 = vunpack.c.l.b16 %v4176
      %v4273 = vunpack.c.l.b16 %v4177
      %v4274 = vunpack.c.l.b16 %v4178
      %v4275 = vunpack.c.l.b16 %v4179
      %v4276 = vunpack.c.l.b16 %v4180
      %v4277 = vunpack.c.l.b16 %v4181
      %v4278 = vunpack.c.l.b16 %v4182
      %v4279 = vpack.c.b16 %v4264, %v4263
      %v4280 = vpack.c.b16 %v4266, %v4265
      %v4281 = vpack.c.b16 %v4268, %v4267
      %v4282 = vpack.c.b16 %v4270, %v4269
      %v4283 = vpack.c.b16 %v4272, %v4271
      %v4284 = vpack.c.b16 %v4274, %v4273
      %v4285 = vpack.c.b16 %v4276, %v4275
      %v4286 = vpack.c.b16 %v4278, %v4277
      %4295 = vmatprep.subr.bf16.mxu0 0
      %4296 = vmatpush1.bf16.msra.mxu0 %v4286
      %4297 = vmatprep.subr.bf16.mxu0 0
      %4298 = vmatpush1.bf16.msra.mxu0 %v4285
      %4299 = vmatprep.subr.bf16.mxu0 0
      %4300 = vmatpush1.bf16.msra.mxu0 %v4284
      %4301 = vmatprep.subr.bf16.mxu0 0
      %4302 = vmatpush1.bf16.msra.mxu0 %v4283
      %4303 = vmatprep.subr.bf16.mxu0 0
      %4304 = vmatpush1.bf16.msra.mxu0 %v4282
      %4305 = vmatprep.subr.bf16.mxu0 0
      %4306 = vmatpush1.bf16.msra.mxu0 %v4281
      %4307 = vmatprep.subr.bf16.mxu0 0
      %4308 = vmatpush1.bf16.msra.mxu0 %v4280
      %4309 = vmatprep.subr.bf16.mxu0 0
      %4310 = vmatpush1.bf16.msra.mxu0 %v4279
      %4311 = vmatprep.subr.bf16.mxu0 0
      %4312 = vmatpush2.bf16.msra.mxu0 0
      %4313 = vmatprep.subr.bf16.mxu0 0
      %4314 = vmatpush2.bf16.msra.mxu0 0
      %4315 = vmatprep.subr.bf16.mxu0 0
      %4316 = vmatpush2.bf16.msra.mxu0 0
      %4317 = vmatprep.subr.bf16.mxu0 0
      %4318 = vmatpush2.bf16.msra.mxu0 0
      %4319 = vmatprep.subr.bf16.mxu0 0
      %4320 = vmatpush2.bf16.msra.mxu0 0
      %4321 = vmatprep.subr.bf16.mxu0 0
      %4322 = vmatpush2.bf16.msra.mxu0 0
      %4323 = vmatprep.subr.bf16.mxu0 0
      %4324 = vmatpush2.bf16.msra.mxu0 0
      %4325 = vmatprep.subr.bf16.mxu0 0
      %4326 = vmatpush2.bf16.msra.mxu0 0
      %4327 = vmatprep.mubr.bf16.mxu0 0
      %4328 = vmatmul.mubr.bf16.gmra.mxu0 %v4215
      %v4329 = vpop.f32.mrf.mxu0
      %v4330 = vadd.f32 0.0, %v4329
      %v4331 = vpop.f32.mrf.mxu0
      %v4332 = vpop.f32.mrf.mxu0
      %v4333 = vadd.f32 0.0, %v4332
      %v4334 = vpop.f32.mrf.mxu0
      %4335 = vmatprep.mubr.bf16.mxu0 0
      %4336 = vmatmul.mubr.bf16.gmra.mxu0 %v4216
      %v4337 = vpop.f32.mrf.mxu0
      %v4338 = vadd.f32 0.0, %v4337
      %v4339 = vpop.f32.mrf.mxu0
      %v4340 = vpop.f32.mrf.mxu0
      %v4341 = vadd.f32 0.0, %v4340
      %v4342 = vpop.f32.mrf.mxu0
      %4343 = vmatprep.mubr.bf16.mxu0 0
      %4344 = vmatmul.mubr.bf16.gmra.mxu0 %v4217
      %v4345 = vpop.f32.mrf.mxu0
      %v4346 = vadd.f32 0.0, %v4345
      %v4347 = vpop.f32.mrf.mxu0
      %v4348 = vpop.f32.mrf.mxu0
      %v4349 = vadd.f32 0.0, %v4348
      %v4350 = vpop.f32.mrf.mxu0
      %4351 = vmatprep.mubr.bf16.mxu0 0
      %4352 = vmatmul.mubr.bf16.gmra.mxu0 %v4218
      %v4353 = vpop.f32.mrf.mxu0
      %v4354 = vadd.f32 0.0, %v4353
      %v4355 = vpop.f32.mrf.mxu0
      %v4356 = vpop.f32.mrf.mxu0
      %v4357 = vadd.f32 0.0, %v4356
      %v4358 = vpop.f32.mrf.mxu0
      %4359 = vmatprep.mubr.bf16.mxu0 0
      %4360 = vmatmul.mubr.bf16.gmra.mxu0 %v4219
      %v4361 = vpop.f32.mrf.mxu0
      %v4362 = vadd.f32 0.0, %v4361
      %v4363 = vpop.f32.mrf.mxu0
      %v4364 = vpop.f32.mrf.mxu0
      %v4365 = vadd.f32 0.0, %v4364
      %v4366 = vpop.f32.mrf.mxu0
      %4367 = vmatprep.mubr.bf16.mxu0 0
      %4368 = vmatmul.mubr.bf16.gmra.mxu0 %v4220
      %v4369 = vpop.f32.mrf.mxu0
      %v4370 = vadd.f32 0.0, %v4369
      %v4371 = vpop.f32.mrf.mxu0
      %v4372 = vpop.f32.mrf.mxu0
      %v4373 = vadd.f32 0.0, %v4372
      %v4374 = vpop.f32.mrf.mxu0
      %4375 = vmatprep.mubr.bf16.mxu0 0
      %4376 = vmatmul.mubr.bf16.gmra.mxu0 %v4221
      %v4377 = vpop.f32.mrf.mxu0
      %v4378 = vadd.f32 0.0, %v4377
      %v4379 = vpop.f32.mrf.mxu0
      %v4380 = vpop.f32.mrf.mxu0
      %v4381 = vadd.f32 0.0, %v4380
      %v4382 = vpop.f32.mrf.mxu0
      %4383 = vmatprep.mubr.bf16.mxu0 0
      %4384 = vmatmul.mubr.bf16.gmra.mxu0 %v4222
      %v4385 = vpop.f32.mrf.mxu0
      %v4386 = vadd.f32 0.0, %v4385
      %v4387 = vpop.f32.mrf.mxu0
      %v4388 = vpop.f32.mrf.mxu0
      %v4389 = vadd.f32 0.0, %v4388
      %v4390 = vpop.f32.mrf.mxu0
      %4391 = vmatprep.mubr.bf16.mxu0 0
      %4392 = vmatmul.mubr.bf16.gmra.mxu0 %v4223
      %v4393 = vpop.f32.mrf.mxu0
      %v4394 = vadd.f32 0.0, %v4393
      %v4395 = vpop.f32.mrf.mxu0
      %v4396 = vpop.f32.mrf.mxu0
      %v4397 = vadd.f32 0.0, %v4396
      %v4398 = vpop.f32.mrf.mxu0
      %4399 = vmatprep.mubr.bf16.mxu0 0
      %4400 = vmatmul.mubr.bf16.gmra.mxu0 %v4224
      %v4401 = vpop.f32.mrf.mxu0
      %v4402 = vadd.f32 0.0, %v4401
      %v4403 = vpop.f32.mrf.mxu0
      %v4404 = vpop.f32.mrf.mxu0
      %v4405 = vadd.f32 0.0, %v4404
      %v4406 = vpop.f32.mrf.mxu0
      %4407 = vmatprep.mubr.bf16.mxu0 0
      %4408 = vmatmul.mubr.bf16.gmra.mxu0 %v4225
      %v4409 = vpop.f32.mrf.mxu0
      %v4410 = vadd.f32 0.0, %v4409
      %v4411 = vpop.f32.mrf.mxu0
      %v4412 = vpop.f32.mrf.mxu0
      %v4413 = vadd.f32 0.0, %v4412
      %v4414 = vpop.f32.mrf.mxu0
      %4415 = vmatprep.mubr.bf16.mxu0 0
      %4416 = vmatmul.mubr.bf16.gmra.mxu0 %v4226
      %v4417 = vpop.f32.mrf.mxu0
      %v4418 = vadd.f32 0.0, %v4417
      %v4419 = vpop.f32.mrf.mxu0
      %v4420 = vpop.f32.mrf.mxu0
      %v4421 = vadd.f32 0.0, %v4420
      %v4422 = vpop.f32.mrf.mxu0
      %4423 = vmatprep.mubr.bf16.mxu0 0
      %4424 = vmatmul.mubr.bf16.gmra.mxu0 %v4227
      %v4425 = vpop.f32.mrf.mxu0
      %v4426 = vadd.f32 0.0, %v4425
      %v4427 = vpop.f32.mrf.mxu0
      %v4428 = vpop.f32.mrf.mxu0
      %v4429 = vadd.f32 0.0, %v4428
      %v4430 = vpop.f32.mrf.mxu0
      %4431 = vmatprep.mubr.bf16.mxu0 0
      %4432 = vmatmul.mubr.bf16.gmra.mxu0 %v4228
      %v4433 = vpop.f32.mrf.mxu0
      %v4434 = vadd.f32 0.0, %v4433
      %v4435 = vpop.f32.mrf.mxu0
      %v4436 = vpop.f32.mrf.mxu0
      %v4437 = vadd.f32 0.0, %v4436
      %v4438 = vpop.f32.mrf.mxu0
      %4439 = vmatprep.mubr.bf16.mxu0 0
      %4440 = vmatmul.mubr.bf16.gmra.mxu0 %v4229
      %v4441 = vpop.f32.mrf.mxu0
      %v4442 = vadd.f32 0.0, %v4441
      %v4443 = vpop.f32.mrf.mxu0
      %v4444 = vpop.f32.mrf.mxu0
      %v4445 = vadd.f32 0.0, %v4444
      %v4446 = vpop.f32.mrf.mxu0
      %4447 = vmatprep.mubr.bf16.mxu0 0
      %4448 = vmatmul.mubr.bf16.gmra.mxu0 %v4230
      %v4449 = vpop.f32.mrf.mxu0
      %v4450 = vadd.f32 0.0, %v4449
      %v4451 = vpop.f32.mrf.mxu0
      %v4452 = vpop.f32.mrf.mxu0
      %v4453 = vadd.f32 0.0, %v4452
      %v4454 = vpop.f32.mrf.mxu0
      %4455 = vdwg.mxu0
      %v4456 = vadd.f32 %v4006, %v4330
      %v4457 = vadd.f32 %v4007, %v4333
      %v4458 = vadd.f32 %v4008, %v4338
      %v4459 = vadd.f32 %v4009, %v4341
      %v4460 = vadd.f32 %v4010, %v4346
      %v4461 = vadd.f32 %v4011, %v4349
      %v4462 = vadd.f32 %v4012, %v4354
      %v4463 = vadd.f32 %v4013, %v4357
      %v4464 = vadd.f32 %v4014, %v4362
      %v4465 = vadd.f32 %v4015, %v4365
      %v4466 = vadd.f32 %v4016, %v4370
      %v4467 = vadd.f32 %v4017, %v4373
      %v4468 = vadd.f32 %v4018, %v4378
      %v4469 = vadd.f32 %v4019, %v4381
      %v4470 = vadd.f32 %v4020, %v4386
      %v4471 = vadd.f32 %v4021, %v4389
      %v4472 = vadd.f32 %v4022, %v4394
      %v4473 = vadd.f32 %v4023, %v4397
      %v4474 = vadd.f32 %v4024, %v4402
      %v4475 = vadd.f32 %v4025, %v4405
      %v4476 = vadd.f32 %v4026, %v4410
      %v4477 = vadd.f32 %v4027, %v4413
      %v4478 = vadd.f32 %v4028, %v4418
      %v4479 = vadd.f32 %v4029, %v4421
      %v4480 = vadd.f32 %v4030, %v4426
      %v4481 = vadd.f32 %v4031, %v4429
      %v4482 = vadd.f32 %v4032, %v4434
      %v4483 = vadd.f32 %v4033, %v4437
      %v4484 = vadd.f32 %v4034, %v4442
      %v4485 = vadd.f32 %v4035, %v4445
      %v4486 = vadd.f32 %v4036, %v4450
      %v4487 = vadd.f32 %v4037, %v4453
      %s4488 = scalar_lea.vmem [#allocation2], 24
      %v4489 = vld [vmem:[%s4488] sm:$0xf]
      %v4490 = vld [vmem:[%s4488 + $0x4] sm:$0xf]
      %v4491 = vld [vmem:[%s4488 + $0x8] sm:$0x1]
      %v4492 = vld [vmem:[%s4488 + $0xc] sm:$0xf]
      %v4493 = vld [vmem:[%s4488 + $0x10] sm:$0xf]
      %v4494 = vld [vmem:[%s4488 + $0x14] sm:$0x1]
      %v4495 = vld [vmem:[%s4488 + $0x18] sm:$0xf]
      %v4496 = vld [vmem:[%s4488 + $0x1c] sm:$0xf]
      %v4497 = vld [vmem:[%s4488 + $0x20] sm:$0x1]
      %v4498 = vld [vmem:[%s4488 + $0x24] sm:$0xf]
      %v4499 = vld [vmem:[%s4488 + $0x28] sm:$0xf]
      %v4500 = vld [vmem:[%s4488 + $0x2c] sm:$0x1]
      %v4501 = vld [vmem:[%s4488 + $0x30] sm:$0xf]
      %v4502 = vld [vmem:[%s4488 + $0x34] sm:$0xf]
      %v4503 = vld [vmem:[%s4488 + $0x38] sm:$0x1]
      %v4504 = vld [vmem:[%s4488 + $0x3c] sm:$0xf]
      %v4505 = vld [vmem:[%s4488 + $0x40] sm:$0xf]
      %v4506 = vld [vmem:[%s4488 + $0x44] sm:$0x1]
      %v4507 = vld [vmem:[%s4488 + $0x48] sm:$0xf]
      %v4508 = vld [vmem:[%s4488 + $0x4c] sm:$0xf]
      %v4509 = vld [vmem:[%s4488 + $0x50] sm:$0x1]
      %v4510 = vld [vmem:[%s4488 + $0x54] sm:$0xf]
      %v4511 = vld [vmem:[%s4488 + $0x58] sm:$0xf]
      %v4512 = vld [vmem:[%s4488 + $0x5c] sm:$0x1]
      %v4513 = vld [vmem:[%s4488 + $0x60] sm:$0xf]
      %v4514 = vld [vmem:[%s4488 + $0x64] sm:$0xf]
      %v4515 = vld [vmem:[%s4488 + $0x68] sm:$0x1]
      %v4516 = vld [vmem:[%s4488 + $0x6c] sm:$0xf]
      %v4517 = vld [vmem:[%s4488 + $0x70] sm:$0xf]
      %v4518 = vld [vmem:[%s4488 + $0x74] sm:$0x1]
      %v4519 = vld [vmem:[%s4488 + $0x78] sm:$0xf]
      %v4520 = vld [vmem:[%s4488 + $0x7c] sm:$0xf]
      %v4521 = vld [vmem:[%s4488 + $0x80] sm:$0x1]
      %v4522 = vld [vmem:[%s4488 + $0x84] sm:$0xf]
      %v4523 = vld [vmem:[%s4488 + $0x88] sm:$0xf]
      %v4524 = vld [vmem:[%s4488 + $0x8c] sm:$0x1]
      %v4525 = vld [vmem:[%s4488 + $0x90] sm:$0xf]
      %v4526 = vld [vmem:[%s4488 + $0x94] sm:$0xf]
      %v4527 = vld [vmem:[%s4488 + $0x98] sm:$0x1]
      %v4528 = vld [vmem:[%s4488 + $0x9c] sm:$0xf]
      %v4529 = vld [vmem:[%s4488 + $0xa0] sm:$0xf]
      %v4530 = vld [vmem:[%s4488 + $0xa4] sm:$0x1]
      %v4531 = vld [vmem:[%s4488 + $0xa8] sm:$0xf]
      %v4532 = vld [vmem:[%s4488 + $0xac] sm:$0xf]
      %v4533 = vld [vmem:[%s4488 + $0xb0] sm:$0x1]
      %v4534 = vld [vmem:[%s4488 + $0xb4] sm:$0xf]
      %v4535 = vld [vmem:[%s4488 + $0xb8] sm:$0xf]
      %v4536 = vld [vmem:[%s4488 + $0xbc] sm:$0x1]
      %s4537 = scalar_lea.vmem %s5, 384
      %v4538 = vld [vmem:[%s4537] sm:$0xf]
      %v4539 = vld [vmem:[%s4537 + $0x4] sm:$0xf]
      %v4540 = vld [vmem:[%s4537 + $0x8] sm:$0xf]
      %v4541 = vld [vmem:[%s4537 + $0xc] sm:$0xf]
      %v4542 = vld [vmem:[%s4537 + $0x10] sm:$0xf]
      %v4543 = vld [vmem:[%s4537 + $0x14] sm:$0xf]
      %v4544 = vld [vmem:[%s4537 + $0x18] sm:$0xf]
      %v4545 = vld [vmem:[%s4537 + $0x1c] sm:$0xf]
      %v4546 = vld [vmem:[%s4537 + $0x20] sm:$0xf]
      %v4547 = vld [vmem:[%s4537 + $0x24] sm:$0xf]
      %v4548 = vld [vmem:[%s4537 + $0x28] sm:$0xf]
      %v4549 = vld [vmem:[%s4537 + $0x2c] sm:$0xf]
      %v4550 = vld [vmem:[%s4537 + $0x30] sm:$0xf]
      %v4551 = vld [vmem:[%s4537 + $0x34] sm:$0xf]
      %v4552 = vld [vmem:[%s4537 + $0x38] sm:$0xf]
      %v4553 = vld [vmem:[%s4537 + $0x3c] sm:$0xf]
      %v4586 = vunpack.c.l.b16 %v4489
      %v4587 = vunpack.c.l.b16 %v4490
      %v4588 = vunpack.c.l.b16 %v4492
      %v4589 = vunpack.c.l.b16 %v4493
      %v4590 = vunpack.c.l.b16 %v4495
      %v4591 = vunpack.c.l.b16 %v4496
      %v4592 = vunpack.c.l.b16 %v4498
      %v4593 = vunpack.c.l.b16 %v4499
      %v4594 = vunpack.c.l.b16 %v4501
      %v4595 = vunpack.c.l.b16 %v4502
      %v4596 = vunpack.c.l.b16 %v4504
      %v4597 = vunpack.c.l.b16 %v4505
      %v4598 = vunpack.c.l.b16 %v4507
      %v4599 = vunpack.c.l.b16 %v4508
      %v4600 = vunpack.c.l.b16 %v4510
      %v4601 = vunpack.c.l.b16 %v4511
      %v4602 = vunpack.c.l.b16 %v4513
      %v4603 = vunpack.c.l.b16 %v4514
      %v4604 = vunpack.c.l.b16 %v4516
      %v4605 = vunpack.c.l.b16 %v4517
      %v4606 = vunpack.c.l.b16 %v4519
      %v4607 = vunpack.c.l.b16 %v4520
      %v4608 = vunpack.c.l.b16 %v4522
      %v4609 = vunpack.c.l.b16 %v4523
      %v4610 = vunpack.c.l.b16 %v4525
      %v4611 = vunpack.c.l.b16 %v4526
      %v4612 = vunpack.c.l.b16 %v4528
      %v4613 = vunpack.c.l.b16 %v4529
      %v4614 = vunpack.c.l.b16 %v4531
      %v4615 = vunpack.c.l.b16 %v4532
      %v4616 = vunpack.c.l.b16 %v4534
      %v4617 = vunpack.c.l.b16 %v4535
      %v4618 = vpack.c.b16 %v4587, %v4586
      %v4619 = vpack.c.b16 %v4589, %v4588
      %v4620 = vpack.c.b16 %v4591, %v4590
      %v4621 = vpack.c.b16 %v4593, %v4592
      %v4622 = vpack.c.b16 %v4595, %v4594
      %v4623 = vpack.c.b16 %v4597, %v4596
      %v4624 = vpack.c.b16 %v4599, %v4598
      %v4625 = vpack.c.b16 %v4601, %v4600
      %v4626 = vpack.c.b16 %v4603, %v4602
      %v4627 = vpack.c.b16 %v4605, %v4604
      %v4628 = vpack.c.b16 %v4607, %v4606
      %v4629 = vpack.c.b16 %v4609, %v4608
      %v4630 = vpack.c.b16 %v4611, %v4610
      %v4631 = vpack.c.b16 %v4613, %v4612
      %v4632 = vpack.c.b16 %v4615, %v4614
      %v4633 = vpack.c.b16 %v4617, %v4616
      %v4666 = vunpack.c.l.b16 %v4538
      %v4667 = vunpack.c.l.b16 %v4539
      %v4668 = vunpack.c.l.b16 %v4540
      %v4669 = vunpack.c.l.b16 %v4541
      %v4670 = vunpack.c.l.b16 %v4542
      %v4671 = vunpack.c.l.b16 %v4543
      %v4672 = vunpack.c.l.b16 %v4544
      %v4673 = vunpack.c.l.b16 %v4545
      %v4674 = vunpack.c.l.b16 %v4546
      %v4675 = vunpack.c.l.b16 %v4547
      %v4676 = vunpack.c.l.b16 %v4548
      %v4677 = vunpack.c.l.b16 %v4549
      %v4678 = vunpack.c.l.b16 %v4550
      %v4679 = vunpack.c.l.b16 %v4551
      %v4680 = vunpack.c.l.b16 %v4552
      %v4681 = vunpack.c.l.b16 %v4553
      %v4682 = vpack.c.b16 %v4667, %v4666
      %v4683 = vpack.c.b16 %v4669, %v4668
      %v4684 = vpack.c.b16 %v4671, %v4670
      %v4685 = vpack.c.b16 %v4673, %v4672
      %v4686 = vpack.c.b16 %v4675, %v4674
      %v4687 = vpack.c.b16 %v4677, %v4676
      %v4688 = vpack.c.b16 %v4679, %v4678
      %v4689 = vpack.c.b16 %v4681, %v4680
      %4698 = vmatprep.subr.bf16.mxu0 0
      %4699 = vmatpush1.bf16.msra.mxu0 %v4689
      %4700 = vmatprep.subr.bf16.mxu0 0
      %4701 = vmatpush1.bf16.msra.mxu0 %v4688
      %4702 = vmatprep.subr.bf16.mxu0 0
      %4703 = vmatpush1.bf16.msra.mxu0 %v4687
      %4704 = vmatprep.subr.bf16.mxu0 0
      %4705 = vmatpush1.bf16.msra.mxu0 %v4686
      %4706 = vmatprep.subr.bf16.mxu0 0
      %4707 = vmatpush1.bf16.msra.mxu0 %v4685
      %4708 = vmatprep.subr.bf16.mxu0 0
      %4709 = vmatpush1.bf16.msra.mxu0 %v4684
      %4710 = vmatprep.subr.bf16.mxu0 0
      %4711 = vmatpush1.bf16.msra.mxu0 %v4683
      %4712 = vmatprep.subr.bf16.mxu0 0
      %4713 = vmatpush1.bf16.msra.mxu0 %v4682
      %4714 = vmatprep.subr.bf16.mxu0 0
      %4715 = vmatpush2.bf16.msra.mxu0 0
      %4716 = vmatprep.subr.bf16.mxu0 0
      %4717 = vmatpush2.bf16.msra.mxu0 0
      %4718 = vmatprep.subr.bf16.mxu0 0
      %4719 = vmatpush2.bf16.msra.mxu0 0
      %4720 = vmatprep.subr.bf16.mxu0 0
      %4721 = vmatpush2.bf16.msra.mxu0 0
      %4722 = vmatprep.subr.bf16.mxu0 0
      %4723 = vmatpush2.bf16.msra.mxu0 0
      %4724 = vmatprep.subr.bf16.mxu0 0
      %4725 = vmatpush2.bf16.msra.mxu0 0
      %4726 = vmatprep.subr.bf16.mxu0 0
      %4727 = vmatpush2.bf16.msra.mxu0 0
      %4728 = vmatprep.subr.bf16.mxu0 0
      %4729 = vmatpush2.bf16.msra.mxu0 0
      %4730 = vmatprep.mubr.bf16.mxu0 0
      %4731 = vmatmul.mubr.bf16.gmra.mxu0 %v4618
      %v4732 = vpop.f32.mrf.mxu0
      %v4733 = vadd.f32 0.0, %v4732
      %v4734 = vpop.f32.mrf.mxu0
      %v4735 = vpop.f32.mrf.mxu0
      %v4736 = vadd.f32 0.0, %v4735
      %v4737 = vpop.f32.mrf.mxu0
      %4738 = vmatprep.mubr.bf16.mxu0 0
      %4739 = vmatmul.mubr.bf16.gmra.mxu0 %v4619
      %v4740 = vpop.f32.mrf.mxu0
      %v4741 = vadd.f32 0.0, %v4740
      %v4742 = vpop.f32.mrf.mxu0
      %v4743 = vpop.f32.mrf.mxu0
      %v4744 = vadd.f32 0.0, %v4743
      %v4745 = vpop.f32.mrf.mxu0
      %4746 = vmatprep.mubr.bf16.mxu0 0
      %4747 = vmatmul.mubr.bf16.gmra.mxu0 %v4620
      %v4748 = vpop.f32.mrf.mxu0
      %v4749 = vadd.f32 0.0, %v4748
      %v4750 = vpop.f32.mrf.mxu0
      %v4751 = vpop.f32.mrf.mxu0
      %v4752 = vadd.f32 0.0, %v4751
      %v4753 = vpop.f32.mrf.mxu0
      %4754 = vmatprep.mubr.bf16.mxu0 0
      %4755 = vmatmul.mubr.bf16.gmra.mxu0 %v4621
      %v4756 = vpop.f32.mrf.mxu0
      %v4757 = vadd.f32 0.0, %v4756
      %v4758 = vpop.f32.mrf.mxu0
      %v4759 = vpop.f32.mrf.mxu0
      %v4760 = vadd.f32 0.0, %v4759
      %v4761 = vpop.f32.mrf.mxu0
      %4762 = vmatprep.mubr.bf16.mxu0 0
      %4763 = vmatmul.mubr.bf16.gmra.mxu0 %v4622
      %v4764 = vpop.f32.mrf.mxu0
      %v4765 = vadd.f32 0.0, %v4764
      %v4766 = vpop.f32.mrf.mxu0
      %v4767 = vpop.f32.mrf.mxu0
      %v4768 = vadd.f32 0.0, %v4767
      %v4769 = vpop.f32.mrf.mxu0
      %4770 = vmatprep.mubr.bf16.mxu0 0
      %4771 = vmatmul.mubr.bf16.gmra.mxu0 %v4623
      %v4772 = vpop.f32.mrf.mxu0
      %v4773 = vadd.f32 0.0, %v4772
      %v4774 = vpop.f32.mrf.mxu0
      %v4775 = vpop.f32.mrf.mxu0
      %v4776 = vadd.f32 0.0, %v4775
      %v4777 = vpop.f32.mrf.mxu0
      %4778 = vmatprep.mubr.bf16.mxu0 0
      %4779 = vmatmul.mubr.bf16.gmra.mxu0 %v4624
      %v4780 = vpop.f32.mrf.mxu0
      %v4781 = vadd.f32 0.0, %v4780
      %v4782 = vpop.f32.mrf.mxu0
      %v4783 = vpop.f32.mrf.mxu0
      %v4784 = vadd.f32 0.0, %v4783
      %v4785 = vpop.f32.mrf.mxu0
      %4786 = vmatprep.mubr.bf16.mxu0 0
      %4787 = vmatmul.mubr.bf16.gmra.mxu0 %v4625
      %v4788 = vpop.f32.mrf.mxu0
      %v4789 = vadd.f32 0.0, %v4788
      %v4790 = vpop.f32.mrf.mxu0
      %v4791 = vpop.f32.mrf.mxu0
      %v4792 = vadd.f32 0.0, %v4791
      %v4793 = vpop.f32.mrf.mxu0
      %4794 = vmatprep.mubr.bf16.mxu0 0
      %4795 = vmatmul.mubr.bf16.gmra.mxu0 %v4626
      %v4796 = vpop.f32.mrf.mxu0
      %v4797 = vadd.f32 0.0, %v4796
      %v4798 = vpop.f32.mrf.mxu0
      %v4799 = vpop.f32.mrf.mxu0
      %v4800 = vadd.f32 0.0, %v4799
      %v4801 = vpop.f32.mrf.mxu0
      %4802 = vmatprep.mubr.bf16.mxu0 0
      %4803 = vmatmul.mubr.bf16.gmra.mxu0 %v4627
      %v4804 = vpop.f32.mrf.mxu0
      %v4805 = vadd.f32 0.0, %v4804
      %v4806 = vpop.f32.mrf.mxu0
      %v4807 = vpop.f32.mrf.mxu0
      %v4808 = vadd.f32 0.0, %v4807
      %v4809 = vpop.f32.mrf.mxu0
      %4810 = vmatprep.mubr.bf16.mxu0 0
      %4811 = vmatmul.mubr.bf16.gmra.mxu0 %v4628
      %v4812 = vpop.f32.mrf.mxu0
      %v4813 = vadd.f32 0.0, %v4812
      %v4814 = vpop.f32.mrf.mxu0
      %v4815 = vpop.f32.mrf.mxu0
      %v4816 = vadd.f32 0.0, %v4815
      %v4817 = vpop.f32.mrf.mxu0
      %4818 = vmatprep.mubr.bf16.mxu0 0
      %4819 = vmatmul.mubr.bf16.gmra.mxu0 %v4629
      %v4820 = vpop.f32.mrf.mxu0
      %v4821 = vadd.f32 0.0, %v4820
      %v4822 = vpop.f32.mrf.mxu0
      %v4823 = vpop.f32.mrf.mxu0
      %v4824 = vadd.f32 0.0, %v4823
      %v4825 = vpop.f32.mrf.mxu0
      %4826 = vmatprep.mubr.bf16.mxu0 0
      %4827 = vmatmul.mubr.bf16.gmra.mxu0 %v4630
      %v4828 = vpop.f32.mrf.mxu0
      %v4829 = vadd.f32 0.0, %v4828
      %v4830 = vpop.f32.mrf.mxu0
      %v4831 = vpop.f32.mrf.mxu0
      %v4832 = vadd.f32 0.0, %v4831
      %v4833 = vpop.f32.mrf.mxu0
      %4834 = vmatprep.mubr.bf16.mxu0 0
      %4835 = vmatmul.mubr.bf16.gmra.mxu0 %v4631
      %v4836 = vpop.f32.mrf.mxu0
      %v4837 = vadd.f32 0.0, %v4836
      %v4838 = vpop.f32.mrf.mxu0
      %v4839 = vpop.f32.mrf.mxu0
      %v4840 = vadd.f32 0.0, %v4839
      %v4841 = vpop.f32.mrf.mxu0
      %4842 = vmatprep.mubr.bf16.mxu0 0
      %4843 = vmatmul.mubr.bf16.gmra.mxu0 %v4632
      %v4844 = vpop.f32.mrf.mxu0
      %v4845 = vadd.f32 0.0, %v4844
      %v4846 = vpop.f32.mrf.mxu0
      %v4847 = vpop.f32.mrf.mxu0
      %v4848 = vadd.f32 0.0, %v4847
      %v4849 = vpop.f32.mrf.mxu0
      %4850 = vmatprep.mubr.bf16.mxu0 0
      %4851 = vmatmul.mubr.bf16.gmra.mxu0 %v4633
      %v4852 = vpop.f32.mrf.mxu0
      %v4853 = vadd.f32 0.0, %v4852
      %v4854 = vpop.f32.mrf.mxu0
      %v4855 = vpop.f32.mrf.mxu0
      %v4856 = vadd.f32 0.0, %v4855
      %v4857 = vpop.f32.mrf.mxu0
      %4858 = vdwg.mxu0
      %v4859 = vadd.f32 %v4456, %v4733
      %v4860 = vadd.f32 %v4457, %v4736
      %v4861 = vadd.f32 %v4458, %v4741
      %v4862 = vadd.f32 %v4459, %v4744
      %v4863 = vadd.f32 %v4460, %v4749
      %v4864 = vadd.f32 %v4461, %v4752
      %v4865 = vadd.f32 %v4462, %v4757
      %v4866 = vadd.f32 %v4463, %v4760
      %v4867 = vadd.f32 %v4464, %v4765
      %v4868 = vadd.f32 %v4465, %v4768
      %v4869 = vadd.f32 %v4466, %v4773
      %v4870 = vadd.f32 %v4467, %v4776
      %v4871 = vadd.f32 %v4468, %v4781
      %v4872 = vadd.f32 %v4469, %v4784
      %v4873 = vadd.f32 %v4470, %v4789
      %v4874 = vadd.f32 %v4471, %v4792
      %v4875 = vadd.f32 %v4472, %v4797
      %v4876 = vadd.f32 %v4473, %v4800
      %v4877 = vadd.f32 %v4474, %v4805
      %v4878 = vadd.f32 %v4475, %v4808
      %v4879 = vadd.f32 %v4476, %v4813
      %v4880 = vadd.f32 %v4477, %v4816
      %v4881 = vadd.f32 %v4478, %v4821
      %v4882 = vadd.f32 %v4479, %v4824
      %v4883 = vadd.f32 %v4480, %v4829
      %v4884 = vadd.f32 %v4481, %v4832
      %v4885 = vadd.f32 %v4482, %v4837
      %v4886 = vadd.f32 %v4483, %v4840
      %v4887 = vadd.f32 %v4484, %v4845
      %v4888 = vadd.f32 %v4485, %v4848
      %v4889 = vadd.f32 %v4486, %v4853
      %v4890 = vadd.f32 %v4487, %v4856
      %v4892 = vshrl.u32 %v4489, 16
      %v4894 = vrot.slane %v4892, 4
      %v4895 = vshll.u32 %v4489, 16
      %v4897 = vrot.slane %v4895, 5
      %v4898 = vor.u32 %v4894, %v4897
      %v4899 = vrot.slane %v4898, 4
      %v4901 = vshll.u32 %v4490, 16
      %v4903 = vrot.slane %v4901, 5
      %v4904 = vsel %vm1497, %v4899, %v4903
      %v4905 = vshrl.u32 %v4490, 16
      %v4907 = vrot.slane %v4905, 4
      %v4908 = vor.u32 %v4907, %v4903
      %v4909 = vrot.slane %v4908, 4
      %v4911 = vshll.u32 %v4491, 16
      %v4913 = vrot.slane %v4911, 5
      %v4914 = vsel %vm1497, %v4909, %v4913
      %v4916 = vshrl.u32 %v4492, 16
      %v4918 = vrot.slane %v4916, 4
      %v4919 = vshll.u32 %v4492, 16
      %v4921 = vrot.slane %v4919, 5
      %v4922 = vor.u32 %v4918, %v4921
      %v4923 = vrot.slane %v4922, 4
      %v4925 = vshll.u32 %v4493, 16
      %v4927 = vrot.slane %v4925, 5
      %v4928 = vsel %vm1497, %v4923, %v4927
      %v4929 = vshrl.u32 %v4493, 16
      %v4931 = vrot.slane %v4929, 4
      %v4932 = vor.u32 %v4931, %v4927
      %v4933 = vrot.slane %v4932, 4
      %v4935 = vshll.u32 %v4494, 16
      %v4937 = vrot.slane %v4935, 5
      %v4938 = vsel %vm1497, %v4933, %v4937
      %v4940 = vshrl.u32 %v4495, 16
      %v4942 = vrot.slane %v4940, 4
      %v4943 = vshll.u32 %v4495, 16
      %v4945 = vrot.slane %v4943, 5
      %v4946 = vor.u32 %v4942, %v4945
      %v4947 = vrot.slane %v4946, 4
      %v4949 = vshll.u32 %v4496, 16
      %v4951 = vrot.slane %v4949, 5
      %v4952 = vsel %vm1497, %v4947, %v4951
      %v4953 = vshrl.u32 %v4496, 16
      %v4955 = vrot.slane %v4953, 4
      %v4956 = vor.u32 %v4955, %v4951
      %v4957 = vrot.slane %v4956, 4
      %v4959 = vshll.u32 %v4497, 16
      %v4961 = vrot.slane %v4959, 5
      %v4962 = vsel %vm1497, %v4957, %v4961
      %v4964 = vshrl.u32 %v4498, 16
      %v4966 = vrot.slane %v4964, 4
      %v4967 = vshll.u32 %v4498, 16
      %v4969 = vrot.slane %v4967, 5
      %v4970 = vor.u32 %v4966, %v4969
      %v4971 = vrot.slane %v4970, 4
      %v4973 = vshll.u32 %v4499, 16
      %v4975 = vrot.slane %v4973, 5
      %v4976 = vsel %vm1497, %v4971, %v4975
      %v4977 = vshrl.u32 %v4499, 16
      %v4979 = vrot.slane %v4977, 4
      %v4980 = vor.u32 %v4979, %v4975
      %v4981 = vrot.slane %v4980, 4
      %v4983 = vshll.u32 %v4500, 16
      %v4985 = vrot.slane %v4983, 5
      %v4986 = vsel %vm1497, %v4981, %v4985
      %v4988 = vshrl.u32 %v4501, 16
      %v4990 = vrot.slane %v4988, 4
      %v4991 = vshll.u32 %v4501, 16
      %v4993 = vrot.slane %v4991, 5
      %v4994 = vor.u32 %v4990, %v4993
      %v4995 = vrot.slane %v4994, 4
      %v4997 = vshll.u32 %v4502, 16
      %v4999 = vrot.slane %v4997, 5
      %v5000 = vsel %vm1497, %v4995, %v4999
      %v5001 = vshrl.u32 %v4502, 16
      %v5003 = vrot.slane %v5001, 4
      %v5004 = vor.u32 %v5003, %v4999
      %v5005 = vrot.slane %v5004, 4
      %v5007 = vshll.u32 %v4503, 16
      %v5009 = vrot.slane %v5007, 5
      %v5010 = vsel %vm1497, %v5005, %v5009
      %v5012 = vshrl.u32 %v4504, 16
      %v5014 = vrot.slane %v5012, 4
      %v5015 = vshll.u32 %v4504, 16
      %v5017 = vrot.slane %v5015, 5
      %v5018 = vor.u32 %v5014, %v5017
      %v5019 = vrot.slane %v5018, 4
      %v5021 = vshll.u32 %v4505, 16
      %v5023 = vrot.slane %v5021, 5
      %v5024 = vsel %vm1497, %v5019, %v5023
      %v5025 = vshrl.u32 %v4505, 16
      %v5027 = vrot.slane %v5025, 4
      %v5028 = vor.u32 %v5027, %v5023
      %v5029 = vrot.slane %v5028, 4
      %v5031 = vshll.u32 %v4506, 16
      %v5033 = vrot.slane %v5031, 5
      %v5034 = vsel %vm1497, %v5029, %v5033
      %v5036 = vshrl.u32 %v4507, 16
      %v5038 = vrot.slane %v5036, 4
      %v5039 = vshll.u32 %v4507, 16
      %v5041 = vrot.slane %v5039, 5
      %v5042 = vor.u32 %v5038, %v5041
      %v5043 = vrot.slane %v5042, 4
      %v5045 = vshll.u32 %v4508, 16
      %v5047 = vrot.slane %v5045, 5
      %v5048 = vsel %vm1497, %v5043, %v5047
      %v5049 = vshrl.u32 %v4508, 16
      %v5051 = vrot.slane %v5049, 4
      %v5052 = vor.u32 %v5051, %v5047
      %v5053 = vrot.slane %v5052, 4
      %v5055 = vshll.u32 %v4509, 16
      %v5057 = vrot.slane %v5055, 5
      %v5058 = vsel %vm1497, %v5053, %v5057
      %v5060 = vshrl.u32 %v4510, 16
      %v5062 = vrot.slane %v5060, 4
      %v5063 = vshll.u32 %v4510, 16
      %v5065 = vrot.slane %v5063, 5
      %v5066 = vor.u32 %v5062, %v5065
      %v5067 = vrot.slane %v5066, 4
      %v5069 = vshll.u32 %v4511, 16
      %v5071 = vrot.slane %v5069, 5
      %v5072 = vsel %vm1497, %v5067, %v5071
      %v5073 = vshrl.u32 %v4511, 16
      %v5075 = vrot.slane %v5073, 4
      %v5076 = vor.u32 %v5075, %v5071
      %v5077 = vrot.slane %v5076, 4
      %v5079 = vshll.u32 %v4512, 16
      %v5081 = vrot.slane %v5079, 5
      %v5082 = vsel %vm1497, %v5077, %v5081
      %v5084 = vshrl.u32 %v4513, 16
      %v5086 = vrot.slane %v5084, 4
      %v5087 = vshll.u32 %v4513, 16
      %v5089 = vrot.slane %v5087, 5
      %v5090 = vor.u32 %v5086, %v5089
      %v5091 = vrot.slane %v5090, 4
      %v5093 = vshll.u32 %v4514, 16
      %v5095 = vrot.slane %v5093, 5
      %v5096 = vsel %vm1497, %v5091, %v5095
      %v5097 = vshrl.u32 %v4514, 16
      %v5099 = vrot.slane %v5097, 4
      %v5100 = vor.u32 %v5099, %v5095
      %v5101 = vrot.slane %v5100, 4
      %v5103 = vshll.u32 %v4515, 16
      %v5105 = vrot.slane %v5103, 5
      %v5106 = vsel %vm1497, %v5101, %v5105
      %v5108 = vshrl.u32 %v4516, 16
      %v5110 = vrot.slane %v5108, 4
      %v5111 = vshll.u32 %v4516, 16
      %v5113 = vrot.slane %v5111, 5
      %v5114 = vor.u32 %v5110, %v5113
      %v5115 = vrot.slane %v5114, 4
      %v5117 = vshll.u32 %v4517, 16
      %v5119 = vrot.slane %v5117, 5
      %v5120 = vsel %vm1497, %v5115, %v5119
      %v5121 = vshrl.u32 %v4517, 16
      %v5123 = vrot.slane %v5121, 4
      %v5124 = vor.u32 %v5123, %v5119
      %v5125 = vrot.slane %v5124, 4
      %v5127 = vshll.u32 %v4518, 16
      %v5129 = vrot.slane %v5127, 5
      %v5130 = vsel %vm1497, %v5125, %v5129
      %v5132 = vshrl.u32 %v4519, 16
      %v5134 = vrot.slane %v5132, 4
      %v5135 = vshll.u32 %v4519, 16
      %v5137 = vrot.slane %v5135, 5
      %v5138 = vor.u32 %v5134, %v5137
      %v5139 = vrot.slane %v5138, 4
      %v5141 = vshll.u32 %v4520, 16
      %v5143 = vrot.slane %v5141, 5
      %v5144 = vsel %vm1497, %v5139, %v5143
      %v5145 = vshrl.u32 %v4520, 16
      %v5147 = vrot.slane %v5145, 4
      %v5148 = vor.u32 %v5147, %v5143
      %v5149 = vrot.slane %v5148, 4
      %v5151 = vshll.u32 %v4521, 16
      %v5153 = vrot.slane %v5151, 5
      %v5154 = vsel %vm1497, %v5149, %v5153
      %v5156 = vshrl.u32 %v4522, 16
      %v5158 = vrot.slane %v5156, 4
      %v5159 = vshll.u32 %v4522, 16
      %v5161 = vrot.slane %v5159, 5
      %v5162 = vor.u32 %v5158, %v5161
      %v5163 = vrot.slane %v5162, 4
      %v5165 = vshll.u32 %v4523, 16
      %v5167 = vrot.slane %v5165, 5
      %v5168 = vsel %vm1497, %v5163, %v5167
      %v5169 = vshrl.u32 %v4523, 16
      %v5171 = vrot.slane %v5169, 4
      %v5172 = vor.u32 %v5171, %v5167
      %v5173 = vrot.slane %v5172, 4
      %v5175 = vshll.u32 %v4524, 16
      %v5177 = vrot.slane %v5175, 5
      %v5178 = vsel %vm1497, %v5173, %v5177
      %v5180 = vshrl.u32 %v4525, 16
      %v5182 = vrot.slane %v5180, 4
      %v5183 = vshll.u32 %v4525, 16
      %v5185 = vrot.slane %v5183, 5
      %v5186 = vor.u32 %v5182, %v5185
      %v5187 = vrot.slane %v5186, 4
      %v5189 = vshll.u32 %v4526, 16
      %v5191 = vrot.slane %v5189, 5
      %v5192 = vsel %vm1497, %v5187, %v5191
      %v5193 = vshrl.u32 %v4526, 16
      %v5195 = vrot.slane %v5193, 4
      %v5196 = vor.u32 %v5195, %v5191
      %v5197 = vrot.slane %v5196, 4
      %v5199 = vshll.u32 %v4527, 16
      %v5201 = vrot.slane %v5199, 5
      %v5202 = vsel %vm1497, %v5197, %v5201
      %v5204 = vshrl.u32 %v4528, 16
      %v5206 = vrot.slane %v5204, 4
      %v5207 = vshll.u32 %v4528, 16
      %v5209 = vrot.slane %v5207, 5
      %v5210 = vor.u32 %v5206, %v5209
      %v5211 = vrot.slane %v5210, 4
      %v5213 = vshll.u32 %v4529, 16
      %v5215 = vrot.slane %v5213, 5
      %v5216 = vsel %vm1497, %v5211, %v5215
      %v5217 = vshrl.u32 %v4529, 16
      %v5219 = vrot.slane %v5217, 4
      %v5220 = vor.u32 %v5219, %v5215
      %v5221 = vrot.slane %v5220, 4
      %v5223 = vshll.u32 %v4530, 16
      %v5225 = vrot.slane %v5223, 5
      %v5226 = vsel %vm1497, %v5221, %v5225
      %v5228 = vshrl.u32 %v4531, 16
      %v5230 = vrot.slane %v5228, 4
      %v5231 = vshll.u32 %v4531, 16
      %v5233 = vrot.slane %v5231, 5
      %v5234 = vor.u32 %v5230, %v5233
      %v5235 = vrot.slane %v5234, 4
      %v5237 = vshll.u32 %v4532, 16
      %v5239 = vrot.slane %v5237, 5
      %v5240 = vsel %vm1497, %v5235, %v5239
      %v5241 = vshrl.u32 %v4532, 16
      %v5243 = vrot.slane %v5241, 4
      %v5244 = vor.u32 %v5243, %v5239
      %v5245 = vrot.slane %v5244, 4
      %v5247 = vshll.u32 %v4533, 16
      %v5249 = vrot.slane %v5247, 5
      %v5250 = vsel %vm1497, %v5245, %v5249
      %v5252 = vshrl.u32 %v4534, 16
      %v5254 = vrot.slane %v5252, 4
      %v5255 = vshll.u32 %v4534, 16
      %v5257 = vrot.slane %v5255, 5
      %v5258 = vor.u32 %v5254, %v5257
      %v5259 = vrot.slane %v5258, 4
      %v5261 = vshll.u32 %v4535, 16
      %v5263 = vrot.slane %v5261, 5
      %v5264 = vsel %vm1497, %v5259, %v5263
      %v5265 = vshrl.u32 %v4535, 16
      %v5267 = vrot.slane %v5265, 4
      %v5268 = vor.u32 %v5267, %v5263
      %v5269 = vrot.slane %v5268, 4
      %v5271 = vshll.u32 %v4536, 16
      %v5273 = vrot.slane %v5271, 5
      %v5274 = vsel %vm1497, %v5269, %v5273
      %s5275 = scalar_lea.vmem %s5, 448
      %v5276 = vld [vmem:[%s5275] sm:$0xf]
      %v5277 = vld [vmem:[%s5275 + $0x4] sm:$0xf]
      %v5278 = vld [vmem:[%s5275 + $0x8] sm:$0xf]
      %v5279 = vld [vmem:[%s5275 + $0xc] sm:$0xf]
      %v5280 = vld [vmem:[%s5275 + $0x10] sm:$0xf]
      %v5281 = vld [vmem:[%s5275 + $0x14] sm:$0xf]
      %v5282 = vld [vmem:[%s5275 + $0x18] sm:$0xf]
      %v5283 = vld [vmem:[%s5275 + $0x1c] sm:$0xf]
      %v5284 = vld [vmem:[%s5275 + $0x20] sm:$0xf]
      %v5285 = vld [vmem:[%s5275 + $0x24] sm:$0xf]
      %v5286 = vld [vmem:[%s5275 + $0x28] sm:$0xf]
      %v5287 = vld [vmem:[%s5275 + $0x2c] sm:$0xf]
      %v5288 = vld [vmem:[%s5275 + $0x30] sm:$0xf]
      %v5289 = vld [vmem:[%s5275 + $0x34] sm:$0xf]
      %v5290 = vld [vmem:[%s5275 + $0x38] sm:$0xf]
      %v5291 = vld [vmem:[%s5275 + $0x3c] sm:$0xf]
      %v5292 = vunpack.c.l.b16 %v4904
      %v5293 = vunpack.c.l.b16 %v4914
      %v5294 = vunpack.c.l.b16 %v4928
      %v5295 = vunpack.c.l.b16 %v4938
      %v5296 = vunpack.c.l.b16 %v4952
      %v5297 = vunpack.c.l.b16 %v4962
      %v5298 = vunpack.c.l.b16 %v4976
      %v5299 = vunpack.c.l.b16 %v4986
      %v5300 = vunpack.c.l.b16 %v5000
      %v5301 = vunpack.c.l.b16 %v5010
      %v5302 = vunpack.c.l.b16 %v5024
      %v5303 = vunpack.c.l.b16 %v5034
      %v5304 = vunpack.c.l.b16 %v5048
      %v5305 = vunpack.c.l.b16 %v5058
      %v5306 = vunpack.c.l.b16 %v5072
      %v5307 = vunpack.c.l.b16 %v5082
      %v5308 = vunpack.c.l.b16 %v5096
      %v5309 = vunpack.c.l.b16 %v5106
      %v5310 = vunpack.c.l.b16 %v5120
      %v5311 = vunpack.c.l.b16 %v5130
      %v5312 = vunpack.c.l.b16 %v5144
      %v5313 = vunpack.c.l.b16 %v5154
      %v5314 = vunpack.c.l.b16 %v5168
      %v5315 = vunpack.c.l.b16 %v5178
      %v5316 = vunpack.c.l.b16 %v5192
      %v5317 = vunpack.c.l.b16 %v5202
      %v5318 = vunpack.c.l.b16 %v5216
      %v5319 = vunpack.c.l.b16 %v5226
      %v5320 = vunpack.c.l.b16 %v5240
      %v5321 = vunpack.c.l.b16 %v5250
      %v5322 = vunpack.c.l.b16 %v5264
      %v5323 = vunpack.c.l.b16 %v5274
      %v5324 = vpack.c.b16 %v5293, %v5292
      %v5325 = vpack.c.b16 %v5295, %v5294
      %v5326 = vpack.c.b16 %v5297, %v5296
      %v5327 = vpack.c.b16 %v5299, %v5298
      %v5328 = vpack.c.b16 %v5301, %v5300
      %v5329 = vpack.c.b16 %v5303, %v5302
      %v5330 = vpack.c.b16 %v5305, %v5304
      %v5331 = vpack.c.b16 %v5307, %v5306
      %v5332 = vpack.c.b16 %v5309, %v5308
      %v5333 = vpack.c.b16 %v5311, %v5310
      %v5334 = vpack.c.b16 %v5313, %v5312
      %v5335 = vpack.c.b16 %v5315, %v5314
      %v5336 = vpack.c.b16 %v5317, %v5316
      %v5337 = vpack.c.b16 %v5319, %v5318
      %v5338 = vpack.c.b16 %v5321, %v5320
      %v5339 = vpack.c.b16 %v5323, %v5322
      %v5372 = vunpack.c.l.b16 %v5276
      %v5373 = vunpack.c.l.b16 %v5277
      %v5374 = vunpack.c.l.b16 %v5278
      %v5375 = vunpack.c.l.b16 %v5279
      %v5376 = vunpack.c.l.b16 %v5280
      %v5377 = vunpack.c.l.b16 %v5281
      %v5378 = vunpack.c.l.b16 %v5282
      %v5379 = vunpack.c.l.b16 %v5283
      %v5380 = vunpack.c.l.b16 %v5284
      %v5381 = vunpack.c.l.b16 %v5285
      %v5382 = vunpack.c.l.b16 %v5286
      %v5383 = vunpack.c.l.b16 %v5287
      %v5384 = vunpack.c.l.b16 %v5288
      %v5385 = vunpack.c.l.b16 %v5289
      %v5386 = vunpack.c.l.b16 %v5290
      %v5387 = vunpack.c.l.b16 %v5291
      %v5388 = vpack.c.b16 %v5373, %v5372
      %v5389 = vpack.c.b16 %v5375, %v5374
      %v5390 = vpack.c.b16 %v5377, %v5376
      %v5391 = vpack.c.b16 %v5379, %v5378
      %v5392 = vpack.c.b16 %v5381, %v5380
      %v5393 = vpack.c.b16 %v5383, %v5382
      %v5394 = vpack.c.b16 %v5385, %v5384
      %v5395 = vpack.c.b16 %v5387, %v5386
      %5404 = vmatprep.subr.bf16.mxu0 0
      %5405 = vmatpush1.bf16.msra.mxu0 %v5395
      %5406 = vmatprep.subr.bf16.mxu0 0
      %5407 = vmatpush1.bf16.msra.mxu0 %v5394
      %5408 = vmatprep.subr.bf16.mxu0 0
      %5409 = vmatpush1.bf16.msra.mxu0 %v5393
      %5410 = vmatprep.subr.bf16.mxu0 0
      %5411 = vmatpush1.bf16.msra.mxu0 %v5392
      %5412 = vmatprep.subr.bf16.mxu0 0
      %5413 = vmatpush1.bf16.msra.mxu0 %v5391
      %5414 = vmatprep.subr.bf16.mxu0 0
      %5415 = vmatpush1.bf16.msra.mxu0 %v5390
      %5416 = vmatprep.subr.bf16.mxu0 0
      %5417 = vmatpush1.bf16.msra.mxu0 %v5389
      %5418 = vmatprep.subr.bf16.mxu0 0
      %5419 = vmatpush1.bf16.msra.mxu0 %v5388
      %5420 = vmatprep.subr.bf16.mxu0 0
      %5421 = vmatpush2.bf16.msra.mxu0 0
      %5422 = vmatprep.subr.bf16.mxu0 0
      %5423 = vmatpush2.bf16.msra.mxu0 0
      %5424 = vmatprep.subr.bf16.mxu0 0
      %5425 = vmatpush2.bf16.msra.mxu0 0
      %5426 = vmatprep.subr.bf16.mxu0 0
      %5427 = vmatpush2.bf16.msra.mxu0 0
      %5428 = vmatprep.subr.bf16.mxu0 0
      %5429 = vmatpush2.bf16.msra.mxu0 0
      %5430 = vmatprep.subr.bf16.mxu0 0
      %5431 = vmatpush2.bf16.msra.mxu0 0
      %5432 = vmatprep.subr.bf16.mxu0 0
      %5433 = vmatpush2.bf16.msra.mxu0 0
      %5434 = vmatprep.subr.bf16.mxu0 0
      %5435 = vmatpush2.bf16.msra.mxu0 0
      %5436 = vmatprep.mubr.bf16.mxu0 0
      %5437 = vmatmul.mubr.bf16.gmra.mxu0 %v5324
      %v5438 = vpop.f32.mrf.mxu0
      %v5439 = vadd.f32 0.0, %v5438
      %v5440 = vpop.f32.mrf.mxu0
      %v5441 = vpop.f32.mrf.mxu0
      %v5442 = vadd.f32 0.0, %v5441
      %v5443 = vpop.f32.mrf.mxu0
      %5444 = vmatprep.mubr.bf16.mxu0 0
      %5445 = vmatmul.mubr.bf16.gmra.mxu0 %v5325
      %v5446 = vpop.f32.mrf.mxu0
      %v5447 = vadd.f32 0.0, %v5446
      %v5448 = vpop.f32.mrf.mxu0
      %v5449 = vpop.f32.mrf.mxu0
      %v5450 = vadd.f32 0.0, %v5449
      %v5451 = vpop.f32.mrf.mxu0
      %5452 = vmatprep.mubr.bf16.mxu0 0
      %5453 = vmatmul.mubr.bf16.gmra.mxu0 %v5326
      %v5454 = vpop.f32.mrf.mxu0
      %v5455 = vadd.f32 0.0, %v5454
      %v5456 = vpop.f32.mrf.mxu0
      %v5457 = vpop.f32.mrf.mxu0
      %v5458 = vadd.f32 0.0, %v5457
      %v5459 = vpop.f32.mrf.mxu0
      %5460 = vmatprep.mubr.bf16.mxu0 0
      %5461 = vmatmul.mubr.bf16.gmra.mxu0 %v5327
      %v5462 = vpop.f32.mrf.mxu0
      %v5463 = vadd.f32 0.0, %v5462
      %v5464 = vpop.f32.mrf.mxu0
      %v5465 = vpop.f32.mrf.mxu0
      %v5466 = vadd.f32 0.0, %v5465
      %v5467 = vpop.f32.mrf.mxu0
      %5468 = vmatprep.mubr.bf16.mxu0 0
      %5469 = vmatmul.mubr.bf16.gmra.mxu0 %v5328
      %v5470 = vpop.f32.mrf.mxu0
      %v5471 = vadd.f32 0.0, %v5470
      %v5472 = vpop.f32.mrf.mxu0
      %v5473 = vpop.f32.mrf.mxu0
      %v5474 = vadd.f32 0.0, %v5473
      %v5475 = vpop.f32.mrf.mxu0
      %5476 = vmatprep.mubr.bf16.mxu0 0
      %5477 = vmatmul.mubr.bf16.gmra.mxu0 %v5329
      %v5478 = vpop.f32.mrf.mxu0
      %v5479 = vadd.f32 0.0, %v5478
      %v5480 = vpop.f32.mrf.mxu0
      %v5481 = vpop.f32.mrf.mxu0
      %v5482 = vadd.f32 0.0, %v5481
      %v5483 = vpop.f32.mrf.mxu0
      %5484 = vmatprep.mubr.bf16.mxu0 0
      %5485 = vmatmul.mubr.bf16.gmra.mxu0 %v5330
      %v5486 = vpop.f32.mrf.mxu0
      %v5487 = vadd.f32 0.0, %v5486
      %v5488 = vpop.f32.mrf.mxu0
      %v5489 = vpop.f32.mrf.mxu0
      %v5490 = vadd.f32 0.0, %v5489
      %v5491 = vpop.f32.mrf.mxu0
      %5492 = vmatprep.mubr.bf16.mxu0 0
      %5493 = vmatmul.mubr.bf16.gmra.mxu0 %v5331
      %v5494 = vpop.f32.mrf.mxu0
      %v5495 = vadd.f32 0.0, %v5494
      %v5496 = vpop.f32.mrf.mxu0
      %v5497 = vpop.f32.mrf.mxu0
      %v5498 = vadd.f32 0.0, %v5497
      %v5499 = vpop.f32.mrf.mxu0
      %5500 = vmatprep.mubr.bf16.mxu0 0
      %5501 = vmatmul.mubr.bf16.gmra.mxu0 %v5332
      %v5502 = vpop.f32.mrf.mxu0
      %v5503 = vadd.f32 0.0, %v5502
      %v5504 = vpop.f32.mrf.mxu0
      %v5505 = vpop.f32.mrf.mxu0
      %v5506 = vadd.f32 0.0, %v5505
      %v5507 = vpop.f32.mrf.mxu0
      %5508 = vmatprep.mubr.bf16.mxu0 0
      %5509 = vmatmul.mubr.bf16.gmra.mxu0 %v5333
      %v5510 = vpop.f32.mrf.mxu0
      %v5511 = vadd.f32 0.0, %v5510
      %v5512 = vpop.f32.mrf.mxu0
      %v5513 = vpop.f32.mrf.mxu0
      %v5514 = vadd.f32 0.0, %v5513
      %v5515 = vpop.f32.mrf.mxu0
      %5516 = vmatprep.mubr.bf16.mxu0 0
      %5517 = vmatmul.mubr.bf16.gmra.mxu0 %v5334
      %v5518 = vpop.f32.mrf.mxu0
      %v5519 = vadd.f32 0.0, %v5518
      %v5520 = vpop.f32.mrf.mxu0
      %v5521 = vpop.f32.mrf.mxu0
      %v5522 = vadd.f32 0.0, %v5521
      %v5523 = vpop.f32.mrf.mxu0
      %5524 = vmatprep.mubr.bf16.mxu0 0
      %5525 = vmatmul.mubr.bf16.gmra.mxu0 %v5335
      %v5526 = vpop.f32.mrf.mxu0
      %v5527 = vadd.f32 0.0, %v5526
      %v5528 = vpop.f32.mrf.mxu0
      %v5529 = vpop.f32.mrf.mxu0
      %v5530 = vadd.f32 0.0, %v5529
      %v5531 = vpop.f32.mrf.mxu0
      %5532 = vmatprep.mubr.bf16.mxu0 0
      %5533 = vmatmul.mubr.bf16.gmra.mxu0 %v5336
      %v5534 = vpop.f32.mrf.mxu0
      %v5535 = vadd.f32 0.0, %v5534
      %v5536 = vpop.f32.mrf.mxu0
      %v5537 = vpop.f32.mrf.mxu0
      %v5538 = vadd.f32 0.0, %v5537
      %v5539 = vpop.f32.mrf.mxu0
      %5540 = vmatprep.mubr.bf16.mxu0 0
      %5541 = vmatmul.mubr.bf16.gmra.mxu0 %v5337
      %v5542 = vpop.f32.mrf.mxu0
      %v5543 = vadd.f32 0.0, %v5542
      %v5544 = vpop.f32.mrf.mxu0
      %v5545 = vpop.f32.mrf.mxu0
      %v5546 = vadd.f32 0.0, %v5545
      %v5547 = vpop.f32.mrf.mxu0
      %5548 = vmatprep.mubr.bf16.mxu0 0
      %5549 = vmatmul.mubr.bf16.gmra.mxu0 %v5338
      %v5550 = vpop.f32.mrf.mxu0
      %v5551 = vadd.f32 0.0, %v5550
      %v5552 = vpop.f32.mrf.mxu0
      %v5553 = vpop.f32.mrf.mxu0
      %v5554 = vadd.f32 0.0, %v5553
      %v5555 = vpop.f32.mrf.mxu0
      %5556 = vmatprep.mubr.bf16.mxu0 0
      %5557 = vmatmul.mubr.bf16.gmra.mxu0 %v5339
      %v5558 = vpop.f32.mrf.mxu0
      %v5559 = vadd.f32 0.0, %v5558
      %v5560 = vpop.f32.mrf.mxu0
      %v5561 = vpop.f32.mrf.mxu0
      %v5562 = vadd.f32 0.0, %v5561
      %v5563 = vpop.f32.mrf.mxu0
      %5564 = vdwg.mxu0
      %v5565 = vadd.f32 %v4859, %v5439
      %v5566 = vadd.f32 %v4860, %v5442
      %v5567 = vadd.f32 %v4861, %v5447
      %v5568 = vadd.f32 %v4862, %v5450
      %v5569 = vadd.f32 %v4863, %v5455
      %v5570 = vadd.f32 %v4864, %v5458
      %v5571 = vadd.f32 %v4865, %v5463
      %v5572 = vadd.f32 %v4866, %v5466
      %v5573 = vadd.f32 %v4867, %v5471
      %v5574 = vadd.f32 %v4868, %v5474
      %v5575 = vadd.f32 %v4869, %v5479
      %v5576 = vadd.f32 %v4870, %v5482
      %v5577 = vadd.f32 %v4871, %v5487
      %v5578 = vadd.f32 %v4872, %v5490
      %v5579 = vadd.f32 %v4873, %v5495
      %v5580 = vadd.f32 %v4874, %v5498
      %v5581 = vadd.f32 %v4875, %v5503
      %v5582 = vadd.f32 %v4876, %v5506
      %v5583 = vadd.f32 %v4877, %v5511
      %v5584 = vadd.f32 %v4878, %v5514
      %v5585 = vadd.f32 %v4879, %v5519
      %v5586 = vadd.f32 %v4880, %v5522
      %v5587 = vadd.f32 %v4881, %v5527
      %v5588 = vadd.f32 %v4882, %v5530
      %v5589 = vadd.f32 %v4883, %v5535
      %v5590 = vadd.f32 %v4884, %v5538
      %v5591 = vadd.f32 %v4885, %v5543
      %v5592 = vadd.f32 %v4886, %v5546
      %v5593 = vadd.f32 %v4887, %v5551
      %v5594 = vadd.f32 %v4888, %v5554
      %v5595 = vadd.f32 %v4889, %v5559
      %v5596 = vadd.f32 %v4890, %v5562
      %v5613 = vrot.slane %v4489, 5
      %v5614 = vrot.slane %v5613, 4
      %v5615 = vrot.slane %v4490, 5
      %v5616 = vsel %vm2495, %v5614, %v5615
      %v5617 = vrot.slane %v5615, 4
      %v5618 = vrot.slane %v4491, 5
      %v5619 = vsel %vm2495, %v5617, %v5618
      %v5620 = vrot.slane %v4492, 5
      %v5621 = vrot.slane %v5620, 4
      %v5622 = vrot.slane %v4493, 5
      %v5623 = vsel %vm2495, %v5621, %v5622
      %v5624 = vrot.slane %v5622, 4
      %v5625 = vrot.slane %v4494, 5
      %v5626 = vsel %vm2495, %v5624, %v5625
      %v5627 = vrot.slane %v4495, 5
      %v5628 = vrot.slane %v5627, 4
      %v5629 = vrot.slane %v4496, 5
      %v5630 = vsel %vm2495, %v5628, %v5629
      %v5631 = vrot.slane %v5629, 4
      %v5632 = vrot.slane %v4497, 5
      %v5633 = vsel %vm2495, %v5631, %v5632
      %v5634 = vrot.slane %v4498, 5
      %v5635 = vrot.slane %v5634, 4
      %v5636 = vrot.slane %v4499, 5
      %v5637 = vsel %vm2495, %v5635, %v5636
      %v5638 = vrot.slane %v5636, 4
      %v5639 = vrot.slane %v4500, 5
      %v5640 = vsel %vm2495, %v5638, %v5639
      %v5641 = vrot.slane %v4501, 5
      %v5642 = vrot.slane %v5641, 4
      %v5643 = vrot.slane %v4502, 5
      %v5644 = vsel %vm2495, %v5642, %v5643
      %v5645 = vrot.slane %v5643, 4
      %v5646 = vrot.slane %v4503, 5
      %v5647 = vsel %vm2495, %v5645, %v5646
      %v5648 = vrot.slane %v4504, 5
      %v5649 = vrot.slane %v5648, 4
      %v5650 = vrot.slane %v4505, 5
      %v5651 = vsel %vm2495, %v5649, %v5650
      %v5652 = vrot.slane %v5650, 4
      %v5653 = vrot.slane %v4506, 5
      %v5654 = vsel %vm2495, %v5652, %v5653
      %v5655 = vrot.slane %v4507, 5
      %v5656 = vrot.slane %v5655, 4
      %v5657 = vrot.slane %v4508, 5
      %v5658 = vsel %vm2495, %v5656, %v5657
      %v5659 = vrot.slane %v5657, 4
      %v5660 = vrot.slane %v4509, 5
      %v5661 = vsel %vm2495, %v5659, %v5660
      %v5662 = vrot.slane %v4510, 5
      %v5663 = vrot.slane %v5662, 4
      %v5664 = vrot.slane %v4511, 5
      %v5665 = vsel %vm2495, %v5663, %v5664
      %v5666 = vrot.slane %v5664, 4
      %v5667 = vrot.slane %v4512, 5
      %v5668 = vsel %vm2495, %v5666, %v5667
      %v5669 = vrot.slane %v4513, 5
      %v5670 = vrot.slane %v5669, 4
      %v5671 = vrot.slane %v4514, 5
      %v5672 = vsel %vm2495, %v5670, %v5671
      %v5673 = vrot.slane %v5671, 4
      %v5674 = vrot.slane %v4515, 5
      %v5675 = vsel %vm2495, %v5673, %v5674
      %v5676 = vrot.slane %v4516, 5
      %v5677 = vrot.slane %v5676, 4
      %v5678 = vrot.slane %v4517, 5
      %v5679 = vsel %vm2495, %v5677, %v5678
      %v5680 = vrot.slane %v5678, 4
      %v5681 = vrot.slane %v4518, 5
      %v5682 = vsel %vm2495, %v5680, %v5681
      %v5683 = vrot.slane %v4519, 5
      %v5684 = vrot.slane %v5683, 4
      %v5685 = vrot.slane %v4520, 5
      %v5686 = vsel %vm2495, %v5684, %v5685
      %v5687 = vrot.slane %v5685, 4
      %v5688 = vrot.slane %v4521, 5
      %v5689 = vsel %vm2495, %v5687, %v5688
      %v5690 = vrot.slane %v4522, 5
      %v5691 = vrot.slane %v5690, 4
      %v5692 = vrot.slane %v4523, 5
      %v5693 = vsel %vm2495, %v5691, %v5692
      %v5694 = vrot.slane %v5692, 4
      %v5695 = vrot.slane %v4524, 5
      %v5696 = vsel %vm2495, %v5694, %v5695
      %v5697 = vrot.slane %v4525, 5
      %v5698 = vrot.slane %v5697, 4
      %v5699 = vrot.slane %v4526, 5
      %v5700 = vsel %vm2495, %v5698, %v5699
      %v5701 = vrot.slane %v5699, 4
      %v5702 = vrot.slane %v4527, 5
      %v5703 = vsel %vm2495, %v5701, %v5702
      %v5704 = vrot.slane %v4528, 5
      %v5705 = vrot.slane %v5704, 4
      %v5706 = vrot.slane %v4529, 5
      %v5707 = vsel %vm2495, %v5705, %v5706
      %v5708 = vrot.slane %v5706, 4
      %v5709 = vrot.slane %v4530, 5
      %v5710 = vsel %vm2495, %v5708, %v5709
      %v5711 = vrot.slane %v4531, 5
      %v5712 = vrot.slane %v5711, 4
      %v5713 = vrot.slane %v4532, 5
      %v5714 = vsel %vm2495, %v5712, %v5713
      %v5715 = vrot.slane %v5713, 4
      %v5716 = vrot.slane %v4533, 5
      %v5717 = vsel %vm2495, %v5715, %v5716
      %v5718 = vrot.slane %v4534, 5
      %v5719 = vrot.slane %v5718, 4
      %v5720 = vrot.slane %v4535, 5
      %v5721 = vsel %vm2495, %v5719, %v5720
      %v5722 = vrot.slane %v5720, 4
      %v5723 = vrot.slane %v4536, 5
      %v5724 = vsel %vm2495, %v5722, %v5723
      %s5725 = scalar_lea.vmem %s5, 512
      %v5726 = vld [vmem:[%s5725] sm:$0xf]
      %v5727 = vld [vmem:[%s5725 + $0x4] sm:$0xf]
      %v5728 = vld [vmem:[%s5725 + $0x8] sm:$0xf]
      %v5729 = vld [vmem:[%s5725 + $0xc] sm:$0xf]
      %v5730 = vld [vmem:[%s5725 + $0x10] sm:$0xf]
      %v5731 = vld [vmem:[%s5725 + $0x14] sm:$0xf]
      %v5732 = vld [vmem:[%s5725 + $0x18] sm:$0xf]
      %v5733 = vld [vmem:[%s5725 + $0x1c] sm:$0xf]
      %v5734 = vld [vmem:[%s5725 + $0x20] sm:$0xf]
      %v5735 = vld [vmem:[%s5725 + $0x24] sm:$0xf]
      %v5736 = vld [vmem:[%s5725 + $0x28] sm:$0xf]
      %v5737 = vld [vmem:[%s5725 + $0x2c] sm:$0xf]
      %v5738 = vld [vmem:[%s5725 + $0x30] sm:$0xf]
      %v5739 = vld [vmem:[%s5725 + $0x34] sm:$0xf]
      %v5740 = vld [vmem:[%s5725 + $0x38] sm:$0xf]
      %v5741 = vld [vmem:[%s5725 + $0x3c] sm:$0xf]
      %v5742 = vunpack.c.l.b16 %v5616
      %v5743 = vunpack.c.l.b16 %v5619
      %v5744 = vunpack.c.l.b16 %v5623
      %v5745 = vunpack.c.l.b16 %v5626
      %v5746 = vunpack.c.l.b16 %v5630
      %v5747 = vunpack.c.l.b16 %v5633
      %v5748 = vunpack.c.l.b16 %v5637
      %v5749 = vunpack.c.l.b16 %v5640
      %v5750 = vunpack.c.l.b16 %v5644
      %v5751 = vunpack.c.l.b16 %v5647
      %v5752 = vunpack.c.l.b16 %v5651
      %v5753 = vunpack.c.l.b16 %v5654
      %v5754 = vunpack.c.l.b16 %v5658
      %v5755 = vunpack.c.l.b16 %v5661
      %v5756 = vunpack.c.l.b16 %v5665
      %v5757 = vunpack.c.l.b16 %v5668
      %v5758 = vunpack.c.l.b16 %v5672
      %v5759 = vunpack.c.l.b16 %v5675
      %v5760 = vunpack.c.l.b16 %v5679
      %v5761 = vunpack.c.l.b16 %v5682
      %v5762 = vunpack.c.l.b16 %v5686
      %v5763 = vunpack.c.l.b16 %v5689
      %v5764 = vunpack.c.l.b16 %v5693
      %v5765 = vunpack.c.l.b16 %v5696
      %v5766 = vunpack.c.l.b16 %v5700
      %v5767 = vunpack.c.l.b16 %v5703
      %v5768 = vunpack.c.l.b16 %v5707
      %v5769 = vunpack.c.l.b16 %v5710
      %v5770 = vunpack.c.l.b16 %v5714
      %v5771 = vunpack.c.l.b16 %v5717
      %v5772 = vunpack.c.l.b16 %v5721
      %v5773 = vunpack.c.l.b16 %v5724
      %v5774 = vpack.c.b16 %v5743, %v5742
      %v5775 = vpack.c.b16 %v5745, %v5744
      %v5776 = vpack.c.b16 %v5747, %v5746
      %v5777 = vpack.c.b16 %v5749, %v5748
      %v5778 = vpack.c.b16 %v5751, %v5750
      %v5779 = vpack.c.b16 %v5753, %v5752
      %v5780 = vpack.c.b16 %v5755, %v5754
      %v5781 = vpack.c.b16 %v5757, %v5756
      %v5782 = vpack.c.b16 %v5759, %v5758
      %v5783 = vpack.c.b16 %v5761, %v5760
      %v5784 = vpack.c.b16 %v5763, %v5762
      %v5785 = vpack.c.b16 %v5765, %v5764
      %v5786 = vpack.c.b16 %v5767, %v5766
      %v5787 = vpack.c.b16 %v5769, %v5768
      %v5788 = vpack.c.b16 %v5771, %v5770
      %v5789 = vpack.c.b16 %v5773, %v5772
      %v5822 = vunpack.c.l.b16 %v5726
      %v5823 = vunpack.c.l.b16 %v5727
      %v5824 = vunpack.c.l.b16 %v5728
      %v5825 = vunpack.c.l.b16 %v5729
      %v5826 = vunpack.c.l.b16 %v5730
      %v5827 = vunpack.c.l.b16 %v5731
      %v5828 = vunpack.c.l.b16 %v5732
      %v5829 = vunpack.c.l.b16 %v5733
      %v5830 = vunpack.c.l.b16 %v5734
      %v5831 = vunpack.c.l.b16 %v5735
      %v5832 = vunpack.c.l.b16 %v5736
      %v5833 = vunpack.c.l.b16 %v5737
      %v5834 = vunpack.c.l.b16 %v5738
      %v5835 = vunpack.c.l.b16 %v5739
      %v5836 = vunpack.c.l.b16 %v5740
      %v5837 = vunpack.c.l.b16 %v5741
      %v5838 = vpack.c.b16 %v5823, %v5822
      %v5839 = vpack.c.b16 %v5825, %v5824
      %v5840 = vpack.c.b16 %v5827, %v5826
      %v5841 = vpack.c.b16 %v5829, %v5828
      %v5842 = vpack.c.b16 %v5831, %v5830
      %v5843 = vpack.c.b16 %v5833, %v5832
      %v5844 = vpack.c.b16 %v5835, %v5834
      %v5845 = vpack.c.b16 %v5837, %v5836
      %5854 = vmatprep.subr.bf16.mxu0 0
      %5855 = vmatpush1.bf16.msra.mxu0 %v5845
      %5856 = vmatprep.subr.bf16.mxu0 0
      %5857 = vmatpush1.bf16.msra.mxu0 %v5844
      %5858 = vmatprep.subr.bf16.mxu0 0
      %5859 = vmatpush1.bf16.msra.mxu0 %v5843
      %5860 = vmatprep.subr.bf16.mxu0 0
      %5861 = vmatpush1.bf16.msra.mxu0 %v5842
      %5862 = vmatprep.subr.bf16.mxu0 0
      %5863 = vmatpush1.bf16.msra.mxu0 %v5841
      %5864 = vmatprep.subr.bf16.mxu0 0
      %5865 = vmatpush1.bf16.msra.mxu0 %v5840
      %5866 = vmatprep.subr.bf16.mxu0 0
      %5867 = vmatpush1.bf16.msra.mxu0 %v5839
      %5868 = vmatprep.subr.bf16.mxu0 0
      %5869 = vmatpush1.bf16.msra.mxu0 %v5838
      %5870 = vmatprep.subr.bf16.mxu0 0
      %5871 = vmatpush2.bf16.msra.mxu0 0
      %5872 = vmatprep.subr.bf16.mxu0 0
      %5873 = vmatpush2.bf16.msra.mxu0 0
      %5874 = vmatprep.subr.bf16.mxu0 0
      %5875 = vmatpush2.bf16.msra.mxu0 0
      %5876 = vmatprep.subr.bf16.mxu0 0
      %5877 = vmatpush2.bf16.msra.mxu0 0
      %5878 = vmatprep.subr.bf16.mxu0 0
      %5879 = vmatpush2.bf16.msra.mxu0 0
      %5880 = vmatprep.subr.bf16.mxu0 0
      %5881 = vmatpush2.bf16.msra.mxu0 0
      %5882 = vmatprep.subr.bf16.mxu0 0
      %5883 = vmatpush2.bf16.msra.mxu0 0
      %5884 = vmatprep.subr.bf16.mxu0 0
      %5885 = vmatpush2.bf16.msra.mxu0 0
      %5886 = vmatprep.mubr.bf16.mxu0 0
      %5887 = vmatmul.mubr.bf16.gmra.mxu0 %v5774
      %v5888 = vpop.f32.mrf.mxu0
      %v5889 = vadd.f32 0.0, %v5888
      %v5890 = vpop.f32.mrf.mxu0
      %v5891 = vpop.f32.mrf.mxu0
      %v5892 = vadd.f32 0.0, %v5891
      %v5893 = vpop.f32.mrf.mxu0
      %5894 = vmatprep.mubr.bf16.mxu0 0
      %5895 = vmatmul.mubr.bf16.gmra.mxu0 %v5775
      %v5896 = vpop.f32.mrf.mxu0
      %v5897 = vadd.f32 0.0, %v5896
      %v5898 = vpop.f32.mrf.mxu0
      %v5899 = vpop.f32.mrf.mxu0
      %v5900 = vadd.f32 0.0, %v5899
      %v5901 = vpop.f32.mrf.mxu0
      %5902 = vmatprep.mubr.bf16.mxu0 0
      %5903 = vmatmul.mubr.bf16.gmra.mxu0 %v5776
      %v5904 = vpop.f32.mrf.mxu0
      %v5905 = vadd.f32 0.0, %v5904
      %v5906 = vpop.f32.mrf.mxu0
      %v5907 = vpop.f32.mrf.mxu0
      %v5908 = vadd.f32 0.0, %v5907
      %v5909 = vpop.f32.mrf.mxu0
      %5910 = vmatprep.mubr.bf16.mxu0 0
      %5911 = vmatmul.mubr.bf16.gmra.mxu0 %v5777
      %v5912 = vpop.f32.mrf.mxu0
      %v5913 = vadd.f32 0.0, %v5912
      %v5914 = vpop.f32.mrf.mxu0
      %v5915 = vpop.f32.mrf.mxu0
      %v5916 = vadd.f32 0.0, %v5915
      %v5917 = vpop.f32.mrf.mxu0
      %5918 = vmatprep.mubr.bf16.mxu0 0
      %5919 = vmatmul.mubr.bf16.gmra.mxu0 %v5778
      %v5920 = vpop.f32.mrf.mxu0
      %v5921 = vadd.f32 0.0, %v5920
      %v5922 = vpop.f32.mrf.mxu0
      %v5923 = vpop.f32.mrf.mxu0
      %v5924 = vadd.f32 0.0, %v5923
      %v5925 = vpop.f32.mrf.mxu0
      %5926 = vmatprep.mubr.bf16.mxu0 0
      %5927 = vmatmul.mubr.bf16.gmra.mxu0 %v5779
      %v5928 = vpop.f32.mrf.mxu0
      %v5929 = vadd.f32 0.0, %v5928
      %v5930 = vpop.f32.mrf.mxu0
      %v5931 = vpop.f32.mrf.mxu0
      %v5932 = vadd.f32 0.0, %v5931
      %v5933 = vpop.f32.mrf.mxu0
      %5934 = vmatprep.mubr.bf16.mxu0 0
      %5935 = vmatmul.mubr.bf16.gmra.mxu0 %v5780
      %v5936 = vpop.f32.mrf.mxu0
      %v5937 = vadd.f32 0.0, %v5936
      %v5938 = vpop.f32.mrf.mxu0
      %v5939 = vpop.f32.mrf.mxu0
      %v5940 = vadd.f32 0.0, %v5939
      %v5941 = vpop.f32.mrf.mxu0
      %5942 = vmatprep.mubr.bf16.mxu0 0
      %5943 = vmatmul.mubr.bf16.gmra.mxu0 %v5781
      %v5944 = vpop.f32.mrf.mxu0
      %v5945 = vadd.f32 0.0, %v5944
      %v5946 = vpop.f32.mrf.mxu0
      %v5947 = vpop.f32.mrf.mxu0
      %v5948 = vadd.f32 0.0, %v5947
      %v5949 = vpop.f32.mrf.mxu0
      %5950 = vmatprep.mubr.bf16.mxu0 0
      %5951 = vmatmul.mubr.bf16.gmra.mxu0 %v5782
      %v5952 = vpop.f32.mrf.mxu0
      %v5953 = vadd.f32 0.0, %v5952
      %v5954 = vpop.f32.mrf.mxu0
      %v5955 = vpop.f32.mrf.mxu0
      %v5956 = vadd.f32 0.0, %v5955
      %v5957 = vpop.f32.mrf.mxu0
      %5958 = vmatprep.mubr.bf16.mxu0 0
      %5959 = vmatmul.mubr.bf16.gmra.mxu0 %v5783
      %v5960 = vpop.f32.mrf.mxu0
      %v5961 = vadd.f32 0.0, %v5960
      %v5962 = vpop.f32.mrf.mxu0
      %v5963 = vpop.f32.mrf.mxu0
      %v5964 = vadd.f32 0.0, %v5963
      %v5965 = vpop.f32.mrf.mxu0
      %5966 = vmatprep.mubr.bf16.mxu0 0
      %5967 = vmatmul.mubr.bf16.gmra.mxu0 %v5784
      %v5968 = vpop.f32.mrf.mxu0
      %v5969 = vadd.f32 0.0, %v5968
      %v5970 = vpop.f32.mrf.mxu0
      %v5971 = vpop.f32.mrf.mxu0
      %v5972 = vadd.f32 0.0, %v5971
      %v5973 = vpop.f32.mrf.mxu0
      %5974 = vmatprep.mubr.bf16.mxu0 0
      %5975 = vmatmul.mubr.bf16.gmra.mxu0 %v5785
      %v5976 = vpop.f32.mrf.mxu0
      %v5977 = vadd.f32 0.0, %v5976
      %v5978 = vpop.f32.mrf.mxu0
      %v5979 = vpop.f32.mrf.mxu0
      %v5980 = vadd.f32 0.0, %v5979
      %v5981 = vpop.f32.mrf.mxu0
      %5982 = vmatprep.mubr.bf16.mxu0 0
      %5983 = vmatmul.mubr.bf16.gmra.mxu0 %v5786
      %v5984 = vpop.f32.mrf.mxu0
      %v5985 = vadd.f32 0.0, %v5984
      %v5986 = vpop.f32.mrf.mxu0
      %v5987 = vpop.f32.mrf.mxu0
      %v5988 = vadd.f32 0.0, %v5987
      %v5989 = vpop.f32.mrf.mxu0
      %5990 = vmatprep.mubr.bf16.mxu0 0
      %5991 = vmatmul.mubr.bf16.gmra.mxu0 %v5787
      %v5992 = vpop.f32.mrf.mxu0
      %v5993 = vadd.f32 0.0, %v5992
      %v5994 = vpop.f32.mrf.mxu0
      %v5995 = vpop.f32.mrf.mxu0
      %v5996 = vadd.f32 0.0, %v5995
      %v5997 = vpop.f32.mrf.mxu0
      %5998 = vmatprep.mubr.bf16.mxu0 0
      %5999 = vmatmul.mubr.bf16.gmra.mxu0 %v5788
      %v6000 = vpop.f32.mrf.mxu0
      %v6001 = vadd.f32 0.0, %v6000
      %v6002 = vpop.f32.mrf.mxu0
      %v6003 = vpop.f32.mrf.mxu0
      %v6004 = vadd.f32 0.0, %v6003
      %v6005 = vpop.f32.mrf.mxu0
      %6006 = vmatprep.mubr.bf16.mxu0 0
      %6007 = vmatmul.mubr.bf16.gmra.mxu0 %v5789
      %v6008 = vpop.f32.mrf.mxu0
      %v6009 = vadd.f32 0.0, %v6008
      %v6010 = vpop.f32.mrf.mxu0
      %v6011 = vpop.f32.mrf.mxu0
      %v6012 = vadd.f32 0.0, %v6011
      %v6013 = vpop.f32.mrf.mxu0
      %6014 = vdwg.mxu0
      %v6015 = vadd.f32 %v5565, %v5889
      %v6016 = vadd.f32 %v5566, %v5892
      %v6017 = vadd.f32 %v5567, %v5897
      %v6018 = vadd.f32 %v5568, %v5900
      %v6019 = vadd.f32 %v5569, %v5905
      %v6020 = vadd.f32 %v5570, %v5908
      %v6021 = vadd.f32 %v5571, %v5913
      %v6022 = vadd.f32 %v5572, %v5916
      %v6023 = vadd.f32 %v5573, %v5921
      %v6024 = vadd.f32 %v5574, %v5924
      %v6025 = vadd.f32 %v5575, %v5929
      %v6026 = vadd.f32 %v5576, %v5932
      %v6027 = vadd.f32 %v5577, %v5937
      %v6028 = vadd.f32 %v5578, %v5940
      %v6029 = vadd.f32 %v5579, %v5945
      %v6030 = vadd.f32 %v5580, %v5948
      %v6031 = vadd.f32 %v5581, %v5953
      %v6032 = vadd.f32 %v5582, %v5956
      %v6033 = vadd.f32 %v5583, %v5961
      %v6034 = vadd.f32 %v5584, %v5964
      %v6035 = vadd.f32 %v5585, %v5969
      %v6036 = vadd.f32 %v5586, %v5972
      %v6037 = vadd.f32 %v5587, %v5977
      %v6038 = vadd.f32 %v5588, %v5980
      %v6039 = vadd.f32 %v5589, %v5985
      %v6040 = vadd.f32 %v5590, %v5988
      %v6041 = vadd.f32 %v5591, %v5993
      %v6042 = vadd.f32 %v5592, %v5996
      %v6043 = vadd.f32 %v5593, %v6001
      %v6044 = vadd.f32 %v5594, %v6004
      %v6045 = vadd.f32 %v5595, %v6009
      %v6046 = vadd.f32 %v5596, %v6012
      %v6047 = vpack.c.bf16 %v6016, %v6015
      %v6048 = vpack.c.bf16 %v6018, %v6017
      %v6049 = vpack.c.bf16 %v6020, %v6019
      %v6050 = vpack.c.bf16 %v6022, %v6021
      %v6051 = vpack.c.bf16 %v6024, %v6023
      %v6052 = vpack.c.bf16 %v6026, %v6025
      %v6053 = vpack.c.bf16 %v6028, %v6027
      %v6054 = vpack.c.bf16 %v6030, %v6029
      %v6055 = vpack.c.bf16 %v6032, %v6031
      %v6056 = vpack.c.bf16 %v6034, %v6033
      %v6057 = vpack.c.bf16 %v6036, %v6035
      %v6058 = vpack.c.bf16 %v6038, %v6037
      %v6059 = vpack.c.bf16 %v6040, %v6039
      %v6060 = vpack.c.bf16 %v6042, %v6041
      %v6061 = vpack.c.bf16 %v6044, %v6043
      %v6062 = vpack.c.bf16 %v6046, %v6045
      %v6079 = vunpack.c.l.b16 %v6047
      %v6080 = vunpack.c.h.b16 %v6047
      %v6081 = vunpack.c.l.b16 %v6048
      %v6082 = vunpack.c.h.b16 %v6048
      %v6083 = vunpack.c.l.b16 %v6049
      %v6084 = vunpack.c.h.b16 %v6049
      %v6085 = vunpack.c.l.b16 %v6050
      %v6086 = vunpack.c.h.b16 %v6050
      %v6087 = vunpack.c.l.b16 %v6051
      %v6088 = vunpack.c.h.b16 %v6051
      %v6089 = vunpack.c.l.b16 %v6052
      %v6090 = vunpack.c.h.b16 %v6052
      %v6091 = vunpack.c.l.b16 %v6053
      %v6092 = vunpack.c.h.b16 %v6053
      %v6093 = vunpack.c.l.b16 %v6054
      %v6094 = vunpack.c.h.b16 %v6054
      %v6095 = vunpack.c.l.b16 %v6055
      %v6096 = vunpack.c.h.b16 %v6055
      %v6097 = vunpack.c.l.b16 %v6056
      %v6098 = vunpack.c.h.b16 %v6056
      %v6099 = vunpack.c.l.b16 %v6057
      %v6100 = vunpack.c.h.b16 %v6057
      %v6101 = vunpack.c.l.b16 %v6058
      %v6102 = vunpack.c.h.b16 %v6058
      %v6103 = vunpack.c.l.b16 %v6059
      %v6104 = vunpack.c.h.b16 %v6059
      %v6105 = vunpack.c.l.b16 %v6060
      %v6106 = vunpack.c.h.b16 %v6060
      %v6107 = vunpack.c.l.b16 %v6061
      %v6108 = vunpack.c.h.b16 %v6061
      %v6109 = vunpack.c.l.b16 %v6062
      %v6110 = vunpack.c.h.b16 %v6062
      %v6111 = vpack.c.b16 %v6079, %v6079
      %v6112 = vpack.c.b16 %v6080, %v6080
      %v6113 = vpack.c.b16 %v6081, %v6081
      %v6114 = vpack.c.b16 %v6082, %v6082
      %v6115 = vpack.c.b16 %v6083, %v6083
      %v6116 = vpack.c.b16 %v6084, %v6084
      %v6117 = vpack.c.b16 %v6085, %v6085
      %v6118 = vpack.c.b16 %v6086, %v6086
      %v6119 = vpack.c.b16 %v6087, %v6087
      %v6120 = vpack.c.b16 %v6088, %v6088
      %v6121 = vpack.c.b16 %v6089, %v6089
      %v6122 = vpack.c.b16 %v6090, %v6090
      %v6123 = vpack.c.b16 %v6091, %v6091
      %v6124 = vpack.c.b16 %v6092, %v6092
      %v6125 = vpack.c.b16 %v6093, %v6093
      %v6126 = vpack.c.b16 %v6094, %v6094
      %v6127 = vpack.c.b16 %v6095, %v6095
      %v6128 = vpack.c.b16 %v6096, %v6096
      %v6129 = vpack.c.b16 %v6097, %v6097
      %v6130 = vpack.c.b16 %v6098, %v6098
      %v6131 = vpack.c.b16 %v6099, %v6099
      %v6132 = vpack.c.b16 %v6100, %v6100
      %v6133 = vpack.c.b16 %v6101, %v6101
      %v6134 = vpack.c.b16 %v6102, %v6102
      %v6135 = vpack.c.b16 %v6103, %v6103
      %v6136 = vpack.c.b16 %v6104, %v6104
      %v6137 = vpack.c.b16 %v6105, %v6105
      %v6138 = vpack.c.b16 %v6106, %v6106
      %v6139 = vpack.c.b16 %v6107, %v6107
      %v6140 = vpack.c.b16 %v6108, %v6108
      %v6141 = vpack.c.b16 %v6109, %v6109
      %v6142 = vpack.c.b16 %v6110, %v6110
      %6175 = vst [vmem:[%s456] sm:$0xf] %v6111
      %6176 = vst [vmem:[%s456 + $0x4] sm:$0xf] %v6112
      %6177 = vst [vmem:[%s456 + $0x8] sm:$0xf] %v6113
      %6178 = vst [vmem:[%s456 + $0xc] sm:$0xf] %v6114
      %6179 = vst [vmem:[%s456 + $0x10] sm:$0xf] %v6115
      %6180 = vst [vmem:[%s456 + $0x14] sm:$0xf] %v6116
      %6181 = vst [vmem:[%s456 + $0x18] sm:$0xf] %v6117
      %6182 = vst [vmem:[%s456 + $0x1c] sm:$0xf] %v6118
      %6183 = vst [vmem:[%s456 + $0x20] sm:$0xf] %v6119
      %6184 = vst [vmem:[%s456 + $0x24] sm:$0xf] %v6120
      %6185 = vst [vmem:[%s456 + $0x28] sm:$0xf] %v6121
      %6186 = vst [vmem:[%s456 + $0x2c] sm:$0xf] %v6122
      %6187 = vst [vmem:[%s456 + $0x30] sm:$0xf] %v6123
      %6188 = vst [vmem:[%s456 + $0x34] sm:$0xf] %v6124
      %6189 = vst [vmem:[%s456 + $0x38] sm:$0xf] %v6125
      %6190 = vst [vmem:[%s456 + $0x3c] sm:$0xf] %v6126
      %6191 = vst [vmem:[%s456 + $0x40] sm:$0xf] %v6127
      %6192 = vst [vmem:[%s456 + $0x44] sm:$0xf] %v6128
      %6193 = vst [vmem:[%s456 + $0x48] sm:$0xf] %v6129
      %6194 = vst [vmem:[%s456 + $0x4c] sm:$0xf] %v6130
      %6195 = vst [vmem:[%s456 + $0x50] sm:$0xf] %v6131
      %6196 = vst [vmem:[%s456 + $0x54] sm:$0xf] %v6132
      %6197 = vst [vmem:[%s456 + $0x58] sm:$0xf] %v6133
      %6198 = vst [vmem:[%s456 + $0x5c] sm:$0xf] %v6134
      %6199 = vst [vmem:[%s456 + $0x60] sm:$0xf] %v6135
      %6200 = vst [vmem:[%s456 + $0x64] sm:$0xf] %v6136
      %6201 = vst [vmem:[%s456 + $0x68] sm:$0xf] %v6137
      %6202 = vst [vmem:[%s456 + $0x6c] sm:$0xf] %v6138
      %6203 = vst [vmem:[%s456 + $0x70] sm:$0xf] %v6139
      %6204 = vst [vmem:[%s456 + $0x74] sm:$0xf] %v6140
      %6205 = vst [vmem:[%s456 + $0x78] sm:$0xf] %v6141
      %6206 = vst [vmem:[%s456 + $0x7c] sm:$0xf] %v6142
      %v6207 = vadd.f32 %v6015, %v6016
      %v6208 = vadd.f32 %v6207, %v6017
      %v6209 = vadd.f32 %v6208, %v6018
      %v6210 = vadd.f32 %v6209, %v6019
      %v6211 = vadd.f32 %v6210, %v6020
      %v6212 = vadd.f32 %v6211, %v6021
      %v6213 = vadd.f32 %v6212, %v6022
      %v6214 = vadd.f32 %v6213, %v6023
      %v6215 = vadd.f32 %v6214, %v6024
      %v6216 = vadd.f32 %v6215, %v6025
      %v6217 = vadd.f32 %v6216, %v6026
      %v6218 = vadd.f32 %v6217, %v6027
      %v6219 = vadd.f32 %v6218, %v6028
      %v6220 = vadd.f32 %v6219, %v6029
      %v6221 = vadd.f32 %v6220, %v6030
      %v6222 = vadd.f32 %v6221, %v6031
      %v6223 = vadd.f32 %v6222, %v6032
      %v6224 = vadd.f32 %v6223, %v6033
      %v6225 = vadd.f32 %v6224, %v6034
      %v6226 = vadd.f32 %v6225, %v6035
      %v6227 = vadd.f32 %v6226, %v6036
      %v6228 = vadd.f32 %v6227, %v6037
      %v6229 = vadd.f32 %v6228, %v6038
      %v6230 = vadd.f32 %v6229, %v6039
      %v6231 = vadd.f32 %v6230, %v6040
      %v6232 = vadd.f32 %v6231, %v6041
      %v6233 = vadd.f32 %v6232, %v6042
      %v6234 = vadd.f32 %v6233, %v6043
      %v6235 = vadd.f32 %v6234, %v6044
      %v6236 = vadd.f32 %v6235, %v6045
      %v6237 = vadd.f32 %v6236, %v6046
      %v6238 = vrot.slane %v6237, 4
      %v6239 = vadd.f32 %v6237, %v6238
      %v6240 = vrot.slane %v6239, 2
      %v6241 = vadd.f32 %v6239, %v6240
      %v6242 = vrot.slane %v6241, 1
      %v6243 = vadd.f32 %v6241, %v6242
      %6244 = vst [vmem:[%s464] sm:$0x1] %v6243
      %v6245 = vmul.f32 %v6015, %v6015
      %v6246 = vmul.f32 %v6016, %v6016
      %v6247 = vmul.f32 %v6017, %v6017
      %v6248 = vmul.f32 %v6018, %v6018
      %v6249 = vmul.f32 %v6019, %v6019
      %v6250 = vmul.f32 %v6020, %v6020
      %v6251 = vmul.f32 %v6021, %v6021
      %v6252 = vmul.f32 %v6022, %v6022
      %v6253 = vmul.f32 %v6023, %v6023
      %v6254 = vmul.f32 %v6024, %v6024
      %v6255 = vmul.f32 %v6025, %v6025
      %v6256 = vmul.f32 %v6026, %v6026
      %v6257 = vmul.f32 %v6027, %v6027
      %v6258 = vmul.f32 %v6028, %v6028
      %v6259 = vmul.f32 %v6029, %v6029
      %v6260 = vmul.f32 %v6030, %v6030
      %v6261 = vmul.f32 %v6031, %v6031
      %v6262 = vmul.f32 %v6032, %v6032
      %v6263 = vmul.f32 %v6033, %v6033
      %v6264 = vmul.f32 %v6034, %v6034
      %v6265 = vmul.f32 %v6035, %v6035
      %v6266 = vmul.f32 %v6036, %v6036
      %v6267 = vmul.f32 %v6037, %v6037
      %v6268 = vmul.f32 %v6038, %v6038
      %v6269 = vmul.f32 %v6039, %v6039
      %v6270 = vmul.f32 %v6040, %v6040
      %v6271 = vmul.f32 %v6041, %v6041
      %v6272 = vmul.f32 %v6042, %v6042
      %v6273 = vmul.f32 %v6043, %v6043
      %v6274 = vmul.f32 %v6044, %v6044
      %v6275 = vmul.f32 %v6045, %v6045
      %v6276 = vmul.f32 %v6046, %v6046
      %v6277 = vadd.f32 %v6245, %v6246
      %v6278 = vadd.f32 %v6277, %v6247
      %v6279 = vadd.f32 %v6278, %v6248
      %v6280 = vadd.f32 %v6279, %v6249
      %v6281 = vadd.f32 %v6280, %v6250
      %v6282 = vadd.f32 %v6281, %v6251
      %v6283 = vadd.f32 %v6282, %v6252
      %v6284 = vadd.f32 %v6283, %v6253
      %v6285 = vadd.f32 %v6284, %v6254
      %v6286 = vadd.f32 %v6285, %v6255
      %v6287 = vadd.f32 %v6286, %v6256
      %v6288 = vadd.f32 %v6287, %v6257
      %v6289 = vadd.f32 %v6288, %v6258
      %v6290 = vadd.f32 %v6289, %v6259
      %v6291 = vadd.f32 %v6290, %v6260
      %v6292 = vadd.f32 %v6291, %v6261
      %v6293 = vadd.f32 %v6292, %v6262
      %v6294 = vadd.f32 %v6293, %v6263
      %v6295 = vadd.f32 %v6294, %v6264
      %v6296 = vadd.f32 %v6295, %v6265
      %v6297 = vadd.f32 %v6296, %v6266
      %v6298 = vadd.f32 %v6297, %v6267
      %v6299 = vadd.f32 %v6298, %v6268
      %v6300 = vadd.f32 %v6299, %v6269
      %v6301 = vadd.f32 %v6300, %v6270
      %v6302 = vadd.f32 %v6301, %v6271
      %v6303 = vadd.f32 %v6302, %v6272
      %v6304 = vadd.f32 %v6303, %v6273
      %v6305 = vadd.f32 %v6304, %v6274
      %v6306 = vadd.f32 %v6305, %v6275
      %v6307 = vadd.f32 %v6306, %v6276
      %v6308 = vrot.slane %v6307, 4
      %v6309 = vadd.f32 %v6307, %v6308
      %v6310 = vrot.slane %v6309, 2
      %v6311 = vadd.f32 %v6309, %v6310
      %v6312 = vrot.slane %v6311, 1
      %v6313 = vadd.f32 %v6311, %v6312
      %6314 = vst [vmem:[%s464 + $0x1] sm:$0x1] %v6313
      %s6315 = smul.u32 32, %s24
      %p6316 = scmp.lt.s32.totalorder %s23, 1
      %s6317 = scalar_select %p6316, %s23, 1
      %p6318 = scmp.lt.s32.totalorder %s6315, 31
      %s6319 = scalar_select %p6318, %s6315, 31
      %s6320 = smul.addr %s6317, 32
      %s6321 = sadd.s32 %s6319, %s6320
      %s6322 = smul.addr %s6321, 4
      %s6323 = scalar_lea.vmem %s6, %s6322
      %p6324 = scmp.lt.s32.totalorder %s23, 1
      %s6325 = scalar_select %p6324, %s23, 1
      %p6326 = scmp.lt.s32.totalorder %s24, 0
      %s6327 = scalar_select %p6326, %s24, 0
      %s6328 = sadd.s32 %s6327, %s6325
      %s6329 = smul.addr %s6328, 2
      %s6330 = scalar_lea.vmem %s7, %s6329
      // Predicated region
      $region61: #{doubleconv_forward.4} parent=43 // pred_check
        %p6331 = pneg %p214
      $region62: #{doubleconv_forward.4} parent=43 // pred_check_branch
        %6333 = sbr.rel (%p6331) target = $region64
      $region63: #{doubleconv_forward.4} parent=43 // pred_region
        %s6334 = smul.u32 32, %s24
      $region64: #{doubleconv_forward.4} parent=43 // pred_fallthru
        _
      // Predicated region
      $region65: #{doubleconv_forward.4} parent=43 // pred_check
        %p6335 = pneg %p242
      $region66: #{doubleconv_forward.4} parent=43 // pred_check_branch
        %6337 = sbr.rel (%p6335) target = $region68
      $region67: #{doubleconv_forward.4} parent=43 // pred_region
        _
      $region68: #{doubleconv_forward.4} parent=43 // pred_fallthru
        _
    $region44: #{doubleconv_forward.4} parent=5 // pred_fallthru
      _
    %p6338 = scmp.le.s32.totalorder 2, %s14
    // Predicated region
    $region69: #{doubleconv_forward.4} parent=5 // pred_check
      %p6339 = pneg %p6338
    $region70: #{doubleconv_forward.4} parent=5 // pred_check_branch
      %6341 = sbr.rel (%p6339) target = $region72
    $region71: #{doubleconv_forward.4} parent=5 // pred_region
      %s6342 = ssub.s32 %s14, 2
      // Predicated region
      $region73: #{doubleconv_forward.4} parent=71 // pred_check
        %p6343 = pneg %p220
      $region74: #{doubleconv_forward.4} parent=71 // pred_check_branch
        %6345 = sbr.rel (%p6343) target = $region76
      $region75: #{doubleconv_forward.4} parent=71 // pred_region
        %s6346 = smul.u32 32, %s26
        %p6347 = scmp.lt.s32.totalorder %s25, 1
        %s6348 = scalar_select %p6347, %s25, 1
        %p6349 = scmp.lt.s32.totalorder %s6346, 31
        %s6350 = scalar_select %p6349, %s6346, 31
        %s6351 = smul.addr %s6348, 32
        %s6352 = sadd.s32 %s6350, %s6351
        %s6353 = smul.addr %s6352, 4
        %s6354 = scalar_lea.vmem %s6, %s6353
      $region76: #{doubleconv_forward.4} parent=71 // pred_fallthru
        _
      // Predicated region
      $region77: #{doubleconv_forward.4} parent=71 // pred_check
        %p6355 = pneg %p248
      $region78: #{doubleconv_forward.4} parent=71 // pred_check_branch
        %6357 = sbr.rel (%p6355) target = $region80
      $region79: #{doubleconv_forward.4} parent=71 // pred_region
        %p6358 = scmp.lt.s32.totalorder %s25, 1
        %s6359 = scalar_select %p6358, %s25, 1
        %p6360 = scmp.lt.s32.totalorder %s26, 0
        %s6361 = scalar_select %p6360, %s26, 0
        %s6362 = sadd.s32 %s6361, %s6359
        %s6363 = smul.addr %s6362, 2
        %s6364 = scalar_lea.vmem %s7, %s6363
      $region80: #{doubleconv_forward.4} parent=71 // pred_fallthru
        _
    $region72: #{doubleconv_forward.4} parent=5 // pred_fallthru
      _
  $region6: #{doubleconv_forward.4} parent=0 // loop_footer
    %s18 = sadd.s32 1, %s14
  $region7: #{doubleconv_forward.4} parent=0 // loop_footer_branch
    %13 = sbr.rel target = $region3
  $region8: #{doubleconv_forward.4} parent=0 // loop_exit
    _

</llo_original>
